<compile_context>
chip_gen: v7x
topology: tpu7x:2x2x1
jax: 0.10.0
libtpu: 0.0.40
codegen_flags: <defaults>
</compile_context>

<pallas_src>
import functools

import jax
import jax.numpy as jnp
from jax.experimental import pallas as pl
from jax.experimental.pallas import tpu as pltpu


def _ffn_resident_kernel(x_ref, w1_ref, b1_ref, w2_ref, b2_ref, o_ref):
    # x_ref : (tm, d_model)        bf16    w1_ref: (d_model, middle_dim) bf16
    # b1_ref: (1, middle_dim)      f32     w2_ref: (middle_dim, tn)      bf16
    # b2_ref: (1, tn)              f32     o_ref : (tm, tn)
    h = jnp.dot(x_ref[...], w1_ref[...], preferred_element_type=jnp.float32)
    h = jnp.maximum(h + b1_ref[...], 0.0)            # fc1 + bias + ReLU
    # dropout(p=0.1) in eval mode == identity
    out = jnp.dot(h.astype(w2_ref.dtype), w2_ref[...],
                  preferred_element_type=jnp.float32)
    o_ref[...] = (out + b2_ref[...]).astype(o_ref.dtype)


def _ffn_streamed_kernel(x_ref, w1_ref, b1_ref, w2_ref, b2_ref, o_ref, acc_ref):
    # K-tiled fallback: hidden dim streamed in (d_model, tk)/(tk, d_model)
    # chunks, (tm, d_model) f32 accumulator resident across the K axis.
    k = pl.program_id(1)

    @pl.when(k == 0)
    def _init():
        acc_ref[...] = jnp.zeros_like(acc_ref)

    h = jnp.dot(x_ref[...], w1_ref[...], preferred_element_type=jnp.float32)
    h = jnp.maximum(h + b1_ref[...], 0.0)            # exact: fc1 contraction untiled
    acc_ref[...] += jnp.dot(h.astype(w2_ref.dtype), w2_ref[...],
                            preferred_element_type=jnp.float32)

    @pl.when(k == pl.num_programs(1) - 1)
    def _store():
        o_ref[...] = (acc_ref[...] + b2_ref[...]).astype(o_ref.dtype)


def _round_up(n, m):
    return ((n + m - 1) // m) * m


def _nbytes(shape, dtype):
    n = 1
    for d in shape:
        n *= int(d)
    return n * jnp.dtype(dtype).itemsize


_RESIDENT_WEIGHT_LIMIT = 16 * 1024 * 1024   # bf16 weight bytes kept resident in VMEM
_VMEM_CAP = 50 * 1024 * 1024                # safe ceiling on v7x (64 MiB/TC)


@functools.partial(jax.jit,
                   static_argnames=("block_m", "block_k", "compute_dtype"))
def feed_forward(x, w1, b1, w2, b2, *, block_m=512, block_k=256,
                 compute_dtype=jnp.bfloat16):
    """x: [batch, seq, d_model] -> [batch, seq, d_model] (eval-mode FFN)."""
    batch, seq, d_model = x.shape
    middle_dim = w1.shape[1]
    M = batch * seq
    out_dtype = x.dtype
    csize = jnp.dtype(compute_dtype).itemsize

    # Wrapper-side bf16 casts: halve weight DMA bytes, no in-kernel casts.
    x2d = x.reshape(M, d_model).astype(compute_dtype)
    w1c = w1.astype(compute_dtype)
    w2c = w2.astype(compute_dtype)
    b1_2d = b1.reshape(1, middle_dim).astype(jnp.float32)
    b2_2d = b2.reshape(1, d_model).astype(jnp.float32)

    # Row tile (multiple of 8); pad M instead of asserting divisibility.
    tm = min(block_m, _round_up(M, 8))
    M_pad = _round_up(M, tm)
    if M_pad != M:
        x2d = jnp.pad(x2d, ((0, M_pad - M), (0, 0)))
    num_m = M_pad // tm

    weight_bytes = (_nbytes((d_model, middle_dim), compute_dtype)
                    + _nbytes((middle_dim, d_model), compute_dtype))
    resident = weight_bytes <= _RESIDENT_WEIGHT_LIMIT

    if resident:
        # Column (N) tiling only when a single M tile would otherwise leave
        # v7x's second TensorCore idle; fc1 recompute per column tile is
        # negligible at small M.
        if num_m == 1 and d_model % 256 == 0:
            tn = d_model // 2
        else:
            tn = d_model
        num_n = d_model // tn
        grid = (num_m, num_n)

        vmem = 2 * (_nbytes((tm, d_model), compute_dtype)
                    + _nbytes((d_model, middle_dim), compute_dtype)
                    + _nbytes((1, middle_dim), jnp.float32)
                    + _nbytes((middle_dim, tn), compute_dtype)
                    + _nbytes((1, tn), jnp.float32)
                    + _nbytes((tm, tn), out_dtype))
        vmem += _nbytes((tm, middle_dim), jnp.float32)       # fc1 intermediate
        vmem_limit = min(max(vmem + 4 * 1024 * 1024, 24 * 1024 * 1024), _VMEM_CAP)

        flops = (num_n + 1) * 2 * M_pad * d_model * middle_dim
        bytes_accessed = (x2d.size * csize + weight_bytes
                          + b1_2d.size * 4 + b2_2d.size * 4
                          + M_pad * d_model * jnp.dtype(out_dtype).itemsize)

        out2d = pl.pallas_call(
            _ffn_resident_kernel,
            out_shape=jax.ShapeDtypeStruct((M_pad, d_model), out_dtype),
            grid_spec=pltpu.PrefetchScalarGridSpec(
                num_scalar_prefetch=0,
                grid=grid,
                in_specs=[
                    pl.BlockSpec((tm, d_model), lambda i, j: (i, 0)),          # x tile
                    pl.BlockSpec((d_model, middle_dim), lambda i, j: (0, 0)),  # w1 resident
                    pl.BlockSpec((1, middle_dim), lambda i, j: (0, 0)),        # b1 resident
                    pl.BlockSpec((middle_dim, tn), lambda i, j: (0, j)),       # w2 cols
                    pl.BlockSpec((1, tn), lambda i, j: (0, j)),                # b2 cols
                ],
                out_specs=pl.BlockSpec((tm, tn), lambda i, j: (i, j)),
            ),
            compiler_params=pltpu.CompilerParams(
                dimension_semantics=("parallel", "parallel"),
                vmem_limit_bytes=int(vmem_limit),
            ),
            cost_estimate=pl.CostEstimate(
                flops=int(flops), transcendentals=0,
                bytes_accessed=int(bytes_accessed)),
        )(x2d, w1c, b1_2d, w2c, b2_2d)
    else:
        # Streamed (K-tiled) fallback for large hidden dims.
        # tk = largest multiple of 128 that divides middle_dim, capped at block_k.
        tk = 0
        cand = (min(block_k, middle_dim) // 128) * 128
        while cand >= 128:
            if middle_dim % cand == 0:
                tk = cand
                break
            cand -= 128
        if tk == 0:
            # TODO(synk): pad middle_dim instead of falling back to the full
            # hidden dim for non-128-divisible models.
            tk = middle_dim
        num_k = middle_dim // tk
        grid = (num_m, num_k)

        vmem = 2 * (_nbytes((tm, d_model), compute_dtype)
                    + _nbytes((d_model, tk), compute_dtype)
                    + _nbytes((1, tk), jnp.float32)
                    + _nbytes((tk, d_model), compute_dtype)
                    + _nbytes((1, d_model), jnp.float32)
                    + _nbytes((tm, d_model), out_dtype))
        vmem += _nbytes((tm, d_model), jnp.float32)   # acc scratch
        vmem += _nbytes((tm, tk), jnp.float32)        # fc1 intermediate
        vmem_limit = min(max(vmem + 4 * 1024 * 1024, 24 * 1024 * 1024), _VMEM_CAP)

        flops = 4 * M_pad * d_model * middle_dim
        # Weights are re-streamed once per M tile -> include that in HBM bytes.
        bytes_accessed = (x2d.size * csize + num_m * weight_bytes
                          + b1_2d.size * 4 + b2_2d.size * 4
                          + M_pad * d_model * jnp.dtype(out_dtype).itemsize)

        out2d = pl.pallas_call(
            _ffn_streamed_kernel,
            out_shape=jax.ShapeDtypeStruct((M_pad, d_model), out_dtype),
            grid_spec=pltpu.PrefetchScalarGridSpec(
                num_scalar_prefetch=0,
                grid=grid,
                in_specs=[
                    pl.BlockSpec((tm, d_model), lambda i, k: (i, 0)),   # x tile
                    pl.BlockSpec((d_model, tk), lambda i, k: (0, k)),   # w1 chunk
                    pl.BlockSpec((1, tk), lambda i, k: (0, k)),         # b1 chunk
                    pl.BlockSpec((tk, d_model), lambda i, k: (k, 0)),   # w2 chunk
                    pl.BlockSpec((1, d_model), lambda i, k: (0, 0)),    # b2
                ],
                out_specs=pl.BlockSpec((tm, d_model), lambda i, k: (i, 0)),
                scratch_shapes=[pltpu.VMEM((tm, d_model), jnp.float32)],
            ),
            compiler_params=pltpu.CompilerParams(
                dimension_semantics=("parallel", "arbitrary"),
                vmem_limit_bytes=int(vmem_limit),
            ),
            cost_estimate=pl.CostEstimate(
                flops=int(flops), transcendentals=0,
                bytes_accessed=int(bytes_accessed)),
        )(x2d, w1c, b1_2d, w2c, b2_2d)

    return out2d[:M].reshape(batch, seq, d_model)


def init_params(key, d_model, middle_dim, dtype=jnp.float32):
    """Deterministic init mimicking nn.Linear: U(-1/sqrt(fan_in), 1/sqrt(fan_in))."""
    k1, k2, k3, k4 = jax.random.split(key, 4)
    bound1 = 1.0 / (d_model ** 0.5)
    bound2 = 1.0 / (middle_dim ** 0.5)
    w1 = jax.random.uniform(k1, (d_model, middle_dim), dtype, -bound1, bound1)
    b1 = jax.random.uniform(k2, (middle_dim,), dtype, -bound1, bound1)
    w2 = jax.random.uniform(k3, (middle_dim, d_model), dtype, -bound2, bound2)
    b2 = jax.random.uniform(k4, (d_model,), dtype, -bound2, bound2)
    return w1, b1, w2, b2


if __name__ == "__main__":
    # Shapes consistent with the module: d_model=512, middle_dim=2048 (defaults),
    # small batch/seq.
    batch, seq = 2, 8
    d_model, middle_dim = 512, 2048

    key = jax.random.PRNGKey(0)
    kx, kp = jax.random.split(key)
    x = jax.random.normal(kx, (batch, seq, d_model), jnp.float32)
    w1, b1, w2, b2 = init_params(kp, d_model, middle_dim)

    out = feed_forward(x, w1, b1, w2, b2)
    out = jax.block_until_ready(out)

    # Reference (pure JAX) with matching bf16 matmul operands / f32 accumulation.
    x2d = x.reshape(-1, d_model)
    h_ref = jnp.dot(x2d.astype(jnp.bfloat16), w1.astype(jnp.bfloat16),
                    preferred_element_type=jnp.float32) + b1
    h_ref = jnp.maximum(h_ref, 0.0)
    ref = jnp.dot(h_ref.astype(jnp.bfloat16), w2.astype(jnp.bfloat16),
                  preferred_element_type=jnp.float32) + b2
    ref = ref.reshape(batch, seq, d_model)

    assert out.shape == (batch, seq, d_model)
    assert jnp.allclose(out, ref, atol=2e-2, rtol=2e-2), float(
        jnp.max(jnp.abs(out - ref)))

    print("KERNEL_OK")
</pallas_src>

<mosaic_0001>
module attributes {stable_mosaic.version = 11 : i64} {
  func.func @_ffn_resident_kernel(%arg0: i32, %arg1: i32, %arg2: memref<16x512xbf16, #tpu.memory_space<vmem>>, %arg3: memref<512x2048xbf16, #tpu.memory_space<vmem>>, %arg4: memref<1x2048xf32, #tpu.memory_space<vmem>>, %arg5: memref<2048x256xbf16, #tpu.memory_space<vmem>>, %arg6: memref<1x256xf32, #tpu.memory_space<vmem>>, %arg7: memref<16x256xf32, #tpu.memory_space<vmem>>) attributes {dimension_semantics = [#tpu.dimension_semantics<parallel>, #tpu.dimension_semantics<parallel>], iteration_bounds = array<i64: 1, 2>, scalar_prefetch = 0 : i64, scratch_operands = 0 : i64, tpu.core_type = #tpu.core_type<tc>, window_params = [{transform_indices = @transform_0, window_bounds = array<i64: 16, 512>}, {pipeline_mode = #tpu.pipeline_mode<synchronous>, transform_indices = @transform_1, window_bounds = array<i64: 512, 2048>}, {pipeline_mode = #tpu.pipeline_mode<synchronous>, transform_indices = @transform_2, window_bounds = array<i64: 1, 2048>}, {transform_indices = @transform_3, window_bounds = array<i64: 2048, 256>}, {transform_indices = @transform_4, window_bounds = array<i64: 1, 256>}, {transform_indices = @transform_5, window_bounds = array<i64: 16, 256>}]} {
    %c0 = arith.constant 0 : index
    %c0_0 = arith.constant 0 : index
    %0 = vector.load %arg2[%c0, %c0_0] : memref<16x512xbf16, #tpu.memory_space<vmem>>, vector<16x512xbf16>
    %c0_1 = arith.constant 0 : index
    %c0_2 = arith.constant 0 : index
    %1 = vector.load %arg3[%c0_1, %c0_2] : memref<512x2048xbf16, #tpu.memory_space<vmem>>, vector<512x2048xbf16>
    %cst = arith.constant dense<0.000000e+00> : vector<16x2048xf32>
    %2 = tpu.matmul %0, %1, %cst {dimension_numbers = #tpu.dot_dimension_numbers<[1], [0], [0], [1], [0, 0, 1, 1], [], []>} : vector<16x512xbf16>, vector<512x2048xbf16>, vector<16x2048xf32> -> vector<16x2048xf32>
    %c0_3 = arith.constant 0 : index
    %c0_4 = arith.constant 0 : index
    %3 = vector.load %arg4[%c0_3, %c0_4] : memref<1x2048xf32, #tpu.memory_space<vmem>>, vector<1x2048xf32>
    %4 = vector.broadcast %3 : vector<1x2048xf32> to vector<16x2048xf32>
    %5 = arith.addf %2, %4 : vector<16x2048xf32>
    %cst_5 = arith.constant 0.000000e+00 : f32
    %6 = vector.broadcast %cst_5 : f32 to vector<16x2048xf32>
    %7 = arith.maximumf %5, %6 : vector<16x2048xf32>
    %8 = arith.truncf %7 : vector<16x2048xf32> to vector<16x2048xbf16>
    %c0_6 = arith.constant 0 : index
    %c0_7 = arith.constant 0 : index
    %9 = vector.load %arg5[%c0_6, %c0_7] : memref<2048x256xbf16, #tpu.memory_space<vmem>>, vector<2048x256xbf16>
    %cst_8 = arith.constant dense<0.000000e+00> : vector<16x256xf32>
    %10 = tpu.matmul %8, %9, %cst_8 {dimension_numbers = #tpu.dot_dimension_numbers<[1], [0], [0], [1], [0, 0, 1, 1], [], []>} : vector<16x2048xbf16>, vector<2048x256xbf16>, vector<16x256xf32> -> vector<16x256xf32>
    %c0_9 = arith.constant 0 : index
    %c0_10 = arith.constant 0 : index
    %11 = vector.load %arg6[%c0_9, %c0_10] : memref<1x256xf32, #tpu.memory_space<vmem>>, vector<1x256xf32>
    %12 = vector.broadcast %11 : vector<1x256xf32> to vector<16x256xf32>
    %13 = arith.addf %10, %12 : vector<16x256xf32>
    %c0_11 = arith.constant 0 : index
    %c0_12 = arith.constant 0 : index
    %14 = vector.load %arg7[%c0_11, %c0_12] : memref<16x256xf32, #tpu.memory_space<vmem>>, vector<16x256xf32>
    tpu.vector_store %arg7[%c0_11, %c0_12], %13 {strides = array<i32>} : memref<16x256xf32, #tpu.memory_space<vmem>>, vector<16x256xf32>,
    return
  }
  func.func @transform_0(%arg0: i32, %arg1: i32) -> (i32, i32) {
    %c0_i32 = arith.constant 0 : i32
    %c0_i32_0 = arith.constant 0 : i32
    return %arg0, %c0_i32 : i32, i32
  }
  func.func @transform_1(%arg0: i32, %arg1: i32) -> (i32, i32) {
    %c0_i32 = arith.constant 0 : i32
    %c0_i32_0 = arith.constant 0 : i32
    %c0_i32_1 = arith.constant 0 : i32
    return %c0_i32, %c0_i32_0 : i32, i32
  }
  func.func @transform_2(%arg0: i32, %arg1: i32) -> (i32, i32) {
    %c0_i32 = arith.constant 0 : i32
    %c0_i32_0 = arith.constant 0 : i32
    %c0_i32_1 = arith.constant 0 : i32
    return %c0_i32, %c0_i32_0 : i32, i32
  }
  func.func @transform_3(%arg0: i32, %arg1: i32) -> (i32, i32) {
    %c0_i32 = arith.constant 0 : i32
    %c0_i32_0 = arith.constant 0 : i32
    return %c0_i32, %arg1 : i32, i32
  }
  func.func @transform_4(%arg0: i32, %arg1: i32) -> (i32, i32) {
    %c0_i32 = arith.constant 0 : i32
    %c0_i32_0 = arith.constant 0 : i32
    return %c0_i32, %arg1 : i32, i32
  }
  func.func @transform_5(%arg0: i32, %arg1: i32) -> (i32, i32) {
    %c0_i32 = arith.constant 0 : i32
    return %arg0, %arg1 : i32, i32
  }
}

</mosaic_0001>

<llo_original>
// kernel: feed_forward.1
$region0: #{feed_forward.1}
  #allocation0 [shape = 'u32[]', space=smem, size = 0x4, offset = 0x4, fixed_abs, tag = 'smem constant byte address 0x4 - core index']
  #allocation1 [shape = 'u32[144,128]{1,0:T(1,128)}', space=vmem, size = 0x12000, scoped, tag = 'internal scratch']
  %s0 = inlined_call_operand.vmem [shape: bf16[16,512], index: 0, kind: input, shape index: {}]
  %s1 = inlined_call_operand.vmem [shape: bf16[512,2048], index: 1, kind: input, shape index: {}]
  %s2 = inlined_call_operand.vmem [shape: f32[1,2048], index: 2, kind: input, shape index: {}]
  %s3 = inlined_call_operand.vmem [shape: bf16[2048,512], index: 3, kind: input, shape index: {}]
  %s4 = inlined_call_operand.vmem [shape: f32[1,512], index: 4, kind: input, shape index: {}]
  %s5 = inlined_call_operand.hbm [shape: f32[16,512], index: 5, kind: output, shape index: {}]
  %s6 = sld [smem:[#allocation0]]
  $region91: #{feed_forward.1} parent=0
    _
  %s8 = ssub.s32 1, %s6
  %s9 = scalar_select 0, %s8, %s6
  $region1: #{feed_forward.1} parent=0
    #allocation2 [shape = 'u8[2097152]{0}', space=vmem, size = 0x200000, scoped, tag = 'input window, operand 3']
    #allocation3 [shape = 'u8[32768]{0}', space=vmem, size = 0x8000, scoped, tag = 'output window, operand 0']
    #allocation4 [shape = 's32[2]{0}', space=sflag, size = 0x8, scoped, tag = 'scoped memory for feed_forward.1']
    %10 = vsyncpa [#allocation4], 0
    %s11 = scalar_lea.sflag [#allocation4], 1
    %12 = vsyncpa %s11, 0
    loop: start=0, step=1, limit=4
    $region2: #{feed_forward.1} parent=1 // loop_pre_header
      _
    $region3: #{feed_forward.1} parent=1 // loop_header
      %s14 = sphi 0, %s18
      %p15 = scmp.ge.s32.totalorder %s14, 4
      %s21 = sphi 0, %s33
      %s22 = sphi 0, %s29
      %s23 = sphi 0, %s21
      %s24 = sphi 0, %s22
      %s25 = sphi 0, %s23
      %s26 = sphi 0, %s24
      %s36 = sphi 0, %s38
      %s39 = sphi 0, %s36
      %s40 = sphi 0, %s39
      %s56 = sphi 0, %s40
      %s60 = sphi 0, %s60
      %s62 = sphi 0, %s60
      %s63 = sphi 0, %s62
      %s77 = sphi 0, %s63
      %s81 = sphi 0, %s81
      %s83 = sphi 0, %s81
      %s84 = sphi 0, %s83
      %s98 = sphi 0, %s84
      %s104 = sphi 0, %s106
      %s107 = sphi 0, %s104
      %s108 = sphi 0, %s107
      %s124 = sphi 0, %s108
      %s130 = sphi 0, %s132
      %s133 = sphi 0, %s130
      %s134 = sphi 0, %s133
      %s150 = sphi 0, %s134
      %s158 = sphi 0, %s160
      %s161 = sphi 0, %s158
      %s162 = sphi 0, %s161
      %s178 = sphi 0, %s162
    $region4: #{feed_forward.1} parent=1 // loop_header_branch
      %17 = sbr.rel (%p15) target = $region8
    $region5: #{feed_forward.1} parent=1 // loop_body
      %s19 = ssub.s32 %s14, 1
      %s20 = ssub.s32 %s14, 2
      %s27 = sadd.s32 1, %s22
      %p28 = scmp.ge.s32.totalorder %s27, 2
      %s29 = scalar_select %p28, 0, %s27
      %s30 = sadd.s32 1, %s21
      %s31 = scalar_select %p28, %s30, %s21
      %p32 = scmp.ge.s32.totalorder %s31, 1
      %s33 = scalar_select %p32, 0, %s31
      %s34 = ssub.s32 %s21, %s33
      %p35 = scmp.eq.s32.totalorder %s34, 0
      %s37 = sadd.s32 %s36, 1
      %s38 = scalar_select %p35, %s36, %s37
      %p41 = pneg %p35
      %p42 = scmp.eq.s32.totalorder %s14, 1
      %p43 = por %p41, %p42
      %p44 = scmp.ne.s32.totalorder %s36, %s39
      %p45 = scmp.eq.s32.totalorder %s14, 0
      %p46 = por %p44, %p45
      %p47 = scmp.ne.s32.totalorder %s36, %s39
      %p48 = scmp.eq.s32.totalorder %s19, 1
      %p49 = por %p47, %p48
      %p50 = scmp.ne.s32.totalorder %s39, %s40
      %p51 = scmp.eq.s32.totalorder %s19, 0
      %p52 = por %p50, %p51
      %p53 = scmp.ne.s32.totalorder %s39, %s40
      %p54 = scmp.eq.s32.totalorder %s20, 1
      %p55 = por %p53, %p54
      %p57 = scmp.ne.s32.totalorder %s40, %s56
      %p58 = scmp.eq.s32.totalorder %s20, 0
      %p59 = por %p57, %p58
      %s61 = sadd.s32 %s60, 1
      %p64 = scmp.eq.s32.totalorder %s14, 1
      %p65 = scmp.ne.s32.totalorder %s60, %s62
      %p66 = scmp.eq.s32.totalorder %s14, 0
      %p67 = por %p65, %p66
      %p68 = scmp.ne.s32.totalorder %s60, %s62
      %p69 = scmp.eq.s32.totalorder %s19, 1
      %p70 = por %p68, %p69
      %p71 = scmp.ne.s32.totalorder %s62, %s63
      %p72 = scmp.eq.s32.totalorder %s19, 0
      %p73 = por %p71, %p72
      %p74 = scmp.ne.s32.totalorder %s62, %s63
      %p75 = scmp.eq.s32.totalorder %s20, 1
      %p76 = por %p74, %p75
      %p78 = scmp.ne.s32.totalorder %s63, %s77
      %p79 = scmp.eq.s32.totalorder %s20, 0
      %p80 = por %p78, %p79
      %s82 = sadd.s32 %s81, 1
      %p85 = scmp.eq.s32.totalorder %s14, 1
      %p86 = scmp.ne.s32.totalorder %s81, %s83
      %p87 = scmp.eq.s32.totalorder %s14, 0
      %p88 = por %p86, %p87
      %p89 = scmp.ne.s32.totalorder %s81, %s83
      %p90 = scmp.eq.s32.totalorder %s19, 1
      %p91 = por %p89, %p90
      %p92 = scmp.ne.s32.totalorder %s83, %s84
      %p93 = scmp.eq.s32.totalorder %s19, 0
      %p94 = por %p92, %p93
      %p95 = scmp.ne.s32.totalorder %s83, %s84
      %p96 = scmp.eq.s32.totalorder %s20, 1
      %p97 = por %p95, %p96
      %p99 = scmp.ne.s32.totalorder %s84, %s98
      %p100 = scmp.eq.s32.totalorder %s20, 0
      %p101 = por %p99, %p100
      %s102 = ssub.s32 %s22, %s29
      %p103 = scmp.eq.s32.totalorder %s102, 0
      %s105 = sadd.s32 %s104, 1
      %s106 = scalar_select %p103, %s104, %s105
      %p109 = pneg %p103
      %p110 = scmp.eq.s32.totalorder %s14, 1
      %p111 = por %p109, %p110
      %p112 = scmp.ne.s32.totalorder %s104, %s107
      %p113 = scmp.eq.s32.totalorder %s14, 0
      %p114 = por %p112, %p113
      %p115 = scmp.ne.s32.totalorder %s104, %s107
      %p116 = scmp.eq.s32.totalorder %s19, 1
      %p117 = por %p115, %p116
      %p118 = scmp.ne.s32.totalorder %s107, %s108
      %p119 = scmp.eq.s32.totalorder %s19, 0
      %p120 = por %p118, %p119
      %p121 = scmp.ne.s32.totalorder %s107, %s108
      %p122 = scmp.eq.s32.totalorder %s20, 1
      %p123 = por %p121, %p122
      %p125 = scmp.ne.s32.totalorder %s108, %s124
      %p126 = scmp.eq.s32.totalorder %s20, 0
      %p127 = por %p125, %p126
      %s128 = ssub.s32 %s22, %s29
      %p129 = scmp.eq.s32.totalorder %s128, 0
      %s131 = sadd.s32 %s130, 1
      %s132 = scalar_select %p129, %s130, %s131
      %p135 = pneg %p129
      %p136 = scmp.eq.s32.totalorder %s14, 1
      %p137 = por %p135, %p136
      %p138 = scmp.ne.s32.totalorder %s130, %s133
      %p139 = scmp.eq.s32.totalorder %s14, 0
      %p140 = por %p138, %p139
      %p141 = scmp.ne.s32.totalorder %s130, %s133
      %p142 = scmp.eq.s32.totalorder %s19, 1
      %p143 = por %p141, %p142
      %p144 = scmp.ne.s32.totalorder %s133, %s134
      %p145 = scmp.eq.s32.totalorder %s19, 0
      %p146 = por %p144, %p145
      %p147 = scmp.ne.s32.totalorder %s133, %s134
      %p148 = scmp.eq.s32.totalorder %s20, 1
      %p149 = por %p147, %p148
      %p151 = scmp.ne.s32.totalorder %s134, %s150
      %p152 = scmp.eq.s32.totalorder %s20, 0
      %p153 = por %p151, %p152
      %s154 = ssub.s32 %s21, %s33
      %s155 = ssub.s32 %s22, %s29
      %s156 = sor.u32 %s154, %s155
      %p157 = scmp.eq.s32.totalorder %s156, 0
      %s159 = sadd.s32 %s158, 1
      %s160 = scalar_select %p157, %s158, %s159
      %p163 = pneg %p157
      %p164 = scmp.eq.s32.totalorder %s14, 1
      %p165 = por %p163, %p164
      %p166 = scmp.ne.s32.totalorder %s158, %s161
      %p167 = scmp.eq.s32.totalorder %s14, 0
      %p168 = por %p166, %p167
      %p169 = scmp.ne.s32.totalorder %s158, %s161
      %p170 = scmp.eq.s32.totalorder %s19, 1
      %p171 = por %p169, %p170
      %p172 = scmp.ne.s32.totalorder %s161, %s162
      %p173 = scmp.eq.s32.totalorder %s19, 0
      %p174 = por %p172, %p173
      %p175 = scmp.ne.s32.totalorder %s161, %s162
      %p176 = scmp.eq.s32.totalorder %s20, 1
      %p177 = por %p175, %p176
      %p179 = scmp.ne.s32.totalorder %s162, %s178
      %p180 = scmp.eq.s32.totalorder %s20, 0
      %p181 = por %p179, %p180
      %p182 = scmp.le.s32.totalorder 1, %s14
      %p183 = scmp.lt.s32.totalorder %s14, 3
      %p184 = pnand %p182, %p183
      %p185 = pneg %p184
      // Predicated region
      $region9: #{feed_forward.1} parent=5 // pred_check
        _
      $region10: #{feed_forward.1} parent=5 // pred_check_branch
        %187 = sbr.rel (%p184) target = $region12
      $region11: #{feed_forward.1} parent=5 // pred_region
        %s188 = ssub.s32 %s14, 1
        // Predicated region
        $region13: #{feed_forward.1} parent=11 // pred_check
          %p189 = pneg %p52
        $region14: #{feed_forward.1} parent=11 // pred_check_branch
          %191 = sbr.rel (%p189) target = $region16
        $region15: #{feed_forward.1} parent=11 // pred_region
          %s192 = smul.u32 2, %s23
          %p193 = scmp.lt.s32.totalorder %s192, 1
          %s194 = scalar_select %p193, %s192, 1
          %s195 = smul.addr %s194, 4
          %s196 = smul.addr %s195, 4
          %s197 = scalar_lea.vmem %s0, %s196
          %s198 = smul.u32 2, %s23
        $region16: #{feed_forward.1} parent=11 // pred_fallthru
          _
        // Predicated region
        $region17: #{feed_forward.1} parent=11 // pred_check
          %p199 = pneg %p73
        $region18: #{feed_forward.1} parent=11 // pred_check_branch
          %201 = sbr.rel (%p199) target = $region20
        $region19: #{feed_forward.1} parent=11 // pred_region
          _
        $region20: #{feed_forward.1} parent=11 // pred_fallthru
          _
        // Predicated region
        $region21: #{feed_forward.1} parent=11 // pred_check
          %p202 = pneg %p94
        $region22: #{feed_forward.1} parent=11 // pred_check_branch
          %204 = sbr.rel (%p202) target = $region24
        $region23: #{feed_forward.1} parent=11 // pred_region
          _
        $region24: #{feed_forward.1} parent=11 // pred_fallthru
          _
      $region12: #{feed_forward.1} parent=5 // pred_fallthru
        _
      %p205 = scmp.lt.s32.totalorder %s14, 2
      // Predicated region
      $region25: #{feed_forward.1} parent=5 // pred_check
        %p206 = pneg %p205
      $region26: #{feed_forward.1} parent=5 // pred_check_branch
        %208 = sbr.rel (%p206) target = $region28
      $region27: #{feed_forward.1} parent=5 // pred_region
        // Predicated region
        $region29: #{feed_forward.1} parent=27 // pred_check
          %p209 = pneg %p114
        $region30: #{feed_forward.1} parent=27 // pred_check_branch
          %211 = sbr.rel (%p209) target = $region32
        $region31: #{feed_forward.1} parent=27 // pred_region
          %s212 = sand.u32 %s104, 1
          %s213 = sand.u32 %s104, 1
          %s214 = smul.addr %s213, 2048
          %s215 = scalar_lea.vmem [#allocation2], %s214
          %s216 = smul.u32 2, %s22
          %s217 = smul.addr %s216, 4
          %s218 = scalar_lea.vmem %s3, %s217
          // Predicated region
          $region33: #{feed_forward.1} parent=31 // pred_check
            _
          $region34: #{feed_forward.1} parent=31 // pred_check_branch
            %220 = sbr.rel (0) target = $region36
          $region35: #{feed_forward.1} parent=31 // pred_region
            // Predicated region
            $region37: #{feed_forward.1} parent=35 // pred_check
              _
            $region38: #{feed_forward.1} parent=35 // pred_check_branch
              %222 = sbr.rel (0) target = $region40
            $region39: #{feed_forward.1} parent=35 // pred_region
              // Predicated region
              $region52: #{feed_forward.1} parent=39 // pred_check
                _
              $region53: #{feed_forward.1} parent=39 // pred_check_branch
                %747 = sbr.rel (0) target = $region55
              $region54: #{feed_forward.1} parent=39 // pred_region
                loop: start=0, step=1, limit=1
                $region56: #{feed_forward.1} parent=54 // loop_pre_header
                  _
                $region57: #{feed_forward.1} parent=54 // loop_header
                  %s749 = sphi 0, %s753
                  %p750 = scmp.ge.s32.totalorder %s749, 1
                  %s754 = sphi %s218, %s218
                  %s755 = sphi %s215, %s215
                $region58: #{feed_forward.1} parent=54 // loop_header_branch
                  %752 = sbr.rel (%p750) target = $region62
                $region59: #{feed_forward.1} parent=54 // loop_body
                  %v756 = vld [vmem:[%s754] sm:$0xff]
                  %757 = vst [vmem:[%s755] sm:$0xff] %v756
                  %v758 = vld [vmem:[%s754 + $0x10] sm:$0xff]
                  %759 = vst [vmem:[%s755 + $0x8] sm:$0xff] %v758
                  %v760 = vld [vmem:[%s754 + $0x20] sm:$0xff]
                  %761 = vst [vmem:[%s755 + $0x10] sm:$0xff] %v760
                  %v762 = vld [vmem:[%s754 + $0x30] sm:$0xff]
                  %763 = vst [vmem:[%s755 + $0x18] sm:$0xff] %v762
                  %v764 = vld [vmem:[%s754 + $0x40] sm:$0xff]
                  %765 = vst [vmem:[%s755 + $0x20] sm:$0xff] %v764
                  %v766 = vld [vmem:[%s754 + $0x50] sm:$0xff]
                  %767 = vst [vmem:[%s755 + $0x28] sm:$0xff] %v766
                  %v768 = vld [vmem:[%s754 + $0x60] sm:$0xff]
                  %769 = vst [vmem:[%s755 + $0x30] sm:$0xff] %v768
                  %v770 = vld [vmem:[%s754 + $0x70] sm:$0xff]
                  %771 = vst [vmem:[%s755 + $0x38] sm:$0xff] %v770
                  %v772 = vld [vmem:[%s754 + $0x80] sm:$0xff]
                  %773 = vst [vmem:[%s755 + $0x40] sm:$0xff] %v772
                  %v774 = vld [vmem:[%s754 + $0x90] sm:$0xff]
                  %775 = vst [vmem:[%s755 + $0x48] sm:$0xff] %v774
                  %v776 = vld [vmem:[%s754 + $0xa0] sm:$0xff]
                  %777 = vst [vmem:[%s755 + $0x50] sm:$0xff] %v776
                  %v778 = vld [vmem:[%s754 + $0xb0] sm:$0xff]
                  %779 = vst [vmem:[%s755 + $0x58] sm:$0xff] %v778
                  %v780 = vld [vmem:[%s754 + $0xc0] sm:$0xff]
                  %781 = vst [vmem:[%s755 + $0x60] sm:$0xff] %v780
                  %v782 = vld [vmem:[%s754 + $0xd0] sm:$0xff]
                  %783 = vst [vmem:[%s755 + $0x68] sm:$0xff] %v782
                  %v784 = vld [vmem:[%s754 + $0xe0] sm:$0xff]
                  %785 = vst [vmem:[%s755 + $0x70] sm:$0xff] %v784
                  %v786 = vld [vmem:[%s754 + $0xf0] sm:$0xff]
                  %787 = vst [vmem:[%s755 + $0x78] sm:$0xff] %v786
                  %v788 = vld [vmem:[%s754 + $0x100] sm:$0xff]
                  %789 = vst [vmem:[%s755 + $0x80] sm:$0xff] %v788
                  %v790 = vld [vmem:[%s754 + $0x110] sm:$0xff]
                  %791 = vst [vmem:[%s755 + $0x88] sm:$0xff] %v790
                  %v792 = vld [vmem:[%s754 + $0x120] sm:$0xff]
                  %793 = vst [vmem:[%s755 + $0x90] sm:$0xff] %v792
                  %v794 = vld [vmem:[%s754 + $0x130] sm:$0xff]
                  %795 = vst [vmem:[%s755 + $0x98] sm:$0xff] %v794
                  %v796 = vld [vmem:[%s754 + $0x140] sm:$0xff]
                  %797 = vst [vmem:[%s755 + $0xa0] sm:$0xff] %v796
                  %v798 = vld [vmem:[%s754 + $0x150] sm:$0xff]
                  %799 = vst [vmem:[%s755 + $0xa8] sm:$0xff] %v798
                  %v800 = vld [vmem:[%s754 + $0x160] sm:$0xff]
                  %801 = vst [vmem:[%s755 + $0xb0] sm:$0xff] %v800
                  %v802 = vld [vmem:[%s754 + $0x170] sm:$0xff]
                  %803 = vst [vmem:[%s755 + $0xb8] sm:$0xff] %v802
                  %v804 = vld [vmem:[%s754 + $0x180] sm:$0xff]
                  %805 = vst [vmem:[%s755 + $0xc0] sm:$0xff] %v804
                  %v806 = vld [vmem:[%s754 + $0x190] sm:$0xff]
                  %807 = vst [vmem:[%s755 + $0xc8] sm:$0xff] %v806
                  %v808 = vld [vmem:[%s754 + $0x1a0] sm:$0xff]
                  %809 = vst [vmem:[%s755 + $0xd0] sm:$0xff] %v808
                  %v810 = vld [vmem:[%s754 + $0x1b0] sm:$0xff]
                  %811 = vst [vmem:[%s755 + $0xd8] sm:$0xff] %v810
                  %v812 = vld [vmem:[%s754 + $0x1c0] sm:$0xff]
                  %813 = vst [vmem:[%s755 + $0xe0] sm:$0xff] %v812
                  %v814 = vld [vmem:[%s754 + $0x1d0] sm:$0xff]
                  %815 = vst [vmem:[%s755 + $0xe8] sm:$0xff] %v814
                  %v816 = vld [vmem:[%s754 + $0x1e0] sm:$0xff]
                  %817 = vst [vmem:[%s755 + $0xf0] sm:$0xff] %v816
                  %v818 = vld [vmem:[%s754 + $0x1f0] sm:$0xff]
                  %819 = vst [vmem:[%s755 + $0xf8] sm:$0xff] %v818
                  %v820 = vld [vmem:[%s754 + $0x200] sm:$0xff]
                  %821 = vst [vmem:[%s755 + $0x100] sm:$0xff] %v820
                  %v822 = vld [vmem:[%s754 + $0x210] sm:$0xff]
                  %823 = vst [vmem:[%s755 + $0x108] sm:$0xff] %v822
                  %v824 = vld [vmem:[%s754 + $0x220] sm:$0xff]
                  %825 = vst [vmem:[%s755 + $0x110] sm:$0xff] %v824
                  %v826 = vld [vmem:[%s754 + $0x230] sm:$0xff]
                  %827 = vst [vmem:[%s755 + $0x118] sm:$0xff] %v826
                  %v828 = vld [vmem:[%s754 + $0x240] sm:$0xff]
                  %829 = vst [vmem:[%s755 + $0x120] sm:$0xff] %v828
                  %v830 = vld [vmem:[%s754 + $0x250] sm:$0xff]
                  %831 = vst [vmem:[%s755 + $0x128] sm:$0xff] %v830
                  %v832 = vld [vmem:[%s754 + $0x260] sm:$0xff]
                  %833 = vst [vmem:[%s755 + $0x130] sm:$0xff] %v832
                  %v834 = vld [vmem:[%s754 + $0x270] sm:$0xff]
                  %835 = vst [vmem:[%s755 + $0x138] sm:$0xff] %v834
                  %v836 = vld [vmem:[%s754 + $0x280] sm:$0xff]
                  %837 = vst [vmem:[%s755 + $0x140] sm:$0xff] %v836
                  %v838 = vld [vmem:[%s754 + $0x290] sm:$0xff]
                  %839 = vst [vmem:[%s755 + $0x148] sm:$0xff] %v838
                  %v840 = vld [vmem:[%s754 + $0x2a0] sm:$0xff]
                  %841 = vst [vmem:[%s755 + $0x150] sm:$0xff] %v840
                  %v842 = vld [vmem:[%s754 + $0x2b0] sm:$0xff]
                  %843 = vst [vmem:[%s755 + $0x158] sm:$0xff] %v842
                  %v844 = vld [vmem:[%s754 + $0x2c0] sm:$0xff]
                  %845 = vst [vmem:[%s755 + $0x160] sm:$0xff] %v844
                  %v846 = vld [vmem:[%s754 + $0x2d0] sm:$0xff]
                  %847 = vst [vmem:[%s755 + $0x168] sm:$0xff] %v846
                  %v848 = vld [vmem:[%s754 + $0x2e0] sm:$0xff]
                  %849 = vst [vmem:[%s755 + $0x170] sm:$0xff] %v848
                  %v850 = vld [vmem:[%s754 + $0x2f0] sm:$0xff]
                  %851 = vst [vmem:[%s755 + $0x178] sm:$0xff] %v850
                  %v852 = vld [vmem:[%s754 + $0x300] sm:$0xff]
                  %853 = vst [vmem:[%s755 + $0x180] sm:$0xff] %v852
                  %v854 = vld [vmem:[%s754 + $0x310] sm:$0xff]
                  %855 = vst [vmem:[%s755 + $0x188] sm:$0xff] %v854
                  %v856 = vld [vmem:[%s754 + $0x320] sm:$0xff]
                  %857 = vst [vmem:[%s755 + $0x190] sm:$0xff] %v856
                  %v858 = vld [vmem:[%s754 + $0x330] sm:$0xff]
                  %859 = vst [vmem:[%s755 + $0x198] sm:$0xff] %v858
                  %v860 = vld [vmem:[%s754 + $0x340] sm:$0xff]
                  %861 = vst [vmem:[%s755 + $0x1a0] sm:$0xff] %v860
                  %v862 = vld [vmem:[%s754 + $0x350] sm:$0xff]
                  %863 = vst [vmem:[%s755 + $0x1a8] sm:$0xff] %v862
                  %v864 = vld [vmem:[%s754 + $0x360] sm:$0xff]
                  %865 = vst [vmem:[%s755 + $0x1b0] sm:$0xff] %v864
                  %v866 = vld [vmem:[%s754 + $0x370] sm:$0xff]
                  %867 = vst [vmem:[%s755 + $0x1b8] sm:$0xff] %v866
                  %v868 = vld [vmem:[%s754 + $0x380] sm:$0xff]
                  %869 = vst [vmem:[%s755 + $0x1c0] sm:$0xff] %v868
                  %v870 = vld [vmem:[%s754 + $0x390] sm:$0xff]
                  %871 = vst [vmem:[%s755 + $0x1c8] sm:$0xff] %v870
                  %v872 = vld [vmem:[%s754 + $0x3a0] sm:$0xff]
                  %873 = vst [vmem:[%s755 + $0x1d0] sm:$0xff] %v872
                  %v874 = vld [vmem:[%s754 + $0x3b0] sm:$0xff]
                  %875 = vst [vmem:[%s755 + $0x1d8] sm:$0xff] %v874
                  %v876 = vld [vmem:[%s754 + $0x3c0] sm:$0xff]
                  %877 = vst [vmem:[%s755 + $0x1e0] sm:$0xff] %v876
                  %v878 = vld [vmem:[%s754 + $0x3d0] sm:$0xff]
                  %879 = vst [vmem:[%s755 + $0x1e8] sm:$0xff] %v878
                  %v880 = vld [vmem:[%s754 + $0x3e0] sm:$0xff]
                  %881 = vst [vmem:[%s755 + $0x1f0] sm:$0xff] %v880
                  %v882 = vld [vmem:[%s754 + $0x3f0] sm:$0xff]
                  %883 = vst [vmem:[%s755 + $0x1f8] sm:$0xff] %v882
                  %v884 = vld [vmem:[%s754 + $0x400] sm:$0xff]
                  %885 = vst [vmem:[%s755 + $0x200] sm:$0xff] %v884
                  %v886 = vld [vmem:[%s754 + $0x410] sm:$0xff]
                  %887 = vst [vmem:[%s755 + $0x208] sm:$0xff] %v886
                  %v888 = vld [vmem:[%s754 + $0x420] sm:$0xff]
                  %889 = vst [vmem:[%s755 + $0x210] sm:$0xff] %v888
                  %v890 = vld [vmem:[%s754 + $0x430] sm:$0xff]
                  %891 = vst [vmem:[%s755 + $0x218] sm:$0xff] %v890
                  %v892 = vld [vmem:[%s754 + $0x440] sm:$0xff]
                  %893 = vst [vmem:[%s755 + $0x220] sm:$0xff] %v892
                  %v894 = vld [vmem:[%s754 + $0x450] sm:$0xff]
                  %895 = vst [vmem:[%s755 + $0x228] sm:$0xff] %v894
                  %v896 = vld [vmem:[%s754 + $0x460] sm:$0xff]
                  %897 = vst [vmem:[%s755 + $0x230] sm:$0xff] %v896
                  %v898 = vld [vmem:[%s754 + $0x470] sm:$0xff]
                  %899 = vst [vmem:[%s755 + $0x238] sm:$0xff] %v898
                  %v900 = vld [vmem:[%s754 + $0x480] sm:$0xff]
                  %901 = vst [vmem:[%s755 + $0x240] sm:$0xff] %v900
                  %v902 = vld [vmem:[%s754 + $0x490] sm:$0xff]
                  %903 = vst [vmem:[%s755 + $0x248] sm:$0xff] %v902
                  %v904 = vld [vmem:[%s754 + $0x4a0] sm:$0xff]
                  %905 = vst [vmem:[%s755 + $0x250] sm:$0xff] %v904
                  %v906 = vld [vmem:[%s754 + $0x4b0] sm:$0xff]
                  %907 = vst [vmem:[%s755 + $0x258] sm:$0xff] %v906
                  %v908 = vld [vmem:[%s754 + $0x4c0] sm:$0xff]
                  %909 = vst [vmem:[%s755 + $0x260] sm:$0xff] %v908
                  %v910 = vld [vmem:[%s754 + $0x4d0] sm:$0xff]
                  %911 = vst [vmem:[%s755 + $0x268] sm:$0xff] %v910
                  %v912 = vld [vmem:[%s754 + $0x4e0] sm:$0xff]
                  %913 = vst [vmem:[%s755 + $0x270] sm:$0xff] %v912
                  %v914 = vld [vmem:[%s754 + $0x4f0] sm:$0xff]
                  %915 = vst [vmem:[%s755 + $0x278] sm:$0xff] %v914
                  %v916 = vld [vmem:[%s754 + $0x500] sm:$0xff]
                  %917 = vst [vmem:[%s755 + $0x280] sm:$0xff] %v916
                  %v918 = vld [vmem:[%s754 + $0x510] sm:$0xff]
                  %919 = vst [vmem:[%s755 + $0x288] sm:$0xff] %v918
                  %v920 = vld [vmem:[%s754 + $0x520] sm:$0xff]
                  %921 = vst [vmem:[%s755 + $0x290] sm:$0xff] %v920
                  %v922 = vld [vmem:[%s754 + $0x530] sm:$0xff]
                  %923 = vst [vmem:[%s755 + $0x298] sm:$0xff] %v922
                  %v924 = vld [vmem:[%s754 + $0x540] sm:$0xff]
                  %925 = vst [vmem:[%s755 + $0x2a0] sm:$0xff] %v924
                  %v926 = vld [vmem:[%s754 + $0x550] sm:$0xff]
                  %927 = vst [vmem:[%s755 + $0x2a8] sm:$0xff] %v926
                  %v928 = vld [vmem:[%s754 + $0x560] sm:$0xff]
                  %929 = vst [vmem:[%s755 + $0x2b0] sm:$0xff] %v928
                  %v930 = vld [vmem:[%s754 + $0x570] sm:$0xff]
                  %931 = vst [vmem:[%s755 + $0x2b8] sm:$0xff] %v930
                  %v932 = vld [vmem:[%s754 + $0x580] sm:$0xff]
                  %933 = vst [vmem:[%s755 + $0x2c0] sm:$0xff] %v932
                  %v934 = vld [vmem:[%s754 + $0x590] sm:$0xff]
                  %935 = vst [vmem:[%s755 + $0x2c8] sm:$0xff] %v934
                  %v936 = vld [vmem:[%s754 + $0x5a0] sm:$0xff]
                  %937 = vst [vmem:[%s755 + $0x2d0] sm:$0xff] %v936
                  %v938 = vld [vmem:[%s754 + $0x5b0] sm:$0xff]
                  %939 = vst [vmem:[%s755 + $0x2d8] sm:$0xff] %v938
                  %v940 = vld [vmem:[%s754 + $0x5c0] sm:$0xff]
                  %941 = vst [vmem:[%s755 + $0x2e0] sm:$0xff] %v940
                  %v942 = vld [vmem:[%s754 + $0x5d0] sm:$0xff]
                  %943 = vst [vmem:[%s755 + $0x2e8] sm:$0xff] %v942
                  %v944 = vld [vmem:[%s754 + $0x5e0] sm:$0xff]
                  %945 = vst [vmem:[%s755 + $0x2f0] sm:$0xff] %v944
                  %v946 = vld [vmem:[%s754 + $0x5f0] sm:$0xff]
                  %947 = vst [vmem:[%s755 + $0x2f8] sm:$0xff] %v946
                  %v948 = vld [vmem:[%s754 + $0x600] sm:$0xff]
                  %949 = vst [vmem:[%s755 + $0x300] sm:$0xff] %v948
                  %v950 = vld [vmem:[%s754 + $0x610] sm:$0xff]
                  %951 = vst [vmem:[%s755 + $0x308] sm:$0xff] %v950
                  %v952 = vld [vmem:[%s754 + $0x620] sm:$0xff]
                  %953 = vst [vmem:[%s755 + $0x310] sm:$0xff] %v952
                  %v954 = vld [vmem:[%s754 + $0x630] sm:$0xff]
                  %955 = vst [vmem:[%s755 + $0x318] sm:$0xff] %v954
                  %v956 = vld [vmem:[%s754 + $0x640] sm:$0xff]
                  %957 = vst [vmem:[%s755 + $0x320] sm:$0xff] %v956
                  %v958 = vld [vmem:[%s754 + $0x650] sm:$0xff]
                  %959 = vst [vmem:[%s755 + $0x328] sm:$0xff] %v958
                  %v960 = vld [vmem:[%s754 + $0x660] sm:$0xff]
                  %961 = vst [vmem:[%s755 + $0x330] sm:$0xff] %v960
                  %v962 = vld [vmem:[%s754 + $0x670] sm:$0xff]
                  %963 = vst [vmem:[%s755 + $0x338] sm:$0xff] %v962
                  %v964 = vld [vmem:[%s754 + $0x680] sm:$0xff]
                  %965 = vst [vmem:[%s755 + $0x340] sm:$0xff] %v964
                  %v966 = vld [vmem:[%s754 + $0x690] sm:$0xff]
                  %967 = vst [vmem:[%s755 + $0x348] sm:$0xff] %v966
                  %v968 = vld [vmem:[%s754 + $0x6a0] sm:$0xff]
                  %969 = vst [vmem:[%s755 + $0x350] sm:$0xff] %v968
                  %v970 = vld [vmem:[%s754 + $0x6b0] sm:$0xff]
                  %971 = vst [vmem:[%s755 + $0x358] sm:$0xff] %v970
                  %v972 = vld [vmem:[%s754 + $0x6c0] sm:$0xff]
                  %973 = vst [vmem:[%s755 + $0x360] sm:$0xff] %v972
                  %v974 = vld [vmem:[%s754 + $0x6d0] sm:$0xff]
                  %975 = vst [vmem:[%s755 + $0x368] sm:$0xff] %v974
                  %v976 = vld [vmem:[%s754 + $0x6e0] sm:$0xff]
                  %977 = vst [vmem:[%s755 + $0x370] sm:$0xff] %v976
                  %v978 = vld [vmem:[%s754 + $0x6f0] sm:$0xff]
                  %979 = vst [vmem:[%s755 + $0x378] sm:$0xff] %v978
                  %v980 = vld [vmem:[%s754 + $0x700] sm:$0xff]
                  %981 = vst [vmem:[%s755 + $0x380] sm:$0xff] %v980
                  %v982 = vld [vmem:[%s754 + $0x710] sm:$0xff]
                  %983 = vst [vmem:[%s755 + $0x388] sm:$0xff] %v982
                  %v984 = vld [vmem:[%s754 + $0x720] sm:$0xff]
                  %985 = vst [vmem:[%s755 + $0x390] sm:$0xff] %v984
                  %v986 = vld [vmem:[%s754 + $0x730] sm:$0xff]
                  %987 = vst [vmem:[%s755 + $0x398] sm:$0xff] %v986
                  %v988 = vld [vmem:[%s754 + $0x740] sm:$0xff]
                  %989 = vst [vmem:[%s755 + $0x3a0] sm:$0xff] %v988
                  %v990 = vld [vmem:[%s754 + $0x750] sm:$0xff]
                  %991 = vst [vmem:[%s755 + $0x3a8] sm:$0xff] %v990
                  %v992 = vld [vmem:[%s754 + $0x760] sm:$0xff]
                  %993 = vst [vmem:[%s755 + $0x3b0] sm:$0xff] %v992
                  %v994 = vld [vmem:[%s754 + $0x770] sm:$0xff]
                  %995 = vst [vmem:[%s755 + $0x3b8] sm:$0xff] %v994
                  %v996 = vld [vmem:[%s754 + $0x780] sm:$0xff]
                  %997 = vst [vmem:[%s755 + $0x3c0] sm:$0xff] %v996
                  %v998 = vld [vmem:[%s754 + $0x790] sm:$0xff]
                  %999 = vst [vmem:[%s755 + $0x3c8] sm:$0xff] %v998
                  %v1000 = vld [vmem:[%s754 + $0x7a0] sm:$0xff]
                  %1001 = vst [vmem:[%s755 + $0x3d0] sm:$0xff] %v1000
                  %v1002 = vld [vmem:[%s754 + $0x7b0] sm:$0xff]
                  %1003 = vst [vmem:[%s755 + $0x3d8] sm:$0xff] %v1002
                  %v1004 = vld [vmem:[%s754 + $0x7c0] sm:$0xff]
                  %1005 = vst [vmem:[%s755 + $0x3e0] sm:$0xff] %v1004
                  %v1006 = vld [vmem:[%s754 + $0x7d0] sm:$0xff]
                  %1007 = vst [vmem:[%s755 + $0x3e8] sm:$0xff] %v1006
                  %v1008 = vld [vmem:[%s754 + $0x7e0] sm:$0xff]
                  %1009 = vst [vmem:[%s755 + $0x3f0] sm:$0xff] %v1008
                  %v1010 = vld [vmem:[%s754 + $0x7f0] sm:$0xff]
                  %1011 = vst [vmem:[%s755 + $0x3f8] sm:$0xff] %v1010
                  %v1012 = vld [vmem:[%s754 + $0x800] sm:$0xff]
                  %1013 = vst [vmem:[%s755 + $0x400] sm:$0xff] %v1012
                  %v1014 = vld [vmem:[%s754 + $0x810] sm:$0xff]
                  %1015 = vst [vmem:[%s755 + $0x408] sm:$0xff] %v1014
                  %v1016 = vld [vmem:[%s754 + $0x820] sm:$0xff]
                  %1017 = vst [vmem:[%s755 + $0x410] sm:$0xff] %v1016
                  %v1018 = vld [vmem:[%s754 + $0x830] sm:$0xff]
                  %1019 = vst [vmem:[%s755 + $0x418] sm:$0xff] %v1018
                  %v1020 = vld [vmem:[%s754 + $0x840] sm:$0xff]
                  %1021 = vst [vmem:[%s755 + $0x420] sm:$0xff] %v1020
                  %v1022 = vld [vmem:[%s754 + $0x850] sm:$0xff]
                  %1023 = vst [vmem:[%s755 + $0x428] sm:$0xff] %v1022
                  %v1024 = vld [vmem:[%s754 + $0x860] sm:$0xff]
                  %1025 = vst [vmem:[%s755 + $0x430] sm:$0xff] %v1024
                  %v1026 = vld [vmem:[%s754 + $0x870] sm:$0xff]
                  %1027 = vst [vmem:[%s755 + $0x438] sm:$0xff] %v1026
                  %v1028 = vld [vmem:[%s754 + $0x880] sm:$0xff]
                  %1029 = vst [vmem:[%s755 + $0x440] sm:$0xff] %v1028
                  %v1030 = vld [vmem:[%s754 + $0x890] sm:$0xff]
                  %1031 = vst [vmem:[%s755 + $0x448] sm:$0xff] %v1030
                  %v1032 = vld [vmem:[%s754 + $0x8a0] sm:$0xff]
                  %1033 = vst [vmem:[%s755 + $0x450] sm:$0xff] %v1032
                  %v1034 = vld [vmem:[%s754 + $0x8b0] sm:$0xff]
                  %1035 = vst [vmem:[%s755 + $0x458] sm:$0xff] %v1034
                  %v1036 = vld [vmem:[%s754 + $0x8c0] sm:$0xff]
                  %1037 = vst [vmem:[%s755 + $0x460] sm:$0xff] %v1036
                  %v1038 = vld [vmem:[%s754 + $0x8d0] sm:$0xff]
                  %1039 = vst [vmem:[%s755 + $0x468] sm:$0xff] %v1038
                  %v1040 = vld [vmem:[%s754 + $0x8e0] sm:$0xff]
                  %1041 = vst [vmem:[%s755 + $0x470] sm:$0xff] %v1040
                  %v1042 = vld [vmem:[%s754 + $0x8f0] sm:$0xff]
                  %1043 = vst [vmem:[%s755 + $0x478] sm:$0xff] %v1042
                  %v1044 = vld [vmem:[%s754 + $0x900] sm:$0xff]
                  %1045 = vst [vmem:[%s755 + $0x480] sm:$0xff] %v1044
                  %v1046 = vld [vmem:[%s754 + $0x910] sm:$0xff]
                  %1047 = vst [vmem:[%s755 + $0x488] sm:$0xff] %v1046
                  %v1048 = vld [vmem:[%s754 + $0x920] sm:$0xff]
                  %1049 = vst [vmem:[%s755 + $0x490] sm:$0xff] %v1048
                  %v1050 = vld [vmem:[%s754 + $0x930] sm:$0xff]
                  %1051 = vst [vmem:[%s755 + $0x498] sm:$0xff] %v1050
                  %v1052 = vld [vmem:[%s754 + $0x940] sm:$0xff]
                  %1053 = vst [vmem:[%s755 + $0x4a0] sm:$0xff] %v1052
                  %v1054 = vld [vmem:[%s754 + $0x950] sm:$0xff]
                  %1055 = vst [vmem:[%s755 + $0x4a8] sm:$0xff] %v1054
                  %v1056 = vld [vmem:[%s754 + $0x960] sm:$0xff]
                  %1057 = vst [vmem:[%s755 + $0x4b0] sm:$0xff] %v1056
                  %v1058 = vld [vmem:[%s754 + $0x970] sm:$0xff]
                  %1059 = vst [vmem:[%s755 + $0x4b8] sm:$0xff] %v1058
                  %v1060 = vld [vmem:[%s754 + $0x980] sm:$0xff]
                  %1061 = vst [vmem:[%s755 + $0x4c0] sm:$0xff] %v1060
                  %v1062 = vld [vmem:[%s754 + $0x990] sm:$0xff]
                  %1063 = vst [vmem:[%s755 + $0x4c8] sm:$0xff] %v1062
                  %v1064 = vld [vmem:[%s754 + $0x9a0] sm:$0xff]
                  %1065 = vst [vmem:[%s755 + $0x4d0] sm:$0xff] %v1064
                  %v1066 = vld [vmem:[%s754 + $0x9b0] sm:$0xff]
                  %1067 = vst [vmem:[%s755 + $0x4d8] sm:$0xff] %v1066
                  %v1068 = vld [vmem:[%s754 + $0x9c0] sm:$0xff]
                  %1069 = vst [vmem:[%s755 + $0x4e0] sm:$0xff] %v1068
                  %v1070 = vld [vmem:[%s754 + $0x9d0] sm:$0xff]
                  %1071 = vst [vmem:[%s755 + $0x4e8] sm:$0xff] %v1070
                  %v1072 = vld [vmem:[%s754 + $0x9e0] sm:$0xff]
                  %1073 = vst [vmem:[%s755 + $0x4f0] sm:$0xff] %v1072
                  %v1074 = vld [vmem:[%s754 + $0x9f0] sm:$0xff]
                  %1075 = vst [vmem:[%s755 + $0x4f8] sm:$0xff] %v1074
                  %v1076 = vld [vmem:[%s754 + $0xa00] sm:$0xff]
                  %1077 = vst [vmem:[%s755 + $0x500] sm:$0xff] %v1076
                  %v1078 = vld [vmem:[%s754 + $0xa10] sm:$0xff]
                  %1079 = vst [vmem:[%s755 + $0x508] sm:$0xff] %v1078
                  %v1080 = vld [vmem:[%s754 + $0xa20] sm:$0xff]
                  %1081 = vst [vmem:[%s755 + $0x510] sm:$0xff] %v1080
                  %v1082 = vld [vmem:[%s754 + $0xa30] sm:$0xff]
                  %1083 = vst [vmem:[%s755 + $0x518] sm:$0xff] %v1082
                  %v1084 = vld [vmem:[%s754 + $0xa40] sm:$0xff]
                  %1085 = vst [vmem:[%s755 + $0x520] sm:$0xff] %v1084
                  %v1086 = vld [vmem:[%s754 + $0xa50] sm:$0xff]
                  %1087 = vst [vmem:[%s755 + $0x528] sm:$0xff] %v1086
                  %v1088 = vld [vmem:[%s754 + $0xa60] sm:$0xff]
                  %1089 = vst [vmem:[%s755 + $0x530] sm:$0xff] %v1088
                  %v1090 = vld [vmem:[%s754 + $0xa70] sm:$0xff]
                  %1091 = vst [vmem:[%s755 + $0x538] sm:$0xff] %v1090
                  %v1092 = vld [vmem:[%s754 + $0xa80] sm:$0xff]
                  %1093 = vst [vmem:[%s755 + $0x540] sm:$0xff] %v1092
                  %v1094 = vld [vmem:[%s754 + $0xa90] sm:$0xff]
                  %1095 = vst [vmem:[%s755 + $0x548] sm:$0xff] %v1094
                  %v1096 = vld [vmem:[%s754 + $0xaa0] sm:$0xff]
                  %1097 = vst [vmem:[%s755 + $0x550] sm:$0xff] %v1096
                  %v1098 = vld [vmem:[%s754 + $0xab0] sm:$0xff]
                  %1099 = vst [vmem:[%s755 + $0x558] sm:$0xff] %v1098
                  %v1100 = vld [vmem:[%s754 + $0xac0] sm:$0xff]
                  %1101 = vst [vmem:[%s755 + $0x560] sm:$0xff] %v1100
                  %v1102 = vld [vmem:[%s754 + $0xad0] sm:$0xff]
                  %1103 = vst [vmem:[%s755 + $0x568] sm:$0xff] %v1102
                  %v1104 = vld [vmem:[%s754 + $0xae0] sm:$0xff]
                  %1105 = vst [vmem:[%s755 + $0x570] sm:$0xff] %v1104
                  %v1106 = vld [vmem:[%s754 + $0xaf0] sm:$0xff]
                  %1107 = vst [vmem:[%s755 + $0x578] sm:$0xff] %v1106
                  %v1108 = vld [vmem:[%s754 + $0xb00] sm:$0xff]
                  %1109 = vst [vmem:[%s755 + $0x580] sm:$0xff] %v1108
                  %v1110 = vld [vmem:[%s754 + $0xb10] sm:$0xff]
                  %1111 = vst [vmem:[%s755 + $0x588] sm:$0xff] %v1110
                  %v1112 = vld [vmem:[%s754 + $0xb20] sm:$0xff]
                  %1113 = vst [vmem:[%s755 + $0x590] sm:$0xff] %v1112
                  %v1114 = vld [vmem:[%s754 + $0xb30] sm:$0xff]
                  %1115 = vst [vmem:[%s755 + $0x598] sm:$0xff] %v1114
                  %v1116 = vld [vmem:[%s754 + $0xb40] sm:$0xff]
                  %1117 = vst [vmem:[%s755 + $0x5a0] sm:$0xff] %v1116
                  %v1118 = vld [vmem:[%s754 + $0xb50] sm:$0xff]
                  %1119 = vst [vmem:[%s755 + $0x5a8] sm:$0xff] %v1118
                  %v1120 = vld [vmem:[%s754 + $0xb60] sm:$0xff]
                  %1121 = vst [vmem:[%s755 + $0x5b0] sm:$0xff] %v1120
                  %v1122 = vld [vmem:[%s754 + $0xb70] sm:$0xff]
                  %1123 = vst [vmem:[%s755 + $0x5b8] sm:$0xff] %v1122
                  %v1124 = vld [vmem:[%s754 + $0xb80] sm:$0xff]
                  %1125 = vst [vmem:[%s755 + $0x5c0] sm:$0xff] %v1124
                  %v1126 = vld [vmem:[%s754 + $0xb90] sm:$0xff]
                  %1127 = vst [vmem:[%s755 + $0x5c8] sm:$0xff] %v1126
                  %v1128 = vld [vmem:[%s754 + $0xba0] sm:$0xff]
                  %1129 = vst [vmem:[%s755 + $0x5d0] sm:$0xff] %v1128
                  %v1130 = vld [vmem:[%s754 + $0xbb0] sm:$0xff]
                  %1131 = vst [vmem:[%s755 + $0x5d8] sm:$0xff] %v1130
                  %v1132 = vld [vmem:[%s754 + $0xbc0] sm:$0xff]
                  %1133 = vst [vmem:[%s755 + $0x5e0] sm:$0xff] %v1132
                  %v1134 = vld [vmem:[%s754 + $0xbd0] sm:$0xff]
                  %1135 = vst [vmem:[%s755 + $0x5e8] sm:$0xff] %v1134
                  %v1136 = vld [vmem:[%s754 + $0xbe0] sm:$0xff]
                  %1137 = vst [vmem:[%s755 + $0x5f0] sm:$0xff] %v1136
                  %v1138 = vld [vmem:[%s754 + $0xbf0] sm:$0xff]
                  %1139 = vst [vmem:[%s755 + $0x5f8] sm:$0xff] %v1138
                  %v1140 = vld [vmem:[%s754 + $0xc00] sm:$0xff]
                  %1141 = vst [vmem:[%s755 + $0x600] sm:$0xff] %v1140
                  %v1142 = vld [vmem:[%s754 + $0xc10] sm:$0xff]
                  %1143 = vst [vmem:[%s755 + $0x608] sm:$0xff] %v1142
                  %v1144 = vld [vmem:[%s754 + $0xc20] sm:$0xff]
                  %1145 = vst [vmem:[%s755 + $0x610] sm:$0xff] %v1144
                  %v1146 = vld [vmem:[%s754 + $0xc30] sm:$0xff]
                  %1147 = vst [vmem:[%s755 + $0x618] sm:$0xff] %v1146
                  %v1148 = vld [vmem:[%s754 + $0xc40] sm:$0xff]
                  %1149 = vst [vmem:[%s755 + $0x620] sm:$0xff] %v1148
                  %v1150 = vld [vmem:[%s754 + $0xc50] sm:$0xff]
                  %1151 = vst [vmem:[%s755 + $0x628] sm:$0xff] %v1150
                  %v1152 = vld [vmem:[%s754 + $0xc60] sm:$0xff]
                  %1153 = vst [vmem:[%s755 + $0x630] sm:$0xff] %v1152
                  %v1154 = vld [vmem:[%s754 + $0xc70] sm:$0xff]
                  %1155 = vst [vmem:[%s755 + $0x638] sm:$0xff] %v1154
                  %v1156 = vld [vmem:[%s754 + $0xc80] sm:$0xff]
                  %1157 = vst [vmem:[%s755 + $0x640] sm:$0xff] %v1156
                  %v1158 = vld [vmem:[%s754 + $0xc90] sm:$0xff]
                  %1159 = vst [vmem:[%s755 + $0x648] sm:$0xff] %v1158
                  %v1160 = vld [vmem:[%s754 + $0xca0] sm:$0xff]
                  %1161 = vst [vmem:[%s755 + $0x650] sm:$0xff] %v1160
                  %v1162 = vld [vmem:[%s754 + $0xcb0] sm:$0xff]
                  %1163 = vst [vmem:[%s755 + $0x658] sm:$0xff] %v1162
                  %v1164 = vld [vmem:[%s754 + $0xcc0] sm:$0xff]
                  %1165 = vst [vmem:[%s755 + $0x660] sm:$0xff] %v1164
                  %v1166 = vld [vmem:[%s754 + $0xcd0] sm:$0xff]
                  %1167 = vst [vmem:[%s755 + $0x668] sm:$0xff] %v1166
                  %v1168 = vld [vmem:[%s754 + $0xce0] sm:$0xff]
                  %1169 = vst [vmem:[%s755 + $0x670] sm:$0xff] %v1168
                  %v1170 = vld [vmem:[%s754 + $0xcf0] sm:$0xff]
                  %1171 = vst [vmem:[%s755 + $0x678] sm:$0xff] %v1170
                  %v1172 = vld [vmem:[%s754 + $0xd00] sm:$0xff]
                  %1173 = vst [vmem:[%s755 + $0x680] sm:$0xff] %v1172
                  %v1174 = vld [vmem:[%s754 + $0xd10] sm:$0xff]
                  %1175 = vst [vmem:[%s755 + $0x688] sm:$0xff] %v1174
                  %v1176 = vld [vmem:[%s754 + $0xd20] sm:$0xff]
                  %1177 = vst [vmem:[%s755 + $0x690] sm:$0xff] %v1176
                  %v1178 = vld [vmem:[%s754 + $0xd30] sm:$0xff]
                  %1179 = vst [vmem:[%s755 + $0x698] sm:$0xff] %v1178
                  %v1180 = vld [vmem:[%s754 + $0xd40] sm:$0xff]
                  %1181 = vst [vmem:[%s755 + $0x6a0] sm:$0xff] %v1180
                  %v1182 = vld [vmem:[%s754 + $0xd50] sm:$0xff]
                  %1183 = vst [vmem:[%s755 + $0x6a8] sm:$0xff] %v1182
                  %v1184 = vld [vmem:[%s754 + $0xd60] sm:$0xff]
                  %1185 = vst [vmem:[%s755 + $0x6b0] sm:$0xff] %v1184
                  %v1186 = vld [vmem:[%s754 + $0xd70] sm:$0xff]
                  %1187 = vst [vmem:[%s755 + $0x6b8] sm:$0xff] %v1186
                  %v1188 = vld [vmem:[%s754 + $0xd80] sm:$0xff]
                  %1189 = vst [vmem:[%s755 + $0x6c0] sm:$0xff] %v1188
                  %v1190 = vld [vmem:[%s754 + $0xd90] sm:$0xff]
                  %1191 = vst [vmem:[%s755 + $0x6c8] sm:$0xff] %v1190
                  %v1192 = vld [vmem:[%s754 + $0xda0] sm:$0xff]
                  %1193 = vst [vmem:[%s755 + $0x6d0] sm:$0xff] %v1192
                  %v1194 = vld [vmem:[%s754 + $0xdb0] sm:$0xff]
                  %1195 = vst [vmem:[%s755 + $0x6d8] sm:$0xff] %v1194
                  %v1196 = vld [vmem:[%s754 + $0xdc0] sm:$0xff]
                  %1197 = vst [vmem:[%s755 + $0x6e0] sm:$0xff] %v1196
                  %v1198 = vld [vmem:[%s754 + $0xdd0] sm:$0xff]
                  %1199 = vst [vmem:[%s755 + $0x6e8] sm:$0xff] %v1198
                  %v1200 = vld [vmem:[%s754 + $0xde0] sm:$0xff]
                  %1201 = vst [vmem:[%s755 + $0x6f0] sm:$0xff] %v1200
                  %v1202 = vld [vmem:[%s754 + $0xdf0] sm:$0xff]
                  %1203 = vst [vmem:[%s755 + $0x6f8] sm:$0xff] %v1202
                  %v1204 = vld [vmem:[%s754 + $0xe00] sm:$0xff]
                  %1205 = vst [vmem:[%s755 + $0x700] sm:$0xff] %v1204
                  %v1206 = vld [vmem:[%s754 + $0xe10] sm:$0xff]
                  %1207 = vst [vmem:[%s755 + $0x708] sm:$0xff] %v1206
                  %v1208 = vld [vmem:[%s754 + $0xe20] sm:$0xff]
                  %1209 = vst [vmem:[%s755 + $0x710] sm:$0xff] %v1208
                  %v1210 = vld [vmem:[%s754 + $0xe30] sm:$0xff]
                  %1211 = vst [vmem:[%s755 + $0x718] sm:$0xff] %v1210
                  %v1212 = vld [vmem:[%s754 + $0xe40] sm:$0xff]
                  %1213 = vst [vmem:[%s755 + $0x720] sm:$0xff] %v1212
                  %v1214 = vld [vmem:[%s754 + $0xe50] sm:$0xff]
                  %1215 = vst [vmem:[%s755 + $0x728] sm:$0xff] %v1214
                  %v1216 = vld [vmem:[%s754 + $0xe60] sm:$0xff]
                  %1217 = vst [vmem:[%s755 + $0x730] sm:$0xff] %v1216
                  %v1218 = vld [vmem:[%s754 + $0xe70] sm:$0xff]
                  %1219 = vst [vmem:[%s755 + $0x738] sm:$0xff] %v1218
                  %v1220 = vld [vmem:[%s754 + $0xe80] sm:$0xff]
                  %1221 = vst [vmem:[%s755 + $0x740] sm:$0xff] %v1220
                  %v1222 = vld [vmem:[%s754 + $0xe90] sm:$0xff]
                  %1223 = vst [vmem:[%s755 + $0x748] sm:$0xff] %v1222
                  %v1224 = vld [vmem:[%s754 + $0xea0] sm:$0xff]
                  %1225 = vst [vmem:[%s755 + $0x750] sm:$0xff] %v1224
                  %v1226 = vld [vmem:[%s754 + $0xeb0] sm:$0xff]
                  %1227 = vst [vmem:[%s755 + $0x758] sm:$0xff] %v1226
                  %v1228 = vld [vmem:[%s754 + $0xec0] sm:$0xff]
                  %1229 = vst [vmem:[%s755 + $0x760] sm:$0xff] %v1228
                  %v1230 = vld [vmem:[%s754 + $0xed0] sm:$0xff]
                  %1231 = vst [vmem:[%s755 + $0x768] sm:$0xff] %v1230
                  %v1232 = vld [vmem:[%s754 + $0xee0] sm:$0xff]
                  %1233 = vst [vmem:[%s755 + $0x770] sm:$0xff] %v1232
                  %v1234 = vld [vmem:[%s754 + $0xef0] sm:$0xff]
                  %1235 = vst [vmem:[%s755 + $0x778] sm:$0xff] %v1234
                  %v1236 = vld [vmem:[%s754 + $0xf00] sm:$0xff]
                  %1237 = vst [vmem:[%s755 + $0x780] sm:$0xff] %v1236
                  %v1238 = vld [vmem:[%s754 + $0xf10] sm:$0xff]
                  %1239 = vst [vmem:[%s755 + $0x788] sm:$0xff] %v1238
                  %v1240 = vld [vmem:[%s754 + $0xf20] sm:$0xff]
                  %1241 = vst [vmem:[%s755 + $0x790] sm:$0xff] %v1240
                  %v1242 = vld [vmem:[%s754 + $0xf30] sm:$0xff]
                  %1243 = vst [vmem:[%s755 + $0x798] sm:$0xff] %v1242
                  %v1244 = vld [vmem:[%s754 + $0xf40] sm:$0xff]
                  %1245 = vst [vmem:[%s755 + $0x7a0] sm:$0xff] %v1244
                  %v1246 = vld [vmem:[%s754 + $0xf50] sm:$0xff]
                  %1247 = vst [vmem:[%s755 + $0x7a8] sm:$0xff] %v1246
                  %v1248 = vld [vmem:[%s754 + $0xf60] sm:$0xff]
                  %1249 = vst [vmem:[%s755 + $0x7b0] sm:$0xff] %v1248
                  %v1250 = vld [vmem:[%s754 + $0xf70] sm:$0xff]
                  %1251 = vst [vmem:[%s755 + $0x7b8] sm:$0xff] %v1250
                  %v1252 = vld [vmem:[%s754 + $0xf80] sm:$0xff]
                  %1253 = vst [vmem:[%s755 + $0x7c0] sm:$0xff] %v1252
                  %v1254 = vld [vmem:[%s754 + $0xf90] sm:$0xff]
                  %1255 = vst [vmem:[%s755 + $0x7c8] sm:$0xff] %v1254
                  %v1256 = vld [vmem:[%s754 + $0xfa0] sm:$0xff]
                  %1257 = vst [vmem:[%s755 + $0x7d0] sm:$0xff] %v1256
                  %v1258 = vld [vmem:[%s754 + $0xfb0] sm:$0xff]
                  %1259 = vst [vmem:[%s755 + $0x7d8] sm:$0xff] %v1258
                  %v1260 = vld [vmem:[%s754 + $0xfc0] sm:$0xff]
                  %1261 = vst [vmem:[%s755 + $0x7e0] sm:$0xff] %v1260
                  %v1262 = vld [vmem:[%s754 + $0xfd0] sm:$0xff]
                  %1263 = vst [vmem:[%s755 + $0x7e8] sm:$0xff] %v1262
                  %v1264 = vld [vmem:[%s754 + $0xfe0] sm:$0xff]
                  %1265 = vst [vmem:[%s755 + $0x7f0] sm:$0xff] %v1264
                  %v1266 = vld [vmem:[%s754 + $0xff0] sm:$0xff]
                  %1267 = vst [vmem:[%s755 + $0x7f8] sm:$0xff] %v1266
                $region60: #{feed_forward.1} parent=54 // loop_footer
                  %s753 = sadd.s32 1, %s749
                $region61: #{feed_forward.1} parent=54 // loop_footer_branch
                  %748 = sbr.rel target = $region57
                $region62: #{feed_forward.1} parent=54 // loop_exit
                  _
              $region55: #{feed_forward.1} parent=39 // pred_fallthru
                _
              // Predicated region
              $region63: #{feed_forward.1} parent=39 // pred_check
                _
              $region64: #{feed_forward.1} parent=39 // pred_check_branch
                %1269 = sbr.rel target = $region66
              $region65: #{feed_forward.1} parent=39 // pred_region
                _
              $region66: #{feed_forward.1} parent=39 // pred_fallthru
                _
            $region40: #{feed_forward.1} parent=35 // pred_fallthru
              _
            // Predicated region
            $region41: #{feed_forward.1} parent=35 // pred_check
              _
            $region42: #{feed_forward.1} parent=35 // pred_check_branch
              %224 = sbr.rel target = $region44
            $region43: #{feed_forward.1} parent=35 // pred_region
              loop: start=0, step=1, limit=1
              $region45: #{feed_forward.1} parent=43 // loop_pre_header
                _
              $region46: #{feed_forward.1} parent=43 // loop_header
                %s227 = sphi 0, %s231
                %p228 = scmp.ge.s32.totalorder %s227, 1
                %s232 = sphi %s218, %s218
                %s233 = sphi %s215, %s215
              $region47: #{feed_forward.1} parent=43 // loop_header_branch
                %230 = sbr.rel (%p228) target = $region51
              $region48: #{feed_forward.1} parent=43 // loop_body
                %v234 = vld [vmem:[%s232] sm:$0xff]
                %235 = vst [vmem:[%s233] sm:$0xff] %v234
                %v236 = vld [vmem:[%s232 + $0x10] sm:$0xff]
                %237 = vst [vmem:[%s233 + $0x8] sm:$0xff] %v236
                %v238 = vld [vmem:[%s232 + $0x20] sm:$0xff]
                %239 = vst [vmem:[%s233 + $0x10] sm:$0xff] %v238
                %v240 = vld [vmem:[%s232 + $0x30] sm:$0xff]
                %241 = vst [vmem:[%s233 + $0x18] sm:$0xff] %v240
                %v242 = vld [vmem:[%s232 + $0x40] sm:$0xff]
                %243 = vst [vmem:[%s233 + $0x20] sm:$0xff] %v242
                %v244 = vld [vmem:[%s232 + $0x50] sm:$0xff]
                %245 = vst [vmem:[%s233 + $0x28] sm:$0xff] %v244
                %v246 = vld [vmem:[%s232 + $0x60] sm:$0xff]
                %247 = vst [vmem:[%s233 + $0x30] sm:$0xff] %v246
                %v248 = vld [vmem:[%s232 + $0x70] sm:$0xff]
                %249 = vst [vmem:[%s233 + $0x38] sm:$0xff] %v248
                %v250 = vld [vmem:[%s232 + $0x80] sm:$0xff]
                %251 = vst [vmem:[%s233 + $0x40] sm:$0xff] %v250
                %v252 = vld [vmem:[%s232 + $0x90] sm:$0xff]
                %253 = vst [vmem:[%s233 + $0x48] sm:$0xff] %v252
                %v254 = vld [vmem:[%s232 + $0xa0] sm:$0xff]
                %255 = vst [vmem:[%s233 + $0x50] sm:$0xff] %v254
                %v256 = vld [vmem:[%s232 + $0xb0] sm:$0xff]
                %257 = vst [vmem:[%s233 + $0x58] sm:$0xff] %v256
                %v258 = vld [vmem:[%s232 + $0xc0] sm:$0xff]
                %259 = vst [vmem:[%s233 + $0x60] sm:$0xff] %v258
                %v260 = vld [vmem:[%s232 + $0xd0] sm:$0xff]
                %261 = vst [vmem:[%s233 + $0x68] sm:$0xff] %v260
                %v262 = vld [vmem:[%s232 + $0xe0] sm:$0xff]
                %263 = vst [vmem:[%s233 + $0x70] sm:$0xff] %v262
                %v264 = vld [vmem:[%s232 + $0xf0] sm:$0xff]
                %265 = vst [vmem:[%s233 + $0x78] sm:$0xff] %v264
                %v266 = vld [vmem:[%s232 + $0x100] sm:$0xff]
                %267 = vst [vmem:[%s233 + $0x80] sm:$0xff] %v266
                %v268 = vld [vmem:[%s232 + $0x110] sm:$0xff]
                %269 = vst [vmem:[%s233 + $0x88] sm:$0xff] %v268
                %v270 = vld [vmem:[%s232 + $0x120] sm:$0xff]
                %271 = vst [vmem:[%s233 + $0x90] sm:$0xff] %v270
                %v272 = vld [vmem:[%s232 + $0x130] sm:$0xff]
                %273 = vst [vmem:[%s233 + $0x98] sm:$0xff] %v272
                %v274 = vld [vmem:[%s232 + $0x140] sm:$0xff]
                %275 = vst [vmem:[%s233 + $0xa0] sm:$0xff] %v274
                %v276 = vld [vmem:[%s232 + $0x150] sm:$0xff]
                %277 = vst [vmem:[%s233 + $0xa8] sm:$0xff] %v276
                %v278 = vld [vmem:[%s232 + $0x160] sm:$0xff]
                %279 = vst [vmem:[%s233 + $0xb0] sm:$0xff] %v278
                %v280 = vld [vmem:[%s232 + $0x170] sm:$0xff]
                %281 = vst [vmem:[%s233 + $0xb8] sm:$0xff] %v280
                %v282 = vld [vmem:[%s232 + $0x180] sm:$0xff]
                %283 = vst [vmem:[%s233 + $0xc0] sm:$0xff] %v282
                %v284 = vld [vmem:[%s232 + $0x190] sm:$0xff]
                %285 = vst [vmem:[%s233 + $0xc8] sm:$0xff] %v284
                %v286 = vld [vmem:[%s232 + $0x1a0] sm:$0xff]
                %287 = vst [vmem:[%s233 + $0xd0] sm:$0xff] %v286
                %v288 = vld [vmem:[%s232 + $0x1b0] sm:$0xff]
                %289 = vst [vmem:[%s233 + $0xd8] sm:$0xff] %v288
                %v290 = vld [vmem:[%s232 + $0x1c0] sm:$0xff]
                %291 = vst [vmem:[%s233 + $0xe0] sm:$0xff] %v290
                %v292 = vld [vmem:[%s232 + $0x1d0] sm:$0xff]
                %293 = vst [vmem:[%s233 + $0xe8] sm:$0xff] %v292
                %v294 = vld [vmem:[%s232 + $0x1e0] sm:$0xff]
                %295 = vst [vmem:[%s233 + $0xf0] sm:$0xff] %v294
                %v296 = vld [vmem:[%s232 + $0x1f0] sm:$0xff]
                %297 = vst [vmem:[%s233 + $0xf8] sm:$0xff] %v296
                %v298 = vld [vmem:[%s232 + $0x200] sm:$0xff]
                %299 = vst [vmem:[%s233 + $0x100] sm:$0xff] %v298
                %v300 = vld [vmem:[%s232 + $0x210] sm:$0xff]
                %301 = vst [vmem:[%s233 + $0x108] sm:$0xff] %v300
                %v302 = vld [vmem:[%s232 + $0x220] sm:$0xff]
                %303 = vst [vmem:[%s233 + $0x110] sm:$0xff] %v302
                %v304 = vld [vmem:[%s232 + $0x230] sm:$0xff]
                %305 = vst [vmem:[%s233 + $0x118] sm:$0xff] %v304
                %v306 = vld [vmem:[%s232 + $0x240] sm:$0xff]
                %307 = vst [vmem:[%s233 + $0x120] sm:$0xff] %v306
                %v308 = vld [vmem:[%s232 + $0x250] sm:$0xff]
                %309 = vst [vmem:[%s233 + $0x128] sm:$0xff] %v308
                %v310 = vld [vmem:[%s232 + $0x260] sm:$0xff]
                %311 = vst [vmem:[%s233 + $0x130] sm:$0xff] %v310
                %v312 = vld [vmem:[%s232 + $0x270] sm:$0xff]
                %313 = vst [vmem:[%s233 + $0x138] sm:$0xff] %v312
                %v314 = vld [vmem:[%s232 + $0x280] sm:$0xff]
                %315 = vst [vmem:[%s233 + $0x140] sm:$0xff] %v314
                %v316 = vld [vmem:[%s232 + $0x290] sm:$0xff]
                %317 = vst [vmem:[%s233 + $0x148] sm:$0xff] %v316
                %v318 = vld [vmem:[%s232 + $0x2a0] sm:$0xff]
                %319 = vst [vmem:[%s233 + $0x150] sm:$0xff] %v318
                %v320 = vld [vmem:[%s232 + $0x2b0] sm:$0xff]
                %321 = vst [vmem:[%s233 + $0x158] sm:$0xff] %v320
                %v322 = vld [vmem:[%s232 + $0x2c0] sm:$0xff]
                %323 = vst [vmem:[%s233 + $0x160] sm:$0xff] %v322
                %v324 = vld [vmem:[%s232 + $0x2d0] sm:$0xff]
                %325 = vst [vmem:[%s233 + $0x168] sm:$0xff] %v324
                %v326 = vld [vmem:[%s232 + $0x2e0] sm:$0xff]
                %327 = vst [vmem:[%s233 + $0x170] sm:$0xff] %v326
                %v328 = vld [vmem:[%s232 + $0x2f0] sm:$0xff]
                %329 = vst [vmem:[%s233 + $0x178] sm:$0xff] %v328
                %v330 = vld [vmem:[%s232 + $0x300] sm:$0xff]
                %331 = vst [vmem:[%s233 + $0x180] sm:$0xff] %v330
                %v332 = vld [vmem:[%s232 + $0x310] sm:$0xff]
                %333 = vst [vmem:[%s233 + $0x188] sm:$0xff] %v332
                %v334 = vld [vmem:[%s232 + $0x320] sm:$0xff]
                %335 = vst [vmem:[%s233 + $0x190] sm:$0xff] %v334
                %v336 = vld [vmem:[%s232 + $0x330] sm:$0xff]
                %337 = vst [vmem:[%s233 + $0x198] sm:$0xff] %v336
                %v338 = vld [vmem:[%s232 + $0x340] sm:$0xff]
                %339 = vst [vmem:[%s233 + $0x1a0] sm:$0xff] %v338
                %v340 = vld [vmem:[%s232 + $0x350] sm:$0xff]
                %341 = vst [vmem:[%s233 + $0x1a8] sm:$0xff] %v340
                %v342 = vld [vmem:[%s232 + $0x360] sm:$0xff]
                %343 = vst [vmem:[%s233 + $0x1b0] sm:$0xff] %v342
                %v344 = vld [vmem:[%s232 + $0x370] sm:$0xff]
                %345 = vst [vmem:[%s233 + $0x1b8] sm:$0xff] %v344
                %v346 = vld [vmem:[%s232 + $0x380] sm:$0xff]
                %347 = vst [vmem:[%s233 + $0x1c0] sm:$0xff] %v346
                %v348 = vld [vmem:[%s232 + $0x390] sm:$0xff]
                %349 = vst [vmem:[%s233 + $0x1c8] sm:$0xff] %v348
                %v350 = vld [vmem:[%s232 + $0x3a0] sm:$0xff]
                %351 = vst [vmem:[%s233 + $0x1d0] sm:$0xff] %v350
                %v352 = vld [vmem:[%s232 + $0x3b0] sm:$0xff]
                %353 = vst [vmem:[%s233 + $0x1d8] sm:$0xff] %v352
                %v354 = vld [vmem:[%s232 + $0x3c0] sm:$0xff]
                %355 = vst [vmem:[%s233 + $0x1e0] sm:$0xff] %v354
                %v356 = vld [vmem:[%s232 + $0x3d0] sm:$0xff]
                %357 = vst [vmem:[%s233 + $0x1e8] sm:$0xff] %v356
                %v358 = vld [vmem:[%s232 + $0x3e0] sm:$0xff]
                %359 = vst [vmem:[%s233 + $0x1f0] sm:$0xff] %v358
                %v360 = vld [vmem:[%s232 + $0x3f0] sm:$0xff]
                %361 = vst [vmem:[%s233 + $0x1f8] sm:$0xff] %v360
                %v362 = vld [vmem:[%s232 + $0x400] sm:$0xff]
                %363 = vst [vmem:[%s233 + $0x200] sm:$0xff] %v362
                %v364 = vld [vmem:[%s232 + $0x410] sm:$0xff]
                %365 = vst [vmem:[%s233 + $0x208] sm:$0xff] %v364
                %v366 = vld [vmem:[%s232 + $0x420] sm:$0xff]
                %367 = vst [vmem:[%s233 + $0x210] sm:$0xff] %v366
                %v368 = vld [vmem:[%s232 + $0x430] sm:$0xff]
                %369 = vst [vmem:[%s233 + $0x218] sm:$0xff] %v368
                %v370 = vld [vmem:[%s232 + $0x440] sm:$0xff]
                %371 = vst [vmem:[%s233 + $0x220] sm:$0xff] %v370
                %v372 = vld [vmem:[%s232 + $0x450] sm:$0xff]
                %373 = vst [vmem:[%s233 + $0x228] sm:$0xff] %v372
                %v374 = vld [vmem:[%s232 + $0x460] sm:$0xff]
                %375 = vst [vmem:[%s233 + $0x230] sm:$0xff] %v374
                %v376 = vld [vmem:[%s232 + $0x470] sm:$0xff]
                %377 = vst [vmem:[%s233 + $0x238] sm:$0xff] %v376
                %v378 = vld [vmem:[%s232 + $0x480] sm:$0xff]
                %379 = vst [vmem:[%s233 + $0x240] sm:$0xff] %v378
                %v380 = vld [vmem:[%s232 + $0x490] sm:$0xff]
                %381 = vst [vmem:[%s233 + $0x248] sm:$0xff] %v380
                %v382 = vld [vmem:[%s232 + $0x4a0] sm:$0xff]
                %383 = vst [vmem:[%s233 + $0x250] sm:$0xff] %v382
                %v384 = vld [vmem:[%s232 + $0x4b0] sm:$0xff]
                %385 = vst [vmem:[%s233 + $0x258] sm:$0xff] %v384
                %v386 = vld [vmem:[%s232 + $0x4c0] sm:$0xff]
                %387 = vst [vmem:[%s233 + $0x260] sm:$0xff] %v386
                %v388 = vld [vmem:[%s232 + $0x4d0] sm:$0xff]
                %389 = vst [vmem:[%s233 + $0x268] sm:$0xff] %v388
                %v390 = vld [vmem:[%s232 + $0x4e0] sm:$0xff]
                %391 = vst [vmem:[%s233 + $0x270] sm:$0xff] %v390
                %v392 = vld [vmem:[%s232 + $0x4f0] sm:$0xff]
                %393 = vst [vmem:[%s233 + $0x278] sm:$0xff] %v392
                %v394 = vld [vmem:[%s232 + $0x500] sm:$0xff]
                %395 = vst [vmem:[%s233 + $0x280] sm:$0xff] %v394
                %v396 = vld [vmem:[%s232 + $0x510] sm:$0xff]
                %397 = vst [vmem:[%s233 + $0x288] sm:$0xff] %v396
                %v398 = vld [vmem:[%s232 + $0x520] sm:$0xff]
                %399 = vst [vmem:[%s233 + $0x290] sm:$0xff] %v398
                %v400 = vld [vmem:[%s232 + $0x530] sm:$0xff]
                %401 = vst [vmem:[%s233 + $0x298] sm:$0xff] %v400
                %v402 = vld [vmem:[%s232 + $0x540] sm:$0xff]
                %403 = vst [vmem:[%s233 + $0x2a0] sm:$0xff] %v402
                %v404 = vld [vmem:[%s232 + $0x550] sm:$0xff]
                %405 = vst [vmem:[%s233 + $0x2a8] sm:$0xff] %v404
                %v406 = vld [vmem:[%s232 + $0x560] sm:$0xff]
                %407 = vst [vmem:[%s233 + $0x2b0] sm:$0xff] %v406
                %v408 = vld [vmem:[%s232 + $0x570] sm:$0xff]
                %409 = vst [vmem:[%s233 + $0x2b8] sm:$0xff] %v408
                %v410 = vld [vmem:[%s232 + $0x580] sm:$0xff]
                %411 = vst [vmem:[%s233 + $0x2c0] sm:$0xff] %v410
                %v412 = vld [vmem:[%s232 + $0x590] sm:$0xff]
                %413 = vst [vmem:[%s233 + $0x2c8] sm:$0xff] %v412
                %v414 = vld [vmem:[%s232 + $0x5a0] sm:$0xff]
                %415 = vst [vmem:[%s233 + $0x2d0] sm:$0xff] %v414
                %v416 = vld [vmem:[%s232 + $0x5b0] sm:$0xff]
                %417 = vst [vmem:[%s233 + $0x2d8] sm:$0xff] %v416
                %v418 = vld [vmem:[%s232 + $0x5c0] sm:$0xff]
                %419 = vst [vmem:[%s233 + $0x2e0] sm:$0xff] %v418
                %v420 = vld [vmem:[%s232 + $0x5d0] sm:$0xff]
                %421 = vst [vmem:[%s233 + $0x2e8] sm:$0xff] %v420
                %v422 = vld [vmem:[%s232 + $0x5e0] sm:$0xff]
                %423 = vst [vmem:[%s233 + $0x2f0] sm:$0xff] %v422
                %v424 = vld [vmem:[%s232 + $0x5f0] sm:$0xff]
                %425 = vst [vmem:[%s233 + $0x2f8] sm:$0xff] %v424
                %v426 = vld [vmem:[%s232 + $0x600] sm:$0xff]
                %427 = vst [vmem:[%s233 + $0x300] sm:$0xff] %v426
                %v428 = vld [vmem:[%s232 + $0x610] sm:$0xff]
                %429 = vst [vmem:[%s233 + $0x308] sm:$0xff] %v428
                %v430 = vld [vmem:[%s232 + $0x620] sm:$0xff]
                %431 = vst [vmem:[%s233 + $0x310] sm:$0xff] %v430
                %v432 = vld [vmem:[%s232 + $0x630] sm:$0xff]
                %433 = vst [vmem:[%s233 + $0x318] sm:$0xff] %v432
                %v434 = vld [vmem:[%s232 + $0x640] sm:$0xff]
                %435 = vst [vmem:[%s233 + $0x320] sm:$0xff] %v434
                %v436 = vld [vmem:[%s232 + $0x650] sm:$0xff]
                %437 = vst [vmem:[%s233 + $0x328] sm:$0xff] %v436
                %v438 = vld [vmem:[%s232 + $0x660] sm:$0xff]
                %439 = vst [vmem:[%s233 + $0x330] sm:$0xff] %v438
                %v440 = vld [vmem:[%s232 + $0x670] sm:$0xff]
                %441 = vst [vmem:[%s233 + $0x338] sm:$0xff] %v440
                %v442 = vld [vmem:[%s232 + $0x680] sm:$0xff]
                %443 = vst [vmem:[%s233 + $0x340] sm:$0xff] %v442
                %v444 = vld [vmem:[%s232 + $0x690] sm:$0xff]
                %445 = vst [vmem:[%s233 + $0x348] sm:$0xff] %v444
                %v446 = vld [vmem:[%s232 + $0x6a0] sm:$0xff]
                %447 = vst [vmem:[%s233 + $0x350] sm:$0xff] %v446
                %v448 = vld [vmem:[%s232 + $0x6b0] sm:$0xff]
                %449 = vst [vmem:[%s233 + $0x358] sm:$0xff] %v448
                %v450 = vld [vmem:[%s232 + $0x6c0] sm:$0xff]
                %451 = vst [vmem:[%s233 + $0x360] sm:$0xff] %v450
                %v452 = vld [vmem:[%s232 + $0x6d0] sm:$0xff]
                %453 = vst [vmem:[%s233 + $0x368] sm:$0xff] %v452
                %v454 = vld [vmem:[%s232 + $0x6e0] sm:$0xff]
                %455 = vst [vmem:[%s233 + $0x370] sm:$0xff] %v454
                %v456 = vld [vmem:[%s232 + $0x6f0] sm:$0xff]
                %457 = vst [vmem:[%s233 + $0x378] sm:$0xff] %v456
                %v458 = vld [vmem:[%s232 + $0x700] sm:$0xff]
                %459 = vst [vmem:[%s233 + $0x380] sm:$0xff] %v458
                %v460 = vld [vmem:[%s232 + $0x710] sm:$0xff]
                %461 = vst [vmem:[%s233 + $0x388] sm:$0xff] %v460
                %v462 = vld [vmem:[%s232 + $0x720] sm:$0xff]
                %463 = vst [vmem:[%s233 + $0x390] sm:$0xff] %v462
                %v464 = vld [vmem:[%s232 + $0x730] sm:$0xff]
                %465 = vst [vmem:[%s233 + $0x398] sm:$0xff] %v464
                %v466 = vld [vmem:[%s232 + $0x740] sm:$0xff]
                %467 = vst [vmem:[%s233 + $0x3a0] sm:$0xff] %v466
                %v468 = vld [vmem:[%s232 + $0x750] sm:$0xff]
                %469 = vst [vmem:[%s233 + $0x3a8] sm:$0xff] %v468
                %v470 = vld [vmem:[%s232 + $0x760] sm:$0xff]
                %471 = vst [vmem:[%s233 + $0x3b0] sm:$0xff] %v470
                %v472 = vld [vmem:[%s232 + $0x770] sm:$0xff]
                %473 = vst [vmem:[%s233 + $0x3b8] sm:$0xff] %v472
                %v474 = vld [vmem:[%s232 + $0x780] sm:$0xff]
                %475 = vst [vmem:[%s233 + $0x3c0] sm:$0xff] %v474
                %v476 = vld [vmem:[%s232 + $0x790] sm:$0xff]
                %477 = vst [vmem:[%s233 + $0x3c8] sm:$0xff] %v476
                %v478 = vld [vmem:[%s232 + $0x7a0] sm:$0xff]
                %479 = vst [vmem:[%s233 + $0x3d0] sm:$0xff] %v478
                %v480 = vld [vmem:[%s232 + $0x7b0] sm:$0xff]
                %481 = vst [vmem:[%s233 + $0x3d8] sm:$0xff] %v480
                %v482 = vld [vmem:[%s232 + $0x7c0] sm:$0xff]
                %483 = vst [vmem:[%s233 + $0x3e0] sm:$0xff] %v482
                %v484 = vld [vmem:[%s232 + $0x7d0] sm:$0xff]
                %485 = vst [vmem:[%s233 + $0x3e8] sm:$0xff] %v484
                %v486 = vld [vmem:[%s232 + $0x7e0] sm:$0xff]
                %487 = vst [vmem:[%s233 + $0x3f0] sm:$0xff] %v486
                %v488 = vld [vmem:[%s232 + $0x7f0] sm:$0xff]
                %489 = vst [vmem:[%s233 + $0x3f8] sm:$0xff] %v488
                %v490 = vld [vmem:[%s232 + $0x800] sm:$0xff]
                %491 = vst [vmem:[%s233 + $0x400] sm:$0xff] %v490
                %v492 = vld [vmem:[%s232 + $0x810] sm:$0xff]
                %493 = vst [vmem:[%s233 + $0x408] sm:$0xff] %v492
                %v494 = vld [vmem:[%s232 + $0x820] sm:$0xff]
                %495 = vst [vmem:[%s233 + $0x410] sm:$0xff] %v494
                %v496 = vld [vmem:[%s232 + $0x830] sm:$0xff]
                %497 = vst [vmem:[%s233 + $0x418] sm:$0xff] %v496
                %v498 = vld [vmem:[%s232 + $0x840] sm:$0xff]
                %499 = vst [vmem:[%s233 + $0x420] sm:$0xff] %v498
                %v500 = vld [vmem:[%s232 + $0x850] sm:$0xff]
                %501 = vst [vmem:[%s233 + $0x428] sm:$0xff] %v500
                %v502 = vld [vmem:[%s232 + $0x860] sm:$0xff]
                %503 = vst [vmem:[%s233 + $0x430] sm:$0xff] %v502
                %v504 = vld [vmem:[%s232 + $0x870] sm:$0xff]
                %505 = vst [vmem:[%s233 + $0x438] sm:$0xff] %v504
                %v506 = vld [vmem:[%s232 + $0x880] sm:$0xff]
                %507 = vst [vmem:[%s233 + $0x440] sm:$0xff] %v506
                %v508 = vld [vmem:[%s232 + $0x890] sm:$0xff]
                %509 = vst [vmem:[%s233 + $0x448] sm:$0xff] %v508
                %v510 = vld [vmem:[%s232 + $0x8a0] sm:$0xff]
                %511 = vst [vmem:[%s233 + $0x450] sm:$0xff] %v510
                %v512 = vld [vmem:[%s232 + $0x8b0] sm:$0xff]
                %513 = vst [vmem:[%s233 + $0x458] sm:$0xff] %v512
                %v514 = vld [vmem:[%s232 + $0x8c0] sm:$0xff]
                %515 = vst [vmem:[%s233 + $0x460] sm:$0xff] %v514
                %v516 = vld [vmem:[%s232 + $0x8d0] sm:$0xff]
                %517 = vst [vmem:[%s233 + $0x468] sm:$0xff] %v516
                %v518 = vld [vmem:[%s232 + $0x8e0] sm:$0xff]
                %519 = vst [vmem:[%s233 + $0x470] sm:$0xff] %v518
                %v520 = vld [vmem:[%s232 + $0x8f0] sm:$0xff]
                %521 = vst [vmem:[%s233 + $0x478] sm:$0xff] %v520
                %v522 = vld [vmem:[%s232 + $0x900] sm:$0xff]
                %523 = vst [vmem:[%s233 + $0x480] sm:$0xff] %v522
                %v524 = vld [vmem:[%s232 + $0x910] sm:$0xff]
                %525 = vst [vmem:[%s233 + $0x488] sm:$0xff] %v524
                %v526 = vld [vmem:[%s232 + $0x920] sm:$0xff]
                %527 = vst [vmem:[%s233 + $0x490] sm:$0xff] %v526
                %v528 = vld [vmem:[%s232 + $0x930] sm:$0xff]
                %529 = vst [vmem:[%s233 + $0x498] sm:$0xff] %v528
                %v530 = vld [vmem:[%s232 + $0x940] sm:$0xff]
                %531 = vst [vmem:[%s233 + $0x4a0] sm:$0xff] %v530
                %v532 = vld [vmem:[%s232 + $0x950] sm:$0xff]
                %533 = vst [vmem:[%s233 + $0x4a8] sm:$0xff] %v532
                %v534 = vld [vmem:[%s232 + $0x960] sm:$0xff]
                %535 = vst [vmem:[%s233 + $0x4b0] sm:$0xff] %v534
                %v536 = vld [vmem:[%s232 + $0x970] sm:$0xff]
                %537 = vst [vmem:[%s233 + $0x4b8] sm:$0xff] %v536
                %v538 = vld [vmem:[%s232 + $0x980] sm:$0xff]
                %539 = vst [vmem:[%s233 + $0x4c0] sm:$0xff] %v538
                %v540 = vld [vmem:[%s232 + $0x990] sm:$0xff]
                %541 = vst [vmem:[%s233 + $0x4c8] sm:$0xff] %v540
                %v542 = vld [vmem:[%s232 + $0x9a0] sm:$0xff]
                %543 = vst [vmem:[%s233 + $0x4d0] sm:$0xff] %v542
                %v544 = vld [vmem:[%s232 + $0x9b0] sm:$0xff]
                %545 = vst [vmem:[%s233 + $0x4d8] sm:$0xff] %v544
                %v546 = vld [vmem:[%s232 + $0x9c0] sm:$0xff]
                %547 = vst [vmem:[%s233 + $0x4e0] sm:$0xff] %v546
                %v548 = vld [vmem:[%s232 + $0x9d0] sm:$0xff]
                %549 = vst [vmem:[%s233 + $0x4e8] sm:$0xff] %v548
                %v550 = vld [vmem:[%s232 + $0x9e0] sm:$0xff]
                %551 = vst [vmem:[%s233 + $0x4f0] sm:$0xff] %v550
                %v552 = vld [vmem:[%s232 + $0x9f0] sm:$0xff]
                %553 = vst [vmem:[%s233 + $0x4f8] sm:$0xff] %v552
                %v554 = vld [vmem:[%s232 + $0xa00] sm:$0xff]
                %555 = vst [vmem:[%s233 + $0x500] sm:$0xff] %v554
                %v556 = vld [vmem:[%s232 + $0xa10] sm:$0xff]
                %557 = vst [vmem:[%s233 + $0x508] sm:$0xff] %v556
                %v558 = vld [vmem:[%s232 + $0xa20] sm:$0xff]
                %559 = vst [vmem:[%s233 + $0x510] sm:$0xff] %v558
                %v560 = vld [vmem:[%s232 + $0xa30] sm:$0xff]
                %561 = vst [vmem:[%s233 + $0x518] sm:$0xff] %v560
                %v562 = vld [vmem:[%s232 + $0xa40] sm:$0xff]
                %563 = vst [vmem:[%s233 + $0x520] sm:$0xff] %v562
                %v564 = vld [vmem:[%s232 + $0xa50] sm:$0xff]
                %565 = vst [vmem:[%s233 + $0x528] sm:$0xff] %v564
                %v566 = vld [vmem:[%s232 + $0xa60] sm:$0xff]
                %567 = vst [vmem:[%s233 + $0x530] sm:$0xff] %v566
                %v568 = vld [vmem:[%s232 + $0xa70] sm:$0xff]
                %569 = vst [vmem:[%s233 + $0x538] sm:$0xff] %v568
                %v570 = vld [vmem:[%s232 + $0xa80] sm:$0xff]
                %571 = vst [vmem:[%s233 + $0x540] sm:$0xff] %v570
                %v572 = vld [vmem:[%s232 + $0xa90] sm:$0xff]
                %573 = vst [vmem:[%s233 + $0x548] sm:$0xff] %v572
                %v574 = vld [vmem:[%s232 + $0xaa0] sm:$0xff]
                %575 = vst [vmem:[%s233 + $0x550] sm:$0xff] %v574
                %v576 = vld [vmem:[%s232 + $0xab0] sm:$0xff]
                %577 = vst [vmem:[%s233 + $0x558] sm:$0xff] %v576
                %v578 = vld [vmem:[%s232 + $0xac0] sm:$0xff]
                %579 = vst [vmem:[%s233 + $0x560] sm:$0xff] %v578
                %v580 = vld [vmem:[%s232 + $0xad0] sm:$0xff]
                %581 = vst [vmem:[%s233 + $0x568] sm:$0xff] %v580
                %v582 = vld [vmem:[%s232 + $0xae0] sm:$0xff]
                %583 = vst [vmem:[%s233 + $0x570] sm:$0xff] %v582
                %v584 = vld [vmem:[%s232 + $0xaf0] sm:$0xff]
                %585 = vst [vmem:[%s233 + $0x578] sm:$0xff] %v584
                %v586 = vld [vmem:[%s232 + $0xb00] sm:$0xff]
                %587 = vst [vmem:[%s233 + $0x580] sm:$0xff] %v586
                %v588 = vld [vmem:[%s232 + $0xb10] sm:$0xff]
                %589 = vst [vmem:[%s233 + $0x588] sm:$0xff] %v588
                %v590 = vld [vmem:[%s232 + $0xb20] sm:$0xff]
                %591 = vst [vmem:[%s233 + $0x590] sm:$0xff] %v590
                %v592 = vld [vmem:[%s232 + $0xb30] sm:$0xff]
                %593 = vst [vmem:[%s233 + $0x598] sm:$0xff] %v592
                %v594 = vld [vmem:[%s232 + $0xb40] sm:$0xff]
                %595 = vst [vmem:[%s233 + $0x5a0] sm:$0xff] %v594
                %v596 = vld [vmem:[%s232 + $0xb50] sm:$0xff]
                %597 = vst [vmem:[%s233 + $0x5a8] sm:$0xff] %v596
                %v598 = vld [vmem:[%s232 + $0xb60] sm:$0xff]
                %599 = vst [vmem:[%s233 + $0x5b0] sm:$0xff] %v598
                %v600 = vld [vmem:[%s232 + $0xb70] sm:$0xff]
                %601 = vst [vmem:[%s233 + $0x5b8] sm:$0xff] %v600
                %v602 = vld [vmem:[%s232 + $0xb80] sm:$0xff]
                %603 = vst [vmem:[%s233 + $0x5c0] sm:$0xff] %v602
                %v604 = vld [vmem:[%s232 + $0xb90] sm:$0xff]
                %605 = vst [vmem:[%s233 + $0x5c8] sm:$0xff] %v604
                %v606 = vld [vmem:[%s232 + $0xba0] sm:$0xff]
                %607 = vst [vmem:[%s233 + $0x5d0] sm:$0xff] %v606
                %v608 = vld [vmem:[%s232 + $0xbb0] sm:$0xff]
                %609 = vst [vmem:[%s233 + $0x5d8] sm:$0xff] %v608
                %v610 = vld [vmem:[%s232 + $0xbc0] sm:$0xff]
                %611 = vst [vmem:[%s233 + $0x5e0] sm:$0xff] %v610
                %v612 = vld [vmem:[%s232 + $0xbd0] sm:$0xff]
                %613 = vst [vmem:[%s233 + $0x5e8] sm:$0xff] %v612
                %v614 = vld [vmem:[%s232 + $0xbe0] sm:$0xff]
                %615 = vst [vmem:[%s233 + $0x5f0] sm:$0xff] %v614
                %v616 = vld [vmem:[%s232 + $0xbf0] sm:$0xff]
                %617 = vst [vmem:[%s233 + $0x5f8] sm:$0xff] %v616
                %v618 = vld [vmem:[%s232 + $0xc00] sm:$0xff]
                %619 = vst [vmem:[%s233 + $0x600] sm:$0xff] %v618
                %v620 = vld [vmem:[%s232 + $0xc10] sm:$0xff]
                %621 = vst [vmem:[%s233 + $0x608] sm:$0xff] %v620
                %v622 = vld [vmem:[%s232 + $0xc20] sm:$0xff]
                %623 = vst [vmem:[%s233 + $0x610] sm:$0xff] %v622
                %v624 = vld [vmem:[%s232 + $0xc30] sm:$0xff]
                %625 = vst [vmem:[%s233 + $0x618] sm:$0xff] %v624
                %v626 = vld [vmem:[%s232 + $0xc40] sm:$0xff]
                %627 = vst [vmem:[%s233 + $0x620] sm:$0xff] %v626
                %v628 = vld [vmem:[%s232 + $0xc50] sm:$0xff]
                %629 = vst [vmem:[%s233 + $0x628] sm:$0xff] %v628
                %v630 = vld [vmem:[%s232 + $0xc60] sm:$0xff]
                %631 = vst [vmem:[%s233 + $0x630] sm:$0xff] %v630
                %v632 = vld [vmem:[%s232 + $0xc70] sm:$0xff]
                %633 = vst [vmem:[%s233 + $0x638] sm:$0xff] %v632
                %v634 = vld [vmem:[%s232 + $0xc80] sm:$0xff]
                %635 = vst [vmem:[%s233 + $0x640] sm:$0xff] %v634
                %v636 = vld [vmem:[%s232 + $0xc90] sm:$0xff]
                %637 = vst [vmem:[%s233 + $0x648] sm:$0xff] %v636
                %v638 = vld [vmem:[%s232 + $0xca0] sm:$0xff]
                %639 = vst [vmem:[%s233 + $0x650] sm:$0xff] %v638
                %v640 = vld [vmem:[%s232 + $0xcb0] sm:$0xff]
                %641 = vst [vmem:[%s233 + $0x658] sm:$0xff] %v640
                %v642 = vld [vmem:[%s232 + $0xcc0] sm:$0xff]
                %643 = vst [vmem:[%s233 + $0x660] sm:$0xff] %v642
                %v644 = vld [vmem:[%s232 + $0xcd0] sm:$0xff]
                %645 = vst [vmem:[%s233 + $0x668] sm:$0xff] %v644
                %v646 = vld [vmem:[%s232 + $0xce0] sm:$0xff]
                %647 = vst [vmem:[%s233 + $0x670] sm:$0xff] %v646
                %v648 = vld [vmem:[%s232 + $0xcf0] sm:$0xff]
                %649 = vst [vmem:[%s233 + $0x678] sm:$0xff] %v648
                %v650 = vld [vmem:[%s232 + $0xd00] sm:$0xff]
                %651 = vst [vmem:[%s233 + $0x680] sm:$0xff] %v650
                %v652 = vld [vmem:[%s232 + $0xd10] sm:$0xff]
                %653 = vst [vmem:[%s233 + $0x688] sm:$0xff] %v652
                %v654 = vld [vmem:[%s232 + $0xd20] sm:$0xff]
                %655 = vst [vmem:[%s233 + $0x690] sm:$0xff] %v654
                %v656 = vld [vmem:[%s232 + $0xd30] sm:$0xff]
                %657 = vst [vmem:[%s233 + $0x698] sm:$0xff] %v656
                %v658 = vld [vmem:[%s232 + $0xd40] sm:$0xff]
                %659 = vst [vmem:[%s233 + $0x6a0] sm:$0xff] %v658
                %v660 = vld [vmem:[%s232 + $0xd50] sm:$0xff]
                %661 = vst [vmem:[%s233 + $0x6a8] sm:$0xff] %v660
                %v662 = vld [vmem:[%s232 + $0xd60] sm:$0xff]
                %663 = vst [vmem:[%s233 + $0x6b0] sm:$0xff] %v662
                %v664 = vld [vmem:[%s232 + $0xd70] sm:$0xff]
                %665 = vst [vmem:[%s233 + $0x6b8] sm:$0xff] %v664
                %v666 = vld [vmem:[%s232 + $0xd80] sm:$0xff]
                %667 = vst [vmem:[%s233 + $0x6c0] sm:$0xff] %v666
                %v668 = vld [vmem:[%s232 + $0xd90] sm:$0xff]
                %669 = vst [vmem:[%s233 + $0x6c8] sm:$0xff] %v668
                %v670 = vld [vmem:[%s232 + $0xda0] sm:$0xff]
                %671 = vst [vmem:[%s233 + $0x6d0] sm:$0xff] %v670
                %v672 = vld [vmem:[%s232 + $0xdb0] sm:$0xff]
                %673 = vst [vmem:[%s233 + $0x6d8] sm:$0xff] %v672
                %v674 = vld [vmem:[%s232 + $0xdc0] sm:$0xff]
                %675 = vst [vmem:[%s233 + $0x6e0] sm:$0xff] %v674
                %v676 = vld [vmem:[%s232 + $0xdd0] sm:$0xff]
                %677 = vst [vmem:[%s233 + $0x6e8] sm:$0xff] %v676
                %v678 = vld [vmem:[%s232 + $0xde0] sm:$0xff]
                %679 = vst [vmem:[%s233 + $0x6f0] sm:$0xff] %v678
                %v680 = vld [vmem:[%s232 + $0xdf0] sm:$0xff]
                %681 = vst [vmem:[%s233 + $0x6f8] sm:$0xff] %v680
                %v682 = vld [vmem:[%s232 + $0xe00] sm:$0xff]
                %683 = vst [vmem:[%s233 + $0x700] sm:$0xff] %v682
                %v684 = vld [vmem:[%s232 + $0xe10] sm:$0xff]
                %685 = vst [vmem:[%s233 + $0x708] sm:$0xff] %v684
                %v686 = vld [vmem:[%s232 + $0xe20] sm:$0xff]
                %687 = vst [vmem:[%s233 + $0x710] sm:$0xff] %v686
                %v688 = vld [vmem:[%s232 + $0xe30] sm:$0xff]
                %689 = vst [vmem:[%s233 + $0x718] sm:$0xff] %v688
                %v690 = vld [vmem:[%s232 + $0xe40] sm:$0xff]
                %691 = vst [vmem:[%s233 + $0x720] sm:$0xff] %v690
                %v692 = vld [vmem:[%s232 + $0xe50] sm:$0xff]
                %693 = vst [vmem:[%s233 + $0x728] sm:$0xff] %v692
                %v694 = vld [vmem:[%s232 + $0xe60] sm:$0xff]
                %695 = vst [vmem:[%s233 + $0x730] sm:$0xff] %v694
                %v696 = vld [vmem:[%s232 + $0xe70] sm:$0xff]
                %697 = vst [vmem:[%s233 + $0x738] sm:$0xff] %v696
                %v698 = vld [vmem:[%s232 + $0xe80] sm:$0xff]
                %699 = vst [vmem:[%s233 + $0x740] sm:$0xff] %v698
                %v700 = vld [vmem:[%s232 + $0xe90] sm:$0xff]
                %701 = vst [vmem:[%s233 + $0x748] sm:$0xff] %v700
                %v702 = vld [vmem:[%s232 + $0xea0] sm:$0xff]
                %703 = vst [vmem:[%s233 + $0x750] sm:$0xff] %v702
                %v704 = vld [vmem:[%s232 + $0xeb0] sm:$0xff]
                %705 = vst [vmem:[%s233 + $0x758] sm:$0xff] %v704
                %v706 = vld [vmem:[%s232 + $0xec0] sm:$0xff]
                %707 = vst [vmem:[%s233 + $0x760] sm:$0xff] %v706
                %v708 = vld [vmem:[%s232 + $0xed0] sm:$0xff]
                %709 = vst [vmem:[%s233 + $0x768] sm:$0xff] %v708
                %v710 = vld [vmem:[%s232 + $0xee0] sm:$0xff]
                %711 = vst [vmem:[%s233 + $0x770] sm:$0xff] %v710
                %v712 = vld [vmem:[%s232 + $0xef0] sm:$0xff]
                %713 = vst [vmem:[%s233 + $0x778] sm:$0xff] %v712
                %v714 = vld [vmem:[%s232 + $0xf00] sm:$0xff]
                %715 = vst [vmem:[%s233 + $0x780] sm:$0xff] %v714
                %v716 = vld [vmem:[%s232 + $0xf10] sm:$0xff]
                %717 = vst [vmem:[%s233 + $0x788] sm:$0xff] %v716
                %v718 = vld [vmem:[%s232 + $0xf20] sm:$0xff]
                %719 = vst [vmem:[%s233 + $0x790] sm:$0xff] %v718
                %v720 = vld [vmem:[%s232 + $0xf30] sm:$0xff]
                %721 = vst [vmem:[%s233 + $0x798] sm:$0xff] %v720
                %v722 = vld [vmem:[%s232 + $0xf40] sm:$0xff]
                %723 = vst [vmem:[%s233 + $0x7a0] sm:$0xff] %v722
                %v724 = vld [vmem:[%s232 + $0xf50] sm:$0xff]
                %725 = vst [vmem:[%s233 + $0x7a8] sm:$0xff] %v724
                %v726 = vld [vmem:[%s232 + $0xf60] sm:$0xff]
                %727 = vst [vmem:[%s233 + $0x7b0] sm:$0xff] %v726
                %v728 = vld [vmem:[%s232 + $0xf70] sm:$0xff]
                %729 = vst [vmem:[%s233 + $0x7b8] sm:$0xff] %v728
                %v730 = vld [vmem:[%s232 + $0xf80] sm:$0xff]
                %731 = vst [vmem:[%s233 + $0x7c0] sm:$0xff] %v730
                %v732 = vld [vmem:[%s232 + $0xf90] sm:$0xff]
                %733 = vst [vmem:[%s233 + $0x7c8] sm:$0xff] %v732
                %v734 = vld [vmem:[%s232 + $0xfa0] sm:$0xff]
                %735 = vst [vmem:[%s233 + $0x7d0] sm:$0xff] %v734
                %v736 = vld [vmem:[%s232 + $0xfb0] sm:$0xff]
                %737 = vst [vmem:[%s233 + $0x7d8] sm:$0xff] %v736
                %v738 = vld [vmem:[%s232 + $0xfc0] sm:$0xff]
                %739 = vst [vmem:[%s233 + $0x7e0] sm:$0xff] %v738
                %v740 = vld [vmem:[%s232 + $0xfd0] sm:$0xff]
                %741 = vst [vmem:[%s233 + $0x7e8] sm:$0xff] %v740
                %v742 = vld [vmem:[%s232 + $0xfe0] sm:$0xff]
                %743 = vst [vmem:[%s233 + $0x7f0] sm:$0xff] %v742
                %v744 = vld [vmem:[%s232 + $0xff0] sm:$0xff]
                %745 = vst [vmem:[%s233 + $0x7f8] sm:$0xff] %v744
              $region49: #{feed_forward.1} parent=43 // loop_footer
                %s231 = sadd.s32 1, %s227
              $region50: #{feed_forward.1} parent=43 // loop_footer_branch
                %226 = sbr.rel target = $region46
              $region51: #{feed_forward.1} parent=43 // loop_exit
                _
            $region44: #{feed_forward.1} parent=35 // pred_fallthru
              _
          $region36: #{feed_forward.1} parent=31 // pred_fallthru
            _
          %1270 = vnop
        $region32: #{feed_forward.1} parent=27 // pred_fallthru
          _
        // Predicated region
        $region67: #{feed_forward.1} parent=27 // pred_check
          %p1271 = pneg %p140
        $region68: #{feed_forward.1} parent=27 // pred_check_branch
          %1273 = sbr.rel (%p1271) target = $region70
        $region69: #{feed_forward.1} parent=27 // pred_region
          %s1274 = smul.u32 2, %s22
          %p1275 = scmp.lt.s32.totalorder %s1274, 3
          %s1276 = scalar_select %p1275, %s1274, 3
          %s1277 = scalar_lea.vmem %s4, %s1276
          %s1278 = smul.u32 2, %s22
        $region70: #{feed_forward.1} parent=27 // pred_fallthru
          _
      $region28: #{feed_forward.1} parent=5 // pred_fallthru
        _
      %p1279 = scmp.le.s32.totalorder 1, %s14
      %p1280 = scmp.lt.s32.totalorder %s14, 3
      %p1281 = pnand %p1279, %p1280
      %p1282 = pneg %p1281
      // Predicated region
      $region71: #{feed_forward.1} parent=5 // pred_check
        _
      $region72: #{feed_forward.1} parent=5 // pred_check_branch
        %1284 = sbr.rel (%p1281) target = $region74
      $region73: #{feed_forward.1} parent=5 // pred_region
        %s1285 = ssub.s32 %s14, 1
        %s1286 = sand.u32 %s107, 1
        %s1287 = sand.u32 %s107, 1
        %s1288 = smul.addr %s1287, 2048
        %s1289 = scalar_lea.vmem [#allocation2], %s1288
        // Predicated region
        $region75: #{feed_forward.1} parent=73 // pred_check
          %p1290 = pneg %p120
        $region76: #{feed_forward.1} parent=73 // pred_check_branch
          %1292 = sbr.rel (%p1290) target = $region78
        $region77: #{feed_forward.1} parent=73 // pred_region
          _
        $region78: #{feed_forward.1} parent=73 // pred_fallthru
          _
        %s1293 = smul.u32 2, %s23
        %p1294 = scmp.lt.s32.totalorder %s1293, 1
        %s1295 = scalar_select %p1294, %s1293, 1
        %s1296 = smul.addr %s1295, 4
        %s1297 = smul.addr %s1296, 4
        %s1298 = scalar_lea.vmem %s0, %s1297
        %p1299 = pneg %p52
        %p1300 = pneg %p49
        %p1301 = pneg %p73
        %p1302 = pneg %p70
        %p1303 = pneg %p94
        %p1304 = pneg %p91
        %s1305 = sand.u32 %s107, 1
        %s1306 = sand.u32 %s107, 1
        %s1307 = smul.addr %s1306, 2048
        %s1308 = scalar_lea.vmem [#allocation2], %s1307
        %p1309 = pneg %p120
        %p1310 = pneg %p117
        %s1311 = smul.u32 2, %s24
        %p1312 = scmp.lt.s32.totalorder %s1311, 3
        %s1313 = scalar_select %p1312, %s1311, 3
        %s1314 = scalar_lea.vmem %s4, %s1313
        %p1315 = pneg %p146
        %p1316 = pneg %p143
        %p1317 = pneg %p174
        %p1318 = pneg %p171
        %s1319 = sand.u32 %s161, 1
        %s1320 = scalar_lea.sflag [#allocation4], %s1319
        %s1321 = sand.u32 %s161, 1
        %s1322 = smul.addr %s1321, 32
        %s1323 = scalar_lea.vmem [#allocation3], %s1322
        %s1324 = smul.u32 2, %s23
        %p1325 = scmp.lt.s32.totalorder %s1324, 1
        %s1326 = scalar_select %p1325, %s1324, 1
        %s1327 = smul.addr %s1326, 4
        %s1328 = smul.addr %s1327, 4
        %s1329 = scalar_lea.vmem %s0, %s1328
        %s1330 = smul.u32 2, %s23
        %s1331 = smul.u32 2, %s24
        %s1332 = smul.u32 2, %s24
        %p1333 = scmp.lt.s32.totalorder %s1332, 3
        %s1334 = scalar_select %p1333, %s1332, 3
        %s1335 = scalar_lea.vmem %s4, %s1334
        %s1336 = smul.u32 2, %s24
        %s1337 = smul.u32 2, %s23
        %s1338 = smul.u32 2, %s24
        %v1339 = vld [vmem:[%s1329] sm:$0xff]
        %v1340 = vld [vmem:[%s1329 + $0x8] sm:$0xff]
        %v1341 = vld [vmem:[%s1329 + $0x10] sm:$0xff]
        %v1342 = vld [vmem:[%s1329 + $0x18] sm:$0xff]
        %v1343 = vld [vmem:[%s1] sm:$0xff]
        %v1344 = vld [vmem:[%s1 + $0x8] sm:$0xff]
        %v1345 = vld [vmem:[%s1 + $0x10] sm:$0xff]
        %v1346 = vld [vmem:[%s1 + $0x18] sm:$0xff]
        %v1347 = vld [vmem:[%s1 + $0x20] sm:$0xff]
        %v1348 = vld [vmem:[%s1 + $0x28] sm:$0xff]
        %v1349 = vld [vmem:[%s1 + $0x30] sm:$0xff]
        %v1350 = vld [vmem:[%s1 + $0x38] sm:$0xff]
        %v1351 = vld [vmem:[%s1 + $0x40] sm:$0xff]
        %v1352 = vld [vmem:[%s1 + $0x48] sm:$0xff]
        %v1353 = vld [vmem:[%s1 + $0x50] sm:$0xff]
        %v1354 = vld [vmem:[%s1 + $0x58] sm:$0xff]
        %v1355 = vld [vmem:[%s1 + $0x60] sm:$0xff]
        %v1356 = vld [vmem:[%s1 + $0x68] sm:$0xff]
        %v1357 = vld [vmem:[%s1 + $0x70] sm:$0xff]
        %v1358 = vld [vmem:[%s1 + $0x78] sm:$0xff]
        %v1359 = vld [vmem:[%s1 + $0x80] sm:$0xff]
        %v1360 = vld [vmem:[%s1 + $0x88] sm:$0xff]
        %v1361 = vld [vmem:[%s1 + $0x90] sm:$0xff]
        %v1362 = vld [vmem:[%s1 + $0x98] sm:$0xff]
        %v1363 = vld [vmem:[%s1 + $0xa0] sm:$0xff]
        %v1364 = vld [vmem:[%s1 + $0xa8] sm:$0xff]
        %v1365 = vld [vmem:[%s1 + $0xb0] sm:$0xff]
        %v1366 = vld [vmem:[%s1 + $0xb8] sm:$0xff]
        %v1367 = vld [vmem:[%s1 + $0xc0] sm:$0xff]
        %v1368 = vld [vmem:[%s1 + $0xc8] sm:$0xff]
        %v1369 = vld [vmem:[%s1 + $0xd0] sm:$0xff]
        %v1370 = vld [vmem:[%s1 + $0xd8] sm:$0xff]
        %v1371 = vld [vmem:[%s1 + $0xe0] sm:$0xff]
        %v1372 = vld [vmem:[%s1 + $0xe8] sm:$0xff]
        %v1373 = vld [vmem:[%s1 + $0xf0] sm:$0xff]
        %v1374 = vld [vmem:[%s1 + $0xf8] sm:$0xff]
        %v1375 = vld [vmem:[%s1 + $0x100] sm:$0xff]
        %v1376 = vld [vmem:[%s1 + $0x108] sm:$0xff]
        %v1377 = vld [vmem:[%s1 + $0x110] sm:$0xff]
        %v1378 = vld [vmem:[%s1 + $0x118] sm:$0xff]
        %v1379 = vld [vmem:[%s1 + $0x120] sm:$0xff]
        %v1380 = vld [vmem:[%s1 + $0x128] sm:$0xff]
        %v1381 = vld [vmem:[%s1 + $0x130] sm:$0xff]
        %v1382 = vld [vmem:[%s1 + $0x138] sm:$0xff]
        %v1383 = vld [vmem:[%s1 + $0x140] sm:$0xff]
        %v1384 = vld [vmem:[%s1 + $0x148] sm:$0xff]
        %v1385 = vld [vmem:[%s1 + $0x150] sm:$0xff]
        %v1386 = vld [vmem:[%s1 + $0x158] sm:$0xff]
        %v1387 = vld [vmem:[%s1 + $0x160] sm:$0xff]
        %v1388 = vld [vmem:[%s1 + $0x168] sm:$0xff]
        %v1389 = vld [vmem:[%s1 + $0x170] sm:$0xff]
        %v1390 = vld [vmem:[%s1 + $0x178] sm:$0xff]
        %v1391 = vld [vmem:[%s1 + $0x180] sm:$0xff]
        %v1392 = vld [vmem:[%s1 + $0x188] sm:$0xff]
        %v1393 = vld [vmem:[%s1 + $0x190] sm:$0xff]
        %v1394 = vld [vmem:[%s1 + $0x198] sm:$0xff]
        %v1395 = vld [vmem:[%s1 + $0x1a0] sm:$0xff]
        %v1396 = vld [vmem:[%s1 + $0x1a8] sm:$0xff]
        %v1397 = vld [vmem:[%s1 + $0x1b0] sm:$0xff]
        %v1398 = vld [vmem:[%s1 + $0x1b8] sm:$0xff]
        %v1399 = vld [vmem:[%s1 + $0x1c0] sm:$0xff]
        %v1400 = vld [vmem:[%s1 + $0x1c8] sm:$0xff]
        %v1401 = vld [vmem:[%s1 + $0x1d0] sm:$0xff]
        %v1402 = vld [vmem:[%s1 + $0x1d8] sm:$0xff]
        %v1403 = vld [vmem:[%s1 + $0x1e0] sm:$0xff]
        %v1404 = vld [vmem:[%s1 + $0x1e8] sm:$0xff]
        %v1405 = vld [vmem:[%s1 + $0x1f0] sm:$0xff]
        %v1406 = vld [vmem:[%s1 + $0x1f8] sm:$0xff]
        %v1407 = vld [vmem:[%s1 + $0x200] sm:$0xff]
        %v1408 = vld [vmem:[%s1 + $0x208] sm:$0xff]
        %v1409 = vld [vmem:[%s1 + $0x210] sm:$0xff]
        %v1410 = vld [vmem:[%s1 + $0x218] sm:$0xff]
        %v1411 = vld [vmem:[%s1 + $0x220] sm:$0xff]
        %v1412 = vld [vmem:[%s1 + $0x228] sm:$0xff]
        %v1413 = vld [vmem:[%s1 + $0x230] sm:$0xff]
        %v1414 = vld [vmem:[%s1 + $0x238] sm:$0xff]
        %v1415 = vld [vmem:[%s1 + $0x240] sm:$0xff]
        %v1416 = vld [vmem:[%s1 + $0x248] sm:$0xff]
        %v1417 = vld [vmem:[%s1 + $0x250] sm:$0xff]
        %v1418 = vld [vmem:[%s1 + $0x258] sm:$0xff]
        %v1419 = vld [vmem:[%s1 + $0x260] sm:$0xff]
        %v1420 = vld [vmem:[%s1 + $0x268] sm:$0xff]
        %v1421 = vld [vmem:[%s1 + $0x270] sm:$0xff]
        %v1422 = vld [vmem:[%s1 + $0x278] sm:$0xff]
        %v1423 = vld [vmem:[%s1 + $0x280] sm:$0xff]
        %v1424 = vld [vmem:[%s1 + $0x288] sm:$0xff]
        %v1425 = vld [vmem:[%s1 + $0x290] sm:$0xff]
        %v1426 = vld [vmem:[%s1 + $0x298] sm:$0xff]
        %v1427 = vld [vmem:[%s1 + $0x2a0] sm:$0xff]
        %v1428 = vld [vmem:[%s1 + $0x2a8] sm:$0xff]
        %v1429 = vld [vmem:[%s1 + $0x2b0] sm:$0xff]
        %v1430 = vld [vmem:[%s1 + $0x2b8] sm:$0xff]
        %v1431 = vld [vmem:[%s1 + $0x2c0] sm:$0xff]
        %v1432 = vld [vmem:[%s1 + $0x2c8] sm:$0xff]
        %v1433 = vld [vmem:[%s1 + $0x2d0] sm:$0xff]
        %v1434 = vld [vmem:[%s1 + $0x2d8] sm:$0xff]
        %v1435 = vld [vmem:[%s1 + $0x2e0] sm:$0xff]
        %v1436 = vld [vmem:[%s1 + $0x2e8] sm:$0xff]
        %v1437 = vld [vmem:[%s1 + $0x2f0] sm:$0xff]
        %v1438 = vld [vmem:[%s1 + $0x2f8] sm:$0xff]
        %v1439 = vld [vmem:[%s1 + $0x300] sm:$0xff]
        %v1440 = vld [vmem:[%s1 + $0x308] sm:$0xff]
        %v1441 = vld [vmem:[%s1 + $0x310] sm:$0xff]
        %v1442 = vld [vmem:[%s1 + $0x318] sm:$0xff]
        %v1443 = vld [vmem:[%s1 + $0x320] sm:$0xff]
        %v1444 = vld [vmem:[%s1 + $0x328] sm:$0xff]
        %v1445 = vld [vmem:[%s1 + $0x330] sm:$0xff]
        %v1446 = vld [vmem:[%s1 + $0x338] sm:$0xff]
        %v1447 = vld [vmem:[%s1 + $0x340] sm:$0xff]
        %v1448 = vld [vmem:[%s1 + $0x348] sm:$0xff]
        %v1449 = vld [vmem:[%s1 + $0x350] sm:$0xff]
        %v1450 = vld [vmem:[%s1 + $0x358] sm:$0xff]
        %v1451 = vld [vmem:[%s1 + $0x360] sm:$0xff]
        %v1452 = vld [vmem:[%s1 + $0x368] sm:$0xff]
        %v1453 = vld [vmem:[%s1 + $0x370] sm:$0xff]
        %v1454 = vld [vmem:[%s1 + $0x378] sm:$0xff]
        %v1455 = vld [vmem:[%s1 + $0x380] sm:$0xff]
        %v1456 = vld [vmem:[%s1 + $0x388] sm:$0xff]
        %v1457 = vld [vmem:[%s1 + $0x390] sm:$0xff]
        %v1458 = vld [vmem:[%s1 + $0x398] sm:$0xff]
        %v1459 = vld [vmem:[%s1 + $0x3a0] sm:$0xff]
        %v1460 = vld [vmem:[%s1 + $0x3a8] sm:$0xff]
        %v1461 = vld [vmem:[%s1 + $0x3b0] sm:$0xff]
        %v1462 = vld [vmem:[%s1 + $0x3b8] sm:$0xff]
        %v1463 = vld [vmem:[%s1 + $0x3c0] sm:$0xff]
        %v1464 = vld [vmem:[%s1 + $0x3c8] sm:$0xff]
        %v1465 = vld [vmem:[%s1 + $0x3d0] sm:$0xff]
        %v1466 = vld [vmem:[%s1 + $0x3d8] sm:$0xff]
        %v1467 = vld [vmem:[%s1 + $0x3e0] sm:$0xff]
        %v1468 = vld [vmem:[%s1 + $0x3e8] sm:$0xff]
        %v1469 = vld [vmem:[%s1 + $0x3f0] sm:$0xff]
        %v1470 = vld [vmem:[%s1 + $0x3f8] sm:$0xff]
        %v1471 = vld [vmem:[%s1 + $0x400] sm:$0xff]
        %v1472 = vld [vmem:[%s1 + $0x408] sm:$0xff]
        %v1473 = vld [vmem:[%s1 + $0x410] sm:$0xff]
        %v1474 = vld [vmem:[%s1 + $0x418] sm:$0xff]
        %v1475 = vld [vmem:[%s1 + $0x420] sm:$0xff]
        %v1476 = vld [vmem:[%s1 + $0x428] sm:$0xff]
        %v1477 = vld [vmem:[%s1 + $0x430] sm:$0xff]
        %v1478 = vld [vmem:[%s1 + $0x438] sm:$0xff]
        %v1479 = vld [vmem:[%s1 + $0x440] sm:$0xff]
        %v1480 = vld [vmem:[%s1 + $0x448] sm:$0xff]
        %v1481 = vld [vmem:[%s1 + $0x450] sm:$0xff]
        %v1482 = vld [vmem:[%s1 + $0x458] sm:$0xff]
        %v1483 = vld [vmem:[%s1 + $0x460] sm:$0xff]
        %v1484 = vld [vmem:[%s1 + $0x468] sm:$0xff]
        %v1485 = vld [vmem:[%s1 + $0x470] sm:$0xff]
        %v1486 = vld [vmem:[%s1 + $0x478] sm:$0xff]
        %v1487 = vld [vmem:[%s1 + $0x480] sm:$0xff]
        %v1488 = vld [vmem:[%s1 + $0x488] sm:$0xff]
        %v1489 = vld [vmem:[%s1 + $0x490] sm:$0xff]
        %v1490 = vld [vmem:[%s1 + $0x498] sm:$0xff]
        %v1491 = vld [vmem:[%s1 + $0x4a0] sm:$0xff]
        %v1492 = vld [vmem:[%s1 + $0x4a8] sm:$0xff]
        %v1493 = vld [vmem:[%s1 + $0x4b0] sm:$0xff]
        %v1494 = vld [vmem:[%s1 + $0x4b8] sm:$0xff]
        %v1495 = vld [vmem:[%s1 + $0x4c0] sm:$0xff]
        %v1496 = vld [vmem:[%s1 + $0x4c8] sm:$0xff]
        %v1497 = vld [vmem:[%s1 + $0x4d0] sm:$0xff]
        %v1498 = vld [vmem:[%s1 + $0x4d8] sm:$0xff]
        %v1499 = vld [vmem:[%s1 + $0x4e0] sm:$0xff]
        %v1500 = vld [vmem:[%s1 + $0x4e8] sm:$0xff]
        %v1501 = vld [vmem:[%s1 + $0x4f0] sm:$0xff]
        %v1502 = vld [vmem:[%s1 + $0x4f8] sm:$0xff]
        %v1503 = vld [vmem:[%s1 + $0x500] sm:$0xff]
        %v1504 = vld [vmem:[%s1 + $0x508] sm:$0xff]
        %v1505 = vld [vmem:[%s1 + $0x510] sm:$0xff]
        %v1506 = vld [vmem:[%s1 + $0x518] sm:$0xff]
        %v1507 = vld [vmem:[%s1 + $0x520] sm:$0xff]
        %v1508 = vld [vmem:[%s1 + $0x528] sm:$0xff]
        %v1509 = vld [vmem:[%s1 + $0x530] sm:$0xff]
        %v1510 = vld [vmem:[%s1 + $0x538] sm:$0xff]
        %v1511 = vld [vmem:[%s1 + $0x540] sm:$0xff]
        %v1512 = vld [vmem:[%s1 + $0x548] sm:$0xff]
        %v1513 = vld [vmem:[%s1 + $0x550] sm:$0xff]
        %v1514 = vld [vmem:[%s1 + $0x558] sm:$0xff]
        %v1515 = vld [vmem:[%s1 + $0x560] sm:$0xff]
        %v1516 = vld [vmem:[%s1 + $0x568] sm:$0xff]
        %v1517 = vld [vmem:[%s1 + $0x570] sm:$0xff]
        %v1518 = vld [vmem:[%s1 + $0x578] sm:$0xff]
        %v1519 = vld [vmem:[%s1 + $0x580] sm:$0xff]
        %v1520 = vld [vmem:[%s1 + $0x588] sm:$0xff]
        %v1521 = vld [vmem:[%s1 + $0x590] sm:$0xff]
        %v1522 = vld [vmem:[%s1 + $0x598] sm:$0xff]
        %v1523 = vld [vmem:[%s1 + $0x5a0] sm:$0xff]
        %v1524 = vld [vmem:[%s1 + $0x5a8] sm:$0xff]
        %v1525 = vld [vmem:[%s1 + $0x5b0] sm:$0xff]
        %v1526 = vld [vmem:[%s1 + $0x5b8] sm:$0xff]
        %v1527 = vld [vmem:[%s1 + $0x5c0] sm:$0xff]
        %v1528 = vld [vmem:[%s1 + $0x5c8] sm:$0xff]
        %v1529 = vld [vmem:[%s1 + $0x5d0] sm:$0xff]
        %v1530 = vld [vmem:[%s1 + $0x5d8] sm:$0xff]
        %v1531 = vld [vmem:[%s1 + $0x5e0] sm:$0xff]
        %v1532 = vld [vmem:[%s1 + $0x5e8] sm:$0xff]
        %v1533 = vld [vmem:[%s1 + $0x5f0] sm:$0xff]
        %v1534 = vld [vmem:[%s1 + $0x5f8] sm:$0xff]
        %v1535 = vld [vmem:[%s1 + $0x600] sm:$0xff]
        %v1536 = vld [vmem:[%s1 + $0x608] sm:$0xff]
        %v1537 = vld [vmem:[%s1 + $0x610] sm:$0xff]
        %v1538 = vld [vmem:[%s1 + $0x618] sm:$0xff]
        %v1539 = vld [vmem:[%s1 + $0x620] sm:$0xff]
        %v1540 = vld [vmem:[%s1 + $0x628] sm:$0xff]
        %v1541 = vld [vmem:[%s1 + $0x630] sm:$0xff]
        %v1542 = vld [vmem:[%s1 + $0x638] sm:$0xff]
        %v1543 = vld [vmem:[%s1 + $0x640] sm:$0xff]
        %v1544 = vld [vmem:[%s1 + $0x648] sm:$0xff]
        %v1545 = vld [vmem:[%s1 + $0x650] sm:$0xff]
        %v1546 = vld [vmem:[%s1 + $0x658] sm:$0xff]
        %v1547 = vld [vmem:[%s1 + $0x660] sm:$0xff]
        %v1548 = vld [vmem:[%s1 + $0x668] sm:$0xff]
        %v1549 = vld [vmem:[%s1 + $0x670] sm:$0xff]
        %v1550 = vld [vmem:[%s1 + $0x678] sm:$0xff]
        %v1551 = vld [vmem:[%s1 + $0x680] sm:$0xff]
        %v1552 = vld [vmem:[%s1 + $0x688] sm:$0xff]
        %v1553 = vld [vmem:[%s1 + $0x690] sm:$0xff]
        %v1554 = vld [vmem:[%s1 + $0x698] sm:$0xff]
        %v1555 = vld [vmem:[%s1 + $0x6a0] sm:$0xff]
        %v1556 = vld [vmem:[%s1 + $0x6a8] sm:$0xff]
        %v1557 = vld [vmem:[%s1 + $0x6b0] sm:$0xff]
        %v1558 = vld [vmem:[%s1 + $0x6b8] sm:$0xff]
        %v1559 = vld [vmem:[%s1 + $0x6c0] sm:$0xff]
        %v1560 = vld [vmem:[%s1 + $0x6c8] sm:$0xff]
        %v1561 = vld [vmem:[%s1 + $0x6d0] sm:$0xff]
        %v1562 = vld [vmem:[%s1 + $0x6d8] sm:$0xff]
        %v1563 = vld [vmem:[%s1 + $0x6e0] sm:$0xff]
        %v1564 = vld [vmem:[%s1 + $0x6e8] sm:$0xff]
        %v1565 = vld [vmem:[%s1 + $0x6f0] sm:$0xff]
        %v1566 = vld [vmem:[%s1 + $0x6f8] sm:$0xff]
        %v1567 = vld [vmem:[%s1 + $0x700] sm:$0xff]
        %v1568 = vld [vmem:[%s1 + $0x708] sm:$0xff]
        %v1569 = vld [vmem:[%s1 + $0x710] sm:$0xff]
        %v1570 = vld [vmem:[%s1 + $0x718] sm:$0xff]
        %v1571 = vld [vmem:[%s1 + $0x720] sm:$0xff]
        %v1572 = vld [vmem:[%s1 + $0x728] sm:$0xff]
        %v1573 = vld [vmem:[%s1 + $0x730] sm:$0xff]
        %v1574 = vld [vmem:[%s1 + $0x738] sm:$0xff]
        %v1575 = vld [vmem:[%s1 + $0x740] sm:$0xff]
        %v1576 = vld [vmem:[%s1 + $0x748] sm:$0xff]
        %v1577 = vld [vmem:[%s1 + $0x750] sm:$0xff]
        %v1578 = vld [vmem:[%s1 + $0x758] sm:$0xff]
        %v1579 = vld [vmem:[%s1 + $0x760] sm:$0xff]
        %v1580 = vld [vmem:[%s1 + $0x768] sm:$0xff]
        %v1581 = vld [vmem:[%s1 + $0x770] sm:$0xff]
        %v1582 = vld [vmem:[%s1 + $0x778] sm:$0xff]
        %v1583 = vld [vmem:[%s1 + $0x780] sm:$0xff]
        %v1584 = vld [vmem:[%s1 + $0x788] sm:$0xff]
        %v1585 = vld [vmem:[%s1 + $0x790] sm:$0xff]
        %v1586 = vld [vmem:[%s1 + $0x798] sm:$0xff]
        %v1587 = vld [vmem:[%s1 + $0x7a0] sm:$0xff]
        %v1588 = vld [vmem:[%s1 + $0x7a8] sm:$0xff]
        %v1589 = vld [vmem:[%s1 + $0x7b0] sm:$0xff]
        %v1590 = vld [vmem:[%s1 + $0x7b8] sm:$0xff]
        %v1591 = vld [vmem:[%s1 + $0x7c0] sm:$0xff]
        %v1592 = vld [vmem:[%s1 + $0x7c8] sm:$0xff]
        %v1593 = vld [vmem:[%s1 + $0x7d0] sm:$0xff]
        %v1594 = vld [vmem:[%s1 + $0x7d8] sm:$0xff]
        %v1595 = vld [vmem:[%s1 + $0x7e0] sm:$0xff]
        %v1596 = vld [vmem:[%s1 + $0x7e8] sm:$0xff]
        %v1597 = vld [vmem:[%s1 + $0x7f0] sm:$0xff]
        %v1598 = vld [vmem:[%s1 + $0x7f8] sm:$0xff]
        %v1599 = vld [vmem:[%s1 + $0x800] sm:$0xff]
        %v1600 = vld [vmem:[%s1 + $0x808] sm:$0xff]
        %v1601 = vld [vmem:[%s1 + $0x810] sm:$0xff]
        %v1602 = vld [vmem:[%s1 + $0x818] sm:$0xff]
        %v1603 = vld [vmem:[%s1 + $0x820] sm:$0xff]
        %v1604 = vld [vmem:[%s1 + $0x828] sm:$0xff]
        %v1605 = vld [vmem:[%s1 + $0x830] sm:$0xff]
        %v1606 = vld [vmem:[%s1 + $0x838] sm:$0xff]
        %v1607 = vld [vmem:[%s1 + $0x840] sm:$0xff]
        %v1608 = vld [vmem:[%s1 + $0x848] sm:$0xff]
        %v1609 = vld [vmem:[%s1 + $0x850] sm:$0xff]
        %v1610 = vld [vmem:[%s1 + $0x858] sm:$0xff]
        %v1611 = vld [vmem:[%s1 + $0x860] sm:$0xff]
        %v1612 = vld [vmem:[%s1 + $0x868] sm:$0xff]
        %v1613 = vld [vmem:[%s1 + $0x870] sm:$0xff]
        %v1614 = vld [vmem:[%s1 + $0x878] sm:$0xff]
        %v1615 = vld [vmem:[%s1 + $0x880] sm:$0xff]
        %v1616 = vld [vmem:[%s1 + $0x888] sm:$0xff]
        %v1617 = vld [vmem:[%s1 + $0x890] sm:$0xff]
        %v1618 = vld [vmem:[%s1 + $0x898] sm:$0xff]
        %v1619 = vld [vmem:[%s1 + $0x8a0] sm:$0xff]
        %v1620 = vld [vmem:[%s1 + $0x8a8] sm:$0xff]
        %v1621 = vld [vmem:[%s1 + $0x8b0] sm:$0xff]
        %v1622 = vld [vmem:[%s1 + $0x8b8] sm:$0xff]
        %v1623 = vld [vmem:[%s1 + $0x8c0] sm:$0xff]
        %v1624 = vld [vmem:[%s1 + $0x8c8] sm:$0xff]
        %v1625 = vld [vmem:[%s1 + $0x8d0] sm:$0xff]
        %v1626 = vld [vmem:[%s1 + $0x8d8] sm:$0xff]
        %v1627 = vld [vmem:[%s1 + $0x8e0] sm:$0xff]
        %v1628 = vld [vmem:[%s1 + $0x8e8] sm:$0xff]
        %v1629 = vld [vmem:[%s1 + $0x8f0] sm:$0xff]
        %v1630 = vld [vmem:[%s1 + $0x8f8] sm:$0xff]
        %v1631 = vld [vmem:[%s1 + $0x900] sm:$0xff]
        %v1632 = vld [vmem:[%s1 + $0x908] sm:$0xff]
        %v1633 = vld [vmem:[%s1 + $0x910] sm:$0xff]
        %v1634 = vld [vmem:[%s1 + $0x918] sm:$0xff]
        %v1635 = vld [vmem:[%s1 + $0x920] sm:$0xff]
        %v1636 = vld [vmem:[%s1 + $0x928] sm:$0xff]
        %v1637 = vld [vmem:[%s1 + $0x930] sm:$0xff]
        %v1638 = vld [vmem:[%s1 + $0x938] sm:$0xff]
        %v1639 = vld [vmem:[%s1 + $0x940] sm:$0xff]
        %v1640 = vld [vmem:[%s1 + $0x948] sm:$0xff]
        %v1641 = vld [vmem:[%s1 + $0x950] sm:$0xff]
        %v1642 = vld [vmem:[%s1 + $0x958] sm:$0xff]
        %v1643 = vld [vmem:[%s1 + $0x960] sm:$0xff]
        %v1644 = vld [vmem:[%s1 + $0x968] sm:$0xff]
        %v1645 = vld [vmem:[%s1 + $0x970] sm:$0xff]
        %v1646 = vld [vmem:[%s1 + $0x978] sm:$0xff]
        %v1647 = vld [vmem:[%s1 + $0x980] sm:$0xff]
        %v1648 = vld [vmem:[%s1 + $0x988] sm:$0xff]
        %v1649 = vld [vmem:[%s1 + $0x990] sm:$0xff]
        %v1650 = vld [vmem:[%s1 + $0x998] sm:$0xff]
        %v1651 = vld [vmem:[%s1 + $0x9a0] sm:$0xff]
        %v1652 = vld [vmem:[%s1 + $0x9a8] sm:$0xff]
        %v1653 = vld [vmem:[%s1 + $0x9b0] sm:$0xff]
        %v1654 = vld [vmem:[%s1 + $0x9b8] sm:$0xff]
        %v1655 = vld [vmem:[%s1 + $0x9c0] sm:$0xff]
        %v1656 = vld [vmem:[%s1 + $0x9c8] sm:$0xff]
        %v1657 = vld [vmem:[%s1 + $0x9d0] sm:$0xff]
        %v1658 = vld [vmem:[%s1 + $0x9d8] sm:$0xff]
        %v1659 = vld [vmem:[%s1 + $0x9e0] sm:$0xff]
        %v1660 = vld [vmem:[%s1 + $0x9e8] sm:$0xff]
        %v1661 = vld [vmem:[%s1 + $0x9f0] sm:$0xff]
        %v1662 = vld [vmem:[%s1 + $0x9f8] sm:$0xff]
        %v1663 = vld [vmem:[%s1 + $0xa00] sm:$0xff]
        %v1664 = vld [vmem:[%s1 + $0xa08] sm:$0xff]
        %v1665 = vld [vmem:[%s1 + $0xa10] sm:$0xff]
        %v1666 = vld [vmem:[%s1 + $0xa18] sm:$0xff]
        %v1667 = vld [vmem:[%s1 + $0xa20] sm:$0xff]
        %v1668 = vld [vmem:[%s1 + $0xa28] sm:$0xff]
        %v1669 = vld [vmem:[%s1 + $0xa30] sm:$0xff]
        %v1670 = vld [vmem:[%s1 + $0xa38] sm:$0xff]
        %v1671 = vld [vmem:[%s1 + $0xa40] sm:$0xff]
        %v1672 = vld [vmem:[%s1 + $0xa48] sm:$0xff]
        %v1673 = vld [vmem:[%s1 + $0xa50] sm:$0xff]
        %v1674 = vld [vmem:[%s1 + $0xa58] sm:$0xff]
        %v1675 = vld [vmem:[%s1 + $0xa60] sm:$0xff]
        %v1676 = vld [vmem:[%s1 + $0xa68] sm:$0xff]
        %v1677 = vld [vmem:[%s1 + $0xa70] sm:$0xff]
        %v1678 = vld [vmem:[%s1 + $0xa78] sm:$0xff]
        %v1679 = vld [vmem:[%s1 + $0xa80] sm:$0xff]
        %v1680 = vld [vmem:[%s1 + $0xa88] sm:$0xff]
        %v1681 = vld [vmem:[%s1 + $0xa90] sm:$0xff]
        %v1682 = vld [vmem:[%s1 + $0xa98] sm:$0xff]
        %v1683 = vld [vmem:[%s1 + $0xaa0] sm:$0xff]
        %v1684 = vld [vmem:[%s1 + $0xaa8] sm:$0xff]
        %v1685 = vld [vmem:[%s1 + $0xab0] sm:$0xff]
        %v1686 = vld [vmem:[%s1 + $0xab8] sm:$0xff]
        %v1687 = vld [vmem:[%s1 + $0xac0] sm:$0xff]
        %v1688 = vld [vmem:[%s1 + $0xac8] sm:$0xff]
        %v1689 = vld [vmem:[%s1 + $0xad0] sm:$0xff]
        %v1690 = vld [vmem:[%s1 + $0xad8] sm:$0xff]
        %v1691 = vld [vmem:[%s1 + $0xae0] sm:$0xff]
        %v1692 = vld [vmem:[%s1 + $0xae8] sm:$0xff]
        %v1693 = vld [vmem:[%s1 + $0xaf0] sm:$0xff]
        %v1694 = vld [vmem:[%s1 + $0xaf8] sm:$0xff]
        %v1695 = vld [vmem:[%s1 + $0xb00] sm:$0xff]
        %v1696 = vld [vmem:[%s1 + $0xb08] sm:$0xff]
        %v1697 = vld [vmem:[%s1 + $0xb10] sm:$0xff]
        %v1698 = vld [vmem:[%s1 + $0xb18] sm:$0xff]
        %v1699 = vld [vmem:[%s1 + $0xb20] sm:$0xff]
        %v1700 = vld [vmem:[%s1 + $0xb28] sm:$0xff]
        %v1701 = vld [vmem:[%s1 + $0xb30] sm:$0xff]
        %v1702 = vld [vmem:[%s1 + $0xb38] sm:$0xff]
        %v1703 = vld [vmem:[%s1 + $0xb40] sm:$0xff]
        %v1704 = vld [vmem:[%s1 + $0xb48] sm:$0xff]
        %v1705 = vld [vmem:[%s1 + $0xb50] sm:$0xff]
        %v1706 = vld [vmem:[%s1 + $0xb58] sm:$0xff]
        %v1707 = vld [vmem:[%s1 + $0xb60] sm:$0xff]
        %v1708 = vld [vmem:[%s1 + $0xb68] sm:$0xff]
        %v1709 = vld [vmem:[%s1 + $0xb70] sm:$0xff]
        %v1710 = vld [vmem:[%s1 + $0xb78] sm:$0xff]
        %v1711 = vld [vmem:[%s1 + $0xb80] sm:$0xff]
        %v1712 = vld [vmem:[%s1 + $0xb88] sm:$0xff]
        %v1713 = vld [vmem:[%s1 + $0xb90] sm:$0xff]
        %v1714 = vld [vmem:[%s1 + $0xb98] sm:$0xff]
        %v1715 = vld [vmem:[%s1 + $0xba0] sm:$0xff]
        %v1716 = vld [vmem:[%s1 + $0xba8] sm:$0xff]
        %v1717 = vld [vmem:[%s1 + $0xbb0] sm:$0xff]
        %v1718 = vld [vmem:[%s1 + $0xbb8] sm:$0xff]
        %v1719 = vld [vmem:[%s1 + $0xbc0] sm:$0xff]
        %v1720 = vld [vmem:[%s1 + $0xbc8] sm:$0xff]
        %v1721 = vld [vmem:[%s1 + $0xbd0] sm:$0xff]
        %v1722 = vld [vmem:[%s1 + $0xbd8] sm:$0xff]
        %v1723 = vld [vmem:[%s1 + $0xbe0] sm:$0xff]
        %v1724 = vld [vmem:[%s1 + $0xbe8] sm:$0xff]
        %v1725 = vld [vmem:[%s1 + $0xbf0] sm:$0xff]
        %v1726 = vld [vmem:[%s1 + $0xbf8] sm:$0xff]
        %v1727 = vld [vmem:[%s1 + $0xc00] sm:$0xff]
        %v1728 = vld [vmem:[%s1 + $0xc08] sm:$0xff]
        %v1729 = vld [vmem:[%s1 + $0xc10] sm:$0xff]
        %v1730 = vld [vmem:[%s1 + $0xc18] sm:$0xff]
        %v1731 = vld [vmem:[%s1 + $0xc20] sm:$0xff]
        %v1732 = vld [vmem:[%s1 + $0xc28] sm:$0xff]
        %v1733 = vld [vmem:[%s1 + $0xc30] sm:$0xff]
        %v1734 = vld [vmem:[%s1 + $0xc38] sm:$0xff]
        %v1735 = vld [vmem:[%s1 + $0xc40] sm:$0xff]
        %v1736 = vld [vmem:[%s1 + $0xc48] sm:$0xff]
        %v1737 = vld [vmem:[%s1 + $0xc50] sm:$0xff]
        %v1738 = vld [vmem:[%s1 + $0xc58] sm:$0xff]
        %v1739 = vld [vmem:[%s1 + $0xc60] sm:$0xff]
        %v1740 = vld [vmem:[%s1 + $0xc68] sm:$0xff]
        %v1741 = vld [vmem:[%s1 + $0xc70] sm:$0xff]
        %v1742 = vld [vmem:[%s1 + $0xc78] sm:$0xff]
        %v1743 = vld [vmem:[%s1 + $0xc80] sm:$0xff]
        %v1744 = vld [vmem:[%s1 + $0xc88] sm:$0xff]
        %v1745 = vld [vmem:[%s1 + $0xc90] sm:$0xff]
        %v1746 = vld [vmem:[%s1 + $0xc98] sm:$0xff]
        %v1747 = vld [vmem:[%s1 + $0xca0] sm:$0xff]
        %v1748 = vld [vmem:[%s1 + $0xca8] sm:$0xff]
        %v1749 = vld [vmem:[%s1 + $0xcb0] sm:$0xff]
        %v1750 = vld [vmem:[%s1 + $0xcb8] sm:$0xff]
        %v1751 = vld [vmem:[%s1 + $0xcc0] sm:$0xff]
        %v1752 = vld [vmem:[%s1 + $0xcc8] sm:$0xff]
        %v1753 = vld [vmem:[%s1 + $0xcd0] sm:$0xff]
        %v1754 = vld [vmem:[%s1 + $0xcd8] sm:$0xff]
        %v1755 = vld [vmem:[%s1 + $0xce0] sm:$0xff]
        %v1756 = vld [vmem:[%s1 + $0xce8] sm:$0xff]
        %v1757 = vld [vmem:[%s1 + $0xcf0] sm:$0xff]
        %v1758 = vld [vmem:[%s1 + $0xcf8] sm:$0xff]
        %v1759 = vld [vmem:[%s1 + $0xd00] sm:$0xff]
        %v1760 = vld [vmem:[%s1 + $0xd08] sm:$0xff]
        %v1761 = vld [vmem:[%s1 + $0xd10] sm:$0xff]
        %v1762 = vld [vmem:[%s1 + $0xd18] sm:$0xff]
        %v1763 = vld [vmem:[%s1 + $0xd20] sm:$0xff]
        %v1764 = vld [vmem:[%s1 + $0xd28] sm:$0xff]
        %v1765 = vld [vmem:[%s1 + $0xd30] sm:$0xff]
        %v1766 = vld [vmem:[%s1 + $0xd38] sm:$0xff]
        %v1767 = vld [vmem:[%s1 + $0xd40] sm:$0xff]
        %v1768 = vld [vmem:[%s1 + $0xd48] sm:$0xff]
        %v1769 = vld [vmem:[%s1 + $0xd50] sm:$0xff]
        %v1770 = vld [vmem:[%s1 + $0xd58] sm:$0xff]
        %v1771 = vld [vmem:[%s1 + $0xd60] sm:$0xff]
        %v1772 = vld [vmem:[%s1 + $0xd68] sm:$0xff]
        %v1773 = vld [vmem:[%s1 + $0xd70] sm:$0xff]
        %v1774 = vld [vmem:[%s1 + $0xd78] sm:$0xff]
        %v1775 = vld [vmem:[%s1 + $0xd80] sm:$0xff]
        %v1776 = vld [vmem:[%s1 + $0xd88] sm:$0xff]
        %v1777 = vld [vmem:[%s1 + $0xd90] sm:$0xff]
        %v1778 = vld [vmem:[%s1 + $0xd98] sm:$0xff]
        %v1779 = vld [vmem:[%s1 + $0xda0] sm:$0xff]
        %v1780 = vld [vmem:[%s1 + $0xda8] sm:$0xff]
        %v1781 = vld [vmem:[%s1 + $0xdb0] sm:$0xff]
        %v1782 = vld [vmem:[%s1 + $0xdb8] sm:$0xff]
        %v1783 = vld [vmem:[%s1 + $0xdc0] sm:$0xff]
        %v1784 = vld [vmem:[%s1 + $0xdc8] sm:$0xff]
        %v1785 = vld [vmem:[%s1 + $0xdd0] sm:$0xff]
        %v1786 = vld [vmem:[%s1 + $0xdd8] sm:$0xff]
        %v1787 = vld [vmem:[%s1 + $0xde0] sm:$0xff]
        %v1788 = vld [vmem:[%s1 + $0xde8] sm:$0xff]
        %v1789 = vld [vmem:[%s1 + $0xdf0] sm:$0xff]
        %v1790 = vld [vmem:[%s1 + $0xdf8] sm:$0xff]
        %v1791 = vld [vmem:[%s1 + $0xe00] sm:$0xff]
        %v1792 = vld [vmem:[%s1 + $0xe08] sm:$0xff]
        %v1793 = vld [vmem:[%s1 + $0xe10] sm:$0xff]
        %v1794 = vld [vmem:[%s1 + $0xe18] sm:$0xff]
        %v1795 = vld [vmem:[%s1 + $0xe20] sm:$0xff]
        %v1796 = vld [vmem:[%s1 + $0xe28] sm:$0xff]
        %v1797 = vld [vmem:[%s1 + $0xe30] sm:$0xff]
        %v1798 = vld [vmem:[%s1 + $0xe38] sm:$0xff]
        %v1799 = vld [vmem:[%s1 + $0xe40] sm:$0xff]
        %v1800 = vld [vmem:[%s1 + $0xe48] sm:$0xff]
        %v1801 = vld [vmem:[%s1 + $0xe50] sm:$0xff]
        %v1802 = vld [vmem:[%s1 + $0xe58] sm:$0xff]
        %v1803 = vld [vmem:[%s1 + $0xe60] sm:$0xff]
        %v1804 = vld [vmem:[%s1 + $0xe68] sm:$0xff]
        %v1805 = vld [vmem:[%s1 + $0xe70] sm:$0xff]
        %v1806 = vld [vmem:[%s1 + $0xe78] sm:$0xff]
        %v1807 = vld [vmem:[%s1 + $0xe80] sm:$0xff]
        %v1808 = vld [vmem:[%s1 + $0xe88] sm:$0xff]
        %v1809 = vld [vmem:[%s1 + $0xe90] sm:$0xff]
        %v1810 = vld [vmem:[%s1 + $0xe98] sm:$0xff]
        %v1811 = vld [vmem:[%s1 + $0xea0] sm:$0xff]
        %v1812 = vld [vmem:[%s1 + $0xea8] sm:$0xff]
        %v1813 = vld [vmem:[%s1 + $0xeb0] sm:$0xff]
        %v1814 = vld [vmem:[%s1 + $0xeb8] sm:$0xff]
        %v1815 = vld [vmem:[%s1 + $0xec0] sm:$0xff]
        %v1816 = vld [vmem:[%s1 + $0xec8] sm:$0xff]
        %v1817 = vld [vmem:[%s1 + $0xed0] sm:$0xff]
        %v1818 = vld [vmem:[%s1 + $0xed8] sm:$0xff]
        %v1819 = vld [vmem:[%s1 + $0xee0] sm:$0xff]
        %v1820 = vld [vmem:[%s1 + $0xee8] sm:$0xff]
        %v1821 = vld [vmem:[%s1 + $0xef0] sm:$0xff]
        %v1822 = vld [vmem:[%s1 + $0xef8] sm:$0xff]
        %v1823 = vld [vmem:[%s1 + $0xf00] sm:$0xff]
        %v1824 = vld [vmem:[%s1 + $0xf08] sm:$0xff]
        %v1825 = vld [vmem:[%s1 + $0xf10] sm:$0xff]
        %v1826 = vld [vmem:[%s1 + $0xf18] sm:$0xff]
        %v1827 = vld [vmem:[%s1 + $0xf20] sm:$0xff]
        %v1828 = vld [vmem:[%s1 + $0xf28] sm:$0xff]
        %v1829 = vld [vmem:[%s1 + $0xf30] sm:$0xff]
        %v1830 = vld [vmem:[%s1 + $0xf38] sm:$0xff]
        %v1831 = vld [vmem:[%s1 + $0xf40] sm:$0xff]
        %v1832 = vld [vmem:[%s1 + $0xf48] sm:$0xff]
        %v1833 = vld [vmem:[%s1 + $0xf50] sm:$0xff]
        %v1834 = vld [vmem:[%s1 + $0xf58] sm:$0xff]
        %v1835 = vld [vmem:[%s1 + $0xf60] sm:$0xff]
        %v1836 = vld [vmem:[%s1 + $0xf68] sm:$0xff]
        %v1837 = vld [vmem:[%s1 + $0xf70] sm:$0xff]
        %v1838 = vld [vmem:[%s1 + $0xf78] sm:$0xff]
        %v1839 = vld [vmem:[%s1 + $0xf80] sm:$0xff]
        %v1840 = vld [vmem:[%s1 + $0xf88] sm:$0xff]
        %v1841 = vld [vmem:[%s1 + $0xf90] sm:$0xff]
        %v1842 = vld [vmem:[%s1 + $0xf98] sm:$0xff]
        %v1843 = vld [vmem:[%s1 + $0xfa0] sm:$0xff]
        %v1844 = vld [vmem:[%s1 + $0xfa8] sm:$0xff]
        %v1845 = vld [vmem:[%s1 + $0xfb0] sm:$0xff]
        %v1846 = vld [vmem:[%s1 + $0xfb8] sm:$0xff]
        %v1847 = vld [vmem:[%s1 + $0xfc0] sm:$0xff]
        %v1848 = vld [vmem:[%s1 + $0xfc8] sm:$0xff]
        %v1849 = vld [vmem:[%s1 + $0xfd0] sm:$0xff]
        %v1850 = vld [vmem:[%s1 + $0xfd8] sm:$0xff]
        %v1851 = vld [vmem:[%s1 + $0xfe0] sm:$0xff]
        %v1852 = vld [vmem:[%s1 + $0xfe8] sm:$0xff]
        %v1853 = vld [vmem:[%s1 + $0xff0] sm:$0xff]
        %v1854 = vld [vmem:[%s1 + $0xff8] sm:$0xff]
        %v1855 = vld [vmem:[%s2] sm:$0xff]
        %v1856 = vld [vmem:[%s2 + $0x8] sm:$0xff]
        %v1859 = vlaneseq
        %v1860 = vshrl.u32 %v1859, 7
        %v1861 = vsub.s32 0, %v1860
        %v1862 = vrot.slane %v1855, %v1861
        %v1863 = vlaneseq
        %v1864 = vshrl.u32 %v1863, 7
        %v1865 = vsub.s32 1, %v1864
        %v1866 = vrot.slane %v1855, %v1865
        %v1867 = vlaneseq
        %v1868 = vshrl.u32 %v1867, 7
        %v1869 = vsub.s32 2, %v1868
        %v1870 = vrot.slane %v1855, %v1869
        %v1871 = vlaneseq
        %v1872 = vshrl.u32 %v1871, 7
        %v1873 = vsub.s32 3, %v1872
        %v1874 = vrot.slane %v1855, %v1873
        %v1875 = vlaneseq
        %v1876 = vshrl.u32 %v1875, 7
        %v1877 = vsub.s32 4, %v1876
        %v1878 = vrot.slane %v1855, %v1877
        %v1879 = vlaneseq
        %v1880 = vshrl.u32 %v1879, 7
        %v1881 = vsub.s32 5, %v1880
        %v1882 = vrot.slane %v1855, %v1881
        %v1883 = vlaneseq
        %v1884 = vshrl.u32 %v1883, 7
        %v1885 = vsub.s32 6, %v1884
        %v1886 = vrot.slane %v1855, %v1885
        %v1887 = vlaneseq
        %v1888 = vshrl.u32 %v1887, 7
        %v1889 = vsub.s32 7, %v1888
        %v1890 = vrot.slane %v1855, %v1889
        %v1891 = vlaneseq
        %v1892 = vshrl.u32 %v1891, 7
        %v1893 = vsub.s32 0, %v1892
        %v1894 = vrot.slane %v1856, %v1893
        %v1895 = vlaneseq
        %v1896 = vshrl.u32 %v1895, 7
        %v1897 = vsub.s32 1, %v1896
        %v1898 = vrot.slane %v1856, %v1897
        %v1899 = vlaneseq
        %v1900 = vshrl.u32 %v1899, 7
        %v1901 = vsub.s32 2, %v1900
        %v1902 = vrot.slane %v1856, %v1901
        %v1903 = vlaneseq
        %v1904 = vshrl.u32 %v1903, 7
        %v1905 = vsub.s32 3, %v1904
        %v1906 = vrot.slane %v1856, %v1905
        %v1907 = vlaneseq
        %v1908 = vshrl.u32 %v1907, 7
        %v1909 = vsub.s32 4, %v1908
        %v1910 = vrot.slane %v1856, %v1909
        %v1911 = vlaneseq
        %v1912 = vshrl.u32 %v1911, 7
        %v1913 = vsub.s32 5, %v1912
        %v1914 = vrot.slane %v1856, %v1913
        %v1915 = vlaneseq
        %v1916 = vshrl.u32 %v1915, 7
        %v1917 = vsub.s32 6, %v1916
        %v1918 = vrot.slane %v1856, %v1917
        %v1919 = vlaneseq
        %v1920 = vshrl.u32 %v1919, 7
        %v1921 = vsub.s32 7, %v1920
        %v1922 = vrot.slane %v1856, %v1921
        %v1943 = vunpack.c.l.b16 %v1339
        %v1944 = vunpack.c.h.b16 %v1339
        %v1945 = vunpack.c.l.b16 %v1340
        %v1946 = vunpack.c.h.b16 %v1340
        %v1947 = vunpack.c.l.b16 %v1341
        %v1948 = vunpack.c.h.b16 %v1341
        %v1949 = vunpack.c.l.b16 %v1342
        %v1950 = vunpack.c.h.b16 %v1342
        %v1951 = vpack.c.b16 %v1947, %v1943
        %v1952 = vpack.c.b16 %v1948, %v1944
        %v1953 = vpack.c.b16 %v1949, %v1945
        %v1954 = vpack.c.b16 %v1950, %v1946
        %v2471 = vunpack.c.l.b16 %v1343
        %v2472 = vunpack.c.h.b16 %v1343
        %v2473 = vunpack.c.l.b16 %v1344
        %v2474 = vunpack.c.h.b16 %v1344
        %v2475 = vunpack.c.l.b16 %v1345
        %v2476 = vunpack.c.h.b16 %v1345
        %v2477 = vunpack.c.l.b16 %v1346
        %v2478 = vunpack.c.h.b16 %v1346
        %v2479 = vunpack.c.l.b16 %v1347
        %v2480 = vunpack.c.h.b16 %v1347
        %v2481 = vunpack.c.l.b16 %v1348
        %v2482 = vunpack.c.h.b16 %v1348
        %v2483 = vunpack.c.l.b16 %v1349
        %v2484 = vunpack.c.h.b16 %v1349
        %v2485 = vunpack.c.l.b16 %v1350
        %v2486 = vunpack.c.h.b16 %v1350
        %v2487 = vunpack.c.l.b16 %v1351
        %v2488 = vunpack.c.h.b16 %v1351
        %v2489 = vunpack.c.l.b16 %v1352
        %v2490 = vunpack.c.h.b16 %v1352
        %v2491 = vunpack.c.l.b16 %v1353
        %v2492 = vunpack.c.h.b16 %v1353
        %v2493 = vunpack.c.l.b16 %v1354
        %v2494 = vunpack.c.h.b16 %v1354
        %v2495 = vunpack.c.l.b16 %v1355
        %v2496 = vunpack.c.h.b16 %v1355
        %v2497 = vunpack.c.l.b16 %v1356
        %v2498 = vunpack.c.h.b16 %v1356
        %v2499 = vunpack.c.l.b16 %v1357
        %v2500 = vunpack.c.h.b16 %v1357
        %v2501 = vunpack.c.l.b16 %v1358
        %v2502 = vunpack.c.h.b16 %v1358
        %v2503 = vunpack.c.l.b16 %v1359
        %v2504 = vunpack.c.h.b16 %v1359
        %v2505 = vunpack.c.l.b16 %v1360
        %v2506 = vunpack.c.h.b16 %v1360
        %v2507 = vunpack.c.l.b16 %v1361
        %v2508 = vunpack.c.h.b16 %v1361
        %v2509 = vunpack.c.l.b16 %v1362
        %v2510 = vunpack.c.h.b16 %v1362
        %v2511 = vunpack.c.l.b16 %v1363
        %v2512 = vunpack.c.h.b16 %v1363
        %v2513 = vunpack.c.l.b16 %v1364
        %v2514 = vunpack.c.h.b16 %v1364
        %v2515 = vunpack.c.l.b16 %v1365
        %v2516 = vunpack.c.h.b16 %v1365
        %v2517 = vunpack.c.l.b16 %v1366
        %v2518 = vunpack.c.h.b16 %v1366
        %v2519 = vunpack.c.l.b16 %v1367
        %v2520 = vunpack.c.h.b16 %v1367
        %v2521 = vunpack.c.l.b16 %v1368
        %v2522 = vunpack.c.h.b16 %v1368
        %v2523 = vunpack.c.l.b16 %v1369
        %v2524 = vunpack.c.h.b16 %v1369
        %v2525 = vunpack.c.l.b16 %v1370
        %v2526 = vunpack.c.h.b16 %v1370
        %v2527 = vunpack.c.l.b16 %v1371
        %v2528 = vunpack.c.h.b16 %v1371
        %v2529 = vunpack.c.l.b16 %v1372
        %v2530 = vunpack.c.h.b16 %v1372
        %v2531 = vunpack.c.l.b16 %v1373
        %v2532 = vunpack.c.h.b16 %v1373
        %v2533 = vunpack.c.l.b16 %v1374
        %v2534 = vunpack.c.h.b16 %v1374
        %v2535 = vunpack.c.l.b16 %v1375
        %v2536 = vunpack.c.h.b16 %v1375
        %v2537 = vunpack.c.l.b16 %v1376
        %v2538 = vunpack.c.h.b16 %v1376
        %v2539 = vunpack.c.l.b16 %v1377
        %v2540 = vunpack.c.h.b16 %v1377
        %v2541 = vunpack.c.l.b16 %v1378
        %v2542 = vunpack.c.h.b16 %v1378
        %v2543 = vunpack.c.l.b16 %v1379
        %v2544 = vunpack.c.h.b16 %v1379
        %v2545 = vunpack.c.l.b16 %v1380
        %v2546 = vunpack.c.h.b16 %v1380
        %v2547 = vunpack.c.l.b16 %v1381
        %v2548 = vunpack.c.h.b16 %v1381
        %v2549 = vunpack.c.l.b16 %v1382
        %v2550 = vunpack.c.h.b16 %v1382
        %v2551 = vunpack.c.l.b16 %v1383
        %v2552 = vunpack.c.h.b16 %v1383
        %v2553 = vunpack.c.l.b16 %v1384
        %v2554 = vunpack.c.h.b16 %v1384
        %v2555 = vunpack.c.l.b16 %v1385
        %v2556 = vunpack.c.h.b16 %v1385
        %v2557 = vunpack.c.l.b16 %v1386
        %v2558 = vunpack.c.h.b16 %v1386
        %v2559 = vunpack.c.l.b16 %v1387
        %v2560 = vunpack.c.h.b16 %v1387
        %v2561 = vunpack.c.l.b16 %v1388
        %v2562 = vunpack.c.h.b16 %v1388
        %v2563 = vunpack.c.l.b16 %v1389
        %v2564 = vunpack.c.h.b16 %v1389
        %v2565 = vunpack.c.l.b16 %v1390
        %v2566 = vunpack.c.h.b16 %v1390
        %v2567 = vunpack.c.l.b16 %v1391
        %v2568 = vunpack.c.h.b16 %v1391
        %v2569 = vunpack.c.l.b16 %v1392
        %v2570 = vunpack.c.h.b16 %v1392
        %v2571 = vunpack.c.l.b16 %v1393
        %v2572 = vunpack.c.h.b16 %v1393
        %v2573 = vunpack.c.l.b16 %v1394
        %v2574 = vunpack.c.h.b16 %v1394
        %v2575 = vunpack.c.l.b16 %v1395
        %v2576 = vunpack.c.h.b16 %v1395
        %v2577 = vunpack.c.l.b16 %v1396
        %v2578 = vunpack.c.h.b16 %v1396
        %v2579 = vunpack.c.l.b16 %v1397
        %v2580 = vunpack.c.h.b16 %v1397
        %v2581 = vunpack.c.l.b16 %v1398
        %v2582 = vunpack.c.h.b16 %v1398
        %v2583 = vunpack.c.l.b16 %v1399
        %v2584 = vunpack.c.h.b16 %v1399
        %v2585 = vunpack.c.l.b16 %v1400
        %v2586 = vunpack.c.h.b16 %v1400
        %v2587 = vunpack.c.l.b16 %v1401
        %v2588 = vunpack.c.h.b16 %v1401
        %v2589 = vunpack.c.l.b16 %v1402
        %v2590 = vunpack.c.h.b16 %v1402
        %v2591 = vunpack.c.l.b16 %v1403
        %v2592 = vunpack.c.h.b16 %v1403
        %v2593 = vunpack.c.l.b16 %v1404
        %v2594 = vunpack.c.h.b16 %v1404
        %v2595 = vunpack.c.l.b16 %v1405
        %v2596 = vunpack.c.h.b16 %v1405
        %v2597 = vunpack.c.l.b16 %v1406
        %v2598 = vunpack.c.h.b16 %v1406
        %v2599 = vunpack.c.l.b16 %v1407
        %v2600 = vunpack.c.h.b16 %v1407
        %v2601 = vunpack.c.l.b16 %v1408
        %v2602 = vunpack.c.h.b16 %v1408
        %v2603 = vunpack.c.l.b16 %v1409
        %v2604 = vunpack.c.h.b16 %v1409
        %v2605 = vunpack.c.l.b16 %v1410
        %v2606 = vunpack.c.h.b16 %v1410
        %v2607 = vunpack.c.l.b16 %v1411
        %v2608 = vunpack.c.h.b16 %v1411
        %v2609 = vunpack.c.l.b16 %v1412
        %v2610 = vunpack.c.h.b16 %v1412
        %v2611 = vunpack.c.l.b16 %v1413
        %v2612 = vunpack.c.h.b16 %v1413
        %v2613 = vunpack.c.l.b16 %v1414
        %v2614 = vunpack.c.h.b16 %v1414
        %v2615 = vunpack.c.l.b16 %v1415
        %v2616 = vunpack.c.h.b16 %v1415
        %v2617 = vunpack.c.l.b16 %v1416
        %v2618 = vunpack.c.h.b16 %v1416
        %v2619 = vunpack.c.l.b16 %v1417
        %v2620 = vunpack.c.h.b16 %v1417
        %v2621 = vunpack.c.l.b16 %v1418
        %v2622 = vunpack.c.h.b16 %v1418
        %v2623 = vunpack.c.l.b16 %v1419
        %v2624 = vunpack.c.h.b16 %v1419
        %v2625 = vunpack.c.l.b16 %v1420
        %v2626 = vunpack.c.h.b16 %v1420
        %v2627 = vunpack.c.l.b16 %v1421
        %v2628 = vunpack.c.h.b16 %v1421
        %v2629 = vunpack.c.l.b16 %v1422
        %v2630 = vunpack.c.h.b16 %v1422
        %v2631 = vunpack.c.l.b16 %v1423
        %v2632 = vunpack.c.h.b16 %v1423
        %v2633 = vunpack.c.l.b16 %v1424
        %v2634 = vunpack.c.h.b16 %v1424
        %v2635 = vunpack.c.l.b16 %v1425
        %v2636 = vunpack.c.h.b16 %v1425
        %v2637 = vunpack.c.l.b16 %v1426
        %v2638 = vunpack.c.h.b16 %v1426
        %v2639 = vunpack.c.l.b16 %v1427
        %v2640 = vunpack.c.h.b16 %v1427
        %v2641 = vunpack.c.l.b16 %v1428
        %v2642 = vunpack.c.h.b16 %v1428
        %v2643 = vunpack.c.l.b16 %v1429
        %v2644 = vunpack.c.h.b16 %v1429
        %v2645 = vunpack.c.l.b16 %v1430
        %v2646 = vunpack.c.h.b16 %v1430
        %v2647 = vunpack.c.l.b16 %v1431
        %v2648 = vunpack.c.h.b16 %v1431
        %v2649 = vunpack.c.l.b16 %v1432
        %v2650 = vunpack.c.h.b16 %v1432
        %v2651 = vunpack.c.l.b16 %v1433
        %v2652 = vunpack.c.h.b16 %v1433
        %v2653 = vunpack.c.l.b16 %v1434
        %v2654 = vunpack.c.h.b16 %v1434
        %v2655 = vunpack.c.l.b16 %v1435
        %v2656 = vunpack.c.h.b16 %v1435
        %v2657 = vunpack.c.l.b16 %v1436
        %v2658 = vunpack.c.h.b16 %v1436
        %v2659 = vunpack.c.l.b16 %v1437
        %v2660 = vunpack.c.h.b16 %v1437
        %v2661 = vunpack.c.l.b16 %v1438
        %v2662 = vunpack.c.h.b16 %v1438
        %v2663 = vunpack.c.l.b16 %v1439
        %v2664 = vunpack.c.h.b16 %v1439
        %v2665 = vunpack.c.l.b16 %v1440
        %v2666 = vunpack.c.h.b16 %v1440
        %v2667 = vunpack.c.l.b16 %v1441
        %v2668 = vunpack.c.h.b16 %v1441
        %v2669 = vunpack.c.l.b16 %v1442
        %v2670 = vunpack.c.h.b16 %v1442
        %v2671 = vunpack.c.l.b16 %v1443
        %v2672 = vunpack.c.h.b16 %v1443
        %v2673 = vunpack.c.l.b16 %v1444
        %v2674 = vunpack.c.h.b16 %v1444
        %v2675 = vunpack.c.l.b16 %v1445
        %v2676 = vunpack.c.h.b16 %v1445
        %v2677 = vunpack.c.l.b16 %v1446
        %v2678 = vunpack.c.h.b16 %v1446
        %v2679 = vunpack.c.l.b16 %v1447
        %v2680 = vunpack.c.h.b16 %v1447
        %v2681 = vunpack.c.l.b16 %v1448
        %v2682 = vunpack.c.h.b16 %v1448
        %v2683 = vunpack.c.l.b16 %v1449
        %v2684 = vunpack.c.h.b16 %v1449
        %v2685 = vunpack.c.l.b16 %v1450
        %v2686 = vunpack.c.h.b16 %v1450
        %v2687 = vunpack.c.l.b16 %v1451
        %v2688 = vunpack.c.h.b16 %v1451
        %v2689 = vunpack.c.l.b16 %v1452
        %v2690 = vunpack.c.h.b16 %v1452
        %v2691 = vunpack.c.l.b16 %v1453
        %v2692 = vunpack.c.h.b16 %v1453
        %v2693 = vunpack.c.l.b16 %v1454
        %v2694 = vunpack.c.h.b16 %v1454
        %v2695 = vunpack.c.l.b16 %v1455
        %v2696 = vunpack.c.h.b16 %v1455
        %v2697 = vunpack.c.l.b16 %v1456
        %v2698 = vunpack.c.h.b16 %v1456
        %v2699 = vunpack.c.l.b16 %v1457
        %v2700 = vunpack.c.h.b16 %v1457
        %v2701 = vunpack.c.l.b16 %v1458
        %v2702 = vunpack.c.h.b16 %v1458
        %v2703 = vunpack.c.l.b16 %v1459
        %v2704 = vunpack.c.h.b16 %v1459
        %v2705 = vunpack.c.l.b16 %v1460
        %v2706 = vunpack.c.h.b16 %v1460
        %v2707 = vunpack.c.l.b16 %v1461
        %v2708 = vunpack.c.h.b16 %v1461
        %v2709 = vunpack.c.l.b16 %v1462
        %v2710 = vunpack.c.h.b16 %v1462
        %v2711 = vunpack.c.l.b16 %v1463
        %v2712 = vunpack.c.h.b16 %v1463
        %v2713 = vunpack.c.l.b16 %v1464
        %v2714 = vunpack.c.h.b16 %v1464
        %v2715 = vunpack.c.l.b16 %v1465
        %v2716 = vunpack.c.h.b16 %v1465
        %v2717 = vunpack.c.l.b16 %v1466
        %v2718 = vunpack.c.h.b16 %v1466
        %v2719 = vunpack.c.l.b16 %v1467
        %v2720 = vunpack.c.h.b16 %v1467
        %v2721 = vunpack.c.l.b16 %v1468
        %v2722 = vunpack.c.h.b16 %v1468
        %v2723 = vunpack.c.l.b16 %v1469
        %v2724 = vunpack.c.h.b16 %v1469
        %v2725 = vunpack.c.l.b16 %v1470
        %v2726 = vunpack.c.h.b16 %v1470
        %v2727 = vunpack.c.l.b16 %v1471
        %v2728 = vunpack.c.h.b16 %v1471
        %v2729 = vunpack.c.l.b16 %v1472
        %v2730 = vunpack.c.h.b16 %v1472
        %v2731 = vunpack.c.l.b16 %v1473
        %v2732 = vunpack.c.h.b16 %v1473
        %v2733 = vunpack.c.l.b16 %v1474
        %v2734 = vunpack.c.h.b16 %v1474
        %v2735 = vunpack.c.l.b16 %v1475
        %v2736 = vunpack.c.h.b16 %v1475
        %v2737 = vunpack.c.l.b16 %v1476
        %v2738 = vunpack.c.h.b16 %v1476
        %v2739 = vunpack.c.l.b16 %v1477
        %v2740 = vunpack.c.h.b16 %v1477
        %v2741 = vunpack.c.l.b16 %v1478
        %v2742 = vunpack.c.h.b16 %v1478
        %v2743 = vunpack.c.l.b16 %v1479
        %v2744 = vunpack.c.h.b16 %v1479
        %v2745 = vunpack.c.l.b16 %v1480
        %v2746 = vunpack.c.h.b16 %v1480
        %v2747 = vunpack.c.l.b16 %v1481
        %v2748 = vunpack.c.h.b16 %v1481
        %v2749 = vunpack.c.l.b16 %v1482
        %v2750 = vunpack.c.h.b16 %v1482
        %v2751 = vunpack.c.l.b16 %v1483
        %v2752 = vunpack.c.h.b16 %v1483
        %v2753 = vunpack.c.l.b16 %v1484
        %v2754 = vunpack.c.h.b16 %v1484
        %v2755 = vunpack.c.l.b16 %v1485
        %v2756 = vunpack.c.h.b16 %v1485
        %v2757 = vunpack.c.l.b16 %v1486
        %v2758 = vunpack.c.h.b16 %v1486
        %v2759 = vunpack.c.l.b16 %v1487
        %v2760 = vunpack.c.h.b16 %v1487
        %v2761 = vunpack.c.l.b16 %v1488
        %v2762 = vunpack.c.h.b16 %v1488
        %v2763 = vunpack.c.l.b16 %v1489
        %v2764 = vunpack.c.h.b16 %v1489
        %v2765 = vunpack.c.l.b16 %v1490
        %v2766 = vunpack.c.h.b16 %v1490
        %v2767 = vunpack.c.l.b16 %v1491
        %v2768 = vunpack.c.h.b16 %v1491
        %v2769 = vunpack.c.l.b16 %v1492
        %v2770 = vunpack.c.h.b16 %v1492
        %v2771 = vunpack.c.l.b16 %v1493
        %v2772 = vunpack.c.h.b16 %v1493
        %v2773 = vunpack.c.l.b16 %v1494
        %v2774 = vunpack.c.h.b16 %v1494
        %v2775 = vunpack.c.l.b16 %v1495
        %v2776 = vunpack.c.h.b16 %v1495
        %v2777 = vunpack.c.l.b16 %v1496
        %v2778 = vunpack.c.h.b16 %v1496
        %v2779 = vunpack.c.l.b16 %v1497
        %v2780 = vunpack.c.h.b16 %v1497
        %v2781 = vunpack.c.l.b16 %v1498
        %v2782 = vunpack.c.h.b16 %v1498
        %v2783 = vunpack.c.l.b16 %v1499
        %v2784 = vunpack.c.h.b16 %v1499
        %v2785 = vunpack.c.l.b16 %v1500
        %v2786 = vunpack.c.h.b16 %v1500
        %v2787 = vunpack.c.l.b16 %v1501
        %v2788 = vunpack.c.h.b16 %v1501
        %v2789 = vunpack.c.l.b16 %v1502
        %v2790 = vunpack.c.h.b16 %v1502
        %v2791 = vunpack.c.l.b16 %v1503
        %v2792 = vunpack.c.h.b16 %v1503
        %v2793 = vunpack.c.l.b16 %v1504
        %v2794 = vunpack.c.h.b16 %v1504
        %v2795 = vunpack.c.l.b16 %v1505
        %v2796 = vunpack.c.h.b16 %v1505
        %v2797 = vunpack.c.l.b16 %v1506
        %v2798 = vunpack.c.h.b16 %v1506
        %v2799 = vunpack.c.l.b16 %v1507
        %v2800 = vunpack.c.h.b16 %v1507
        %v2801 = vunpack.c.l.b16 %v1508
        %v2802 = vunpack.c.h.b16 %v1508
        %v2803 = vunpack.c.l.b16 %v1509
        %v2804 = vunpack.c.h.b16 %v1509
        %v2805 = vunpack.c.l.b16 %v1510
        %v2806 = vunpack.c.h.b16 %v1510
        %v2807 = vunpack.c.l.b16 %v1511
        %v2808 = vunpack.c.h.b16 %v1511
        %v2809 = vunpack.c.l.b16 %v1512
        %v2810 = vunpack.c.h.b16 %v1512
        %v2811 = vunpack.c.l.b16 %v1513
        %v2812 = vunpack.c.h.b16 %v1513
        %v2813 = vunpack.c.l.b16 %v1514
        %v2814 = vunpack.c.h.b16 %v1514
        %v2815 = vunpack.c.l.b16 %v1515
        %v2816 = vunpack.c.h.b16 %v1515
        %v2817 = vunpack.c.l.b16 %v1516
        %v2818 = vunpack.c.h.b16 %v1516
        %v2819 = vunpack.c.l.b16 %v1517
        %v2820 = vunpack.c.h.b16 %v1517
        %v2821 = vunpack.c.l.b16 %v1518
        %v2822 = vunpack.c.h.b16 %v1518
        %v2823 = vunpack.c.l.b16 %v1519
        %v2824 = vunpack.c.h.b16 %v1519
        %v2825 = vunpack.c.l.b16 %v1520
        %v2826 = vunpack.c.h.b16 %v1520
        %v2827 = vunpack.c.l.b16 %v1521
        %v2828 = vunpack.c.h.b16 %v1521
        %v2829 = vunpack.c.l.b16 %v1522
        %v2830 = vunpack.c.h.b16 %v1522
        %v2831 = vunpack.c.l.b16 %v1523
        %v2832 = vunpack.c.h.b16 %v1523
        %v2833 = vunpack.c.l.b16 %v1524
        %v2834 = vunpack.c.h.b16 %v1524
        %v2835 = vunpack.c.l.b16 %v1525
        %v2836 = vunpack.c.h.b16 %v1525
        %v2837 = vunpack.c.l.b16 %v1526
        %v2838 = vunpack.c.h.b16 %v1526
        %v2839 = vunpack.c.l.b16 %v1527
        %v2840 = vunpack.c.h.b16 %v1527
        %v2841 = vunpack.c.l.b16 %v1528
        %v2842 = vunpack.c.h.b16 %v1528
        %v2843 = vunpack.c.l.b16 %v1529
        %v2844 = vunpack.c.h.b16 %v1529
        %v2845 = vunpack.c.l.b16 %v1530
        %v2846 = vunpack.c.h.b16 %v1530
        %v2847 = vunpack.c.l.b16 %v1531
        %v2848 = vunpack.c.h.b16 %v1531
        %v2849 = vunpack.c.l.b16 %v1532
        %v2850 = vunpack.c.h.b16 %v1532
        %v2851 = vunpack.c.l.b16 %v1533
        %v2852 = vunpack.c.h.b16 %v1533
        %v2853 = vunpack.c.l.b16 %v1534
        %v2854 = vunpack.c.h.b16 %v1534
        %v2855 = vunpack.c.l.b16 %v1535
        %v2856 = vunpack.c.h.b16 %v1535
        %v2857 = vunpack.c.l.b16 %v1536
        %v2858 = vunpack.c.h.b16 %v1536
        %v2859 = vunpack.c.l.b16 %v1537
        %v2860 = vunpack.c.h.b16 %v1537
        %v2861 = vunpack.c.l.b16 %v1538
        %v2862 = vunpack.c.h.b16 %v1538
        %v2863 = vunpack.c.l.b16 %v1539
        %v2864 = vunpack.c.h.b16 %v1539
        %v2865 = vunpack.c.l.b16 %v1540
        %v2866 = vunpack.c.h.b16 %v1540
        %v2867 = vunpack.c.l.b16 %v1541
        %v2868 = vunpack.c.h.b16 %v1541
        %v2869 = vunpack.c.l.b16 %v1542
        %v2870 = vunpack.c.h.b16 %v1542
        %v2871 = vunpack.c.l.b16 %v1543
        %v2872 = vunpack.c.h.b16 %v1543
        %v2873 = vunpack.c.l.b16 %v1544
        %v2874 = vunpack.c.h.b16 %v1544
        %v2875 = vunpack.c.l.b16 %v1545
        %v2876 = vunpack.c.h.b16 %v1545
        %v2877 = vunpack.c.l.b16 %v1546
        %v2878 = vunpack.c.h.b16 %v1546
        %v2879 = vunpack.c.l.b16 %v1547
        %v2880 = vunpack.c.h.b16 %v1547
        %v2881 = vunpack.c.l.b16 %v1548
        %v2882 = vunpack.c.h.b16 %v1548
        %v2883 = vunpack.c.l.b16 %v1549
        %v2884 = vunpack.c.h.b16 %v1549
        %v2885 = vunpack.c.l.b16 %v1550
        %v2886 = vunpack.c.h.b16 %v1550
        %v2887 = vunpack.c.l.b16 %v1551
        %v2888 = vunpack.c.h.b16 %v1551
        %v2889 = vunpack.c.l.b16 %v1552
        %v2890 = vunpack.c.h.b16 %v1552
        %v2891 = vunpack.c.l.b16 %v1553
        %v2892 = vunpack.c.h.b16 %v1553
        %v2893 = vunpack.c.l.b16 %v1554
        %v2894 = vunpack.c.h.b16 %v1554
        %v2895 = vunpack.c.l.b16 %v1555
        %v2896 = vunpack.c.h.b16 %v1555
        %v2897 = vunpack.c.l.b16 %v1556
        %v2898 = vunpack.c.h.b16 %v1556
        %v2899 = vunpack.c.l.b16 %v1557
        %v2900 = vunpack.c.h.b16 %v1557
        %v2901 = vunpack.c.l.b16 %v1558
        %v2902 = vunpack.c.h.b16 %v1558
        %v2903 = vunpack.c.l.b16 %v1559
        %v2904 = vunpack.c.h.b16 %v1559
        %v2905 = vunpack.c.l.b16 %v1560
        %v2906 = vunpack.c.h.b16 %v1560
        %v2907 = vunpack.c.l.b16 %v1561
        %v2908 = vunpack.c.h.b16 %v1561
        %v2909 = vunpack.c.l.b16 %v1562
        %v2910 = vunpack.c.h.b16 %v1562
        %v2911 = vunpack.c.l.b16 %v1563
        %v2912 = vunpack.c.h.b16 %v1563
        %v2913 = vunpack.c.l.b16 %v1564
        %v2914 = vunpack.c.h.b16 %v1564
        %v2915 = vunpack.c.l.b16 %v1565
        %v2916 = vunpack.c.h.b16 %v1565
        %v2917 = vunpack.c.l.b16 %v1566
        %v2918 = vunpack.c.h.b16 %v1566
        %v2919 = vunpack.c.l.b16 %v1567
        %v2920 = vunpack.c.h.b16 %v1567
        %v2921 = vunpack.c.l.b16 %v1568
        %v2922 = vunpack.c.h.b16 %v1568
        %v2923 = vunpack.c.l.b16 %v1569
        %v2924 = vunpack.c.h.b16 %v1569
        %v2925 = vunpack.c.l.b16 %v1570
        %v2926 = vunpack.c.h.b16 %v1570
        %v2927 = vunpack.c.l.b16 %v1571
        %v2928 = vunpack.c.h.b16 %v1571
        %v2929 = vunpack.c.l.b16 %v1572
        %v2930 = vunpack.c.h.b16 %v1572
        %v2931 = vunpack.c.l.b16 %v1573
        %v2932 = vunpack.c.h.b16 %v1573
        %v2933 = vunpack.c.l.b16 %v1574
        %v2934 = vunpack.c.h.b16 %v1574
        %v2935 = vunpack.c.l.b16 %v1575
        %v2936 = vunpack.c.h.b16 %v1575
        %v2937 = vunpack.c.l.b16 %v1576
        %v2938 = vunpack.c.h.b16 %v1576
        %v2939 = vunpack.c.l.b16 %v1577
        %v2940 = vunpack.c.h.b16 %v1577
        %v2941 = vunpack.c.l.b16 %v1578
        %v2942 = vunpack.c.h.b16 %v1578
        %v2943 = vunpack.c.l.b16 %v1579
        %v2944 = vunpack.c.h.b16 %v1579
        %v2945 = vunpack.c.l.b16 %v1580
        %v2946 = vunpack.c.h.b16 %v1580
        %v2947 = vunpack.c.l.b16 %v1581
        %v2948 = vunpack.c.h.b16 %v1581
        %v2949 = vunpack.c.l.b16 %v1582
        %v2950 = vunpack.c.h.b16 %v1582
        %v2951 = vunpack.c.l.b16 %v1583
        %v2952 = vunpack.c.h.b16 %v1583
        %v2953 = vunpack.c.l.b16 %v1584
        %v2954 = vunpack.c.h.b16 %v1584
        %v2955 = vunpack.c.l.b16 %v1585
        %v2956 = vunpack.c.h.b16 %v1585
        %v2957 = vunpack.c.l.b16 %v1586
        %v2958 = vunpack.c.h.b16 %v1586
        %v2959 = vunpack.c.l.b16 %v1587
        %v2960 = vunpack.c.h.b16 %v1587
        %v2961 = vunpack.c.l.b16 %v1588
        %v2962 = vunpack.c.h.b16 %v1588
        %v2963 = vunpack.c.l.b16 %v1589
        %v2964 = vunpack.c.h.b16 %v1589
        %v2965 = vunpack.c.l.b16 %v1590
        %v2966 = vunpack.c.h.b16 %v1590
        %v2967 = vunpack.c.l.b16 %v1591
        %v2968 = vunpack.c.h.b16 %v1591
        %v2969 = vunpack.c.l.b16 %v1592
        %v2970 = vunpack.c.h.b16 %v1592
        %v2971 = vunpack.c.l.b16 %v1593
        %v2972 = vunpack.c.h.b16 %v1593
        %v2973 = vunpack.c.l.b16 %v1594
        %v2974 = vunpack.c.h.b16 %v1594
        %v2975 = vunpack.c.l.b16 %v1595
        %v2976 = vunpack.c.h.b16 %v1595
        %v2977 = vunpack.c.l.b16 %v1596
        %v2978 = vunpack.c.h.b16 %v1596
        %v2979 = vunpack.c.l.b16 %v1597
        %v2980 = vunpack.c.h.b16 %v1597
        %v2981 = vunpack.c.l.b16 %v1598
        %v2982 = vunpack.c.h.b16 %v1598
        %v2983 = vunpack.c.l.b16 %v1599
        %v2984 = vunpack.c.h.b16 %v1599
        %v2985 = vunpack.c.l.b16 %v1600
        %v2986 = vunpack.c.h.b16 %v1600
        %v2987 = vunpack.c.l.b16 %v1601
        %v2988 = vunpack.c.h.b16 %v1601
        %v2989 = vunpack.c.l.b16 %v1602
        %v2990 = vunpack.c.h.b16 %v1602
        %v2991 = vunpack.c.l.b16 %v1603
        %v2992 = vunpack.c.h.b16 %v1603
        %v2993 = vunpack.c.l.b16 %v1604
        %v2994 = vunpack.c.h.b16 %v1604
        %v2995 = vunpack.c.l.b16 %v1605
        %v2996 = vunpack.c.h.b16 %v1605
        %v2997 = vunpack.c.l.b16 %v1606
        %v2998 = vunpack.c.h.b16 %v1606
        %v2999 = vunpack.c.l.b16 %v1607
        %v3000 = vunpack.c.h.b16 %v1607
        %v3001 = vunpack.c.l.b16 %v1608
        %v3002 = vunpack.c.h.b16 %v1608
        %v3003 = vunpack.c.l.b16 %v1609
        %v3004 = vunpack.c.h.b16 %v1609
        %v3005 = vunpack.c.l.b16 %v1610
        %v3006 = vunpack.c.h.b16 %v1610
        %v3007 = vunpack.c.l.b16 %v1611
        %v3008 = vunpack.c.h.b16 %v1611
        %v3009 = vunpack.c.l.b16 %v1612
        %v3010 = vunpack.c.h.b16 %v1612
        %v3011 = vunpack.c.l.b16 %v1613
        %v3012 = vunpack.c.h.b16 %v1613
        %v3013 = vunpack.c.l.b16 %v1614
        %v3014 = vunpack.c.h.b16 %v1614
        %v3015 = vunpack.c.l.b16 %v1615
        %v3016 = vunpack.c.h.b16 %v1615
        %v3017 = vunpack.c.l.b16 %v1616
        %v3018 = vunpack.c.h.b16 %v1616
        %v3019 = vunpack.c.l.b16 %v1617
        %v3020 = vunpack.c.h.b16 %v1617
        %v3021 = vunpack.c.l.b16 %v1618
        %v3022 = vunpack.c.h.b16 %v1618
        %v3023 = vunpack.c.l.b16 %v1619
        %v3024 = vunpack.c.h.b16 %v1619
        %v3025 = vunpack.c.l.b16 %v1620
        %v3026 = vunpack.c.h.b16 %v1620
        %v3027 = vunpack.c.l.b16 %v1621
        %v3028 = vunpack.c.h.b16 %v1621
        %v3029 = vunpack.c.l.b16 %v1622
        %v3030 = vunpack.c.h.b16 %v1622
        %v3031 = vunpack.c.l.b16 %v1623
        %v3032 = vunpack.c.h.b16 %v1623
        %v3033 = vunpack.c.l.b16 %v1624
        %v3034 = vunpack.c.h.b16 %v1624
        %v3035 = vunpack.c.l.b16 %v1625
        %v3036 = vunpack.c.h.b16 %v1625
        %v3037 = vunpack.c.l.b16 %v1626
        %v3038 = vunpack.c.h.b16 %v1626
        %v3039 = vunpack.c.l.b16 %v1627
        %v3040 = vunpack.c.h.b16 %v1627
        %v3041 = vunpack.c.l.b16 %v1628
        %v3042 = vunpack.c.h.b16 %v1628
        %v3043 = vunpack.c.l.b16 %v1629
        %v3044 = vunpack.c.h.b16 %v1629
        %v3045 = vunpack.c.l.b16 %v1630
        %v3046 = vunpack.c.h.b16 %v1630
        %v3047 = vunpack.c.l.b16 %v1631
        %v3048 = vunpack.c.h.b16 %v1631
        %v3049 = vunpack.c.l.b16 %v1632
        %v3050 = vunpack.c.h.b16 %v1632
        %v3051 = vunpack.c.l.b16 %v1633
        %v3052 = vunpack.c.h.b16 %v1633
        %v3053 = vunpack.c.l.b16 %v1634
        %v3054 = vunpack.c.h.b16 %v1634
        %v3055 = vunpack.c.l.b16 %v1635
        %v3056 = vunpack.c.h.b16 %v1635
        %v3057 = vunpack.c.l.b16 %v1636
        %v3058 = vunpack.c.h.b16 %v1636
        %v3059 = vunpack.c.l.b16 %v1637
        %v3060 = vunpack.c.h.b16 %v1637
        %v3061 = vunpack.c.l.b16 %v1638
        %v3062 = vunpack.c.h.b16 %v1638
        %v3063 = vunpack.c.l.b16 %v1639
        %v3064 = vunpack.c.h.b16 %v1639
        %v3065 = vunpack.c.l.b16 %v1640
        %v3066 = vunpack.c.h.b16 %v1640
        %v3067 = vunpack.c.l.b16 %v1641
        %v3068 = vunpack.c.h.b16 %v1641
        %v3069 = vunpack.c.l.b16 %v1642
        %v3070 = vunpack.c.h.b16 %v1642
        %v3071 = vunpack.c.l.b16 %v1643
        %v3072 = vunpack.c.h.b16 %v1643
        %v3073 = vunpack.c.l.b16 %v1644
        %v3074 = vunpack.c.h.b16 %v1644
        %v3075 = vunpack.c.l.b16 %v1645
        %v3076 = vunpack.c.h.b16 %v1645
        %v3077 = vunpack.c.l.b16 %v1646
        %v3078 = vunpack.c.h.b16 %v1646
        %v3079 = vunpack.c.l.b16 %v1647
        %v3080 = vunpack.c.h.b16 %v1647
        %v3081 = vunpack.c.l.b16 %v1648
        %v3082 = vunpack.c.h.b16 %v1648
        %v3083 = vunpack.c.l.b16 %v1649
        %v3084 = vunpack.c.h.b16 %v1649
        %v3085 = vunpack.c.l.b16 %v1650
        %v3086 = vunpack.c.h.b16 %v1650
        %v3087 = vunpack.c.l.b16 %v1651
        %v3088 = vunpack.c.h.b16 %v1651
        %v3089 = vunpack.c.l.b16 %v1652
        %v3090 = vunpack.c.h.b16 %v1652
        %v3091 = vunpack.c.l.b16 %v1653
        %v3092 = vunpack.c.h.b16 %v1653
        %v3093 = vunpack.c.l.b16 %v1654
        %v3094 = vunpack.c.h.b16 %v1654
        %v3095 = vunpack.c.l.b16 %v1655
        %v3096 = vunpack.c.h.b16 %v1655
        %v3097 = vunpack.c.l.b16 %v1656
        %v3098 = vunpack.c.h.b16 %v1656
        %v3099 = vunpack.c.l.b16 %v1657
        %v3100 = vunpack.c.h.b16 %v1657
        %v3101 = vunpack.c.l.b16 %v1658
        %v3102 = vunpack.c.h.b16 %v1658
        %v3103 = vunpack.c.l.b16 %v1659
        %v3104 = vunpack.c.h.b16 %v1659
        %v3105 = vunpack.c.l.b16 %v1660
        %v3106 = vunpack.c.h.b16 %v1660
        %v3107 = vunpack.c.l.b16 %v1661
        %v3108 = vunpack.c.h.b16 %v1661
        %v3109 = vunpack.c.l.b16 %v1662
        %v3110 = vunpack.c.h.b16 %v1662
        %v3111 = vunpack.c.l.b16 %v1663
        %v3112 = vunpack.c.h.b16 %v1663
        %v3113 = vunpack.c.l.b16 %v1664
        %v3114 = vunpack.c.h.b16 %v1664
        %v3115 = vunpack.c.l.b16 %v1665
        %v3116 = vunpack.c.h.b16 %v1665
        %v3117 = vunpack.c.l.b16 %v1666
        %v3118 = vunpack.c.h.b16 %v1666
        %v3119 = vunpack.c.l.b16 %v1667
        %v3120 = vunpack.c.h.b16 %v1667
        %v3121 = vunpack.c.l.b16 %v1668
        %v3122 = vunpack.c.h.b16 %v1668
        %v3123 = vunpack.c.l.b16 %v1669
        %v3124 = vunpack.c.h.b16 %v1669
        %v3125 = vunpack.c.l.b16 %v1670
        %v3126 = vunpack.c.h.b16 %v1670
        %v3127 = vunpack.c.l.b16 %v1671
        %v3128 = vunpack.c.h.b16 %v1671
        %v3129 = vunpack.c.l.b16 %v1672
        %v3130 = vunpack.c.h.b16 %v1672
        %v3131 = vunpack.c.l.b16 %v1673
        %v3132 = vunpack.c.h.b16 %v1673
        %v3133 = vunpack.c.l.b16 %v1674
        %v3134 = vunpack.c.h.b16 %v1674
        %v3135 = vunpack.c.l.b16 %v1675
        %v3136 = vunpack.c.h.b16 %v1675
        %v3137 = vunpack.c.l.b16 %v1676
        %v3138 = vunpack.c.h.b16 %v1676
        %v3139 = vunpack.c.l.b16 %v1677
        %v3140 = vunpack.c.h.b16 %v1677
        %v3141 = vunpack.c.l.b16 %v1678
        %v3142 = vunpack.c.h.b16 %v1678
        %v3143 = vunpack.c.l.b16 %v1679
        %v3144 = vunpack.c.h.b16 %v1679
        %v3145 = vunpack.c.l.b16 %v1680
        %v3146 = vunpack.c.h.b16 %v1680
        %v3147 = vunpack.c.l.b16 %v1681
        %v3148 = vunpack.c.h.b16 %v1681
        %v3149 = vunpack.c.l.b16 %v1682
        %v3150 = vunpack.c.h.b16 %v1682
        %v3151 = vunpack.c.l.b16 %v1683
        %v3152 = vunpack.c.h.b16 %v1683
        %v3153 = vunpack.c.l.b16 %v1684
        %v3154 = vunpack.c.h.b16 %v1684
        %v3155 = vunpack.c.l.b16 %v1685
        %v3156 = vunpack.c.h.b16 %v1685
        %v3157 = vunpack.c.l.b16 %v1686
        %v3158 = vunpack.c.h.b16 %v1686
        %v3159 = vunpack.c.l.b16 %v1687
        %v3160 = vunpack.c.h.b16 %v1687
        %v3161 = vunpack.c.l.b16 %v1688
        %v3162 = vunpack.c.h.b16 %v1688
        %v3163 = vunpack.c.l.b16 %v1689
        %v3164 = vunpack.c.h.b16 %v1689
        %v3165 = vunpack.c.l.b16 %v1690
        %v3166 = vunpack.c.h.b16 %v1690
        %v3167 = vunpack.c.l.b16 %v1691
        %v3168 = vunpack.c.h.b16 %v1691
        %v3169 = vunpack.c.l.b16 %v1692
        %v3170 = vunpack.c.h.b16 %v1692
        %v3171 = vunpack.c.l.b16 %v1693
        %v3172 = vunpack.c.h.b16 %v1693
        %v3173 = vunpack.c.l.b16 %v1694
        %v3174 = vunpack.c.h.b16 %v1694
        %v3175 = vunpack.c.l.b16 %v1695
        %v3176 = vunpack.c.h.b16 %v1695
        %v3177 = vunpack.c.l.b16 %v1696
        %v3178 = vunpack.c.h.b16 %v1696
        %v3179 = vunpack.c.l.b16 %v1697
        %v3180 = vunpack.c.h.b16 %v1697
        %v3181 = vunpack.c.l.b16 %v1698
        %v3182 = vunpack.c.h.b16 %v1698
        %v3183 = vunpack.c.l.b16 %v1699
        %v3184 = vunpack.c.h.b16 %v1699
        %v3185 = vunpack.c.l.b16 %v1700
        %v3186 = vunpack.c.h.b16 %v1700
        %v3187 = vunpack.c.l.b16 %v1701
        %v3188 = vunpack.c.h.b16 %v1701
        %v3189 = vunpack.c.l.b16 %v1702
        %v3190 = vunpack.c.h.b16 %v1702
        %v3191 = vunpack.c.l.b16 %v1703
        %v3192 = vunpack.c.h.b16 %v1703
        %v3193 = vunpack.c.l.b16 %v1704
        %v3194 = vunpack.c.h.b16 %v1704
        %v3195 = vunpack.c.l.b16 %v1705
        %v3196 = vunpack.c.h.b16 %v1705
        %v3197 = vunpack.c.l.b16 %v1706
        %v3198 = vunpack.c.h.b16 %v1706
        %v3199 = vunpack.c.l.b16 %v1707
        %v3200 = vunpack.c.h.b16 %v1707
        %v3201 = vunpack.c.l.b16 %v1708
        %v3202 = vunpack.c.h.b16 %v1708
        %v3203 = vunpack.c.l.b16 %v1709
        %v3204 = vunpack.c.h.b16 %v1709
        %v3205 = vunpack.c.l.b16 %v1710
        %v3206 = vunpack.c.h.b16 %v1710
        %v3207 = vunpack.c.l.b16 %v1711
        %v3208 = vunpack.c.h.b16 %v1711
        %v3209 = vunpack.c.l.b16 %v1712
        %v3210 = vunpack.c.h.b16 %v1712
        %v3211 = vunpack.c.l.b16 %v1713
        %v3212 = vunpack.c.h.b16 %v1713
        %v3213 = vunpack.c.l.b16 %v1714
        %v3214 = vunpack.c.h.b16 %v1714
        %v3215 = vunpack.c.l.b16 %v1715
        %v3216 = vunpack.c.h.b16 %v1715
        %v3217 = vunpack.c.l.b16 %v1716
        %v3218 = vunpack.c.h.b16 %v1716
        %v3219 = vunpack.c.l.b16 %v1717
        %v3220 = vunpack.c.h.b16 %v1717
        %v3221 = vunpack.c.l.b16 %v1718
        %v3222 = vunpack.c.h.b16 %v1718
        %v3223 = vunpack.c.l.b16 %v1719
        %v3224 = vunpack.c.h.b16 %v1719
        %v3225 = vunpack.c.l.b16 %v1720
        %v3226 = vunpack.c.h.b16 %v1720
        %v3227 = vunpack.c.l.b16 %v1721
        %v3228 = vunpack.c.h.b16 %v1721
        %v3229 = vunpack.c.l.b16 %v1722
        %v3230 = vunpack.c.h.b16 %v1722
        %v3231 = vunpack.c.l.b16 %v1723
        %v3232 = vunpack.c.h.b16 %v1723
        %v3233 = vunpack.c.l.b16 %v1724
        %v3234 = vunpack.c.h.b16 %v1724
        %v3235 = vunpack.c.l.b16 %v1725
        %v3236 = vunpack.c.h.b16 %v1725
        %v3237 = vunpack.c.l.b16 %v1726
        %v3238 = vunpack.c.h.b16 %v1726
        %v3239 = vunpack.c.l.b16 %v1727
        %v3240 = vunpack.c.h.b16 %v1727
        %v3241 = vunpack.c.l.b16 %v1728
        %v3242 = vunpack.c.h.b16 %v1728
        %v3243 = vunpack.c.l.b16 %v1729
        %v3244 = vunpack.c.h.b16 %v1729
        %v3245 = vunpack.c.l.b16 %v1730
        %v3246 = vunpack.c.h.b16 %v1730
        %v3247 = vunpack.c.l.b16 %v1731
        %v3248 = vunpack.c.h.b16 %v1731
        %v3249 = vunpack.c.l.b16 %v1732
        %v3250 = vunpack.c.h.b16 %v1732
        %v3251 = vunpack.c.l.b16 %v1733
        %v3252 = vunpack.c.h.b16 %v1733
        %v3253 = vunpack.c.l.b16 %v1734
        %v3254 = vunpack.c.h.b16 %v1734
        %v3255 = vunpack.c.l.b16 %v1735
        %v3256 = vunpack.c.h.b16 %v1735
        %v3257 = vunpack.c.l.b16 %v1736
        %v3258 = vunpack.c.h.b16 %v1736
        %v3259 = vunpack.c.l.b16 %v1737
        %v3260 = vunpack.c.h.b16 %v1737
        %v3261 = vunpack.c.l.b16 %v1738
        %v3262 = vunpack.c.h.b16 %v1738
        %v3263 = vunpack.c.l.b16 %v1739
        %v3264 = vunpack.c.h.b16 %v1739
        %v3265 = vunpack.c.l.b16 %v1740
        %v3266 = vunpack.c.h.b16 %v1740
        %v3267 = vunpack.c.l.b16 %v1741
        %v3268 = vunpack.c.h.b16 %v1741
        %v3269 = vunpack.c.l.b16 %v1742
        %v3270 = vunpack.c.h.b16 %v1742
        %v3271 = vunpack.c.l.b16 %v1743
        %v3272 = vunpack.c.h.b16 %v1743
        %v3273 = vunpack.c.l.b16 %v1744
        %v3274 = vunpack.c.h.b16 %v1744
        %v3275 = vunpack.c.l.b16 %v1745
        %v3276 = vunpack.c.h.b16 %v1745
        %v3277 = vunpack.c.l.b16 %v1746
        %v3278 = vunpack.c.h.b16 %v1746
        %v3279 = vunpack.c.l.b16 %v1747
        %v3280 = vunpack.c.h.b16 %v1747
        %v3281 = vunpack.c.l.b16 %v1748
        %v3282 = vunpack.c.h.b16 %v1748
        %v3283 = vunpack.c.l.b16 %v1749
        %v3284 = vunpack.c.h.b16 %v1749
        %v3285 = vunpack.c.l.b16 %v1750
        %v3286 = vunpack.c.h.b16 %v1750
        %v3287 = vunpack.c.l.b16 %v1751
        %v3288 = vunpack.c.h.b16 %v1751
        %v3289 = vunpack.c.l.b16 %v1752
        %v3290 = vunpack.c.h.b16 %v1752
        %v3291 = vunpack.c.l.b16 %v1753
        %v3292 = vunpack.c.h.b16 %v1753
        %v3293 = vunpack.c.l.b16 %v1754
        %v3294 = vunpack.c.h.b16 %v1754
        %v3295 = vunpack.c.l.b16 %v1755
        %v3296 = vunpack.c.h.b16 %v1755
        %v3297 = vunpack.c.l.b16 %v1756
        %v3298 = vunpack.c.h.b16 %v1756
        %v3299 = vunpack.c.l.b16 %v1757
        %v3300 = vunpack.c.h.b16 %v1757
        %v3301 = vunpack.c.l.b16 %v1758
        %v3302 = vunpack.c.h.b16 %v1758
        %v3303 = vunpack.c.l.b16 %v1759
        %v3304 = vunpack.c.h.b16 %v1759
        %v3305 = vunpack.c.l.b16 %v1760
        %v3306 = vunpack.c.h.b16 %v1760
        %v3307 = vunpack.c.l.b16 %v1761
        %v3308 = vunpack.c.h.b16 %v1761
        %v3309 = vunpack.c.l.b16 %v1762
        %v3310 = vunpack.c.h.b16 %v1762
        %v3311 = vunpack.c.l.b16 %v1763
        %v3312 = vunpack.c.h.b16 %v1763
        %v3313 = vunpack.c.l.b16 %v1764
        %v3314 = vunpack.c.h.b16 %v1764
        %v3315 = vunpack.c.l.b16 %v1765
        %v3316 = vunpack.c.h.b16 %v1765
        %v3317 = vunpack.c.l.b16 %v1766
        %v3318 = vunpack.c.h.b16 %v1766
        %v3319 = vunpack.c.l.b16 %v1767
        %v3320 = vunpack.c.h.b16 %v1767
        %v3321 = vunpack.c.l.b16 %v1768
        %v3322 = vunpack.c.h.b16 %v1768
        %v3323 = vunpack.c.l.b16 %v1769
        %v3324 = vunpack.c.h.b16 %v1769
        %v3325 = vunpack.c.l.b16 %v1770
        %v3326 = vunpack.c.h.b16 %v1770
        %v3327 = vunpack.c.l.b16 %v1771
        %v3328 = vunpack.c.h.b16 %v1771
        %v3329 = vunpack.c.l.b16 %v1772
        %v3330 = vunpack.c.h.b16 %v1772
        %v3331 = vunpack.c.l.b16 %v1773
        %v3332 = vunpack.c.h.b16 %v1773
        %v3333 = vunpack.c.l.b16 %v1774
        %v3334 = vunpack.c.h.b16 %v1774
        %v3335 = vunpack.c.l.b16 %v1775
        %v3336 = vunpack.c.h.b16 %v1775
        %v3337 = vunpack.c.l.b16 %v1776
        %v3338 = vunpack.c.h.b16 %v1776
        %v3339 = vunpack.c.l.b16 %v1777
        %v3340 = vunpack.c.h.b16 %v1777
        %v3341 = vunpack.c.l.b16 %v1778
        %v3342 = vunpack.c.h.b16 %v1778
        %v3343 = vunpack.c.l.b16 %v1779
        %v3344 = vunpack.c.h.b16 %v1779
        %v3345 = vunpack.c.l.b16 %v1780
        %v3346 = vunpack.c.h.b16 %v1780
        %v3347 = vunpack.c.l.b16 %v1781
        %v3348 = vunpack.c.h.b16 %v1781
        %v3349 = vunpack.c.l.b16 %v1782
        %v3350 = vunpack.c.h.b16 %v1782
        %v3351 = vunpack.c.l.b16 %v1783
        %v3352 = vunpack.c.h.b16 %v1783
        %v3353 = vunpack.c.l.b16 %v1784
        %v3354 = vunpack.c.h.b16 %v1784
        %v3355 = vunpack.c.l.b16 %v1785
        %v3356 = vunpack.c.h.b16 %v1785
        %v3357 = vunpack.c.l.b16 %v1786
        %v3358 = vunpack.c.h.b16 %v1786
        %v3359 = vunpack.c.l.b16 %v1787
        %v3360 = vunpack.c.h.b16 %v1787
        %v3361 = vunpack.c.l.b16 %v1788
        %v3362 = vunpack.c.h.b16 %v1788
        %v3363 = vunpack.c.l.b16 %v1789
        %v3364 = vunpack.c.h.b16 %v1789
        %v3365 = vunpack.c.l.b16 %v1790
        %v3366 = vunpack.c.h.b16 %v1790
        %v3367 = vunpack.c.l.b16 %v1791
        %v3368 = vunpack.c.h.b16 %v1791
        %v3369 = vunpack.c.l.b16 %v1792
        %v3370 = vunpack.c.h.b16 %v1792
        %v3371 = vunpack.c.l.b16 %v1793
        %v3372 = vunpack.c.h.b16 %v1793
        %v3373 = vunpack.c.l.b16 %v1794
        %v3374 = vunpack.c.h.b16 %v1794
        %v3375 = vunpack.c.l.b16 %v1795
        %v3376 = vunpack.c.h.b16 %v1795
        %v3377 = vunpack.c.l.b16 %v1796
        %v3378 = vunpack.c.h.b16 %v1796
        %v3379 = vunpack.c.l.b16 %v1797
        %v3380 = vunpack.c.h.b16 %v1797
        %v3381 = vunpack.c.l.b16 %v1798
        %v3382 = vunpack.c.h.b16 %v1798
        %v3383 = vunpack.c.l.b16 %v1799
        %v3384 = vunpack.c.h.b16 %v1799
        %v3385 = vunpack.c.l.b16 %v1800
        %v3386 = vunpack.c.h.b16 %v1800
        %v3387 = vunpack.c.l.b16 %v1801
        %v3388 = vunpack.c.h.b16 %v1801
        %v3389 = vunpack.c.l.b16 %v1802
        %v3390 = vunpack.c.h.b16 %v1802
        %v3391 = vunpack.c.l.b16 %v1803
        %v3392 = vunpack.c.h.b16 %v1803
        %v3393 = vunpack.c.l.b16 %v1804
        %v3394 = vunpack.c.h.b16 %v1804
        %v3395 = vunpack.c.l.b16 %v1805
        %v3396 = vunpack.c.h.b16 %v1805
        %v3397 = vunpack.c.l.b16 %v1806
        %v3398 = vunpack.c.h.b16 %v1806
        %v3399 = vunpack.c.l.b16 %v1807
        %v3400 = vunpack.c.h.b16 %v1807
        %v3401 = vunpack.c.l.b16 %v1808
        %v3402 = vunpack.c.h.b16 %v1808
        %v3403 = vunpack.c.l.b16 %v1809
        %v3404 = vunpack.c.h.b16 %v1809
        %v3405 = vunpack.c.l.b16 %v1810
        %v3406 = vunpack.c.h.b16 %v1810
        %v3407 = vunpack.c.l.b16 %v1811
        %v3408 = vunpack.c.h.b16 %v1811
        %v3409 = vunpack.c.l.b16 %v1812
        %v3410 = vunpack.c.h.b16 %v1812
        %v3411 = vunpack.c.l.b16 %v1813
        %v3412 = vunpack.c.h.b16 %v1813
        %v3413 = vunpack.c.l.b16 %v1814
        %v3414 = vunpack.c.h.b16 %v1814
        %v3415 = vunpack.c.l.b16 %v1815
        %v3416 = vunpack.c.h.b16 %v1815
        %v3417 = vunpack.c.l.b16 %v1816
        %v3418 = vunpack.c.h.b16 %v1816
        %v3419 = vunpack.c.l.b16 %v1817
        %v3420 = vunpack.c.h.b16 %v1817
        %v3421 = vunpack.c.l.b16 %v1818
        %v3422 = vunpack.c.h.b16 %v1818
        %v3423 = vunpack.c.l.b16 %v1819
        %v3424 = vunpack.c.h.b16 %v1819
        %v3425 = vunpack.c.l.b16 %v1820
        %v3426 = vunpack.c.h.b16 %v1820
        %v3427 = vunpack.c.l.b16 %v1821
        %v3428 = vunpack.c.h.b16 %v1821
        %v3429 = vunpack.c.l.b16 %v1822
        %v3430 = vunpack.c.h.b16 %v1822
        %v3431 = vunpack.c.l.b16 %v1823
        %v3432 = vunpack.c.h.b16 %v1823
        %v3433 = vunpack.c.l.b16 %v1824
        %v3434 = vunpack.c.h.b16 %v1824
        %v3435 = vunpack.c.l.b16 %v1825
        %v3436 = vunpack.c.h.b16 %v1825
        %v3437 = vunpack.c.l.b16 %v1826
        %v3438 = vunpack.c.h.b16 %v1826
        %v3439 = vunpack.c.l.b16 %v1827
        %v3440 = vunpack.c.h.b16 %v1827
        %v3441 = vunpack.c.l.b16 %v1828
        %v3442 = vunpack.c.h.b16 %v1828
        %v3443 = vunpack.c.l.b16 %v1829
        %v3444 = vunpack.c.h.b16 %v1829
        %v3445 = vunpack.c.l.b16 %v1830
        %v3446 = vunpack.c.h.b16 %v1830
        %v3447 = vunpack.c.l.b16 %v1831
        %v3448 = vunpack.c.h.b16 %v1831
        %v3449 = vunpack.c.l.b16 %v1832
        %v3450 = vunpack.c.h.b16 %v1832
        %v3451 = vunpack.c.l.b16 %v1833
        %v3452 = vunpack.c.h.b16 %v1833
        %v3453 = vunpack.c.l.b16 %v1834
        %v3454 = vunpack.c.h.b16 %v1834
        %v3455 = vunpack.c.l.b16 %v1835
        %v3456 = vunpack.c.h.b16 %v1835
        %v3457 = vunpack.c.l.b16 %v1836
        %v3458 = vunpack.c.h.b16 %v1836
        %v3459 = vunpack.c.l.b16 %v1837
        %v3460 = vunpack.c.h.b16 %v1837
        %v3461 = vunpack.c.l.b16 %v1838
        %v3462 = vunpack.c.h.b16 %v1838
        %v3463 = vunpack.c.l.b16 %v1839
        %v3464 = vunpack.c.h.b16 %v1839
        %v3465 = vunpack.c.l.b16 %v1840
        %v3466 = vunpack.c.h.b16 %v1840
        %v3467 = vunpack.c.l.b16 %v1841
        %v3468 = vunpack.c.h.b16 %v1841
        %v3469 = vunpack.c.l.b16 %v1842
        %v3470 = vunpack.c.h.b16 %v1842
        %v3471 = vunpack.c.l.b16 %v1843
        %v3472 = vunpack.c.h.b16 %v1843
        %v3473 = vunpack.c.l.b16 %v1844
        %v3474 = vunpack.c.h.b16 %v1844
        %v3475 = vunpack.c.l.b16 %v1845
        %v3476 = vunpack.c.h.b16 %v1845
        %v3477 = vunpack.c.l.b16 %v1846
        %v3478 = vunpack.c.h.b16 %v1846
        %v3479 = vunpack.c.l.b16 %v1847
        %v3480 = vunpack.c.h.b16 %v1847
        %v3481 = vunpack.c.l.b16 %v1848
        %v3482 = vunpack.c.h.b16 %v1848
        %v3483 = vunpack.c.l.b16 %v1849
        %v3484 = vunpack.c.h.b16 %v1849
        %v3485 = vunpack.c.l.b16 %v1850
        %v3486 = vunpack.c.h.b16 %v1850
        %v3487 = vunpack.c.l.b16 %v1851
        %v3488 = vunpack.c.h.b16 %v1851
        %v3489 = vunpack.c.l.b16 %v1852
        %v3490 = vunpack.c.h.b16 %v1852
        %v3491 = vunpack.c.l.b16 %v1853
        %v3492 = vunpack.c.h.b16 %v1853
        %v3493 = vunpack.c.l.b16 %v1854
        %v3494 = vunpack.c.h.b16 %v1854
        %v3495 = vpack.c.b16 %v2487, %v2471
        %v3496 = vpack.c.b16 %v2488, %v2472
        %v3497 = vpack.c.b16 %v2489, %v2473
        %v3498 = vpack.c.b16 %v2490, %v2474
        %v3499 = vpack.c.b16 %v2491, %v2475
        %v3500 = vpack.c.b16 %v2492, %v2476
        %v3501 = vpack.c.b16 %v2493, %v2477
        %v3502 = vpack.c.b16 %v2494, %v2478
        %v3503 = vpack.c.b16 %v2495, %v2479
        %v3504 = vpack.c.b16 %v2496, %v2480
        %v3505 = vpack.c.b16 %v2497, %v2481
        %v3506 = vpack.c.b16 %v2498, %v2482
        %v3507 = vpack.c.b16 %v2499, %v2483
        %v3508 = vpack.c.b16 %v2500, %v2484
        %v3509 = vpack.c.b16 %v2501, %v2485
        %v3510 = vpack.c.b16 %v2502, %v2486
        %v3511 = vpack.c.b16 %v2519, %v2503
        %v3512 = vpack.c.b16 %v2520, %v2504
        %v3513 = vpack.c.b16 %v2521, %v2505
        %v3514 = vpack.c.b16 %v2522, %v2506
        %v3515 = vpack.c.b16 %v2523, %v2507
        %v3516 = vpack.c.b16 %v2524, %v2508
        %v3517 = vpack.c.b16 %v2525, %v2509
        %v3518 = vpack.c.b16 %v2526, %v2510
        %v3519 = vpack.c.b16 %v2527, %v2511
        %v3520 = vpack.c.b16 %v2528, %v2512
        %v3521 = vpack.c.b16 %v2529, %v2513
        %v3522 = vpack.c.b16 %v2530, %v2514
        %v3523 = vpack.c.b16 %v2531, %v2515
        %v3524 = vpack.c.b16 %v2532, %v2516
        %v3525 = vpack.c.b16 %v2533, %v2517
        %v3526 = vpack.c.b16 %v2534, %v2518
        %v3527 = vpack.c.b16 %v2551, %v2535
        %v3528 = vpack.c.b16 %v2552, %v2536
        %v3529 = vpack.c.b16 %v2553, %v2537
        %v3530 = vpack.c.b16 %v2554, %v2538
        %v3531 = vpack.c.b16 %v2555, %v2539
        %v3532 = vpack.c.b16 %v2556, %v2540
        %v3533 = vpack.c.b16 %v2557, %v2541
        %v3534 = vpack.c.b16 %v2558, %v2542
        %v3535 = vpack.c.b16 %v2559, %v2543
        %v3536 = vpack.c.b16 %v2560, %v2544
        %v3537 = vpack.c.b16 %v2561, %v2545
        %v3538 = vpack.c.b16 %v2562, %v2546
        %v3539 = vpack.c.b16 %v2563, %v2547
        %v3540 = vpack.c.b16 %v2564, %v2548
        %v3541 = vpack.c.b16 %v2565, %v2549
        %v3542 = vpack.c.b16 %v2566, %v2550
        %v3543 = vpack.c.b16 %v2583, %v2567
        %v3544 = vpack.c.b16 %v2584, %v2568
        %v3545 = vpack.c.b16 %v2585, %v2569
        %v3546 = vpack.c.b16 %v2586, %v2570
        %v3547 = vpack.c.b16 %v2587, %v2571
        %v3548 = vpack.c.b16 %v2588, %v2572
        %v3549 = vpack.c.b16 %v2589, %v2573
        %v3550 = vpack.c.b16 %v2590, %v2574
        %v3551 = vpack.c.b16 %v2591, %v2575
        %v3552 = vpack.c.b16 %v2592, %v2576
        %v3553 = vpack.c.b16 %v2593, %v2577
        %v3554 = vpack.c.b16 %v2594, %v2578
        %v3555 = vpack.c.b16 %v2595, %v2579
        %v3556 = vpack.c.b16 %v2596, %v2580
        %v3557 = vpack.c.b16 %v2597, %v2581
        %v3558 = vpack.c.b16 %v2598, %v2582
        %v3559 = vpack.c.b16 %v2615, %v2599
        %v3560 = vpack.c.b16 %v2616, %v2600
        %v3561 = vpack.c.b16 %v2617, %v2601
        %v3562 = vpack.c.b16 %v2618, %v2602
        %v3563 = vpack.c.b16 %v2619, %v2603
        %v3564 = vpack.c.b16 %v2620, %v2604
        %v3565 = vpack.c.b16 %v2621, %v2605
        %v3566 = vpack.c.b16 %v2622, %v2606
        %v3567 = vpack.c.b16 %v2623, %v2607
        %v3568 = vpack.c.b16 %v2624, %v2608
        %v3569 = vpack.c.b16 %v2625, %v2609
        %v3570 = vpack.c.b16 %v2626, %v2610
        %v3571 = vpack.c.b16 %v2627, %v2611
        %v3572 = vpack.c.b16 %v2628, %v2612
        %v3573 = vpack.c.b16 %v2629, %v2613
        %v3574 = vpack.c.b16 %v2630, %v2614
        %v3575 = vpack.c.b16 %v2647, %v2631
        %v3576 = vpack.c.b16 %v2648, %v2632
        %v3577 = vpack.c.b16 %v2649, %v2633
        %v3578 = vpack.c.b16 %v2650, %v2634
        %v3579 = vpack.c.b16 %v2651, %v2635
        %v3580 = vpack.c.b16 %v2652, %v2636
        %v3581 = vpack.c.b16 %v2653, %v2637
        %v3582 = vpack.c.b16 %v2654, %v2638
        %v3583 = vpack.c.b16 %v2655, %v2639
        %v3584 = vpack.c.b16 %v2656, %v2640
        %v3585 = vpack.c.b16 %v2657, %v2641
        %v3586 = vpack.c.b16 %v2658, %v2642
        %v3587 = vpack.c.b16 %v2659, %v2643
        %v3588 = vpack.c.b16 %v2660, %v2644
        %v3589 = vpack.c.b16 %v2661, %v2645
        %v3590 = vpack.c.b16 %v2662, %v2646
        %v3591 = vpack.c.b16 %v2679, %v2663
        %v3592 = vpack.c.b16 %v2680, %v2664
        %v3593 = vpack.c.b16 %v2681, %v2665
        %v3594 = vpack.c.b16 %v2682, %v2666
        %v3595 = vpack.c.b16 %v2683, %v2667
        %v3596 = vpack.c.b16 %v2684, %v2668
        %v3597 = vpack.c.b16 %v2685, %v2669
        %v3598 = vpack.c.b16 %v2686, %v2670
        %v3599 = vpack.c.b16 %v2687, %v2671
        %v3600 = vpack.c.b16 %v2688, %v2672
        %v3601 = vpack.c.b16 %v2689, %v2673
        %v3602 = vpack.c.b16 %v2690, %v2674
        %v3603 = vpack.c.b16 %v2691, %v2675
        %v3604 = vpack.c.b16 %v2692, %v2676
        %v3605 = vpack.c.b16 %v2693, %v2677
        %v3606 = vpack.c.b16 %v2694, %v2678
        %v3607 = vpack.c.b16 %v2711, %v2695
        %v3608 = vpack.c.b16 %v2712, %v2696
        %v3609 = vpack.c.b16 %v2713, %v2697
        %v3610 = vpack.c.b16 %v2714, %v2698
        %v3611 = vpack.c.b16 %v2715, %v2699
        %v3612 = vpack.c.b16 %v2716, %v2700
        %v3613 = vpack.c.b16 %v2717, %v2701
        %v3614 = vpack.c.b16 %v2718, %v2702
        %v3615 = vpack.c.b16 %v2719, %v2703
        %v3616 = vpack.c.b16 %v2720, %v2704
        %v3617 = vpack.c.b16 %v2721, %v2705
        %v3618 = vpack.c.b16 %v2722, %v2706
        %v3619 = vpack.c.b16 %v2723, %v2707
        %v3620 = vpack.c.b16 %v2724, %v2708
        %v3621 = vpack.c.b16 %v2725, %v2709
        %v3622 = vpack.c.b16 %v2726, %v2710
        %v3623 = vpack.c.b16 %v2743, %v2727
        %v3624 = vpack.c.b16 %v2744, %v2728
        %v3625 = vpack.c.b16 %v2745, %v2729
        %v3626 = vpack.c.b16 %v2746, %v2730
        %v3627 = vpack.c.b16 %v2747, %v2731
        %v3628 = vpack.c.b16 %v2748, %v2732
        %v3629 = vpack.c.b16 %v2749, %v2733
        %v3630 = vpack.c.b16 %v2750, %v2734
        %v3631 = vpack.c.b16 %v2751, %v2735
        %v3632 = vpack.c.b16 %v2752, %v2736
        %v3633 = vpack.c.b16 %v2753, %v2737
        %v3634 = vpack.c.b16 %v2754, %v2738
        %v3635 = vpack.c.b16 %v2755, %v2739
        %v3636 = vpack.c.b16 %v2756, %v2740
        %v3637 = vpack.c.b16 %v2757, %v2741
        %v3638 = vpack.c.b16 %v2758, %v2742
        %v3639 = vpack.c.b16 %v2775, %v2759
        %v3640 = vpack.c.b16 %v2776, %v2760
        %v3641 = vpack.c.b16 %v2777, %v2761
        %v3642 = vpack.c.b16 %v2778, %v2762
        %v3643 = vpack.c.b16 %v2779, %v2763
        %v3644 = vpack.c.b16 %v2780, %v2764
        %v3645 = vpack.c.b16 %v2781, %v2765
        %v3646 = vpack.c.b16 %v2782, %v2766
        %v3647 = vpack.c.b16 %v2783, %v2767
        %v3648 = vpack.c.b16 %v2784, %v2768
        %v3649 = vpack.c.b16 %v2785, %v2769
        %v3650 = vpack.c.b16 %v2786, %v2770
        %v3651 = vpack.c.b16 %v2787, %v2771
        %v3652 = vpack.c.b16 %v2788, %v2772
        %v3653 = vpack.c.b16 %v2789, %v2773
        %v3654 = vpack.c.b16 %v2790, %v2774
        %v3655 = vpack.c.b16 %v2807, %v2791
        %v3656 = vpack.c.b16 %v2808, %v2792
        %v3657 = vpack.c.b16 %v2809, %v2793
        %v3658 = vpack.c.b16 %v2810, %v2794
        %v3659 = vpack.c.b16 %v2811, %v2795
        %v3660 = vpack.c.b16 %v2812, %v2796
        %v3661 = vpack.c.b16 %v2813, %v2797
        %v3662 = vpack.c.b16 %v2814, %v2798
        %v3663 = vpack.c.b16 %v2815, %v2799
        %v3664 = vpack.c.b16 %v2816, %v2800
        %v3665 = vpack.c.b16 %v2817, %v2801
        %v3666 = vpack.c.b16 %v2818, %v2802
        %v3667 = vpack.c.b16 %v2819, %v2803
        %v3668 = vpack.c.b16 %v2820, %v2804
        %v3669 = vpack.c.b16 %v2821, %v2805
        %v3670 = vpack.c.b16 %v2822, %v2806
        %v3671 = vpack.c.b16 %v2839, %v2823
        %v3672 = vpack.c.b16 %v2840, %v2824
        %v3673 = vpack.c.b16 %v2841, %v2825
        %v3674 = vpack.c.b16 %v2842, %v2826
        %v3675 = vpack.c.b16 %v2843, %v2827
        %v3676 = vpack.c.b16 %v2844, %v2828
        %v3677 = vpack.c.b16 %v2845, %v2829
        %v3678 = vpack.c.b16 %v2846, %v2830
        %v3679 = vpack.c.b16 %v2847, %v2831
        %v3680 = vpack.c.b16 %v2848, %v2832
        %v3681 = vpack.c.b16 %v2849, %v2833
        %v3682 = vpack.c.b16 %v2850, %v2834
        %v3683 = vpack.c.b16 %v2851, %v2835
        %v3684 = vpack.c.b16 %v2852, %v2836
        %v3685 = vpack.c.b16 %v2853, %v2837
        %v3686 = vpack.c.b16 %v2854, %v2838
        %v3687 = vpack.c.b16 %v2871, %v2855
        %v3688 = vpack.c.b16 %v2872, %v2856
        %v3689 = vpack.c.b16 %v2873, %v2857
        %v3690 = vpack.c.b16 %v2874, %v2858
        %v3691 = vpack.c.b16 %v2875, %v2859
        %v3692 = vpack.c.b16 %v2876, %v2860
        %v3693 = vpack.c.b16 %v2877, %v2861
        %v3694 = vpack.c.b16 %v2878, %v2862
        %v3695 = vpack.c.b16 %v2879, %v2863
        %v3696 = vpack.c.b16 %v2880, %v2864
        %v3697 = vpack.c.b16 %v2881, %v2865
        %v3698 = vpack.c.b16 %v2882, %v2866
        %v3699 = vpack.c.b16 %v2883, %v2867
        %v3700 = vpack.c.b16 %v2884, %v2868
        %v3701 = vpack.c.b16 %v2885, %v2869
        %v3702 = vpack.c.b16 %v2886, %v2870
        %v3703 = vpack.c.b16 %v2903, %v2887
        %v3704 = vpack.c.b16 %v2904, %v2888
        %v3705 = vpack.c.b16 %v2905, %v2889
        %v3706 = vpack.c.b16 %v2906, %v2890
        %v3707 = vpack.c.b16 %v2907, %v2891
        %v3708 = vpack.c.b16 %v2908, %v2892
        %v3709 = vpack.c.b16 %v2909, %v2893
        %v3710 = vpack.c.b16 %v2910, %v2894
        %v3711 = vpack.c.b16 %v2911, %v2895
        %v3712 = vpack.c.b16 %v2912, %v2896
        %v3713 = vpack.c.b16 %v2913, %v2897
        %v3714 = vpack.c.b16 %v2914, %v2898
        %v3715 = vpack.c.b16 %v2915, %v2899
        %v3716 = vpack.c.b16 %v2916, %v2900
        %v3717 = vpack.c.b16 %v2917, %v2901
        %v3718 = vpack.c.b16 %v2918, %v2902
        %v3719 = vpack.c.b16 %v2935, %v2919
        %v3720 = vpack.c.b16 %v2936, %v2920
        %v3721 = vpack.c.b16 %v2937, %v2921
        %v3722 = vpack.c.b16 %v2938, %v2922
        %v3723 = vpack.c.b16 %v2939, %v2923
        %v3724 = vpack.c.b16 %v2940, %v2924
        %v3725 = vpack.c.b16 %v2941, %v2925
        %v3726 = vpack.c.b16 %v2942, %v2926
        %v3727 = vpack.c.b16 %v2943, %v2927
        %v3728 = vpack.c.b16 %v2944, %v2928
        %v3729 = vpack.c.b16 %v2945, %v2929
        %v3730 = vpack.c.b16 %v2946, %v2930
        %v3731 = vpack.c.b16 %v2947, %v2931
        %v3732 = vpack.c.b16 %v2948, %v2932
        %v3733 = vpack.c.b16 %v2949, %v2933
        %v3734 = vpack.c.b16 %v2950, %v2934
        %v3735 = vpack.c.b16 %v2967, %v2951
        %v3736 = vpack.c.b16 %v2968, %v2952
        %v3737 = vpack.c.b16 %v2969, %v2953
        %v3738 = vpack.c.b16 %v2970, %v2954
        %v3739 = vpack.c.b16 %v2971, %v2955
        %v3740 = vpack.c.b16 %v2972, %v2956
        %v3741 = vpack.c.b16 %v2973, %v2957
        %v3742 = vpack.c.b16 %v2974, %v2958
        %v3743 = vpack.c.b16 %v2975, %v2959
        %v3744 = vpack.c.b16 %v2976, %v2960
        %v3745 = vpack.c.b16 %v2977, %v2961
        %v3746 = vpack.c.b16 %v2978, %v2962
        %v3747 = vpack.c.b16 %v2979, %v2963
        %v3748 = vpack.c.b16 %v2980, %v2964
        %v3749 = vpack.c.b16 %v2981, %v2965
        %v3750 = vpack.c.b16 %v2982, %v2966
        %v3751 = vpack.c.b16 %v2999, %v2983
        %v3752 = vpack.c.b16 %v3000, %v2984
        %v3753 = vpack.c.b16 %v3001, %v2985
        %v3754 = vpack.c.b16 %v3002, %v2986
        %v3755 = vpack.c.b16 %v3003, %v2987
        %v3756 = vpack.c.b16 %v3004, %v2988
        %v3757 = vpack.c.b16 %v3005, %v2989
        %v3758 = vpack.c.b16 %v3006, %v2990
        %v3759 = vpack.c.b16 %v3007, %v2991
        %v3760 = vpack.c.b16 %v3008, %v2992
        %v3761 = vpack.c.b16 %v3009, %v2993
        %v3762 = vpack.c.b16 %v3010, %v2994
        %v3763 = vpack.c.b16 %v3011, %v2995
        %v3764 = vpack.c.b16 %v3012, %v2996
        %v3765 = vpack.c.b16 %v3013, %v2997
        %v3766 = vpack.c.b16 %v3014, %v2998
        %v3767 = vpack.c.b16 %v3031, %v3015
        %v3768 = vpack.c.b16 %v3032, %v3016
        %v3769 = vpack.c.b16 %v3033, %v3017
        %v3770 = vpack.c.b16 %v3034, %v3018
        %v3771 = vpack.c.b16 %v3035, %v3019
        %v3772 = vpack.c.b16 %v3036, %v3020
        %v3773 = vpack.c.b16 %v3037, %v3021
        %v3774 = vpack.c.b16 %v3038, %v3022
        %v3775 = vpack.c.b16 %v3039, %v3023
        %v3776 = vpack.c.b16 %v3040, %v3024
        %v3777 = vpack.c.b16 %v3041, %v3025
        %v3778 = vpack.c.b16 %v3042, %v3026
        %v3779 = vpack.c.b16 %v3043, %v3027
        %v3780 = vpack.c.b16 %v3044, %v3028
        %v3781 = vpack.c.b16 %v3045, %v3029
        %v3782 = vpack.c.b16 %v3046, %v3030
        %v3783 = vpack.c.b16 %v3063, %v3047
        %v3784 = vpack.c.b16 %v3064, %v3048
        %v3785 = vpack.c.b16 %v3065, %v3049
        %v3786 = vpack.c.b16 %v3066, %v3050
        %v3787 = vpack.c.b16 %v3067, %v3051
        %v3788 = vpack.c.b16 %v3068, %v3052
        %v3789 = vpack.c.b16 %v3069, %v3053
        %v3790 = vpack.c.b16 %v3070, %v3054
        %v3791 = vpack.c.b16 %v3071, %v3055
        %v3792 = vpack.c.b16 %v3072, %v3056
        %v3793 = vpack.c.b16 %v3073, %v3057
        %v3794 = vpack.c.b16 %v3074, %v3058
        %v3795 = vpack.c.b16 %v3075, %v3059
        %v3796 = vpack.c.b16 %v3076, %v3060
        %v3797 = vpack.c.b16 %v3077, %v3061
        %v3798 = vpack.c.b16 %v3078, %v3062
        %v3799 = vpack.c.b16 %v3095, %v3079
        %v3800 = vpack.c.b16 %v3096, %v3080
        %v3801 = vpack.c.b16 %v3097, %v3081
        %v3802 = vpack.c.b16 %v3098, %v3082
        %v3803 = vpack.c.b16 %v3099, %v3083
        %v3804 = vpack.c.b16 %v3100, %v3084
        %v3805 = vpack.c.b16 %v3101, %v3085
        %v3806 = vpack.c.b16 %v3102, %v3086
        %v3807 = vpack.c.b16 %v3103, %v3087
        %v3808 = vpack.c.b16 %v3104, %v3088
        %v3809 = vpack.c.b16 %v3105, %v3089
        %v3810 = vpack.c.b16 %v3106, %v3090
        %v3811 = vpack.c.b16 %v3107, %v3091
        %v3812 = vpack.c.b16 %v3108, %v3092
        %v3813 = vpack.c.b16 %v3109, %v3093
        %v3814 = vpack.c.b16 %v3110, %v3094
        %v3815 = vpack.c.b16 %v3127, %v3111
        %v3816 = vpack.c.b16 %v3128, %v3112
        %v3817 = vpack.c.b16 %v3129, %v3113
        %v3818 = vpack.c.b16 %v3130, %v3114
        %v3819 = vpack.c.b16 %v3131, %v3115
        %v3820 = vpack.c.b16 %v3132, %v3116
        %v3821 = vpack.c.b16 %v3133, %v3117
        %v3822 = vpack.c.b16 %v3134, %v3118
        %v3823 = vpack.c.b16 %v3135, %v3119
        %v3824 = vpack.c.b16 %v3136, %v3120
        %v3825 = vpack.c.b16 %v3137, %v3121
        %v3826 = vpack.c.b16 %v3138, %v3122
        %v3827 = vpack.c.b16 %v3139, %v3123
        %v3828 = vpack.c.b16 %v3140, %v3124
        %v3829 = vpack.c.b16 %v3141, %v3125
        %v3830 = vpack.c.b16 %v3142, %v3126
        %v3831 = vpack.c.b16 %v3159, %v3143
        %v3832 = vpack.c.b16 %v3160, %v3144
        %v3833 = vpack.c.b16 %v3161, %v3145
        %v3834 = vpack.c.b16 %v3162, %v3146
        %v3835 = vpack.c.b16 %v3163, %v3147
        %v3836 = vpack.c.b16 %v3164, %v3148
        %v3837 = vpack.c.b16 %v3165, %v3149
        %v3838 = vpack.c.b16 %v3166, %v3150
        %v3839 = vpack.c.b16 %v3167, %v3151
        %v3840 = vpack.c.b16 %v3168, %v3152
        %v3841 = vpack.c.b16 %v3169, %v3153
        %v3842 = vpack.c.b16 %v3170, %v3154
        %v3843 = vpack.c.b16 %v3171, %v3155
        %v3844 = vpack.c.b16 %v3172, %v3156
        %v3845 = vpack.c.b16 %v3173, %v3157
        %v3846 = vpack.c.b16 %v3174, %v3158
        %v3847 = vpack.c.b16 %v3191, %v3175
        %v3848 = vpack.c.b16 %v3192, %v3176
        %v3849 = vpack.c.b16 %v3193, %v3177
        %v3850 = vpack.c.b16 %v3194, %v3178
        %v3851 = vpack.c.b16 %v3195, %v3179
        %v3852 = vpack.c.b16 %v3196, %v3180
        %v3853 = vpack.c.b16 %v3197, %v3181
        %v3854 = vpack.c.b16 %v3198, %v3182
        %v3855 = vpack.c.b16 %v3199, %v3183
        %v3856 = vpack.c.b16 %v3200, %v3184
        %v3857 = vpack.c.b16 %v3201, %v3185
        %v3858 = vpack.c.b16 %v3202, %v3186
        %v3859 = vpack.c.b16 %v3203, %v3187
        %v3860 = vpack.c.b16 %v3204, %v3188
        %v3861 = vpack.c.b16 %v3205, %v3189
        %v3862 = vpack.c.b16 %v3206, %v3190
        %v3863 = vpack.c.b16 %v3223, %v3207
        %v3864 = vpack.c.b16 %v3224, %v3208
        %v3865 = vpack.c.b16 %v3225, %v3209
        %v3866 = vpack.c.b16 %v3226, %v3210
        %v3867 = vpack.c.b16 %v3227, %v3211
        %v3868 = vpack.c.b16 %v3228, %v3212
        %v3869 = vpack.c.b16 %v3229, %v3213
        %v3870 = vpack.c.b16 %v3230, %v3214
        %v3871 = vpack.c.b16 %v3231, %v3215
        %v3872 = vpack.c.b16 %v3232, %v3216
        %v3873 = vpack.c.b16 %v3233, %v3217
        %v3874 = vpack.c.b16 %v3234, %v3218
        %v3875 = vpack.c.b16 %v3235, %v3219
        %v3876 = vpack.c.b16 %v3236, %v3220
        %v3877 = vpack.c.b16 %v3237, %v3221
        %v3878 = vpack.c.b16 %v3238, %v3222
        %v3879 = vpack.c.b16 %v3255, %v3239
        %v3880 = vpack.c.b16 %v3256, %v3240
        %v3881 = vpack.c.b16 %v3257, %v3241
        %v3882 = vpack.c.b16 %v3258, %v3242
        %v3883 = vpack.c.b16 %v3259, %v3243
        %v3884 = vpack.c.b16 %v3260, %v3244
        %v3885 = vpack.c.b16 %v3261, %v3245
        %v3886 = vpack.c.b16 %v3262, %v3246
        %v3887 = vpack.c.b16 %v3263, %v3247
        %v3888 = vpack.c.b16 %v3264, %v3248
        %v3889 = vpack.c.b16 %v3265, %v3249
        %v3890 = vpack.c.b16 %v3266, %v3250
        %v3891 = vpack.c.b16 %v3267, %v3251
        %v3892 = vpack.c.b16 %v3268, %v3252
        %v3893 = vpack.c.b16 %v3269, %v3253
        %v3894 = vpack.c.b16 %v3270, %v3254
        %v3895 = vpack.c.b16 %v3287, %v3271
        %v3896 = vpack.c.b16 %v3288, %v3272
        %v3897 = vpack.c.b16 %v3289, %v3273
        %v3898 = vpack.c.b16 %v3290, %v3274
        %v3899 = vpack.c.b16 %v3291, %v3275
        %v3900 = vpack.c.b16 %v3292, %v3276
        %v3901 = vpack.c.b16 %v3293, %v3277
        %v3902 = vpack.c.b16 %v3294, %v3278
        %v3903 = vpack.c.b16 %v3295, %v3279
        %v3904 = vpack.c.b16 %v3296, %v3280
        %v3905 = vpack.c.b16 %v3297, %v3281
        %v3906 = vpack.c.b16 %v3298, %v3282
        %v3907 = vpack.c.b16 %v3299, %v3283
        %v3908 = vpack.c.b16 %v3300, %v3284
        %v3909 = vpack.c.b16 %v3301, %v3285
        %v3910 = vpack.c.b16 %v3302, %v3286
        %v3911 = vpack.c.b16 %v3319, %v3303
        %v3912 = vpack.c.b16 %v3320, %v3304
        %v3913 = vpack.c.b16 %v3321, %v3305
        %v3914 = vpack.c.b16 %v3322, %v3306
        %v3915 = vpack.c.b16 %v3323, %v3307
        %v3916 = vpack.c.b16 %v3324, %v3308
        %v3917 = vpack.c.b16 %v3325, %v3309
        %v3918 = vpack.c.b16 %v3326, %v3310
        %v3919 = vpack.c.b16 %v3327, %v3311
        %v3920 = vpack.c.b16 %v3328, %v3312
        %v3921 = vpack.c.b16 %v3329, %v3313
        %v3922 = vpack.c.b16 %v3330, %v3314
        %v3923 = vpack.c.b16 %v3331, %v3315
        %v3924 = vpack.c.b16 %v3332, %v3316
        %v3925 = vpack.c.b16 %v3333, %v3317
        %v3926 = vpack.c.b16 %v3334, %v3318
        %v3927 = vpack.c.b16 %v3351, %v3335
        %v3928 = vpack.c.b16 %v3352, %v3336
        %v3929 = vpack.c.b16 %v3353, %v3337
        %v3930 = vpack.c.b16 %v3354, %v3338
        %v3931 = vpack.c.b16 %v3355, %v3339
        %v3932 = vpack.c.b16 %v3356, %v3340
        %v3933 = vpack.c.b16 %v3357, %v3341
        %v3934 = vpack.c.b16 %v3358, %v3342
        %v3935 = vpack.c.b16 %v3359, %v3343
        %v3936 = vpack.c.b16 %v3360, %v3344
        %v3937 = vpack.c.b16 %v3361, %v3345
        %v3938 = vpack.c.b16 %v3362, %v3346
        %v3939 = vpack.c.b16 %v3363, %v3347
        %v3940 = vpack.c.b16 %v3364, %v3348
        %v3941 = vpack.c.b16 %v3365, %v3349
        %v3942 = vpack.c.b16 %v3366, %v3350
        %v3943 = vpack.c.b16 %v3383, %v3367
        %v3944 = vpack.c.b16 %v3384, %v3368
        %v3945 = vpack.c.b16 %v3385, %v3369
        %v3946 = vpack.c.b16 %v3386, %v3370
        %v3947 = vpack.c.b16 %v3387, %v3371
        %v3948 = vpack.c.b16 %v3388, %v3372
        %v3949 = vpack.c.b16 %v3389, %v3373
        %v3950 = vpack.c.b16 %v3390, %v3374
        %v3951 = vpack.c.b16 %v3391, %v3375
        %v3952 = vpack.c.b16 %v3392, %v3376
        %v3953 = vpack.c.b16 %v3393, %v3377
        %v3954 = vpack.c.b16 %v3394, %v3378
        %v3955 = vpack.c.b16 %v3395, %v3379
        %v3956 = vpack.c.b16 %v3396, %v3380
        %v3957 = vpack.c.b16 %v3397, %v3381
        %v3958 = vpack.c.b16 %v3398, %v3382
        %v3959 = vpack.c.b16 %v3415, %v3399
        %v3960 = vpack.c.b16 %v3416, %v3400
        %v3961 = vpack.c.b16 %v3417, %v3401
        %v3962 = vpack.c.b16 %v3418, %v3402
        %v3963 = vpack.c.b16 %v3419, %v3403
        %v3964 = vpack.c.b16 %v3420, %v3404
        %v3965 = vpack.c.b16 %v3421, %v3405
        %v3966 = vpack.c.b16 %v3422, %v3406
        %v3967 = vpack.c.b16 %v3423, %v3407
        %v3968 = vpack.c.b16 %v3424, %v3408
        %v3969 = vpack.c.b16 %v3425, %v3409
        %v3970 = vpack.c.b16 %v3426, %v3410
        %v3971 = vpack.c.b16 %v3427, %v3411
        %v3972 = vpack.c.b16 %v3428, %v3412
        %v3973 = vpack.c.b16 %v3429, %v3413
        %v3974 = vpack.c.b16 %v3430, %v3414
        %v3975 = vpack.c.b16 %v3447, %v3431
        %v3976 = vpack.c.b16 %v3448, %v3432
        %v3977 = vpack.c.b16 %v3449, %v3433
        %v3978 = vpack.c.b16 %v3450, %v3434
        %v3979 = vpack.c.b16 %v3451, %v3435
        %v3980 = vpack.c.b16 %v3452, %v3436
        %v3981 = vpack.c.b16 %v3453, %v3437
        %v3982 = vpack.c.b16 %v3454, %v3438
        %v3983 = vpack.c.b16 %v3455, %v3439
        %v3984 = vpack.c.b16 %v3456, %v3440
        %v3985 = vpack.c.b16 %v3457, %v3441
        %v3986 = vpack.c.b16 %v3458, %v3442
        %v3987 = vpack.c.b16 %v3459, %v3443
        %v3988 = vpack.c.b16 %v3460, %v3444
        %v3989 = vpack.c.b16 %v3461, %v3445
        %v3990 = vpack.c.b16 %v3462, %v3446
        %v3991 = vpack.c.b16 %v3479, %v3463
        %v3992 = vpack.c.b16 %v3480, %v3464
        %v3993 = vpack.c.b16 %v3481, %v3465
        %v3994 = vpack.c.b16 %v3482, %v3466
        %v3995 = vpack.c.b16 %v3483, %v3467
        %v3996 = vpack.c.b16 %v3484, %v3468
        %v3997 = vpack.c.b16 %v3485, %v3469
        %v3998 = vpack.c.b16 %v3486, %v3470
        %v3999 = vpack.c.b16 %v3487, %v3471
        %v4000 = vpack.c.b16 %v3488, %v3472
        %v4001 = vpack.c.b16 %v3489, %v3473
        %v4002 = vpack.c.b16 %v3490, %v3474
        %v4003 = vpack.c.b16 %v3491, %v3475
        %v4004 = vpack.c.b16 %v3492, %v3476
        %v4005 = vpack.c.b16 %v3493, %v3477
        %v4006 = vpack.c.b16 %v3494, %v3478
        %4519 = vmatprep.subr.bf16.mxu0 %v3496
        %4520 = vmatpush1.bf16.msra.mxu0 %v3495
        %4521 = vmatprep.subr.bf16.mxu0 %v3512
        %4522 = vmatpush1.bf16.msra.mxu0 %v3511
        %4523 = vmatprep.subr.bf16.mxu0 %v3528
        %4524 = vmatpush1.bf16.msra.mxu0 %v3527
        %4525 = vmatprep.subr.bf16.mxu0 %v3544
        %4526 = vmatpush1.bf16.msra.mxu0 %v3543
        %4527 = vmatprep.subr.bf16.mxu0 %v3560
        %4528 = vmatpush1.bf16.msra.mxu0 %v3559
        %4529 = vmatprep.subr.bf16.mxu0 %v3576
        %4530 = vmatpush1.bf16.msra.mxu0 %v3575
        %4531 = vmatprep.subr.bf16.mxu0 %v3592
        %4532 = vmatpush1.bf16.msra.mxu0 %v3591
        %4533 = vmatprep.subr.bf16.mxu0 %v3608
        %4534 = vmatpush1.bf16.msra.mxu0 %v3607
        %4535 = vmatprep.subr.bf16.mxu0 %v3624
        %4536 = vmatpush1.bf16.msra.mxu0 %v3623
        %4537 = vmatprep.subr.bf16.mxu0 %v3640
        %4538 = vmatpush1.bf16.msra.mxu0 %v3639
        %4539 = vmatprep.subr.bf16.mxu0 %v3656
        %4540 = vmatpush1.bf16.msra.mxu0 %v3655
        %4541 = vmatprep.subr.bf16.mxu0 %v3672
        %4542 = vmatpush1.bf16.msra.mxu0 %v3671
        %4543 = vmatprep.subr.bf16.mxu0 %v3688
        %4544 = vmatpush1.bf16.msra.mxu0 %v3687
        %4545 = vmatprep.subr.bf16.mxu0 %v3704
        %4546 = vmatpush1.bf16.msra.mxu0 %v3703
        %4547 = vmatprep.subr.bf16.mxu0 %v3720
        %4548 = vmatpush1.bf16.msra.mxu0 %v3719
        %4549 = vmatprep.subr.bf16.mxu0 %v3736
        %4550 = vmatpush1.bf16.msra.mxu0 %v3735
        %4551 = vmatprep.mubr.bf16.mxu0 %v1952
        %4552 = vmatmul.mubr.bf16.gmra.mrb[0].mxu0 %v1951
        %v4553 = vpop.f32.mrb[0].mxu0
        %v4554 = vadd.f32 %v1862, %v4553
        %v4555 = vpop.f32.mrb[0].mxu0
        %v4556 = vadd.f32 %v1866, %v4555
        %v4557 = vpop.f32.mrb[0].mxu0
        %v4558 = vadd.f32 %v1862, %v4557
        %v4559 = vpop.f32.mrb[0].mxu0
        %v4560 = vadd.f32 %v1866, %v4559
        %4561 = vdwg.mxu0
        %4562 = vmatprep.subr.bf16.mxu0 %v3752
        %4563 = vmatpush1.bf16.msra.mxu0 %v3751
        %4564 = vmatprep.subr.bf16.mxu0 %v3768
        %4565 = vmatpush1.bf16.msra.mxu0 %v3767
        %4566 = vmatprep.subr.bf16.mxu0 %v3784
        %4567 = vmatpush1.bf16.msra.mxu0 %v3783
        %4568 = vmatprep.subr.bf16.mxu0 %v3800
        %4569 = vmatpush1.bf16.msra.mxu0 %v3799
        %4570 = vmatprep.subr.bf16.mxu0 %v3816
        %4571 = vmatpush1.bf16.msra.mxu0 %v3815
        %4572 = vmatprep.subr.bf16.mxu0 %v3832
        %4573 = vmatpush1.bf16.msra.mxu0 %v3831
        %4574 = vmatprep.subr.bf16.mxu0 %v3848
        %4575 = vmatpush1.bf16.msra.mxu0 %v3847
        %4576 = vmatprep.subr.bf16.mxu0 %v3864
        %4577 = vmatpush1.bf16.msra.mxu0 %v3863
        %4578 = vmatprep.subr.bf16.mxu0 %v3880
        %4579 = vmatpush1.bf16.msra.mxu0 %v3879
        %4580 = vmatprep.subr.bf16.mxu0 %v3896
        %4581 = vmatpush1.bf16.msra.mxu0 %v3895
        %4582 = vmatprep.subr.bf16.mxu0 %v3912
        %4583 = vmatpush1.bf16.msra.mxu0 %v3911
        %4584 = vmatprep.subr.bf16.mxu0 %v3928
        %4585 = vmatpush1.bf16.msra.mxu0 %v3927
        %4586 = vmatprep.subr.bf16.mxu0 %v3944
        %4587 = vmatpush1.bf16.msra.mxu0 %v3943
        %4588 = vmatprep.subr.bf16.mxu0 %v3960
        %4589 = vmatpush1.bf16.msra.mxu0 %v3959
        %4590 = vmatprep.subr.bf16.mxu0 %v3976
        %4591 = vmatpush1.bf16.msra.mxu0 %v3975
        %4592 = vmatprep.subr.bf16.mxu0 %v3992
        %4593 = vmatpush1.bf16.msra.mxu0 %v3991
        %4594 = vmatprep.mubr.bf16.mxu0 %v1954
        %4595 = vmatmul.mubr.bf16.gmra.mrb[0].mxu0 %v1953
        %v4596 = vpop.f32.mrb[0].mxu0
        %v4597 = vadd.f32 %v4554, %v4596
        %v4598 = vpop.f32.mrb[0].mxu0
        %v4599 = vadd.f32 %v4556, %v4598
        %v4600 = vpop.f32.mrb[0].mxu0
        %v4601 = vadd.f32 %v4558, %v4600
        %v4602 = vpop.f32.mrb[0].mxu0
        %v4603 = vadd.f32 %v4560, %v4602
        %4604 = vdwg.mxu0
        %4605 = vmatprep.subr.bf16.mxu0 %v3498
        %4606 = vmatpush1.bf16.msra.mxu0 %v3497
        %4607 = vmatprep.subr.bf16.mxu0 %v3514
        %4608 = vmatpush1.bf16.msra.mxu0 %v3513
        %4609 = vmatprep.subr.bf16.mxu0 %v3530
        %4610 = vmatpush1.bf16.msra.mxu0 %v3529
        %4611 = vmatprep.subr.bf16.mxu0 %v3546
        %4612 = vmatpush1.bf16.msra.mxu0 %v3545
        %4613 = vmatprep.subr.bf16.mxu0 %v3562
        %4614 = vmatpush1.bf16.msra.mxu0 %v3561
        %4615 = vmatprep.subr.bf16.mxu0 %v3578
        %4616 = vmatpush1.bf16.msra.mxu0 %v3577
        %4617 = vmatprep.subr.bf16.mxu0 %v3594
        %4618 = vmatpush1.bf16.msra.mxu0 %v3593
        %4619 = vmatprep.subr.bf16.mxu0 %v3610
        %4620 = vmatpush1.bf16.msra.mxu0 %v3609
        %4621 = vmatprep.subr.bf16.mxu0 %v3626
        %4622 = vmatpush1.bf16.msra.mxu0 %v3625
        %4623 = vmatprep.subr.bf16.mxu0 %v3642
        %4624 = vmatpush1.bf16.msra.mxu0 %v3641
        %4625 = vmatprep.subr.bf16.mxu0 %v3658
        %4626 = vmatpush1.bf16.msra.mxu0 %v3657
        %4627 = vmatprep.subr.bf16.mxu0 %v3674
        %4628 = vmatpush1.bf16.msra.mxu0 %v3673
        %4629 = vmatprep.subr.bf16.mxu0 %v3690
        %4630 = vmatpush1.bf16.msra.mxu0 %v3689
        %4631 = vmatprep.subr.bf16.mxu0 %v3706
        %4632 = vmatpush1.bf16.msra.mxu0 %v3705
        %4633 = vmatprep.subr.bf16.mxu0 %v3722
        %4634 = vmatpush1.bf16.msra.mxu0 %v3721
        %4635 = vmatprep.subr.bf16.mxu0 %v3738
        %4636 = vmatpush1.bf16.msra.mxu0 %v3737
        %4637 = vmatprep.mubr.bf16.mxu0 %v1952
        %4638 = vmatmul.mubr.bf16.gmra.mrb[0].mxu0 %v1951
        %v4639 = vpop.f32.mrb[0].mxu0
        %v4640 = vadd.f32 %v1870, %v4639
        %v4641 = vpop.f32.mrb[0].mxu0
        %v4642 = vadd.f32 %v1874, %v4641
        %v4643 = vpop.f32.mrb[0].mxu0
        %v4644 = vadd.f32 %v1870, %v4643
        %v4645 = vpop.f32.mrb[0].mxu0
        %v4646 = vadd.f32 %v1874, %v4645
        %4647 = vdwg.mxu0
        %4648 = vmatprep.subr.bf16.mxu0 %v3754
        %4649 = vmatpush1.bf16.msra.mxu0 %v3753
        %4650 = vmatprep.subr.bf16.mxu0 %v3770
        %4651 = vmatpush1.bf16.msra.mxu0 %v3769
        %4652 = vmatprep.subr.bf16.mxu0 %v3786
        %4653 = vmatpush1.bf16.msra.mxu0 %v3785
        %4654 = vmatprep.subr.bf16.mxu0 %v3802
        %4655 = vmatpush1.bf16.msra.mxu0 %v3801
        %4656 = vmatprep.subr.bf16.mxu0 %v3818
        %4657 = vmatpush1.bf16.msra.mxu0 %v3817
        %4658 = vmatprep.subr.bf16.mxu0 %v3834
        %4659 = vmatpush1.bf16.msra.mxu0 %v3833
        %4660 = vmatprep.subr.bf16.mxu0 %v3850
        %4661 = vmatpush1.bf16.msra.mxu0 %v3849
        %4662 = vmatprep.subr.bf16.mxu0 %v3866
        %4663 = vmatpush1.bf16.msra.mxu0 %v3865
        %4664 = vmatprep.subr.bf16.mxu0 %v3882
        %4665 = vmatpush1.bf16.msra.mxu0 %v3881
        %4666 = vmatprep.subr.bf16.mxu0 %v3898
        %4667 = vmatpush1.bf16.msra.mxu0 %v3897
        %4668 = vmatprep.subr.bf16.mxu0 %v3914
        %4669 = vmatpush1.bf16.msra.mxu0 %v3913
        %4670 = vmatprep.subr.bf16.mxu0 %v3930
        %4671 = vmatpush1.bf16.msra.mxu0 %v3929
        %4672 = vmatprep.subr.bf16.mxu0 %v3946
        %4673 = vmatpush1.bf16.msra.mxu0 %v3945
        %4674 = vmatprep.subr.bf16.mxu0 %v3962
        %4675 = vmatpush1.bf16.msra.mxu0 %v3961
        %4676 = vmatprep.subr.bf16.mxu0 %v3978
        %4677 = vmatpush1.bf16.msra.mxu0 %v3977
        %4678 = vmatprep.subr.bf16.mxu0 %v3994
        %4679 = vmatpush1.bf16.msra.mxu0 %v3993
        %4680 = vmatprep.mubr.bf16.mxu0 %v1954
        %4681 = vmatmul.mubr.bf16.gmra.mrb[0].mxu0 %v1953
        %v4682 = vpop.f32.mrb[0].mxu0
        %v4683 = vadd.f32 %v4640, %v4682
        %v4684 = vpop.f32.mrb[0].mxu0
        %v4685 = vadd.f32 %v4642, %v4684
        %v4686 = vpop.f32.mrb[0].mxu0
        %v4687 = vadd.f32 %v4644, %v4686
        %v4688 = vpop.f32.mrb[0].mxu0
        %v4689 = vadd.f32 %v4646, %v4688
        %4690 = vdwg.mxu0
        %4691 = vmatprep.subr.bf16.mxu0 %v3500
        %4692 = vmatpush1.bf16.msra.mxu0 %v3499
        %4693 = vmatprep.subr.bf16.mxu0 %v3516
        %4694 = vmatpush1.bf16.msra.mxu0 %v3515
        %4695 = vmatprep.subr.bf16.mxu0 %v3532
        %4696 = vmatpush1.bf16.msra.mxu0 %v3531
        %4697 = vmatprep.subr.bf16.mxu0 %v3548
        %4698 = vmatpush1.bf16.msra.mxu0 %v3547
        %4699 = vmatprep.subr.bf16.mxu0 %v3564
        %4700 = vmatpush1.bf16.msra.mxu0 %v3563
        %4701 = vmatprep.subr.bf16.mxu0 %v3580
        %4702 = vmatpush1.bf16.msra.mxu0 %v3579
        %4703 = vmatprep.subr.bf16.mxu0 %v3596
        %4704 = vmatpush1.bf16.msra.mxu0 %v3595
        %4705 = vmatprep.subr.bf16.mxu0 %v3612
        %4706 = vmatpush1.bf16.msra.mxu0 %v3611
        %4707 = vmatprep.subr.bf16.mxu0 %v3628
        %4708 = vmatpush1.bf16.msra.mxu0 %v3627
        %4709 = vmatprep.subr.bf16.mxu0 %v3644
        %4710 = vmatpush1.bf16.msra.mxu0 %v3643
        %4711 = vmatprep.subr.bf16.mxu0 %v3660
        %4712 = vmatpush1.bf16.msra.mxu0 %v3659
        %4713 = vmatprep.subr.bf16.mxu0 %v3676
        %4714 = vmatpush1.bf16.msra.mxu0 %v3675
        %4715 = vmatprep.subr.bf16.mxu0 %v3692
        %4716 = vmatpush1.bf16.msra.mxu0 %v3691
        %4717 = vmatprep.subr.bf16.mxu0 %v3708
        %4718 = vmatpush1.bf16.msra.mxu0 %v3707
        %4719 = vmatprep.subr.bf16.mxu0 %v3724
        %4720 = vmatpush1.bf16.msra.mxu0 %v3723
        %4721 = vmatprep.subr.bf16.mxu0 %v3740
        %4722 = vmatpush1.bf16.msra.mxu0 %v3739
        %4723 = vmatprep.mubr.bf16.mxu0 %v1952
        %4724 = vmatmul.mubr.bf16.gmra.mrb[0].mxu0 %v1951
        %v4725 = vpop.f32.mrb[0].mxu0
        %v4726 = vadd.f32 %v1878, %v4725
        %v4727 = vpop.f32.mrb[0].mxu0
        %v4728 = vadd.f32 %v1882, %v4727
        %v4729 = vpop.f32.mrb[0].mxu0
        %v4730 = vadd.f32 %v1878, %v4729
        %v4731 = vpop.f32.mrb[0].mxu0
        %v4732 = vadd.f32 %v1882, %v4731
        %4733 = vdwg.mxu0
        %4734 = vmatprep.subr.bf16.mxu0 %v3756
        %4735 = vmatpush1.bf16.msra.mxu0 %v3755
        %4736 = vmatprep.subr.bf16.mxu0 %v3772
        %4737 = vmatpush1.bf16.msra.mxu0 %v3771
        %4738 = vmatprep.subr.bf16.mxu0 %v3788
        %4739 = vmatpush1.bf16.msra.mxu0 %v3787
        %4740 = vmatprep.subr.bf16.mxu0 %v3804
        %4741 = vmatpush1.bf16.msra.mxu0 %v3803
        %4742 = vmatprep.subr.bf16.mxu0 %v3820
        %4743 = vmatpush1.bf16.msra.mxu0 %v3819
        %4744 = vmatprep.subr.bf16.mxu0 %v3836
        %4745 = vmatpush1.bf16.msra.mxu0 %v3835
        %4746 = vmatprep.subr.bf16.mxu0 %v3852
        %4747 = vmatpush1.bf16.msra.mxu0 %v3851
        %4748 = vmatprep.subr.bf16.mxu0 %v3868
        %4749 = vmatpush1.bf16.msra.mxu0 %v3867
        %4750 = vmatprep.subr.bf16.mxu0 %v3884
        %4751 = vmatpush1.bf16.msra.mxu0 %v3883
        %4752 = vmatprep.subr.bf16.mxu0 %v3900
        %4753 = vmatpush1.bf16.msra.mxu0 %v3899
        %4754 = vmatprep.subr.bf16.mxu0 %v3916
        %4755 = vmatpush1.bf16.msra.mxu0 %v3915
        %4756 = vmatprep.subr.bf16.mxu0 %v3932
        %4757 = vmatpush1.bf16.msra.mxu0 %v3931
        %4758 = vmatprep.subr.bf16.mxu0 %v3948
        %4759 = vmatpush1.bf16.msra.mxu0 %v3947
        %4760 = vmatprep.subr.bf16.mxu0 %v3964
        %4761 = vmatpush1.bf16.msra.mxu0 %v3963
        %4762 = vmatprep.subr.bf16.mxu0 %v3980
        %4763 = vmatpush1.bf16.msra.mxu0 %v3979
        %4764 = vmatprep.subr.bf16.mxu0 %v3996
        %4765 = vmatpush1.bf16.msra.mxu0 %v3995
        %4766 = vmatprep.mubr.bf16.mxu0 %v1954
        %4767 = vmatmul.mubr.bf16.gmra.mrb[0].mxu0 %v1953
        %v4768 = vpop.f32.mrb[0].mxu0
        %v4769 = vadd.f32 %v4726, %v4768
        %v4770 = vpop.f32.mrb[0].mxu0
        %v4771 = vadd.f32 %v4728, %v4770
        %v4772 = vpop.f32.mrb[0].mxu0
        %v4773 = vadd.f32 %v4730, %v4772
        %v4774 = vpop.f32.mrb[0].mxu0
        %v4775 = vadd.f32 %v4732, %v4774
        %4776 = vdwg.mxu0
        %4777 = vmatprep.subr.bf16.mxu0 %v3502
        %4778 = vmatpush1.bf16.msra.mxu0 %v3501
        %4779 = vmatprep.subr.bf16.mxu0 %v3518
        %4780 = vmatpush1.bf16.msra.mxu0 %v3517
        %4781 = vmatprep.subr.bf16.mxu0 %v3534
        %4782 = vmatpush1.bf16.msra.mxu0 %v3533
        %4783 = vmatprep.subr.bf16.mxu0 %v3550
        %4784 = vmatpush1.bf16.msra.mxu0 %v3549
        %4785 = vmatprep.subr.bf16.mxu0 %v3566
        %4786 = vmatpush1.bf16.msra.mxu0 %v3565
        %4787 = vmatprep.subr.bf16.mxu0 %v3582
        %4788 = vmatpush1.bf16.msra.mxu0 %v3581
        %4789 = vmatprep.subr.bf16.mxu0 %v3598
        %4790 = vmatpush1.bf16.msra.mxu0 %v3597
        %4791 = vmatprep.subr.bf16.mxu0 %v3614
        %4792 = vmatpush1.bf16.msra.mxu0 %v3613
        %4793 = vmatprep.subr.bf16.mxu0 %v3630
        %4794 = vmatpush1.bf16.msra.mxu0 %v3629
        %4795 = vmatprep.subr.bf16.mxu0 %v3646
        %4796 = vmatpush1.bf16.msra.mxu0 %v3645
        %4797 = vmatprep.subr.bf16.mxu0 %v3662
        %4798 = vmatpush1.bf16.msra.mxu0 %v3661
        %4799 = vmatprep.subr.bf16.mxu0 %v3678
        %4800 = vmatpush1.bf16.msra.mxu0 %v3677
        %4801 = vmatprep.subr.bf16.mxu0 %v3694
        %4802 = vmatpush1.bf16.msra.mxu0 %v3693
        %4803 = vmatprep.subr.bf16.mxu0 %v3710
        %4804 = vmatpush1.bf16.msra.mxu0 %v3709
        %4805 = vmatprep.subr.bf16.mxu0 %v3726
        %4806 = vmatpush1.bf16.msra.mxu0 %v3725
        %4807 = vmatprep.subr.bf16.mxu0 %v3742
        %4808 = vmatpush1.bf16.msra.mxu0 %v3741
        %4809 = vmatprep.mubr.bf16.mxu0 %v1952
        %4810 = vmatmul.mubr.bf16.gmra.mrb[0].mxu0 %v1951
        %v4811 = vpop.f32.mrb[0].mxu0
        %v4812 = vadd.f32 %v1886, %v4811
        %v4813 = vpop.f32.mrb[0].mxu0
        %v4814 = vadd.f32 %v1890, %v4813
        %v4815 = vpop.f32.mrb[0].mxu0
        %v4816 = vadd.f32 %v1886, %v4815
        %v4817 = vpop.f32.mrb[0].mxu0
        %v4818 = vadd.f32 %v1890, %v4817
        %4819 = vdwg.mxu0
        %4820 = vmatprep.subr.bf16.mxu0 %v3758
        %4821 = vmatpush1.bf16.msra.mxu0 %v3757
        %4822 = vmatprep.subr.bf16.mxu0 %v3774
        %4823 = vmatpush1.bf16.msra.mxu0 %v3773
        %4824 = vmatprep.subr.bf16.mxu0 %v3790
        %4825 = vmatpush1.bf16.msra.mxu0 %v3789
        %4826 = vmatprep.subr.bf16.mxu0 %v3806
        %4827 = vmatpush1.bf16.msra.mxu0 %v3805
        %4828 = vmatprep.subr.bf16.mxu0 %v3822
        %4829 = vmatpush1.bf16.msra.mxu0 %v3821
        %4830 = vmatprep.subr.bf16.mxu0 %v3838
        %4831 = vmatpush1.bf16.msra.mxu0 %v3837
        %4832 = vmatprep.subr.bf16.mxu0 %v3854
        %4833 = vmatpush1.bf16.msra.mxu0 %v3853
        %4834 = vmatprep.subr.bf16.mxu0 %v3870
        %4835 = vmatpush1.bf16.msra.mxu0 %v3869
        %4836 = vmatprep.subr.bf16.mxu0 %v3886
        %4837 = vmatpush1.bf16.msra.mxu0 %v3885
        %4838 = vmatprep.subr.bf16.mxu0 %v3902
        %4839 = vmatpush1.bf16.msra.mxu0 %v3901
        %4840 = vmatprep.subr.bf16.mxu0 %v3918
        %4841 = vmatpush1.bf16.msra.mxu0 %v3917
        %4842 = vmatprep.subr.bf16.mxu0 %v3934
        %4843 = vmatpush1.bf16.msra.mxu0 %v3933
        %4844 = vmatprep.subr.bf16.mxu0 %v3950
        %4845 = vmatpush1.bf16.msra.mxu0 %v3949
        %4846 = vmatprep.subr.bf16.mxu0 %v3966
        %4847 = vmatpush1.bf16.msra.mxu0 %v3965
        %4848 = vmatprep.subr.bf16.mxu0 %v3982
        %4849 = vmatpush1.bf16.msra.mxu0 %v3981
        %4850 = vmatprep.subr.bf16.mxu0 %v3998
        %4851 = vmatpush1.bf16.msra.mxu0 %v3997
        %4852 = vmatprep.mubr.bf16.mxu0 %v1954
        %4853 = vmatmul.mubr.bf16.gmra.mrb[0].mxu0 %v1953
        %v4854 = vpop.f32.mrb[0].mxu0
        %v4855 = vadd.f32 %v4812, %v4854
        %v4856 = vpop.f32.mrb[0].mxu0
        %v4857 = vadd.f32 %v4814, %v4856
        %v4858 = vpop.f32.mrb[0].mxu0
        %v4859 = vadd.f32 %v4816, %v4858
        %v4860 = vpop.f32.mrb[0].mxu0
        %v4861 = vadd.f32 %v4818, %v4860
        %4862 = vdwg.mxu0
        %4863 = vmatprep.subr.bf16.mxu0 %v3504
        %4864 = vmatpush1.bf16.msra.mxu0 %v3503
        %4865 = vmatprep.subr.bf16.mxu0 %v3520
        %4866 = vmatpush1.bf16.msra.mxu0 %v3519
        %4867 = vmatprep.subr.bf16.mxu0 %v3536
        %4868 = vmatpush1.bf16.msra.mxu0 %v3535
        %4869 = vmatprep.subr.bf16.mxu0 %v3552
        %4870 = vmatpush1.bf16.msra.mxu0 %v3551
        %4871 = vmatprep.subr.bf16.mxu0 %v3568
        %4872 = vmatpush1.bf16.msra.mxu0 %v3567
        %4873 = vmatprep.subr.bf16.mxu0 %v3584
        %4874 = vmatpush1.bf16.msra.mxu0 %v3583
        %4875 = vmatprep.subr.bf16.mxu0 %v3600
        %4876 = vmatpush1.bf16.msra.mxu0 %v3599
        %4877 = vmatprep.subr.bf16.mxu0 %v3616
        %4878 = vmatpush1.bf16.msra.mxu0 %v3615
        %4879 = vmatprep.subr.bf16.mxu0 %v3632
        %4880 = vmatpush1.bf16.msra.mxu0 %v3631
        %4881 = vmatprep.subr.bf16.mxu0 %v3648
        %4882 = vmatpush1.bf16.msra.mxu0 %v3647
        %4883 = vmatprep.subr.bf16.mxu0 %v3664
        %4884 = vmatpush1.bf16.msra.mxu0 %v3663
        %4885 = vmatprep.subr.bf16.mxu0 %v3680
        %4886 = vmatpush1.bf16.msra.mxu0 %v3679
        %4887 = vmatprep.subr.bf16.mxu0 %v3696
        %4888 = vmatpush1.bf16.msra.mxu0 %v3695
        %4889 = vmatprep.subr.bf16.mxu0 %v3712
        %4890 = vmatpush1.bf16.msra.mxu0 %v3711
        %4891 = vmatprep.subr.bf16.mxu0 %v3728
        %4892 = vmatpush1.bf16.msra.mxu0 %v3727
        %4893 = vmatprep.subr.bf16.mxu0 %v3744
        %4894 = vmatpush1.bf16.msra.mxu0 %v3743
        %4895 = vmatprep.mubr.bf16.mxu0 %v1952
        %4896 = vmatmul.mubr.bf16.gmra.mrb[0].mxu0 %v1951
        %v4897 = vpop.f32.mrb[0].mxu0
        %v4898 = vadd.f32 %v1894, %v4897
        %v4899 = vpop.f32.mrb[0].mxu0
        %v4900 = vadd.f32 %v1898, %v4899
        %v4901 = vpop.f32.mrb[0].mxu0
        %v4902 = vadd.f32 %v1894, %v4901
        %v4903 = vpop.f32.mrb[0].mxu0
        %v4904 = vadd.f32 %v1898, %v4903
        %4905 = vdwg.mxu0
        %4906 = vmatprep.subr.bf16.mxu0 %v3760
        %4907 = vmatpush1.bf16.msra.mxu0 %v3759
        %4908 = vmatprep.subr.bf16.mxu0 %v3776
        %4909 = vmatpush1.bf16.msra.mxu0 %v3775
        %4910 = vmatprep.subr.bf16.mxu0 %v3792
        %4911 = vmatpush1.bf16.msra.mxu0 %v3791
        %4912 = vmatprep.subr.bf16.mxu0 %v3808
        %4913 = vmatpush1.bf16.msra.mxu0 %v3807
        %4914 = vmatprep.subr.bf16.mxu0 %v3824
        %4915 = vmatpush1.bf16.msra.mxu0 %v3823
        %4916 = vmatprep.subr.bf16.mxu0 %v3840
        %4917 = vmatpush1.bf16.msra.mxu0 %v3839
        %4918 = vmatprep.subr.bf16.mxu0 %v3856
        %4919 = vmatpush1.bf16.msra.mxu0 %v3855
        %4920 = vmatprep.subr.bf16.mxu0 %v3872
        %4921 = vmatpush1.bf16.msra.mxu0 %v3871
        %4922 = vmatprep.subr.bf16.mxu0 %v3888
        %4923 = vmatpush1.bf16.msra.mxu0 %v3887
        %4924 = vmatprep.subr.bf16.mxu0 %v3904
        %4925 = vmatpush1.bf16.msra.mxu0 %v3903
        %4926 = vmatprep.subr.bf16.mxu0 %v3920
        %4927 = vmatpush1.bf16.msra.mxu0 %v3919
        %4928 = vmatprep.subr.bf16.mxu0 %v3936
        %4929 = vmatpush1.bf16.msra.mxu0 %v3935
        %4930 = vmatprep.subr.bf16.mxu0 %v3952
        %4931 = vmatpush1.bf16.msra.mxu0 %v3951
        %4932 = vmatprep.subr.bf16.mxu0 %v3968
        %4933 = vmatpush1.bf16.msra.mxu0 %v3967
        %4934 = vmatprep.subr.bf16.mxu0 %v3984
        %4935 = vmatpush1.bf16.msra.mxu0 %v3983
        %4936 = vmatprep.subr.bf16.mxu0 %v4000
        %4937 = vmatpush1.bf16.msra.mxu0 %v3999
        %4938 = vmatprep.mubr.bf16.mxu0 %v1954
        %4939 = vmatmul.mubr.bf16.gmra.mrb[0].mxu0 %v1953
        %v4940 = vpop.f32.mrb[0].mxu0
        %v4941 = vadd.f32 %v4898, %v4940
        %v4942 = vpop.f32.mrb[0].mxu0
        %v4943 = vadd.f32 %v4900, %v4942
        %v4944 = vpop.f32.mrb[0].mxu0
        %v4945 = vadd.f32 %v4902, %v4944
        %v4946 = vpop.f32.mrb[0].mxu0
        %v4947 = vadd.f32 %v4904, %v4946
        %4948 = vdwg.mxu0
        %4949 = vmatprep.subr.bf16.mxu0 %v3506
        %4950 = vmatpush1.bf16.msra.mxu0 %v3505
        %4951 = vmatprep.subr.bf16.mxu0 %v3522
        %4952 = vmatpush1.bf16.msra.mxu0 %v3521
        %4953 = vmatprep.subr.bf16.mxu0 %v3538
        %4954 = vmatpush1.bf16.msra.mxu0 %v3537
        %4955 = vmatprep.subr.bf16.mxu0 %v3554
        %4956 = vmatpush1.bf16.msra.mxu0 %v3553
        %4957 = vmatprep.subr.bf16.mxu0 %v3570
        %4958 = vmatpush1.bf16.msra.mxu0 %v3569
        %4959 = vmatprep.subr.bf16.mxu0 %v3586
        %4960 = vmatpush1.bf16.msra.mxu0 %v3585
        %4961 = vmatprep.subr.bf16.mxu0 %v3602
        %4962 = vmatpush1.bf16.msra.mxu0 %v3601
        %4963 = vmatprep.subr.bf16.mxu0 %v3618
        %4964 = vmatpush1.bf16.msra.mxu0 %v3617
        %4965 = vmatprep.subr.bf16.mxu0 %v3634
        %4966 = vmatpush1.bf16.msra.mxu0 %v3633
        %4967 = vmatprep.subr.bf16.mxu0 %v3650
        %4968 = vmatpush1.bf16.msra.mxu0 %v3649
        %4969 = vmatprep.subr.bf16.mxu0 %v3666
        %4970 = vmatpush1.bf16.msra.mxu0 %v3665
        %4971 = vmatprep.subr.bf16.mxu0 %v3682
        %4972 = vmatpush1.bf16.msra.mxu0 %v3681
        %4973 = vmatprep.subr.bf16.mxu0 %v3698
        %4974 = vmatpush1.bf16.msra.mxu0 %v3697
        %4975 = vmatprep.subr.bf16.mxu0 %v3714
        %4976 = vmatpush1.bf16.msra.mxu0 %v3713
        %4977 = vmatprep.subr.bf16.mxu0 %v3730
        %4978 = vmatpush1.bf16.msra.mxu0 %v3729
        %4979 = vmatprep.subr.bf16.mxu0 %v3746
        %4980 = vmatpush1.bf16.msra.mxu0 %v3745
        %4981 = vmatprep.mubr.bf16.mxu0 %v1952
        %4982 = vmatmul.mubr.bf16.gmra.mrb[0].mxu0 %v1951
        %v4983 = vpop.f32.mrb[0].mxu0
        %v4984 = vadd.f32 %v1902, %v4983
        %v4985 = vpop.f32.mrb[0].mxu0
        %v4986 = vadd.f32 %v1906, %v4985
        %v4987 = vpop.f32.mrb[0].mxu0
        %v4988 = vadd.f32 %v1902, %v4987
        %v4989 = vpop.f32.mrb[0].mxu0
        %v4990 = vadd.f32 %v1906, %v4989
        %4991 = vdwg.mxu0
        %4992 = vmatprep.subr.bf16.mxu0 %v3762
        %4993 = vmatpush1.bf16.msra.mxu0 %v3761
        %4994 = vmatprep.subr.bf16.mxu0 %v3778
        %4995 = vmatpush1.bf16.msra.mxu0 %v3777
        %4996 = vmatprep.subr.bf16.mxu0 %v3794
        %4997 = vmatpush1.bf16.msra.mxu0 %v3793
        %4998 = vmatprep.subr.bf16.mxu0 %v3810
        %4999 = vmatpush1.bf16.msra.mxu0 %v3809
        %5000 = vmatprep.subr.bf16.mxu0 %v3826
        %5001 = vmatpush1.bf16.msra.mxu0 %v3825
        %5002 = vmatprep.subr.bf16.mxu0 %v3842
        %5003 = vmatpush1.bf16.msra.mxu0 %v3841
        %5004 = vmatprep.subr.bf16.mxu0 %v3858
        %5005 = vmatpush1.bf16.msra.mxu0 %v3857
        %5006 = vmatprep.subr.bf16.mxu0 %v3874
        %5007 = vmatpush1.bf16.msra.mxu0 %v3873
        %5008 = vmatprep.subr.bf16.mxu0 %v3890
        %5009 = vmatpush1.bf16.msra.mxu0 %v3889
        %5010 = vmatprep.subr.bf16.mxu0 %v3906
        %5011 = vmatpush1.bf16.msra.mxu0 %v3905
        %5012 = vmatprep.subr.bf16.mxu0 %v3922
        %5013 = vmatpush1.bf16.msra.mxu0 %v3921
        %5014 = vmatprep.subr.bf16.mxu0 %v3938
        %5015 = vmatpush1.bf16.msra.mxu0 %v3937
        %5016 = vmatprep.subr.bf16.mxu0 %v3954
        %5017 = vmatpush1.bf16.msra.mxu0 %v3953
        %5018 = vmatprep.subr.bf16.mxu0 %v3970
        %5019 = vmatpush1.bf16.msra.mxu0 %v3969
        %5020 = vmatprep.subr.bf16.mxu0 %v3986
        %5021 = vmatpush1.bf16.msra.mxu0 %v3985
        %5022 = vmatprep.subr.bf16.mxu0 %v4002
        %5023 = vmatpush1.bf16.msra.mxu0 %v4001
        %5024 = vmatprep.mubr.bf16.mxu0 %v1954
        %5025 = vmatmul.mubr.bf16.gmra.mrb[0].mxu0 %v1953
        %v5026 = vpop.f32.mrb[0].mxu0
        %v5027 = vadd.f32 %v4984, %v5026
        %v5028 = vpop.f32.mrb[0].mxu0
        %v5029 = vadd.f32 %v4986, %v5028
        %v5030 = vpop.f32.mrb[0].mxu0
        %v5031 = vadd.f32 %v4988, %v5030
        %v5032 = vpop.f32.mrb[0].mxu0
        %v5033 = vadd.f32 %v4990, %v5032
        %5034 = vdwg.mxu0
        %5035 = vmatprep.subr.bf16.mxu0 %v3508
        %5036 = vmatpush1.bf16.msra.mxu0 %v3507
        %5037 = vmatprep.subr.bf16.mxu0 %v3524
        %5038 = vmatpush1.bf16.msra.mxu0 %v3523
        %5039 = vmatprep.subr.bf16.mxu0 %v3540
        %5040 = vmatpush1.bf16.msra.mxu0 %v3539
        %5041 = vmatprep.subr.bf16.mxu0 %v3556
        %5042 = vmatpush1.bf16.msra.mxu0 %v3555
        %5043 = vmatprep.subr.bf16.mxu0 %v3572
        %5044 = vmatpush1.bf16.msra.mxu0 %v3571
        %5045 = vmatprep.subr.bf16.mxu0 %v3588
        %5046 = vmatpush1.bf16.msra.mxu0 %v3587
        %5047 = vmatprep.subr.bf16.mxu0 %v3604
        %5048 = vmatpush1.bf16.msra.mxu0 %v3603
        %5049 = vmatprep.subr.bf16.mxu0 %v3620
        %5050 = vmatpush1.bf16.msra.mxu0 %v3619
        %5051 = vmatprep.subr.bf16.mxu0 %v3636
        %5052 = vmatpush1.bf16.msra.mxu0 %v3635
        %5053 = vmatprep.subr.bf16.mxu0 %v3652
        %5054 = vmatpush1.bf16.msra.mxu0 %v3651
        %5055 = vmatprep.subr.bf16.mxu0 %v3668
        %5056 = vmatpush1.bf16.msra.mxu0 %v3667
        %5057 = vmatprep.subr.bf16.mxu0 %v3684
        %5058 = vmatpush1.bf16.msra.mxu0 %v3683
        %5059 = vmatprep.subr.bf16.mxu0 %v3700
        %5060 = vmatpush1.bf16.msra.mxu0 %v3699
        %5061 = vmatprep.subr.bf16.mxu0 %v3716
        %5062 = vmatpush1.bf16.msra.mxu0 %v3715
        %5063 = vmatprep.subr.bf16.mxu0 %v3732
        %5064 = vmatpush1.bf16.msra.mxu0 %v3731
        %5065 = vmatprep.subr.bf16.mxu0 %v3748
        %5066 = vmatpush1.bf16.msra.mxu0 %v3747
        %5067 = vmatprep.mubr.bf16.mxu0 %v1952
        %5068 = vmatmul.mubr.bf16.gmra.mrb[0].mxu0 %v1951
        %v5069 = vpop.f32.mrb[0].mxu0
        %v5070 = vadd.f32 %v1910, %v5069
        %v5071 = vpop.f32.mrb[0].mxu0
        %v5072 = vadd.f32 %v1914, %v5071
        %v5073 = vpop.f32.mrb[0].mxu0
        %v5074 = vadd.f32 %v1910, %v5073
        %v5075 = vpop.f32.mrb[0].mxu0
        %v5076 = vadd.f32 %v1914, %v5075
        %5077 = vdwg.mxu0
        %5078 = vmatprep.subr.bf16.mxu0 %v3764
        %5079 = vmatpush1.bf16.msra.mxu0 %v3763
        %5080 = vmatprep.subr.bf16.mxu0 %v3780
        %5081 = vmatpush1.bf16.msra.mxu0 %v3779
        %5082 = vmatprep.subr.bf16.mxu0 %v3796
        %5083 = vmatpush1.bf16.msra.mxu0 %v3795
        %5084 = vmatprep.subr.bf16.mxu0 %v3812
        %5085 = vmatpush1.bf16.msra.mxu0 %v3811
        %5086 = vmatprep.subr.bf16.mxu0 %v3828
        %5087 = vmatpush1.bf16.msra.mxu0 %v3827
        %5088 = vmatprep.subr.bf16.mxu0 %v3844
        %5089 = vmatpush1.bf16.msra.mxu0 %v3843
        %5090 = vmatprep.subr.bf16.mxu0 %v3860
        %5091 = vmatpush1.bf16.msra.mxu0 %v3859
        %5092 = vmatprep.subr.bf16.mxu0 %v3876
        %5093 = vmatpush1.bf16.msra.mxu0 %v3875
        %5094 = vmatprep.subr.bf16.mxu0 %v3892
        %5095 = vmatpush1.bf16.msra.mxu0 %v3891
        %5096 = vmatprep.subr.bf16.mxu0 %v3908
        %5097 = vmatpush1.bf16.msra.mxu0 %v3907
        %5098 = vmatprep.subr.bf16.mxu0 %v3924
        %5099 = vmatpush1.bf16.msra.mxu0 %v3923
        %5100 = vmatprep.subr.bf16.mxu0 %v3940
        %5101 = vmatpush1.bf16.msra.mxu0 %v3939
        %5102 = vmatprep.subr.bf16.mxu0 %v3956
        %5103 = vmatpush1.bf16.msra.mxu0 %v3955
        %5104 = vmatprep.subr.bf16.mxu0 %v3972
        %5105 = vmatpush1.bf16.msra.mxu0 %v3971
        %5106 = vmatprep.subr.bf16.mxu0 %v3988
        %5107 = vmatpush1.bf16.msra.mxu0 %v3987
        %5108 = vmatprep.subr.bf16.mxu0 %v4004
        %5109 = vmatpush1.bf16.msra.mxu0 %v4003
        %5110 = vmatprep.mubr.bf16.mxu0 %v1954
        %5111 = vmatmul.mubr.bf16.gmra.mrb[0].mxu0 %v1953
        %v5112 = vpop.f32.mrb[0].mxu0
        %v5113 = vadd.f32 %v5070, %v5112
        %v5114 = vpop.f32.mrb[0].mxu0
        %v5115 = vadd.f32 %v5072, %v5114
        %v5116 = vpop.f32.mrb[0].mxu0
        %v5117 = vadd.f32 %v5074, %v5116
        %v5118 = vpop.f32.mrb[0].mxu0
        %v5119 = vadd.f32 %v5076, %v5118
        %5120 = vdwg.mxu0
        %5121 = vmatprep.subr.bf16.mxu0 %v3510
        %5122 = vmatpush1.bf16.msra.mxu0 %v3509
        %5123 = vmatprep.subr.bf16.mxu0 %v3526
        %5124 = vmatpush1.bf16.msra.mxu0 %v3525
        %5125 = vmatprep.subr.bf16.mxu0 %v3542
        %5126 = vmatpush1.bf16.msra.mxu0 %v3541
        %5127 = vmatprep.subr.bf16.mxu0 %v3558
        %5128 = vmatpush1.bf16.msra.mxu0 %v3557
        %5129 = vmatprep.subr.bf16.mxu0 %v3574
        %5130 = vmatpush1.bf16.msra.mxu0 %v3573
        %5131 = vmatprep.subr.bf16.mxu0 %v3590
        %5132 = vmatpush1.bf16.msra.mxu0 %v3589
        %5133 = vmatprep.subr.bf16.mxu0 %v3606
        %5134 = vmatpush1.bf16.msra.mxu0 %v3605
        %5135 = vmatprep.subr.bf16.mxu0 %v3622
        %5136 = vmatpush1.bf16.msra.mxu0 %v3621
        %5137 = vmatprep.subr.bf16.mxu0 %v3638
        %5138 = vmatpush1.bf16.msra.mxu0 %v3637
        %5139 = vmatprep.subr.bf16.mxu0 %v3654
        %5140 = vmatpush1.bf16.msra.mxu0 %v3653
        %5141 = vmatprep.subr.bf16.mxu0 %v3670
        %5142 = vmatpush1.bf16.msra.mxu0 %v3669
        %5143 = vmatprep.subr.bf16.mxu0 %v3686
        %5144 = vmatpush1.bf16.msra.mxu0 %v3685
        %5145 = vmatprep.subr.bf16.mxu0 %v3702
        %5146 = vmatpush1.bf16.msra.mxu0 %v3701
        %5147 = vmatprep.subr.bf16.mxu0 %v3718
        %5148 = vmatpush1.bf16.msra.mxu0 %v3717
        %5149 = vmatprep.subr.bf16.mxu0 %v3734
        %5150 = vmatpush1.bf16.msra.mxu0 %v3733
        %5151 = vmatprep.subr.bf16.mxu0 %v3750
        %5152 = vmatpush1.bf16.msra.mxu0 %v3749
        %5153 = vmatprep.mubr.bf16.mxu0 %v1952
        %5154 = vmatmul.mubr.bf16.gmra.mrb[0].mxu0 %v1951
        %v5155 = vpop.f32.mrb[0].mxu0
        %v5156 = vadd.f32 %v1918, %v5155
        %v5157 = vpop.f32.mrb[0].mxu0
        %v5158 = vadd.f32 %v1922, %v5157
        %v5159 = vpop.f32.mrb[0].mxu0
        %v5160 = vadd.f32 %v1918, %v5159
        %v5161 = vpop.f32.mrb[0].mxu0
        %v5162 = vadd.f32 %v1922, %v5161
        %5163 = vdwg.mxu0
        %5164 = vmatprep.subr.bf16.mxu0 %v3766
        %5165 = vmatpush1.bf16.msra.mxu0 %v3765
        %5166 = vmatprep.subr.bf16.mxu0 %v3782
        %5167 = vmatpush1.bf16.msra.mxu0 %v3781
        %5168 = vmatprep.subr.bf16.mxu0 %v3798
        %5169 = vmatpush1.bf16.msra.mxu0 %v3797
        %5170 = vmatprep.subr.bf16.mxu0 %v3814
        %5171 = vmatpush1.bf16.msra.mxu0 %v3813
        %5172 = vmatprep.subr.bf16.mxu0 %v3830
        %5173 = vmatpush1.bf16.msra.mxu0 %v3829
        %5174 = vmatprep.subr.bf16.mxu0 %v3846
        %5175 = vmatpush1.bf16.msra.mxu0 %v3845
        %5176 = vmatprep.subr.bf16.mxu0 %v3862
        %5177 = vmatpush1.bf16.msra.mxu0 %v3861
        %5178 = vmatprep.subr.bf16.mxu0 %v3878
        %5179 = vmatpush1.bf16.msra.mxu0 %v3877
        %5180 = vmatprep.subr.bf16.mxu0 %v3894
        %5181 = vmatpush1.bf16.msra.mxu0 %v3893
        %5182 = vmatprep.subr.bf16.mxu0 %v3910
        %5183 = vmatpush1.bf16.msra.mxu0 %v3909
        %5184 = vmatprep.subr.bf16.mxu0 %v3926
        %5185 = vmatpush1.bf16.msra.mxu0 %v3925
        %5186 = vmatprep.subr.bf16.mxu0 %v3942
        %5187 = vmatpush1.bf16.msra.mxu0 %v3941
        %5188 = vmatprep.subr.bf16.mxu0 %v3958
        %5189 = vmatpush1.bf16.msra.mxu0 %v3957
        %5190 = vmatprep.subr.bf16.mxu0 %v3974
        %5191 = vmatpush1.bf16.msra.mxu0 %v3973
        %5192 = vmatprep.subr.bf16.mxu0 %v3990
        %5193 = vmatpush1.bf16.msra.mxu0 %v3989
        %5194 = vmatprep.subr.bf16.mxu0 %v4006
        %5195 = vmatpush1.bf16.msra.mxu0 %v4005
        %5196 = vmatprep.mubr.bf16.mxu0 %v1954
        %5197 = vmatmul.mubr.bf16.gmra.mrb[0].mxu0 %v1953
        %v5198 = vpop.f32.mrb[0].mxu0
        %v5199 = vadd.f32 %v5156, %v5198
        %v5200 = vpop.f32.mrb[0].mxu0
        %v5201 = vadd.f32 %v5158, %v5200
        %v5202 = vpop.f32.mrb[0].mxu0
        %v5203 = vadd.f32 %v5160, %v5202
        %v5204 = vpop.f32.mrb[0].mxu0
        %v5205 = vadd.f32 %v5162, %v5204
        %5206 = vdwg.mxu0
        %v5207 = vmax.f32 %v4597, 0.0
        %v5208 = vmax.f32 %v4599, 0.0
        %v5209 = vmax.f32 %v4683, 0.0
        %v5210 = vmax.f32 %v4685, 0.0
        %v5211 = vmax.f32 %v4769, 0.0
        %v5212 = vmax.f32 %v4771, 0.0
        %v5213 = vmax.f32 %v4855, 0.0
        %v5214 = vmax.f32 %v4857, 0.0
        %v5215 = vmax.f32 %v4941, 0.0
        %v5216 = vmax.f32 %v4943, 0.0
        %v5217 = vmax.f32 %v5027, 0.0
        %v5218 = vmax.f32 %v5029, 0.0
        %v5219 = vmax.f32 %v5113, 0.0
        %v5220 = vmax.f32 %v5115, 0.0
        %v5221 = vmax.f32 %v5199, 0.0
        %v5222 = vmax.f32 %v5201, 0.0
        %v5223 = vmax.f32 %v4601, 0.0
        %v5224 = vmax.f32 %v4603, 0.0
        %v5225 = vmax.f32 %v4687, 0.0
        %v5226 = vmax.f32 %v4689, 0.0
        %v5227 = vmax.f32 %v4773, 0.0
        %v5228 = vmax.f32 %v4775, 0.0
        %v5229 = vmax.f32 %v4859, 0.0
        %v5230 = vmax.f32 %v4861, 0.0
        %v5231 = vmax.f32 %v4945, 0.0
        %v5232 = vmax.f32 %v4947, 0.0
        %v5233 = vmax.f32 %v5031, 0.0
        %v5234 = vmax.f32 %v5033, 0.0
        %v5235 = vmax.f32 %v5117, 0.0
        %v5236 = vmax.f32 %v5119, 0.0
        %v5237 = vmax.f32 %v5203, 0.0
        %v5238 = vmax.f32 %v5205, 0.0
        %v5239 = vpack.c.bf16 %v5223, %v5207
        %v5240 = vpack.c.bf16 %v5224, %v5208
        %v5241 = vpack.c.bf16 %v5225, %v5209
        %v5242 = vpack.c.bf16 %v5226, %v5210
        %v5243 = vpack.c.bf16 %v5227, %v5211
        %v5244 = vpack.c.bf16 %v5228, %v5212
        %v5245 = vpack.c.bf16 %v5229, %v5213
        %v5246 = vpack.c.bf16 %v5230, %v5214
        %v5247 = vpack.c.bf16 %v5231, %v5215
        %v5248 = vpack.c.bf16 %v5232, %v5216
        %v5249 = vpack.c.bf16 %v5233, %v5217
        %v5250 = vpack.c.bf16 %v5234, %v5218
        %v5251 = vpack.c.bf16 %v5235, %v5219
        %v5252 = vpack.c.bf16 %v5236, %v5220
        %v5253 = vpack.c.bf16 %v5237, %v5221
        %v5254 = vpack.c.bf16 %v5238, %v5222
        %v5255 = vld [vmem:[%s1289] sm:$0xff]
        %v5256 = vld [vmem:[%s1289 + $0x8] sm:$0xff]
        %v5257 = vld [vmem:[%s1289 + $0x10] sm:$0xff]
        %v5258 = vld [vmem:[%s1289 + $0x18] sm:$0xff]
        %v5259 = vld [vmem:[%s1289 + $0x20] sm:$0xff]
        %v5260 = vld [vmem:[%s1289 + $0x28] sm:$0xff]
        %v5261 = vld [vmem:[%s1289 + $0x30] sm:$0xff]
        %v5262 = vld [vmem:[%s1289 + $0x38] sm:$0xff]
        %v5263 = vld [vmem:[%s1289 + $0x40] sm:$0xff]
        %v5264 = vld [vmem:[%s1289 + $0x48] sm:$0xff]
        %v5265 = vld [vmem:[%s1289 + $0x50] sm:$0xff]
        %v5266 = vld [vmem:[%s1289 + $0x58] sm:$0xff]
        %v5267 = vld [vmem:[%s1289 + $0x60] sm:$0xff]
        %v5268 = vld [vmem:[%s1289 + $0x68] sm:$0xff]
        %v5269 = vld [vmem:[%s1289 + $0x70] sm:$0xff]
        %v5270 = vld [vmem:[%s1289 + $0x78] sm:$0xff]
        %v5271 = vld [vmem:[%s1289 + $0x80] sm:$0xff]
        %v5272 = vld [vmem:[%s1289 + $0x88] sm:$0xff]
        %v5273 = vld [vmem:[%s1289 + $0x90] sm:$0xff]
        %v5274 = vld [vmem:[%s1289 + $0x98] sm:$0xff]
        %v5275 = vld [vmem:[%s1289 + $0xa0] sm:$0xff]
        %v5276 = vld [vmem:[%s1289 + $0xa8] sm:$0xff]
        %v5277 = vld [vmem:[%s1289 + $0xb0] sm:$0xff]
        %v5278 = vld [vmem:[%s1289 + $0xb8] sm:$0xff]
        %v5279 = vld [vmem:[%s1289 + $0xc0] sm:$0xff]
        %v5280 = vld [vmem:[%s1289 + $0xc8] sm:$0xff]
        %v5281 = vld [vmem:[%s1289 + $0xd0] sm:$0xff]
        %v5282 = vld [vmem:[%s1289 + $0xd8] sm:$0xff]
        %v5283 = vld [vmem:[%s1289 + $0xe0] sm:$0xff]
        %v5284 = vld [vmem:[%s1289 + $0xe8] sm:$0xff]
        %v5285 = vld [vmem:[%s1289 + $0xf0] sm:$0xff]
        %v5286 = vld [vmem:[%s1289 + $0xf8] sm:$0xff]
        %v5287 = vld [vmem:[%s1289 + $0x100] sm:$0xff]
        %v5288 = vld [vmem:[%s1289 + $0x108] sm:$0xff]
        %v5289 = vld [vmem:[%s1289 + $0x110] sm:$0xff]
        %v5290 = vld [vmem:[%s1289 + $0x118] sm:$0xff]
        %v5291 = vld [vmem:[%s1289 + $0x120] sm:$0xff]
        %v5292 = vld [vmem:[%s1289 + $0x128] sm:$0xff]
        %v5293 = vld [vmem:[%s1289 + $0x130] sm:$0xff]
        %v5294 = vld [vmem:[%s1289 + $0x138] sm:$0xff]
        %v5295 = vld [vmem:[%s1289 + $0x140] sm:$0xff]
        %v5296 = vld [vmem:[%s1289 + $0x148] sm:$0xff]
        %v5297 = vld [vmem:[%s1289 + $0x150] sm:$0xff]
        %v5298 = vld [vmem:[%s1289 + $0x158] sm:$0xff]
        %v5299 = vld [vmem:[%s1289 + $0x160] sm:$0xff]
        %v5300 = vld [vmem:[%s1289 + $0x168] sm:$0xff]
        %v5301 = vld [vmem:[%s1289 + $0x170] sm:$0xff]
        %v5302 = vld [vmem:[%s1289 + $0x178] sm:$0xff]
        %v5303 = vld [vmem:[%s1289 + $0x180] sm:$0xff]
        %v5304 = vld [vmem:[%s1289 + $0x188] sm:$0xff]
        %v5305 = vld [vmem:[%s1289 + $0x190] sm:$0xff]
        %v5306 = vld [vmem:[%s1289 + $0x198] sm:$0xff]
        %v5307 = vld [vmem:[%s1289 + $0x1a0] sm:$0xff]
        %v5308 = vld [vmem:[%s1289 + $0x1a8] sm:$0xff]
        %v5309 = vld [vmem:[%s1289 + $0x1b0] sm:$0xff]
        %v5310 = vld [vmem:[%s1289 + $0x1b8] sm:$0xff]
        %v5311 = vld [vmem:[%s1289 + $0x1c0] sm:$0xff]
        %v5312 = vld [vmem:[%s1289 + $0x1c8] sm:$0xff]
        %v5313 = vld [vmem:[%s1289 + $0x1d0] sm:$0xff]
        %v5314 = vld [vmem:[%s1289 + $0x1d8] sm:$0xff]
        %v5315 = vld [vmem:[%s1289 + $0x1e0] sm:$0xff]
        %v5316 = vld [vmem:[%s1289 + $0x1e8] sm:$0xff]
        %v5317 = vld [vmem:[%s1289 + $0x1f0] sm:$0xff]
        %v5318 = vld [vmem:[%s1289 + $0x1f8] sm:$0xff]
        %v5319 = vld [vmem:[%s1289 + $0x200] sm:$0xff]
        %v5320 = vld [vmem:[%s1289 + $0x208] sm:$0xff]
        %v5321 = vld [vmem:[%s1289 + $0x210] sm:$0xff]
        %v5322 = vld [vmem:[%s1289 + $0x218] sm:$0xff]
        %v5323 = vld [vmem:[%s1289 + $0x220] sm:$0xff]
        %v5324 = vld [vmem:[%s1289 + $0x228] sm:$0xff]
        %v5325 = vld [vmem:[%s1289 + $0x230] sm:$0xff]
        %v5326 = vld [vmem:[%s1289 + $0x238] sm:$0xff]
        %v5327 = vld [vmem:[%s1289 + $0x240] sm:$0xff]
        %v5328 = vld [vmem:[%s1289 + $0x248] sm:$0xff]
        %v5329 = vld [vmem:[%s1289 + $0x250] sm:$0xff]
        %v5330 = vld [vmem:[%s1289 + $0x258] sm:$0xff]
        %v5331 = vld [vmem:[%s1289 + $0x260] sm:$0xff]
        %v5332 = vld [vmem:[%s1289 + $0x268] sm:$0xff]
        %v5333 = vld [vmem:[%s1289 + $0x270] sm:$0xff]
        %v5334 = vld [vmem:[%s1289 + $0x278] sm:$0xff]
        %v5335 = vld [vmem:[%s1289 + $0x280] sm:$0xff]
        %v5336 = vld [vmem:[%s1289 + $0x288] sm:$0xff]
        %v5337 = vld [vmem:[%s1289 + $0x290] sm:$0xff]
        %v5338 = vld [vmem:[%s1289 + $0x298] sm:$0xff]
        %v5339 = vld [vmem:[%s1289 + $0x2a0] sm:$0xff]
        %v5340 = vld [vmem:[%s1289 + $0x2a8] sm:$0xff]
        %v5341 = vld [vmem:[%s1289 + $0x2b0] sm:$0xff]
        %v5342 = vld [vmem:[%s1289 + $0x2b8] sm:$0xff]
        %v5343 = vld [vmem:[%s1289 + $0x2c0] sm:$0xff]
        %v5344 = vld [vmem:[%s1289 + $0x2c8] sm:$0xff]
        %v5345 = vld [vmem:[%s1289 + $0x2d0] sm:$0xff]
        %v5346 = vld [vmem:[%s1289 + $0x2d8] sm:$0xff]
        %v5347 = vld [vmem:[%s1289 + $0x2e0] sm:$0xff]
        %v5348 = vld [vmem:[%s1289 + $0x2e8] sm:$0xff]
        %v5349 = vld [vmem:[%s1289 + $0x2f0] sm:$0xff]
        %v5350 = vld [vmem:[%s1289 + $0x2f8] sm:$0xff]
        %v5351 = vld [vmem:[%s1289 + $0x300] sm:$0xff]
        %v5352 = vld [vmem:[%s1289 + $0x308] sm:$0xff]
        %v5353 = vld [vmem:[%s1289 + $0x310] sm:$0xff]
        %v5354 = vld [vmem:[%s1289 + $0x318] sm:$0xff]
        %v5355 = vld [vmem:[%s1289 + $0x320] sm:$0xff]
        %v5356 = vld [vmem:[%s1289 + $0x328] sm:$0xff]
        %v5357 = vld [vmem:[%s1289 + $0x330] sm:$0xff]
        %v5358 = vld [vmem:[%s1289 + $0x338] sm:$0xff]
        %v5359 = vld [vmem:[%s1289 + $0x340] sm:$0xff]
        %v5360 = vld [vmem:[%s1289 + $0x348] sm:$0xff]
        %v5361 = vld [vmem:[%s1289 + $0x350] sm:$0xff]
        %v5362 = vld [vmem:[%s1289 + $0x358] sm:$0xff]
        %v5363 = vld [vmem:[%s1289 + $0x360] sm:$0xff]
        %v5364 = vld [vmem:[%s1289 + $0x368] sm:$0xff]
        %v5365 = vld [vmem:[%s1289 + $0x370] sm:$0xff]
        %v5366 = vld [vmem:[%s1289 + $0x378] sm:$0xff]
        %v5367 = vld [vmem:[%s1289 + $0x380] sm:$0xff]
        %v5368 = vld [vmem:[%s1289 + $0x388] sm:$0xff]
        %v5369 = vld [vmem:[%s1289 + $0x390] sm:$0xff]
        %v5370 = vld [vmem:[%s1289 + $0x398] sm:$0xff]
        %v5371 = vld [vmem:[%s1289 + $0x3a0] sm:$0xff]
        %v5372 = vld [vmem:[%s1289 + $0x3a8] sm:$0xff]
        %v5373 = vld [vmem:[%s1289 + $0x3b0] sm:$0xff]
        %v5374 = vld [vmem:[%s1289 + $0x3b8] sm:$0xff]
        %v5375 = vld [vmem:[%s1289 + $0x3c0] sm:$0xff]
        %v5376 = vld [vmem:[%s1289 + $0x3c8] sm:$0xff]
        %v5377 = vld [vmem:[%s1289 + $0x3d0] sm:$0xff]
        %v5378 = vld [vmem:[%s1289 + $0x3d8] sm:$0xff]
        %v5379 = vld [vmem:[%s1289 + $0x3e0] sm:$0xff]
        %v5380 = vld [vmem:[%s1289 + $0x3e8] sm:$0xff]
        %v5381 = vld [vmem:[%s1289 + $0x3f0] sm:$0xff]
        %v5382 = vld [vmem:[%s1289 + $0x3f8] sm:$0xff]
        %v5383 = vld [vmem:[%s1289 + $0x400] sm:$0xff]
        %v5384 = vld [vmem:[%s1289 + $0x408] sm:$0xff]
        %v5385 = vld [vmem:[%s1289 + $0x410] sm:$0xff]
        %v5386 = vld [vmem:[%s1289 + $0x418] sm:$0xff]
        %v5387 = vld [vmem:[%s1289 + $0x420] sm:$0xff]
        %v5388 = vld [vmem:[%s1289 + $0x428] sm:$0xff]
        %v5389 = vld [vmem:[%s1289 + $0x430] sm:$0xff]
        %v5390 = vld [vmem:[%s1289 + $0x438] sm:$0xff]
        %v5391 = vld [vmem:[%s1289 + $0x440] sm:$0xff]
        %v5392 = vld [vmem:[%s1289 + $0x448] sm:$0xff]
        %v5393 = vld [vmem:[%s1289 + $0x450] sm:$0xff]
        %v5394 = vld [vmem:[%s1289 + $0x458] sm:$0xff]
        %v5395 = vld [vmem:[%s1289 + $0x460] sm:$0xff]
        %v5396 = vld [vmem:[%s1289 + $0x468] sm:$0xff]
        %v5397 = vld [vmem:[%s1289 + $0x470] sm:$0xff]
        %v5398 = vld [vmem:[%s1289 + $0x478] sm:$0xff]
        %v5399 = vld [vmem:[%s1289 + $0x480] sm:$0xff]
        %v5400 = vld [vmem:[%s1289 + $0x488] sm:$0xff]
        %v5401 = vld [vmem:[%s1289 + $0x490] sm:$0xff]
        %v5402 = vld [vmem:[%s1289 + $0x498] sm:$0xff]
        %v5403 = vld [vmem:[%s1289 + $0x4a0] sm:$0xff]
        %v5404 = vld [vmem:[%s1289 + $0x4a8] sm:$0xff]
        %v5405 = vld [vmem:[%s1289 + $0x4b0] sm:$0xff]
        %v5406 = vld [vmem:[%s1289 + $0x4b8] sm:$0xff]
        %v5407 = vld [vmem:[%s1289 + $0x4c0] sm:$0xff]
        %v5408 = vld [vmem:[%s1289 + $0x4c8] sm:$0xff]
        %v5409 = vld [vmem:[%s1289 + $0x4d0] sm:$0xff]
        %v5410 = vld [vmem:[%s1289 + $0x4d8] sm:$0xff]
        %v5411 = vld [vmem:[%s1289 + $0x4e0] sm:$0xff]
        %v5412 = vld [vmem:[%s1289 + $0x4e8] sm:$0xff]
        %v5413 = vld [vmem:[%s1289 + $0x4f0] sm:$0xff]
        %v5414 = vld [vmem:[%s1289 + $0x4f8] sm:$0xff]
        %v5415 = vld [vmem:[%s1289 + $0x500] sm:$0xff]
        %v5416 = vld [vmem:[%s1289 + $0x508] sm:$0xff]
        %v5417 = vld [vmem:[%s1289 + $0x510] sm:$0xff]
        %v5418 = vld [vmem:[%s1289 + $0x518] sm:$0xff]
        %v5419 = vld [vmem:[%s1289 + $0x520] sm:$0xff]
        %v5420 = vld [vmem:[%s1289 + $0x528] sm:$0xff]
        %v5421 = vld [vmem:[%s1289 + $0x530] sm:$0xff]
        %v5422 = vld [vmem:[%s1289 + $0x538] sm:$0xff]
        %v5423 = vld [vmem:[%s1289 + $0x540] sm:$0xff]
        %v5424 = vld [vmem:[%s1289 + $0x548] sm:$0xff]
        %v5425 = vld [vmem:[%s1289 + $0x550] sm:$0xff]
        %v5426 = vld [vmem:[%s1289 + $0x558] sm:$0xff]
        %v5427 = vld [vmem:[%s1289 + $0x560] sm:$0xff]
        %v5428 = vld [vmem:[%s1289 + $0x568] sm:$0xff]
        %v5429 = vld [vmem:[%s1289 + $0x570] sm:$0xff]
        %v5430 = vld [vmem:[%s1289 + $0x578] sm:$0xff]
        %v5431 = vld [vmem:[%s1289 + $0x580] sm:$0xff]
        %v5432 = vld [vmem:[%s1289 + $0x588] sm:$0xff]
        %v5433 = vld [vmem:[%s1289 + $0x590] sm:$0xff]
        %v5434 = vld [vmem:[%s1289 + $0x598] sm:$0xff]
        %v5435 = vld [vmem:[%s1289 + $0x5a0] sm:$0xff]
        %v5436 = vld [vmem:[%s1289 + $0x5a8] sm:$0xff]
        %v5437 = vld [vmem:[%s1289 + $0x5b0] sm:$0xff]
        %v5438 = vld [vmem:[%s1289 + $0x5b8] sm:$0xff]
        %v5439 = vld [vmem:[%s1289 + $0x5c0] sm:$0xff]
        %v5440 = vld [vmem:[%s1289 + $0x5c8] sm:$0xff]
        %v5441 = vld [vmem:[%s1289 + $0x5d0] sm:$0xff]
        %v5442 = vld [vmem:[%s1289 + $0x5d8] sm:$0xff]
        %v5443 = vld [vmem:[%s1289 + $0x5e0] sm:$0xff]
        %v5444 = vld [vmem:[%s1289 + $0x5e8] sm:$0xff]
        %v5445 = vld [vmem:[%s1289 + $0x5f0] sm:$0xff]
        %v5446 = vld [vmem:[%s1289 + $0x5f8] sm:$0xff]
        %v5447 = vld [vmem:[%s1289 + $0x600] sm:$0xff]
        %v5448 = vld [vmem:[%s1289 + $0x608] sm:$0xff]
        %v5449 = vld [vmem:[%s1289 + $0x610] sm:$0xff]
        %v5450 = vld [vmem:[%s1289 + $0x618] sm:$0xff]
        %v5451 = vld [vmem:[%s1289 + $0x620] sm:$0xff]
        %v5452 = vld [vmem:[%s1289 + $0x628] sm:$0xff]
        %v5453 = vld [vmem:[%s1289 + $0x630] sm:$0xff]
        %v5454 = vld [vmem:[%s1289 + $0x638] sm:$0xff]
        %v5455 = vld [vmem:[%s1289 + $0x640] sm:$0xff]
        %v5456 = vld [vmem:[%s1289 + $0x648] sm:$0xff]
        %v5457 = vld [vmem:[%s1289 + $0x650] sm:$0xff]
        %v5458 = vld [vmem:[%s1289 + $0x658] sm:$0xff]
        %v5459 = vld [vmem:[%s1289 + $0x660] sm:$0xff]
        %v5460 = vld [vmem:[%s1289 + $0x668] sm:$0xff]
        %v5461 = vld [vmem:[%s1289 + $0x670] sm:$0xff]
        %v5462 = vld [vmem:[%s1289 + $0x678] sm:$0xff]
        %v5463 = vld [vmem:[%s1289 + $0x680] sm:$0xff]
        %v5464 = vld [vmem:[%s1289 + $0x688] sm:$0xff]
        %v5465 = vld [vmem:[%s1289 + $0x690] sm:$0xff]
        %v5466 = vld [vmem:[%s1289 + $0x698] sm:$0xff]
        %v5467 = vld [vmem:[%s1289 + $0x6a0] sm:$0xff]
        %v5468 = vld [vmem:[%s1289 + $0x6a8] sm:$0xff]
        %v5469 = vld [vmem:[%s1289 + $0x6b0] sm:$0xff]
        %v5470 = vld [vmem:[%s1289 + $0x6b8] sm:$0xff]
        %v5471 = vld [vmem:[%s1289 + $0x6c0] sm:$0xff]
        %v5472 = vld [vmem:[%s1289 + $0x6c8] sm:$0xff]
        %v5473 = vld [vmem:[%s1289 + $0x6d0] sm:$0xff]
        %v5474 = vld [vmem:[%s1289 + $0x6d8] sm:$0xff]
        %v5475 = vld [vmem:[%s1289 + $0x6e0] sm:$0xff]
        %v5476 = vld [vmem:[%s1289 + $0x6e8] sm:$0xff]
        %v5477 = vld [vmem:[%s1289 + $0x6f0] sm:$0xff]
        %v5478 = vld [vmem:[%s1289 + $0x6f8] sm:$0xff]
        %v5479 = vld [vmem:[%s1289 + $0x700] sm:$0xff]
        %v5480 = vld [vmem:[%s1289 + $0x708] sm:$0xff]
        %v5481 = vld [vmem:[%s1289 + $0x710] sm:$0xff]
        %v5482 = vld [vmem:[%s1289 + $0x718] sm:$0xff]
        %v5483 = vld [vmem:[%s1289 + $0x720] sm:$0xff]
        %v5484 = vld [vmem:[%s1289 + $0x728] sm:$0xff]
        %v5485 = vld [vmem:[%s1289 + $0x730] sm:$0xff]
        %v5486 = vld [vmem:[%s1289 + $0x738] sm:$0xff]
        %v5487 = vld [vmem:[%s1289 + $0x740] sm:$0xff]
        %v5488 = vld [vmem:[%s1289 + $0x748] sm:$0xff]
        %v5489 = vld [vmem:[%s1289 + $0x750] sm:$0xff]
        %v5490 = vld [vmem:[%s1289 + $0x758] sm:$0xff]
        %v5491 = vld [vmem:[%s1289 + $0x760] sm:$0xff]
        %v5492 = vld [vmem:[%s1289 + $0x768] sm:$0xff]
        %v5493 = vld [vmem:[%s1289 + $0x770] sm:$0xff]
        %v5494 = vld [vmem:[%s1289 + $0x778] sm:$0xff]
        %v5495 = vld [vmem:[%s1289 + $0x780] sm:$0xff]
        %v5496 = vld [vmem:[%s1289 + $0x788] sm:$0xff]
        %v5497 = vld [vmem:[%s1289 + $0x790] sm:$0xff]
        %v5498 = vld [vmem:[%s1289 + $0x798] sm:$0xff]
        %v5499 = vld [vmem:[%s1289 + $0x7a0] sm:$0xff]
        %v5500 = vld [vmem:[%s1289 + $0x7a8] sm:$0xff]
        %v5501 = vld [vmem:[%s1289 + $0x7b0] sm:$0xff]
        %v5502 = vld [vmem:[%s1289 + $0x7b8] sm:$0xff]
        %v5503 = vld [vmem:[%s1289 + $0x7c0] sm:$0xff]
        %v5504 = vld [vmem:[%s1289 + $0x7c8] sm:$0xff]
        %v5505 = vld [vmem:[%s1289 + $0x7d0] sm:$0xff]
        %v5506 = vld [vmem:[%s1289 + $0x7d8] sm:$0xff]
        %v5507 = vld [vmem:[%s1289 + $0x7e0] sm:$0xff]
        %v5508 = vld [vmem:[%s1289 + $0x7e8] sm:$0xff]
        %v5509 = vld [vmem:[%s1289 + $0x7f0] sm:$0xff]
        %v5510 = vld [vmem:[%s1289 + $0x7f8] sm:$0xff]
        %v5511 = vld [vmem:[%s1335] sm:$0x3]
        %v5513 = vlaneseq
        %v5514 = vshrl.u32 %v5513, 7
        %v5515 = vsub.s32 0, %v5514
        %v5516 = vrot.slane %v5511, %v5515
        %v5517 = vlaneseq
        %v5518 = vshrl.u32 %v5517, 7
        %v5519 = vsub.s32 1, %v5518
        %v5520 = vrot.slane %v5511, %v5519
        %v5779 = vunpack.c.l.b16 %v5255
        %v5780 = vunpack.c.h.b16 %v5255
        %v5781 = vunpack.c.l.b16 %v5256
        %v5782 = vunpack.c.h.b16 %v5256
        %v5783 = vunpack.c.l.b16 %v5257
        %v5784 = vunpack.c.h.b16 %v5257
        %v5785 = vunpack.c.l.b16 %v5258
        %v5786 = vunpack.c.h.b16 %v5258
        %v5787 = vunpack.c.l.b16 %v5259
        %v5788 = vunpack.c.h.b16 %v5259
        %v5789 = vunpack.c.l.b16 %v5260
        %v5790 = vunpack.c.h.b16 %v5260
        %v5791 = vunpack.c.l.b16 %v5261
        %v5792 = vunpack.c.h.b16 %v5261
        %v5793 = vunpack.c.l.b16 %v5262
        %v5794 = vunpack.c.h.b16 %v5262
        %v5795 = vunpack.c.l.b16 %v5263
        %v5796 = vunpack.c.h.b16 %v5263
        %v5797 = vunpack.c.l.b16 %v5264
        %v5798 = vunpack.c.h.b16 %v5264
        %v5799 = vunpack.c.l.b16 %v5265
        %v5800 = vunpack.c.h.b16 %v5265
        %v5801 = vunpack.c.l.b16 %v5266
        %v5802 = vunpack.c.h.b16 %v5266
        %v5803 = vunpack.c.l.b16 %v5267
        %v5804 = vunpack.c.h.b16 %v5267
        %v5805 = vunpack.c.l.b16 %v5268
        %v5806 = vunpack.c.h.b16 %v5268
        %v5807 = vunpack.c.l.b16 %v5269
        %v5808 = vunpack.c.h.b16 %v5269
        %v5809 = vunpack.c.l.b16 %v5270
        %v5810 = vunpack.c.h.b16 %v5270
        %v5811 = vunpack.c.l.b16 %v5271
        %v5812 = vunpack.c.h.b16 %v5271
        %v5813 = vunpack.c.l.b16 %v5272
        %v5814 = vunpack.c.h.b16 %v5272
        %v5815 = vunpack.c.l.b16 %v5273
        %v5816 = vunpack.c.h.b16 %v5273
        %v5817 = vunpack.c.l.b16 %v5274
        %v5818 = vunpack.c.h.b16 %v5274
        %v5819 = vunpack.c.l.b16 %v5275
        %v5820 = vunpack.c.h.b16 %v5275
        %v5821 = vunpack.c.l.b16 %v5276
        %v5822 = vunpack.c.h.b16 %v5276
        %v5823 = vunpack.c.l.b16 %v5277
        %v5824 = vunpack.c.h.b16 %v5277
        %v5825 = vunpack.c.l.b16 %v5278
        %v5826 = vunpack.c.h.b16 %v5278
        %v5827 = vunpack.c.l.b16 %v5279
        %v5828 = vunpack.c.h.b16 %v5279
        %v5829 = vunpack.c.l.b16 %v5280
        %v5830 = vunpack.c.h.b16 %v5280
        %v5831 = vunpack.c.l.b16 %v5281
        %v5832 = vunpack.c.h.b16 %v5281
        %v5833 = vunpack.c.l.b16 %v5282
        %v5834 = vunpack.c.h.b16 %v5282
        %v5835 = vunpack.c.l.b16 %v5283
        %v5836 = vunpack.c.h.b16 %v5283
        %v5837 = vunpack.c.l.b16 %v5284
        %v5838 = vunpack.c.h.b16 %v5284
        %v5839 = vunpack.c.l.b16 %v5285
        %v5840 = vunpack.c.h.b16 %v5285
        %v5841 = vunpack.c.l.b16 %v5286
        %v5842 = vunpack.c.h.b16 %v5286
        %v5843 = vunpack.c.l.b16 %v5287
        %v5844 = vunpack.c.h.b16 %v5287
        %v5845 = vunpack.c.l.b16 %v5288
        %v5846 = vunpack.c.h.b16 %v5288
        %v5847 = vunpack.c.l.b16 %v5289
        %v5848 = vunpack.c.h.b16 %v5289
        %v5849 = vunpack.c.l.b16 %v5290
        %v5850 = vunpack.c.h.b16 %v5290
        %v5851 = vunpack.c.l.b16 %v5291
        %v5852 = vunpack.c.h.b16 %v5291
        %v5853 = vunpack.c.l.b16 %v5292
        %v5854 = vunpack.c.h.b16 %v5292
        %v5855 = vunpack.c.l.b16 %v5293
        %v5856 = vunpack.c.h.b16 %v5293
        %v5857 = vunpack.c.l.b16 %v5294
        %v5858 = vunpack.c.h.b16 %v5294
        %v5859 = vunpack.c.l.b16 %v5295
        %v5860 = vunpack.c.h.b16 %v5295
        %v5861 = vunpack.c.l.b16 %v5296
        %v5862 = vunpack.c.h.b16 %v5296
        %v5863 = vunpack.c.l.b16 %v5297
        %v5864 = vunpack.c.h.b16 %v5297
        %v5865 = vunpack.c.l.b16 %v5298
        %v5866 = vunpack.c.h.b16 %v5298
        %v5867 = vunpack.c.l.b16 %v5299
        %v5868 = vunpack.c.h.b16 %v5299
        %v5869 = vunpack.c.l.b16 %v5300
        %v5870 = vunpack.c.h.b16 %v5300
        %v5871 = vunpack.c.l.b16 %v5301
        %v5872 = vunpack.c.h.b16 %v5301
        %v5873 = vunpack.c.l.b16 %v5302
        %v5874 = vunpack.c.h.b16 %v5302
        %v5875 = vunpack.c.l.b16 %v5303
        %v5876 = vunpack.c.h.b16 %v5303
        %v5877 = vunpack.c.l.b16 %v5304
        %v5878 = vunpack.c.h.b16 %v5304
        %v5879 = vunpack.c.l.b16 %v5305
        %v5880 = vunpack.c.h.b16 %v5305
        %v5881 = vunpack.c.l.b16 %v5306
        %v5882 = vunpack.c.h.b16 %v5306
        %v5883 = vunpack.c.l.b16 %v5307
        %v5884 = vunpack.c.h.b16 %v5307
        %v5885 = vunpack.c.l.b16 %v5308
        %v5886 = vunpack.c.h.b16 %v5308
        %v5887 = vunpack.c.l.b16 %v5309
        %v5888 = vunpack.c.h.b16 %v5309
        %v5889 = vunpack.c.l.b16 %v5310
        %v5890 = vunpack.c.h.b16 %v5310
        %v5891 = vunpack.c.l.b16 %v5311
        %v5892 = vunpack.c.h.b16 %v5311
        %v5893 = vunpack.c.l.b16 %v5312
        %v5894 = vunpack.c.h.b16 %v5312
        %v5895 = vunpack.c.l.b16 %v5313
        %v5896 = vunpack.c.h.b16 %v5313
        %v5897 = vunpack.c.l.b16 %v5314
        %v5898 = vunpack.c.h.b16 %v5314
        %v5899 = vunpack.c.l.b16 %v5315
        %v5900 = vunpack.c.h.b16 %v5315
        %v5901 = vunpack.c.l.b16 %v5316
        %v5902 = vunpack.c.h.b16 %v5316
        %v5903 = vunpack.c.l.b16 %v5317
        %v5904 = vunpack.c.h.b16 %v5317
        %v5905 = vunpack.c.l.b16 %v5318
        %v5906 = vunpack.c.h.b16 %v5318
        %v5907 = vunpack.c.l.b16 %v5319
        %v5908 = vunpack.c.h.b16 %v5319
        %v5909 = vunpack.c.l.b16 %v5320
        %v5910 = vunpack.c.h.b16 %v5320
        %v5911 = vunpack.c.l.b16 %v5321
        %v5912 = vunpack.c.h.b16 %v5321
        %v5913 = vunpack.c.l.b16 %v5322
        %v5914 = vunpack.c.h.b16 %v5322
        %v5915 = vunpack.c.l.b16 %v5323
        %v5916 = vunpack.c.h.b16 %v5323
        %v5917 = vunpack.c.l.b16 %v5324
        %v5918 = vunpack.c.h.b16 %v5324
        %v5919 = vunpack.c.l.b16 %v5325
        %v5920 = vunpack.c.h.b16 %v5325
        %v5921 = vunpack.c.l.b16 %v5326
        %v5922 = vunpack.c.h.b16 %v5326
        %v5923 = vunpack.c.l.b16 %v5327
        %v5924 = vunpack.c.h.b16 %v5327
        %v5925 = vunpack.c.l.b16 %v5328
        %v5926 = vunpack.c.h.b16 %v5328
        %v5927 = vunpack.c.l.b16 %v5329
        %v5928 = vunpack.c.h.b16 %v5329
        %v5929 = vunpack.c.l.b16 %v5330
        %v5930 = vunpack.c.h.b16 %v5330
        %v5931 = vunpack.c.l.b16 %v5331
        %v5932 = vunpack.c.h.b16 %v5331
        %v5933 = vunpack.c.l.b16 %v5332
        %v5934 = vunpack.c.h.b16 %v5332
        %v5935 = vunpack.c.l.b16 %v5333
        %v5936 = vunpack.c.h.b16 %v5333
        %v5937 = vunpack.c.l.b16 %v5334
        %v5938 = vunpack.c.h.b16 %v5334
        %v5939 = vunpack.c.l.b16 %v5335
        %v5940 = vunpack.c.h.b16 %v5335
        %v5941 = vunpack.c.l.b16 %v5336
        %v5942 = vunpack.c.h.b16 %v5336
        %v5943 = vunpack.c.l.b16 %v5337
        %v5944 = vunpack.c.h.b16 %v5337
        %v5945 = vunpack.c.l.b16 %v5338
        %v5946 = vunpack.c.h.b16 %v5338
        %v5947 = vunpack.c.l.b16 %v5339
        %v5948 = vunpack.c.h.b16 %v5339
        %v5949 = vunpack.c.l.b16 %v5340
        %v5950 = vunpack.c.h.b16 %v5340
        %v5951 = vunpack.c.l.b16 %v5341
        %v5952 = vunpack.c.h.b16 %v5341
        %v5953 = vunpack.c.l.b16 %v5342
        %v5954 = vunpack.c.h.b16 %v5342
        %v5955 = vunpack.c.l.b16 %v5343
        %v5956 = vunpack.c.h.b16 %v5343
        %v5957 = vunpack.c.l.b16 %v5344
        %v5958 = vunpack.c.h.b16 %v5344
        %v5959 = vunpack.c.l.b16 %v5345
        %v5960 = vunpack.c.h.b16 %v5345
        %v5961 = vunpack.c.l.b16 %v5346
        %v5962 = vunpack.c.h.b16 %v5346
        %v5963 = vunpack.c.l.b16 %v5347
        %v5964 = vunpack.c.h.b16 %v5347
        %v5965 = vunpack.c.l.b16 %v5348
        %v5966 = vunpack.c.h.b16 %v5348
        %v5967 = vunpack.c.l.b16 %v5349
        %v5968 = vunpack.c.h.b16 %v5349
        %v5969 = vunpack.c.l.b16 %v5350
        %v5970 = vunpack.c.h.b16 %v5350
        %v5971 = vunpack.c.l.b16 %v5351
        %v5972 = vunpack.c.h.b16 %v5351
        %v5973 = vunpack.c.l.b16 %v5352
        %v5974 = vunpack.c.h.b16 %v5352
        %v5975 = vunpack.c.l.b16 %v5353
        %v5976 = vunpack.c.h.b16 %v5353
        %v5977 = vunpack.c.l.b16 %v5354
        %v5978 = vunpack.c.h.b16 %v5354
        %v5979 = vunpack.c.l.b16 %v5355
        %v5980 = vunpack.c.h.b16 %v5355
        %v5981 = vunpack.c.l.b16 %v5356
        %v5982 = vunpack.c.h.b16 %v5356
        %v5983 = vunpack.c.l.b16 %v5357
        %v5984 = vunpack.c.h.b16 %v5357
        %v5985 = vunpack.c.l.b16 %v5358
        %v5986 = vunpack.c.h.b16 %v5358
        %v5987 = vunpack.c.l.b16 %v5359
        %v5988 = vunpack.c.h.b16 %v5359
        %v5989 = vunpack.c.l.b16 %v5360
        %v5990 = vunpack.c.h.b16 %v5360
        %v5991 = vunpack.c.l.b16 %v5361
        %v5992 = vunpack.c.h.b16 %v5361
        %v5993 = vunpack.c.l.b16 %v5362
        %v5994 = vunpack.c.h.b16 %v5362
        %v5995 = vunpack.c.l.b16 %v5363
        %v5996 = vunpack.c.h.b16 %v5363
        %v5997 = vunpack.c.l.b16 %v5364
        %v5998 = vunpack.c.h.b16 %v5364
        %v5999 = vunpack.c.l.b16 %v5365
        %v6000 = vunpack.c.h.b16 %v5365
        %v6001 = vunpack.c.l.b16 %v5366
        %v6002 = vunpack.c.h.b16 %v5366
        %v6003 = vunpack.c.l.b16 %v5367
        %v6004 = vunpack.c.h.b16 %v5367
        %v6005 = vunpack.c.l.b16 %v5368
        %v6006 = vunpack.c.h.b16 %v5368
        %v6007 = vunpack.c.l.b16 %v5369
        %v6008 = vunpack.c.h.b16 %v5369
        %v6009 = vunpack.c.l.b16 %v5370
        %v6010 = vunpack.c.h.b16 %v5370
        %v6011 = vunpack.c.l.b16 %v5371
        %v6012 = vunpack.c.h.b16 %v5371
        %v6013 = vunpack.c.l.b16 %v5372
        %v6014 = vunpack.c.h.b16 %v5372
        %v6015 = vunpack.c.l.b16 %v5373
        %v6016 = vunpack.c.h.b16 %v5373
        %v6017 = vunpack.c.l.b16 %v5374
        %v6018 = vunpack.c.h.b16 %v5374
        %v6019 = vunpack.c.l.b16 %v5375
        %v6020 = vunpack.c.h.b16 %v5375
        %v6021 = vunpack.c.l.b16 %v5376
        %v6022 = vunpack.c.h.b16 %v5376
        %v6023 = vunpack.c.l.b16 %v5377
        %v6024 = vunpack.c.h.b16 %v5377
        %v6025 = vunpack.c.l.b16 %v5378
        %v6026 = vunpack.c.h.b16 %v5378
        %v6027 = vunpack.c.l.b16 %v5379
        %v6028 = vunpack.c.h.b16 %v5379
        %v6029 = vunpack.c.l.b16 %v5380
        %v6030 = vunpack.c.h.b16 %v5380
        %v6031 = vunpack.c.l.b16 %v5381
        %v6032 = vunpack.c.h.b16 %v5381
        %v6033 = vunpack.c.l.b16 %v5382
        %v6034 = vunpack.c.h.b16 %v5382
        %v6035 = vunpack.c.l.b16 %v5383
        %v6036 = vunpack.c.h.b16 %v5383
        %v6037 = vunpack.c.l.b16 %v5384
        %v6038 = vunpack.c.h.b16 %v5384
        %v6039 = vunpack.c.l.b16 %v5385
        %v6040 = vunpack.c.h.b16 %v5385
        %v6041 = vunpack.c.l.b16 %v5386
        %v6042 = vunpack.c.h.b16 %v5386
        %v6043 = vunpack.c.l.b16 %v5387
        %v6044 = vunpack.c.h.b16 %v5387
        %v6045 = vunpack.c.l.b16 %v5388
        %v6046 = vunpack.c.h.b16 %v5388
        %v6047 = vunpack.c.l.b16 %v5389
        %v6048 = vunpack.c.h.b16 %v5389
        %v6049 = vunpack.c.l.b16 %v5390
        %v6050 = vunpack.c.h.b16 %v5390
        %v6051 = vunpack.c.l.b16 %v5391
        %v6052 = vunpack.c.h.b16 %v5391
        %v6053 = vunpack.c.l.b16 %v5392
        %v6054 = vunpack.c.h.b16 %v5392
        %v6055 = vunpack.c.l.b16 %v5393
        %v6056 = vunpack.c.h.b16 %v5393
        %v6057 = vunpack.c.l.b16 %v5394
        %v6058 = vunpack.c.h.b16 %v5394
        %v6059 = vunpack.c.l.b16 %v5395
        %v6060 = vunpack.c.h.b16 %v5395
        %v6061 = vunpack.c.l.b16 %v5396
        %v6062 = vunpack.c.h.b16 %v5396
        %v6063 = vunpack.c.l.b16 %v5397
        %v6064 = vunpack.c.h.b16 %v5397
        %v6065 = vunpack.c.l.b16 %v5398
        %v6066 = vunpack.c.h.b16 %v5398
        %v6067 = vunpack.c.l.b16 %v5399
        %v6068 = vunpack.c.h.b16 %v5399
        %v6069 = vunpack.c.l.b16 %v5400
        %v6070 = vunpack.c.h.b16 %v5400
        %v6071 = vunpack.c.l.b16 %v5401
        %v6072 = vunpack.c.h.b16 %v5401
        %v6073 = vunpack.c.l.b16 %v5402
        %v6074 = vunpack.c.h.b16 %v5402
        %v6075 = vunpack.c.l.b16 %v5403
        %v6076 = vunpack.c.h.b16 %v5403
        %v6077 = vunpack.c.l.b16 %v5404
        %v6078 = vunpack.c.h.b16 %v5404
        %v6079 = vunpack.c.l.b16 %v5405
        %v6080 = vunpack.c.h.b16 %v5405
        %v6081 = vunpack.c.l.b16 %v5406
        %v6082 = vunpack.c.h.b16 %v5406
        %v6083 = vunpack.c.l.b16 %v5407
        %v6084 = vunpack.c.h.b16 %v5407
        %v6085 = vunpack.c.l.b16 %v5408
        %v6086 = vunpack.c.h.b16 %v5408
        %v6087 = vunpack.c.l.b16 %v5409
        %v6088 = vunpack.c.h.b16 %v5409
        %v6089 = vunpack.c.l.b16 %v5410
        %v6090 = vunpack.c.h.b16 %v5410
        %v6091 = vunpack.c.l.b16 %v5411
        %v6092 = vunpack.c.h.b16 %v5411
        %v6093 = vunpack.c.l.b16 %v5412
        %v6094 = vunpack.c.h.b16 %v5412
        %v6095 = vunpack.c.l.b16 %v5413
        %v6096 = vunpack.c.h.b16 %v5413
        %v6097 = vunpack.c.l.b16 %v5414
        %v6098 = vunpack.c.h.b16 %v5414
        %v6099 = vunpack.c.l.b16 %v5415
        %v6100 = vunpack.c.h.b16 %v5415
        %v6101 = vunpack.c.l.b16 %v5416
        %v6102 = vunpack.c.h.b16 %v5416
        %v6103 = vunpack.c.l.b16 %v5417
        %v6104 = vunpack.c.h.b16 %v5417
        %v6105 = vunpack.c.l.b16 %v5418
        %v6106 = vunpack.c.h.b16 %v5418
        %v6107 = vunpack.c.l.b16 %v5419
        %v6108 = vunpack.c.h.b16 %v5419
        %v6109 = vunpack.c.l.b16 %v5420
        %v6110 = vunpack.c.h.b16 %v5420
        %v6111 = vunpack.c.l.b16 %v5421
        %v6112 = vunpack.c.h.b16 %v5421
        %v6113 = vunpack.c.l.b16 %v5422
        %v6114 = vunpack.c.h.b16 %v5422
        %v6115 = vunpack.c.l.b16 %v5423
        %v6116 = vunpack.c.h.b16 %v5423
        %v6117 = vunpack.c.l.b16 %v5424
        %v6118 = vunpack.c.h.b16 %v5424
        %v6119 = vunpack.c.l.b16 %v5425
        %v6120 = vunpack.c.h.b16 %v5425
        %v6121 = vunpack.c.l.b16 %v5426
        %v6122 = vunpack.c.h.b16 %v5426
        %v6123 = vunpack.c.l.b16 %v5427
        %v6124 = vunpack.c.h.b16 %v5427
        %v6125 = vunpack.c.l.b16 %v5428
        %v6126 = vunpack.c.h.b16 %v5428
        %v6127 = vunpack.c.l.b16 %v5429
        %v6128 = vunpack.c.h.b16 %v5429
        %v6129 = vunpack.c.l.b16 %v5430
        %v6130 = vunpack.c.h.b16 %v5430
        %v6131 = vunpack.c.l.b16 %v5431
        %v6132 = vunpack.c.h.b16 %v5431
        %v6133 = vunpack.c.l.b16 %v5432
        %v6134 = vunpack.c.h.b16 %v5432
        %v6135 = vunpack.c.l.b16 %v5433
        %v6136 = vunpack.c.h.b16 %v5433
        %v6137 = vunpack.c.l.b16 %v5434
        %v6138 = vunpack.c.h.b16 %v5434
        %v6139 = vunpack.c.l.b16 %v5435
        %v6140 = vunpack.c.h.b16 %v5435
        %v6141 = vunpack.c.l.b16 %v5436
        %v6142 = vunpack.c.h.b16 %v5436
        %v6143 = vunpack.c.l.b16 %v5437
        %v6144 = vunpack.c.h.b16 %v5437
        %v6145 = vunpack.c.l.b16 %v5438
        %v6146 = vunpack.c.h.b16 %v5438
        %v6147 = vunpack.c.l.b16 %v5439
        %v6148 = vunpack.c.h.b16 %v5439
        %v6149 = vunpack.c.l.b16 %v5440
        %v6150 = vunpack.c.h.b16 %v5440
        %v6151 = vunpack.c.l.b16 %v5441
        %v6152 = vunpack.c.h.b16 %v5441
        %v6153 = vunpack.c.l.b16 %v5442
        %v6154 = vunpack.c.h.b16 %v5442
        %v6155 = vunpack.c.l.b16 %v5443
        %v6156 = vunpack.c.h.b16 %v5443
        %v6157 = vunpack.c.l.b16 %v5444
        %v6158 = vunpack.c.h.b16 %v5444
        %v6159 = vunpack.c.l.b16 %v5445
        %v6160 = vunpack.c.h.b16 %v5445
        %v6161 = vunpack.c.l.b16 %v5446
        %v6162 = vunpack.c.h.b16 %v5446
        %v6163 = vunpack.c.l.b16 %v5447
        %v6164 = vunpack.c.h.b16 %v5447
        %v6165 = vunpack.c.l.b16 %v5448
        %v6166 = vunpack.c.h.b16 %v5448
        %v6167 = vunpack.c.l.b16 %v5449
        %v6168 = vunpack.c.h.b16 %v5449
        %v6169 = vunpack.c.l.b16 %v5450
        %v6170 = vunpack.c.h.b16 %v5450
        %v6171 = vunpack.c.l.b16 %v5451
        %v6172 = vunpack.c.h.b16 %v5451
        %v6173 = vunpack.c.l.b16 %v5452
        %v6174 = vunpack.c.h.b16 %v5452
        %v6175 = vunpack.c.l.b16 %v5453
        %v6176 = vunpack.c.h.b16 %v5453
        %v6177 = vunpack.c.l.b16 %v5454
        %v6178 = vunpack.c.h.b16 %v5454
        %v6179 = vunpack.c.l.b16 %v5455
        %v6180 = vunpack.c.h.b16 %v5455
        %v6181 = vunpack.c.l.b16 %v5456
        %v6182 = vunpack.c.h.b16 %v5456
        %v6183 = vunpack.c.l.b16 %v5457
        %v6184 = vunpack.c.h.b16 %v5457
        %v6185 = vunpack.c.l.b16 %v5458
        %v6186 = vunpack.c.h.b16 %v5458
        %v6187 = vunpack.c.l.b16 %v5459
        %v6188 = vunpack.c.h.b16 %v5459
        %v6189 = vunpack.c.l.b16 %v5460
        %v6190 = vunpack.c.h.b16 %v5460
        %v6191 = vunpack.c.l.b16 %v5461
        %v6192 = vunpack.c.h.b16 %v5461
        %v6193 = vunpack.c.l.b16 %v5462
        %v6194 = vunpack.c.h.b16 %v5462
        %v6195 = vunpack.c.l.b16 %v5463
        %v6196 = vunpack.c.h.b16 %v5463
        %v6197 = vunpack.c.l.b16 %v5464
        %v6198 = vunpack.c.h.b16 %v5464
        %v6199 = vunpack.c.l.b16 %v5465
        %v6200 = vunpack.c.h.b16 %v5465
        %v6201 = vunpack.c.l.b16 %v5466
        %v6202 = vunpack.c.h.b16 %v5466
        %v6203 = vunpack.c.l.b16 %v5467
        %v6204 = vunpack.c.h.b16 %v5467
        %v6205 = vunpack.c.l.b16 %v5468
        %v6206 = vunpack.c.h.b16 %v5468
        %v6207 = vunpack.c.l.b16 %v5469
        %v6208 = vunpack.c.h.b16 %v5469
        %v6209 = vunpack.c.l.b16 %v5470
        %v6210 = vunpack.c.h.b16 %v5470
        %v6211 = vunpack.c.l.b16 %v5471
        %v6212 = vunpack.c.h.b16 %v5471
        %v6213 = vunpack.c.l.b16 %v5472
        %v6214 = vunpack.c.h.b16 %v5472
        %v6215 = vunpack.c.l.b16 %v5473
        %v6216 = vunpack.c.h.b16 %v5473
        %v6217 = vunpack.c.l.b16 %v5474
        %v6218 = vunpack.c.h.b16 %v5474
        %v6219 = vunpack.c.l.b16 %v5475
        %v6220 = vunpack.c.h.b16 %v5475
        %v6221 = vunpack.c.l.b16 %v5476
        %v6222 = vunpack.c.h.b16 %v5476
        %v6223 = vunpack.c.l.b16 %v5477
        %v6224 = vunpack.c.h.b16 %v5477
        %v6225 = vunpack.c.l.b16 %v5478
        %v6226 = vunpack.c.h.b16 %v5478
        %v6227 = vunpack.c.l.b16 %v5479
        %v6228 = vunpack.c.h.b16 %v5479
        %v6229 = vunpack.c.l.b16 %v5480
        %v6230 = vunpack.c.h.b16 %v5480
        %v6231 = vunpack.c.l.b16 %v5481
        %v6232 = vunpack.c.h.b16 %v5481
        %v6233 = vunpack.c.l.b16 %v5482
        %v6234 = vunpack.c.h.b16 %v5482
        %v6235 = vunpack.c.l.b16 %v5483
        %v6236 = vunpack.c.h.b16 %v5483
        %v6237 = vunpack.c.l.b16 %v5484
        %v6238 = vunpack.c.h.b16 %v5484
        %v6239 = vunpack.c.l.b16 %v5485
        %v6240 = vunpack.c.h.b16 %v5485
        %v6241 = vunpack.c.l.b16 %v5486
        %v6242 = vunpack.c.h.b16 %v5486
        %v6243 = vunpack.c.l.b16 %v5487
        %v6244 = vunpack.c.h.b16 %v5487
        %v6245 = vunpack.c.l.b16 %v5488
        %v6246 = vunpack.c.h.b16 %v5488
        %v6247 = vunpack.c.l.b16 %v5489
        %v6248 = vunpack.c.h.b16 %v5489
        %v6249 = vunpack.c.l.b16 %v5490
        %v6250 = vunpack.c.h.b16 %v5490
        %v6251 = vunpack.c.l.b16 %v5491
        %v6252 = vunpack.c.h.b16 %v5491
        %v6253 = vunpack.c.l.b16 %v5492
        %v6254 = vunpack.c.h.b16 %v5492
        %v6255 = vunpack.c.l.b16 %v5493
        %v6256 = vunpack.c.h.b16 %v5493
        %v6257 = vunpack.c.l.b16 %v5494
        %v6258 = vunpack.c.h.b16 %v5494
        %v6259 = vunpack.c.l.b16 %v5495
        %v6260 = vunpack.c.h.b16 %v5495
        %v6261 = vunpack.c.l.b16 %v5496
        %v6262 = vunpack.c.h.b16 %v5496
        %v6263 = vunpack.c.l.b16 %v5497
        %v6264 = vunpack.c.h.b16 %v5497
        %v6265 = vunpack.c.l.b16 %v5498
        %v6266 = vunpack.c.h.b16 %v5498
        %v6267 = vunpack.c.l.b16 %v5499
        %v6268 = vunpack.c.h.b16 %v5499
        %v6269 = vunpack.c.l.b16 %v5500
        %v6270 = vunpack.c.h.b16 %v5500
        %v6271 = vunpack.c.l.b16 %v5501
        %v6272 = vunpack.c.h.b16 %v5501
        %v6273 = vunpack.c.l.b16 %v5502
        %v6274 = vunpack.c.h.b16 %v5502
        %v6275 = vunpack.c.l.b16 %v5503
        %v6276 = vunpack.c.h.b16 %v5503
        %v6277 = vunpack.c.l.b16 %v5504
        %v6278 = vunpack.c.h.b16 %v5504
        %v6279 = vunpack.c.l.b16 %v5505
        %v6280 = vunpack.c.h.b16 %v5505
        %v6281 = vunpack.c.l.b16 %v5506
        %v6282 = vunpack.c.h.b16 %v5506
        %v6283 = vunpack.c.l.b16 %v5507
        %v6284 = vunpack.c.h.b16 %v5507
        %v6285 = vunpack.c.l.b16 %v5508
        %v6286 = vunpack.c.h.b16 %v5508
        %v6287 = vunpack.c.l.b16 %v5509
        %v6288 = vunpack.c.h.b16 %v5509
        %v6289 = vunpack.c.l.b16 %v5510
        %v6290 = vunpack.c.h.b16 %v5510
        %v6291 = vpack.c.b16 %v5781, %v5779
        %v6292 = vpack.c.b16 %v5782, %v5780
        %v6293 = vpack.c.b16 %v5785, %v5783
        %v6294 = vpack.c.b16 %v5786, %v5784
        %v6295 = vpack.c.b16 %v5789, %v5787
        %v6296 = vpack.c.b16 %v5790, %v5788
        %v6297 = vpack.c.b16 %v5793, %v5791
        %v6298 = vpack.c.b16 %v5794, %v5792
        %v6299 = vpack.c.b16 %v5797, %v5795
        %v6300 = vpack.c.b16 %v5798, %v5796
        %v6301 = vpack.c.b16 %v5801, %v5799
        %v6302 = vpack.c.b16 %v5802, %v5800
        %v6303 = vpack.c.b16 %v5805, %v5803
        %v6304 = vpack.c.b16 %v5806, %v5804
        %v6305 = vpack.c.b16 %v5809, %v5807
        %v6306 = vpack.c.b16 %v5810, %v5808
        %v6307 = vpack.c.b16 %v5813, %v5811
        %v6308 = vpack.c.b16 %v5814, %v5812
        %v6309 = vpack.c.b16 %v5817, %v5815
        %v6310 = vpack.c.b16 %v5818, %v5816
        %v6311 = vpack.c.b16 %v5821, %v5819
        %v6312 = vpack.c.b16 %v5822, %v5820
        %v6313 = vpack.c.b16 %v5825, %v5823
        %v6314 = vpack.c.b16 %v5826, %v5824
        %v6315 = vpack.c.b16 %v5829, %v5827
        %v6316 = vpack.c.b16 %v5830, %v5828
        %v6317 = vpack.c.b16 %v5833, %v5831
        %v6318 = vpack.c.b16 %v5834, %v5832
        %v6319 = vpack.c.b16 %v5837, %v5835
        %v6320 = vpack.c.b16 %v5838, %v5836
        %v6321 = vpack.c.b16 %v5841, %v5839
        %v6322 = vpack.c.b16 %v5842, %v5840
        %v6323 = vpack.c.b16 %v5845, %v5843
        %v6324 = vpack.c.b16 %v5846, %v5844
        %v6325 = vpack.c.b16 %v5849, %v5847
        %v6326 = vpack.c.b16 %v5850, %v5848
        %v6327 = vpack.c.b16 %v5853, %v5851
        %v6328 = vpack.c.b16 %v5854, %v5852
        %v6329 = vpack.c.b16 %v5857, %v5855
        %v6330 = vpack.c.b16 %v5858, %v5856
        %v6331 = vpack.c.b16 %v5861, %v5859
        %v6332 = vpack.c.b16 %v5862, %v5860
        %v6333 = vpack.c.b16 %v5865, %v5863
        %v6334 = vpack.c.b16 %v5866, %v5864
        %v6335 = vpack.c.b16 %v5869, %v5867
        %v6336 = vpack.c.b16 %v5870, %v5868
        %v6337 = vpack.c.b16 %v5873, %v5871
        %v6338 = vpack.c.b16 %v5874, %v5872
        %v6339 = vpack.c.b16 %v5877, %v5875
        %v6340 = vpack.c.b16 %v5878, %v5876
        %v6341 = vpack.c.b16 %v5881, %v5879
        %v6342 = vpack.c.b16 %v5882, %v5880
        %v6343 = vpack.c.b16 %v5885, %v5883
        %v6344 = vpack.c.b16 %v5886, %v5884
        %v6345 = vpack.c.b16 %v5889, %v5887
        %v6346 = vpack.c.b16 %v5890, %v5888
        %v6347 = vpack.c.b16 %v5893, %v5891
        %v6348 = vpack.c.b16 %v5894, %v5892
        %v6349 = vpack.c.b16 %v5897, %v5895
        %v6350 = vpack.c.b16 %v5898, %v5896
        %v6351 = vpack.c.b16 %v5901, %v5899
        %v6352 = vpack.c.b16 %v5902, %v5900
        %v6353 = vpack.c.b16 %v5905, %v5903
        %v6354 = vpack.c.b16 %v5906, %v5904
        %v6355 = vpack.c.b16 %v5909, %v5907
        %v6356 = vpack.c.b16 %v5910, %v5908
        %v6357 = vpack.c.b16 %v5913, %v5911
        %v6358 = vpack.c.b16 %v5914, %v5912
        %v6359 = vpack.c.b16 %v5917, %v5915
        %v6360 = vpack.c.b16 %v5918, %v5916
        %v6361 = vpack.c.b16 %v5921, %v5919
        %v6362 = vpack.c.b16 %v5922, %v5920
        %v6363 = vpack.c.b16 %v5925, %v5923
        %v6364 = vpack.c.b16 %v5926, %v5924
        %v6365 = vpack.c.b16 %v5929, %v5927
        %v6366 = vpack.c.b16 %v5930, %v5928
        %v6367 = vpack.c.b16 %v5933, %v5931
        %v6368 = vpack.c.b16 %v5934, %v5932
        %v6369 = vpack.c.b16 %v5937, %v5935
        %v6370 = vpack.c.b16 %v5938, %v5936
        %v6371 = vpack.c.b16 %v5941, %v5939
        %v6372 = vpack.c.b16 %v5942, %v5940
        %v6373 = vpack.c.b16 %v5945, %v5943
        %v6374 = vpack.c.b16 %v5946, %v5944
        %v6375 = vpack.c.b16 %v5949, %v5947
        %v6376 = vpack.c.b16 %v5950, %v5948
        %v6377 = vpack.c.b16 %v5953, %v5951
        %v6378 = vpack.c.b16 %v5954, %v5952
        %v6379 = vpack.c.b16 %v5957, %v5955
        %v6380 = vpack.c.b16 %v5958, %v5956
        %v6381 = vpack.c.b16 %v5961, %v5959
        %v6382 = vpack.c.b16 %v5962, %v5960
        %v6383 = vpack.c.b16 %v5965, %v5963
        %v6384 = vpack.c.b16 %v5966, %v5964
        %v6385 = vpack.c.b16 %v5969, %v5967
        %v6386 = vpack.c.b16 %v5970, %v5968
        %v6387 = vpack.c.b16 %v5973, %v5971
        %v6388 = vpack.c.b16 %v5974, %v5972
        %v6389 = vpack.c.b16 %v5977, %v5975
        %v6390 = vpack.c.b16 %v5978, %v5976
        %v6391 = vpack.c.b16 %v5981, %v5979
        %v6392 = vpack.c.b16 %v5982, %v5980
        %v6393 = vpack.c.b16 %v5985, %v5983
        %v6394 = vpack.c.b16 %v5986, %v5984
        %v6395 = vpack.c.b16 %v5989, %v5987
        %v6396 = vpack.c.b16 %v5990, %v5988
        %v6397 = vpack.c.b16 %v5993, %v5991
        %v6398 = vpack.c.b16 %v5994, %v5992
        %v6399 = vpack.c.b16 %v5997, %v5995
        %v6400 = vpack.c.b16 %v5998, %v5996
        %v6401 = vpack.c.b16 %v6001, %v5999
        %v6402 = vpack.c.b16 %v6002, %v6000
        %v6403 = vpack.c.b16 %v6005, %v6003
        %v6404 = vpack.c.b16 %v6006, %v6004
        %v6405 = vpack.c.b16 %v6009, %v6007
        %v6406 = vpack.c.b16 %v6010, %v6008
        %v6407 = vpack.c.b16 %v6013, %v6011
        %v6408 = vpack.c.b16 %v6014, %v6012
        %v6409 = vpack.c.b16 %v6017, %v6015
        %v6410 = vpack.c.b16 %v6018, %v6016
        %v6411 = vpack.c.b16 %v6021, %v6019
        %v6412 = vpack.c.b16 %v6022, %v6020
        %v6413 = vpack.c.b16 %v6025, %v6023
        %v6414 = vpack.c.b16 %v6026, %v6024
        %v6415 = vpack.c.b16 %v6029, %v6027
        %v6416 = vpack.c.b16 %v6030, %v6028
        %v6417 = vpack.c.b16 %v6033, %v6031
        %v6418 = vpack.c.b16 %v6034, %v6032
        %v6419 = vpack.c.b16 %v6037, %v6035
        %v6420 = vpack.c.b16 %v6038, %v6036
        %v6421 = vpack.c.b16 %v6041, %v6039
        %v6422 = vpack.c.b16 %v6042, %v6040
        %v6423 = vpack.c.b16 %v6045, %v6043
        %v6424 = vpack.c.b16 %v6046, %v6044
        %v6425 = vpack.c.b16 %v6049, %v6047
        %v6426 = vpack.c.b16 %v6050, %v6048
        %v6427 = vpack.c.b16 %v6053, %v6051
        %v6428 = vpack.c.b16 %v6054, %v6052
        %v6429 = vpack.c.b16 %v6057, %v6055
        %v6430 = vpack.c.b16 %v6058, %v6056
        %v6431 = vpack.c.b16 %v6061, %v6059
        %v6432 = vpack.c.b16 %v6062, %v6060
        %v6433 = vpack.c.b16 %v6065, %v6063
        %v6434 = vpack.c.b16 %v6066, %v6064
        %v6435 = vpack.c.b16 %v6069, %v6067
        %v6436 = vpack.c.b16 %v6070, %v6068
        %v6437 = vpack.c.b16 %v6073, %v6071
        %v6438 = vpack.c.b16 %v6074, %v6072
        %v6439 = vpack.c.b16 %v6077, %v6075
        %v6440 = vpack.c.b16 %v6078, %v6076
        %v6441 = vpack.c.b16 %v6081, %v6079
        %v6442 = vpack.c.b16 %v6082, %v6080
        %v6443 = vpack.c.b16 %v6085, %v6083
        %v6444 = vpack.c.b16 %v6086, %v6084
        %v6445 = vpack.c.b16 %v6089, %v6087
        %v6446 = vpack.c.b16 %v6090, %v6088
        %v6447 = vpack.c.b16 %v6093, %v6091
        %v6448 = vpack.c.b16 %v6094, %v6092
        %v6449 = vpack.c.b16 %v6097, %v6095
        %v6450 = vpack.c.b16 %v6098, %v6096
        %v6451 = vpack.c.b16 %v6101, %v6099
        %v6452 = vpack.c.b16 %v6102, %v6100
        %v6453 = vpack.c.b16 %v6105, %v6103
        %v6454 = vpack.c.b16 %v6106, %v6104
        %v6455 = vpack.c.b16 %v6109, %v6107
        %v6456 = vpack.c.b16 %v6110, %v6108
        %v6457 = vpack.c.b16 %v6113, %v6111
        %v6458 = vpack.c.b16 %v6114, %v6112
        %v6459 = vpack.c.b16 %v6117, %v6115
        %v6460 = vpack.c.b16 %v6118, %v6116
        %v6461 = vpack.c.b16 %v6121, %v6119
        %v6462 = vpack.c.b16 %v6122, %v6120
        %v6463 = vpack.c.b16 %v6125, %v6123
        %v6464 = vpack.c.b16 %v6126, %v6124
        %v6465 = vpack.c.b16 %v6129, %v6127
        %v6466 = vpack.c.b16 %v6130, %v6128
        %v6467 = vpack.c.b16 %v6133, %v6131
        %v6468 = vpack.c.b16 %v6134, %v6132
        %v6469 = vpack.c.b16 %v6137, %v6135
        %v6470 = vpack.c.b16 %v6138, %v6136
        %v6471 = vpack.c.b16 %v6141, %v6139
        %v6472 = vpack.c.b16 %v6142, %v6140
        %v6473 = vpack.c.b16 %v6145, %v6143
        %v6474 = vpack.c.b16 %v6146, %v6144
        %v6475 = vpack.c.b16 %v6149, %v6147
        %v6476 = vpack.c.b16 %v6150, %v6148
        %v6477 = vpack.c.b16 %v6153, %v6151
        %v6478 = vpack.c.b16 %v6154, %v6152
        %v6479 = vpack.c.b16 %v6157, %v6155
        %v6480 = vpack.c.b16 %v6158, %v6156
        %v6481 = vpack.c.b16 %v6161, %v6159
        %v6482 = vpack.c.b16 %v6162, %v6160
        %v6483 = vpack.c.b16 %v6165, %v6163
        %v6484 = vpack.c.b16 %v6166, %v6164
        %v6485 = vpack.c.b16 %v6169, %v6167
        %v6486 = vpack.c.b16 %v6170, %v6168
        %v6487 = vpack.c.b16 %v6173, %v6171
        %v6488 = vpack.c.b16 %v6174, %v6172
        %v6489 = vpack.c.b16 %v6177, %v6175
        %v6490 = vpack.c.b16 %v6178, %v6176
        %v6491 = vpack.c.b16 %v6181, %v6179
        %v6492 = vpack.c.b16 %v6182, %v6180
        %v6493 = vpack.c.b16 %v6185, %v6183
        %v6494 = vpack.c.b16 %v6186, %v6184
        %v6495 = vpack.c.b16 %v6189, %v6187
        %v6496 = vpack.c.b16 %v6190, %v6188
        %v6497 = vpack.c.b16 %v6193, %v6191
        %v6498 = vpack.c.b16 %v6194, %v6192
        %v6499 = vpack.c.b16 %v6197, %v6195
        %v6500 = vpack.c.b16 %v6198, %v6196
        %v6501 = vpack.c.b16 %v6201, %v6199
        %v6502 = vpack.c.b16 %v6202, %v6200
        %v6503 = vpack.c.b16 %v6205, %v6203
        %v6504 = vpack.c.b16 %v6206, %v6204
        %v6505 = vpack.c.b16 %v6209, %v6207
        %v6506 = vpack.c.b16 %v6210, %v6208
        %v6507 = vpack.c.b16 %v6213, %v6211
        %v6508 = vpack.c.b16 %v6214, %v6212
        %v6509 = vpack.c.b16 %v6217, %v6215
        %v6510 = vpack.c.b16 %v6218, %v6216
        %v6511 = vpack.c.b16 %v6221, %v6219
        %v6512 = vpack.c.b16 %v6222, %v6220
        %v6513 = vpack.c.b16 %v6225, %v6223
        %v6514 = vpack.c.b16 %v6226, %v6224
        %v6515 = vpack.c.b16 %v6229, %v6227
        %v6516 = vpack.c.b16 %v6230, %v6228
        %v6517 = vpack.c.b16 %v6233, %v6231
        %v6518 = vpack.c.b16 %v6234, %v6232
        %v6519 = vpack.c.b16 %v6237, %v6235
        %v6520 = vpack.c.b16 %v6238, %v6236
        %v6521 = vpack.c.b16 %v6241, %v6239
        %v6522 = vpack.c.b16 %v6242, %v6240
        %v6523 = vpack.c.b16 %v6245, %v6243
        %v6524 = vpack.c.b16 %v6246, %v6244
        %v6525 = vpack.c.b16 %v6249, %v6247
        %v6526 = vpack.c.b16 %v6250, %v6248
        %v6527 = vpack.c.b16 %v6253, %v6251
        %v6528 = vpack.c.b16 %v6254, %v6252
        %v6529 = vpack.c.b16 %v6257, %v6255
        %v6530 = vpack.c.b16 %v6258, %v6256
        %v6531 = vpack.c.b16 %v6261, %v6259
        %v6532 = vpack.c.b16 %v6262, %v6260
        %v6533 = vpack.c.b16 %v6265, %v6263
        %v6534 = vpack.c.b16 %v6266, %v6264
        %v6535 = vpack.c.b16 %v6269, %v6267
        %v6536 = vpack.c.b16 %v6270, %v6268
        %v6537 = vpack.c.b16 %v6273, %v6271
        %v6538 = vpack.c.b16 %v6274, %v6272
        %v6539 = vpack.c.b16 %v6277, %v6275
        %v6540 = vpack.c.b16 %v6278, %v6276
        %v6541 = vpack.c.b16 %v6281, %v6279
        %v6542 = vpack.c.b16 %v6282, %v6280
        %v6543 = vpack.c.b16 %v6285, %v6283
        %v6544 = vpack.c.b16 %v6286, %v6284
        %v6545 = vpack.c.b16 %v6289, %v6287
        %v6546 = vpack.c.b16 %v6290, %v6288
        %6803 = vmatprep.subr.bf16.mxu0 %v6292
        %6804 = vmatpush1.bf16.msra.mxu0 %v6291
        %6805 = vmatprep.subr.bf16.mxu0 %v6294
        %6806 = vmatpush1.bf16.msra.mxu0 %v6293
        %6807 = vmatprep.subr.bf16.mxu0 %v6296
        %6808 = vmatpush1.bf16.msra.mxu0 %v6295
        %6809 = vmatprep.subr.bf16.mxu0 %v6298
        %6810 = vmatpush1.bf16.msra.mxu0 %v6297
        %6811 = vmatprep.subr.bf16.mxu0 %v6300
        %6812 = vmatpush1.bf16.msra.mxu0 %v6299
        %6813 = vmatprep.subr.bf16.mxu0 %v6302
        %6814 = vmatpush1.bf16.msra.mxu0 %v6301
        %6815 = vmatprep.subr.bf16.mxu0 %v6304
        %6816 = vmatpush1.bf16.msra.mxu0 %v6303
        %6817 = vmatprep.subr.bf16.mxu0 %v6306
        %6818 = vmatpush1.bf16.msra.mxu0 %v6305
        %6819 = vmatprep.subr.bf16.mxu0 %v6308
        %6820 = vmatpush1.bf16.msra.mxu0 %v6307
        %6821 = vmatprep.subr.bf16.mxu0 %v6310
        %6822 = vmatpush1.bf16.msra.mxu0 %v6309
        %6823 = vmatprep.subr.bf16.mxu0 %v6312
        %6824 = vmatpush1.bf16.msra.mxu0 %v6311
        %6825 = vmatprep.subr.bf16.mxu0 %v6314
        %6826 = vmatpush1.bf16.msra.mxu0 %v6313
        %6827 = vmatprep.subr.bf16.mxu0 %v6316
        %6828 = vmatpush1.bf16.msra.mxu0 %v6315
        %6829 = vmatprep.subr.bf16.mxu0 %v6318
        %6830 = vmatpush1.bf16.msra.mxu0 %v6317
        %6831 = vmatprep.subr.bf16.mxu0 %v6320
        %6832 = vmatpush1.bf16.msra.mxu0 %v6319
        %6833 = vmatprep.subr.bf16.mxu0 %v6322
        %6834 = vmatpush1.bf16.msra.mxu0 %v6321
        %6835 = vmatprep.mubr.bf16.mxu0 %v5240
        %6836 = vmatmul.mubr.bf16.gmra.mrb[0].mxu0 %v5239
        %v6837 = vpop.f32.mrb[0].mxu0
        %v6838 = vadd.f32 %v5516, %v6837
        %v6839 = vpop.f32.mrb[0].mxu0
        %v6840 = vadd.f32 %v5520, %v6839
        %v6841 = vpop.f32.mrb[0].mxu0
        %v6842 = vadd.f32 %v5516, %v6841
        %v6843 = vpop.f32.mrb[0].mxu0
        %v6844 = vadd.f32 %v5520, %v6843
        %6845 = vdwg.mxu0
        %6846 = vmatprep.subr.bf16.mxu0 %v6324
        %6847 = vmatpush1.bf16.msra.mxu0 %v6323
        %6848 = vmatprep.subr.bf16.mxu0 %v6326
        %6849 = vmatpush1.bf16.msra.mxu0 %v6325
        %6850 = vmatprep.subr.bf16.mxu0 %v6328
        %6851 = vmatpush1.bf16.msra.mxu0 %v6327
        %6852 = vmatprep.subr.bf16.mxu0 %v6330
        %6853 = vmatpush1.bf16.msra.mxu0 %v6329
        %6854 = vmatprep.subr.bf16.mxu0 %v6332
        %6855 = vmatpush1.bf16.msra.mxu0 %v6331
        %6856 = vmatprep.subr.bf16.mxu0 %v6334
        %6857 = vmatpush1.bf16.msra.mxu0 %v6333
        %6858 = vmatprep.subr.bf16.mxu0 %v6336
        %6859 = vmatpush1.bf16.msra.mxu0 %v6335
        %6860 = vmatprep.subr.bf16.mxu0 %v6338
        %6861 = vmatpush1.bf16.msra.mxu0 %v6337
        %6862 = vmatprep.subr.bf16.mxu0 %v6340
        %6863 = vmatpush1.bf16.msra.mxu0 %v6339
        %6864 = vmatprep.subr.bf16.mxu0 %v6342
        %6865 = vmatpush1.bf16.msra.mxu0 %v6341
        %6866 = vmatprep.subr.bf16.mxu0 %v6344
        %6867 = vmatpush1.bf16.msra.mxu0 %v6343
        %6868 = vmatprep.subr.bf16.mxu0 %v6346
        %6869 = vmatpush1.bf16.msra.mxu0 %v6345
        %6870 = vmatprep.subr.bf16.mxu0 %v6348
        %6871 = vmatpush1.bf16.msra.mxu0 %v6347
        %6872 = vmatprep.subr.bf16.mxu0 %v6350
        %6873 = vmatpush1.bf16.msra.mxu0 %v6349
        %6874 = vmatprep.subr.bf16.mxu0 %v6352
        %6875 = vmatpush1.bf16.msra.mxu0 %v6351
        %6876 = vmatprep.subr.bf16.mxu0 %v6354
        %6877 = vmatpush1.bf16.msra.mxu0 %v6353
        %6878 = vmatprep.mubr.bf16.mxu0 %v5242
        %6879 = vmatmul.mubr.bf16.gmra.mrb[0].mxu0 %v5241
        %v6880 = vpop.f32.mrb[0].mxu0
        %v6881 = vadd.f32 %v6838, %v6880
        %v6882 = vpop.f32.mrb[0].mxu0
        %v6883 = vadd.f32 %v6840, %v6882
        %v6884 = vpop.f32.mrb[0].mxu0
        %v6885 = vadd.f32 %v6842, %v6884
        %v6886 = vpop.f32.mrb[0].mxu0
        %v6887 = vadd.f32 %v6844, %v6886
        %6888 = vdwg.mxu0
        %6889 = vmatprep.subr.bf16.mxu0 %v6356
        %6890 = vmatpush1.bf16.msra.mxu0 %v6355
        %6891 = vmatprep.subr.bf16.mxu0 %v6358
        %6892 = vmatpush1.bf16.msra.mxu0 %v6357
        %6893 = vmatprep.subr.bf16.mxu0 %v6360
        %6894 = vmatpush1.bf16.msra.mxu0 %v6359
        %6895 = vmatprep.subr.bf16.mxu0 %v6362
        %6896 = vmatpush1.bf16.msra.mxu0 %v6361
        %6897 = vmatprep.subr.bf16.mxu0 %v6364
        %6898 = vmatpush1.bf16.msra.mxu0 %v6363
        %6899 = vmatprep.subr.bf16.mxu0 %v6366
        %6900 = vmatpush1.bf16.msra.mxu0 %v6365
        %6901 = vmatprep.subr.bf16.mxu0 %v6368
        %6902 = vmatpush1.bf16.msra.mxu0 %v6367
        %6903 = vmatprep.subr.bf16.mxu0 %v6370
        %6904 = vmatpush1.bf16.msra.mxu0 %v6369
        %6905 = vmatprep.subr.bf16.mxu0 %v6372
        %6906 = vmatpush1.bf16.msra.mxu0 %v6371
        %6907 = vmatprep.subr.bf16.mxu0 %v6374
        %6908 = vmatpush1.bf16.msra.mxu0 %v6373
        %6909 = vmatprep.subr.bf16.mxu0 %v6376
        %6910 = vmatpush1.bf16.msra.mxu0 %v6375
        %6911 = vmatprep.subr.bf16.mxu0 %v6378
        %6912 = vmatpush1.bf16.msra.mxu0 %v6377
        %6913 = vmatprep.subr.bf16.mxu0 %v6380
        %6914 = vmatpush1.bf16.msra.mxu0 %v6379
        %6915 = vmatprep.subr.bf16.mxu0 %v6382
        %6916 = vmatpush1.bf16.msra.mxu0 %v6381
        %6917 = vmatprep.subr.bf16.mxu0 %v6384
        %6918 = vmatpush1.bf16.msra.mxu0 %v6383
        %6919 = vmatprep.subr.bf16.mxu0 %v6386
        %6920 = vmatpush1.bf16.msra.mxu0 %v6385
        %6921 = vmatprep.mubr.bf16.mxu0 %v5244
        %6922 = vmatmul.mubr.bf16.gmra.mrb[0].mxu0 %v5243
        %v6923 = vpop.f32.mrb[0].mxu0
        %v6924 = vadd.f32 %v6881, %v6923
        %v6925 = vpop.f32.mrb[0].mxu0
        %v6926 = vadd.f32 %v6883, %v6925
        %v6927 = vpop.f32.mrb[0].mxu0
        %v6928 = vadd.f32 %v6885, %v6927
        %v6929 = vpop.f32.mrb[0].mxu0
        %v6930 = vadd.f32 %v6887, %v6929
        %6931 = vdwg.mxu0
        %6932 = vmatprep.subr.bf16.mxu0 %v6388
        %6933 = vmatpush1.bf16.msra.mxu0 %v6387
        %6934 = vmatprep.subr.bf16.mxu0 %v6390
        %6935 = vmatpush1.bf16.msra.mxu0 %v6389
        %6936 = vmatprep.subr.bf16.mxu0 %v6392
        %6937 = vmatpush1.bf16.msra.mxu0 %v6391
        %6938 = vmatprep.subr.bf16.mxu0 %v6394
        %6939 = vmatpush1.bf16.msra.mxu0 %v6393
        %6940 = vmatprep.subr.bf16.mxu0 %v6396
        %6941 = vmatpush1.bf16.msra.mxu0 %v6395
        %6942 = vmatprep.subr.bf16.mxu0 %v6398
        %6943 = vmatpush1.bf16.msra.mxu0 %v6397
        %6944 = vmatprep.subr.bf16.mxu0 %v6400
        %6945 = vmatpush1.bf16.msra.mxu0 %v6399
        %6946 = vmatprep.subr.bf16.mxu0 %v6402
        %6947 = vmatpush1.bf16.msra.mxu0 %v6401
        %6948 = vmatprep.subr.bf16.mxu0 %v6404
        %6949 = vmatpush1.bf16.msra.mxu0 %v6403
        %6950 = vmatprep.subr.bf16.mxu0 %v6406
        %6951 = vmatpush1.bf16.msra.mxu0 %v6405
        %6952 = vmatprep.subr.bf16.mxu0 %v6408
        %6953 = vmatpush1.bf16.msra.mxu0 %v6407
        %6954 = vmatprep.subr.bf16.mxu0 %v6410
        %6955 = vmatpush1.bf16.msra.mxu0 %v6409
        %6956 = vmatprep.subr.bf16.mxu0 %v6412
        %6957 = vmatpush1.bf16.msra.mxu0 %v6411
        %6958 = vmatprep.subr.bf16.mxu0 %v6414
        %6959 = vmatpush1.bf16.msra.mxu0 %v6413
        %6960 = vmatprep.subr.bf16.mxu0 %v6416
        %6961 = vmatpush1.bf16.msra.mxu0 %v6415
        %6962 = vmatprep.subr.bf16.mxu0 %v6418
        %6963 = vmatpush1.bf16.msra.mxu0 %v6417
        %6964 = vmatprep.mubr.bf16.mxu0 %v5246
        %6965 = vmatmul.mubr.bf16.gmra.mrb[0].mxu0 %v5245
        %v6966 = vpop.f32.mrb[0].mxu0
        %v6967 = vadd.f32 %v6924, %v6966
        %v6968 = vpop.f32.mrb[0].mxu0
        %v6969 = vadd.f32 %v6926, %v6968
        %v6970 = vpop.f32.mrb[0].mxu0
        %v6971 = vadd.f32 %v6928, %v6970
        %v6972 = vpop.f32.mrb[0].mxu0
        %v6973 = vadd.f32 %v6930, %v6972
        %6974 = vdwg.mxu0
        %6975 = vmatprep.subr.bf16.mxu0 %v6420
        %6976 = vmatpush1.bf16.msra.mxu0 %v6419
        %6977 = vmatprep.subr.bf16.mxu0 %v6422
        %6978 = vmatpush1.bf16.msra.mxu0 %v6421
        %6979 = vmatprep.subr.bf16.mxu0 %v6424
        %6980 = vmatpush1.bf16.msra.mxu0 %v6423
        %6981 = vmatprep.subr.bf16.mxu0 %v6426
        %6982 = vmatpush1.bf16.msra.mxu0 %v6425
        %6983 = vmatprep.subr.bf16.mxu0 %v6428
        %6984 = vmatpush1.bf16.msra.mxu0 %v6427
        %6985 = vmatprep.subr.bf16.mxu0 %v6430
        %6986 = vmatpush1.bf16.msra.mxu0 %v6429
        %6987 = vmatprep.subr.bf16.mxu0 %v6432
        %6988 = vmatpush1.bf16.msra.mxu0 %v6431
        %6989 = vmatprep.subr.bf16.mxu0 %v6434
        %6990 = vmatpush1.bf16.msra.mxu0 %v6433
        %6991 = vmatprep.subr.bf16.mxu0 %v6436
        %6992 = vmatpush1.bf16.msra.mxu0 %v6435
        %6993 = vmatprep.subr.bf16.mxu0 %v6438
        %6994 = vmatpush1.bf16.msra.mxu0 %v6437
        %6995 = vmatprep.subr.bf16.mxu0 %v6440
        %6996 = vmatpush1.bf16.msra.mxu0 %v6439
        %6997 = vmatprep.subr.bf16.mxu0 %v6442
        %6998 = vmatpush1.bf16.msra.mxu0 %v6441
        %6999 = vmatprep.subr.bf16.mxu0 %v6444
        %7000 = vmatpush1.bf16.msra.mxu0 %v6443
        %7001 = vmatprep.subr.bf16.mxu0 %v6446
        %7002 = vmatpush1.bf16.msra.mxu0 %v6445
        %7003 = vmatprep.subr.bf16.mxu0 %v6448
        %7004 = vmatpush1.bf16.msra.mxu0 %v6447
        %7005 = vmatprep.subr.bf16.mxu0 %v6450
        %7006 = vmatpush1.bf16.msra.mxu0 %v6449
        %7007 = vmatprep.mubr.bf16.mxu0 %v5248
        %7008 = vmatmul.mubr.bf16.gmra.mrb[0].mxu0 %v5247
        %v7009 = vpop.f32.mrb[0].mxu0
        %v7010 = vadd.f32 %v6967, %v7009
        %v7011 = vpop.f32.mrb[0].mxu0
        %v7012 = vadd.f32 %v6969, %v7011
        %v7013 = vpop.f32.mrb[0].mxu0
        %v7014 = vadd.f32 %v6971, %v7013
        %v7015 = vpop.f32.mrb[0].mxu0
        %v7016 = vadd.f32 %v6973, %v7015
        %7017 = vdwg.mxu0
        %7018 = vmatprep.subr.bf16.mxu0 %v6452
        %7019 = vmatpush1.bf16.msra.mxu0 %v6451
        %7020 = vmatprep.subr.bf16.mxu0 %v6454
        %7021 = vmatpush1.bf16.msra.mxu0 %v6453
        %7022 = vmatprep.subr.bf16.mxu0 %v6456
        %7023 = vmatpush1.bf16.msra.mxu0 %v6455
        %7024 = vmatprep.subr.bf16.mxu0 %v6458
        %7025 = vmatpush1.bf16.msra.mxu0 %v6457
        %7026 = vmatprep.subr.bf16.mxu0 %v6460
        %7027 = vmatpush1.bf16.msra.mxu0 %v6459
        %7028 = vmatprep.subr.bf16.mxu0 %v6462
        %7029 = vmatpush1.bf16.msra.mxu0 %v6461
        %7030 = vmatprep.subr.bf16.mxu0 %v6464
        %7031 = vmatpush1.bf16.msra.mxu0 %v6463
        %7032 = vmatprep.subr.bf16.mxu0 %v6466
        %7033 = vmatpush1.bf16.msra.mxu0 %v6465
        %7034 = vmatprep.subr.bf16.mxu0 %v6468
        %7035 = vmatpush1.bf16.msra.mxu0 %v6467
        %7036 = vmatprep.subr.bf16.mxu0 %v6470
        %7037 = vmatpush1.bf16.msra.mxu0 %v6469
        %7038 = vmatprep.subr.bf16.mxu0 %v6472
        %7039 = vmatpush1.bf16.msra.mxu0 %v6471
        %7040 = vmatprep.subr.bf16.mxu0 %v6474
        %7041 = vmatpush1.bf16.msra.mxu0 %v6473
        %7042 = vmatprep.subr.bf16.mxu0 %v6476
        %7043 = vmatpush1.bf16.msra.mxu0 %v6475
        %7044 = vmatprep.subr.bf16.mxu0 %v6478
        %7045 = vmatpush1.bf16.msra.mxu0 %v6477
        %7046 = vmatprep.subr.bf16.mxu0 %v6480
        %7047 = vmatpush1.bf16.msra.mxu0 %v6479
        %7048 = vmatprep.subr.bf16.mxu0 %v6482
        %7049 = vmatpush1.bf16.msra.mxu0 %v6481
        %7050 = vmatprep.mubr.bf16.mxu0 %v5250
        %7051 = vmatmul.mubr.bf16.gmra.mrb[0].mxu0 %v5249
        %v7052 = vpop.f32.mrb[0].mxu0
        %v7053 = vadd.f32 %v7010, %v7052
        %v7054 = vpop.f32.mrb[0].mxu0
        %v7055 = vadd.f32 %v7012, %v7054
        %v7056 = vpop.f32.mrb[0].mxu0
        %v7057 = vadd.f32 %v7014, %v7056
        %v7058 = vpop.f32.mrb[0].mxu0
        %v7059 = vadd.f32 %v7016, %v7058
        %7060 = vdwg.mxu0
        %7061 = vmatprep.subr.bf16.mxu0 %v6484
        %7062 = vmatpush1.bf16.msra.mxu0 %v6483
        %7063 = vmatprep.subr.bf16.mxu0 %v6486
        %7064 = vmatpush1.bf16.msra.mxu0 %v6485
        %7065 = vmatprep.subr.bf16.mxu0 %v6488
        %7066 = vmatpush1.bf16.msra.mxu0 %v6487
        %7067 = vmatprep.subr.bf16.mxu0 %v6490
        %7068 = vmatpush1.bf16.msra.mxu0 %v6489
        %7069 = vmatprep.subr.bf16.mxu0 %v6492
        %7070 = vmatpush1.bf16.msra.mxu0 %v6491
        %7071 = vmatprep.subr.bf16.mxu0 %v6494
        %7072 = vmatpush1.bf16.msra.mxu0 %v6493
        %7073 = vmatprep.subr.bf16.mxu0 %v6496
        %7074 = vmatpush1.bf16.msra.mxu0 %v6495
        %7075 = vmatprep.subr.bf16.mxu0 %v6498
        %7076 = vmatpush1.bf16.msra.mxu0 %v6497
        %7077 = vmatprep.subr.bf16.mxu0 %v6500
        %7078 = vmatpush1.bf16.msra.mxu0 %v6499
        %7079 = vmatprep.subr.bf16.mxu0 %v6502
        %7080 = vmatpush1.bf16.msra.mxu0 %v6501
        %7081 = vmatprep.subr.bf16.mxu0 %v6504
        %7082 = vmatpush1.bf16.msra.mxu0 %v6503
        %7083 = vmatprep.subr.bf16.mxu0 %v6506
        %7084 = vmatpush1.bf16.msra.mxu0 %v6505
        %7085 = vmatprep.subr.bf16.mxu0 %v6508
        %7086 = vmatpush1.bf16.msra.mxu0 %v6507
        %7087 = vmatprep.subr.bf16.mxu0 %v6510
        %7088 = vmatpush1.bf16.msra.mxu0 %v6509
        %7089 = vmatprep.subr.bf16.mxu0 %v6512
        %7090 = vmatpush1.bf16.msra.mxu0 %v6511
        %7091 = vmatprep.subr.bf16.mxu0 %v6514
        %7092 = vmatpush1.bf16.msra.mxu0 %v6513
        %7093 = vmatprep.mubr.bf16.mxu0 %v5252
        %7094 = vmatmul.mubr.bf16.gmra.mrb[0].mxu0 %v5251
        %v7095 = vpop.f32.mrb[0].mxu0
        %v7096 = vadd.f32 %v7053, %v7095
        %v7097 = vpop.f32.mrb[0].mxu0
        %v7098 = vadd.f32 %v7055, %v7097
        %v7099 = vpop.f32.mrb[0].mxu0
        %v7100 = vadd.f32 %v7057, %v7099
        %v7101 = vpop.f32.mrb[0].mxu0
        %v7102 = vadd.f32 %v7059, %v7101
        %7103 = vdwg.mxu0
        %7104 = vmatprep.subr.bf16.mxu0 %v6516
        %7105 = vmatpush1.bf16.msra.mxu0 %v6515
        %7106 = vmatprep.subr.bf16.mxu0 %v6518
        %7107 = vmatpush1.bf16.msra.mxu0 %v6517
        %7108 = vmatprep.subr.bf16.mxu0 %v6520
        %7109 = vmatpush1.bf16.msra.mxu0 %v6519
        %7110 = vmatprep.subr.bf16.mxu0 %v6522
        %7111 = vmatpush1.bf16.msra.mxu0 %v6521
        %7112 = vmatprep.subr.bf16.mxu0 %v6524
        %7113 = vmatpush1.bf16.msra.mxu0 %v6523
        %7114 = vmatprep.subr.bf16.mxu0 %v6526
        %7115 = vmatpush1.bf16.msra.mxu0 %v6525
        %7116 = vmatprep.subr.bf16.mxu0 %v6528
        %7117 = vmatpush1.bf16.msra.mxu0 %v6527
        %7118 = vmatprep.subr.bf16.mxu0 %v6530
        %7119 = vmatpush1.bf16.msra.mxu0 %v6529
        %7120 = vmatprep.subr.bf16.mxu0 %v6532
        %7121 = vmatpush1.bf16.msra.mxu0 %v6531
        %7122 = vmatprep.subr.bf16.mxu0 %v6534
        %7123 = vmatpush1.bf16.msra.mxu0 %v6533
        %7124 = vmatprep.subr.bf16.mxu0 %v6536
        %7125 = vmatpush1.bf16.msra.mxu0 %v6535
        %7126 = vmatprep.subr.bf16.mxu0 %v6538
        %7127 = vmatpush1.bf16.msra.mxu0 %v6537
        %7128 = vmatprep.subr.bf16.mxu0 %v6540
        %7129 = vmatpush1.bf16.msra.mxu0 %v6539
        %7130 = vmatprep.subr.bf16.mxu0 %v6542
        %7131 = vmatpush1.bf16.msra.mxu0 %v6541
        %7132 = vmatprep.subr.bf16.mxu0 %v6544
        %7133 = vmatpush1.bf16.msra.mxu0 %v6543
        %7134 = vmatprep.subr.bf16.mxu0 %v6546
        %7135 = vmatpush1.bf16.msra.mxu0 %v6545
        %7136 = vmatprep.mubr.bf16.mxu0 %v5254
        %7137 = vmatmul.mubr.bf16.gmra.mrb[0].mxu0 %v5253
        %v7138 = vpop.f32.mrb[0].mxu0
        %v7139 = vadd.f32 %v7096, %v7138
        %v7140 = vpop.f32.mrb[0].mxu0
        %v7141 = vadd.f32 %v7098, %v7140
        %v7142 = vpop.f32.mrb[0].mxu0
        %v7143 = vadd.f32 %v7100, %v7142
        %v7144 = vpop.f32.mrb[0].mxu0
        %v7145 = vadd.f32 %v7102, %v7144
        %7146 = vdwg.mxu0
        %7147 = vst [vmem:[%s1323] sm:$0xff] %v7139
        %7148 = vst [vmem:[%s1323 + $0x8] sm:$0xff] %v7141
        %7149 = vst [vmem:[%s1323 + $0x10] sm:$0xff] %v7143
        %7150 = vst [vmem:[%s1323 + $0x18] sm:$0xff] %v7145
        %s7151 = sand.u32 %s161, 1
        %s7152 = scalar_lea.sflag [#allocation4], %s7151
        %s7153 = sand.u32 %s161, 1
        %s7154 = smul.addr %s7153, 32
        %s7155 = scalar_lea.vmem [#allocation3], %s7154
        // Predicated region
        $region79: #{feed_forward.1} parent=73 // pred_check
          %p7156 = pneg %p171
        $region80: #{feed_forward.1} parent=73 // pred_check_branch
          %7158 = sbr.rel (%p7156) target = $region82
        $region81: #{feed_forward.1} parent=73 // pred_region
          %s7159 = smul.u32 2, %s23
          %s7160 = smul.u32 2, %s24
          %s7162 = ssub.s32 512, 512
          %7163 = vsyncadd %s7152, %s7162
          %s7164 = smul.addr %s7159, 4
          %s7165 = sadd.s32 %s7160, %s7164
          %s7166 = smul.addr %s7165, 128
          %s7167 = scalar_lea.hbm %s5, %s7166
          %s7168 = sshll.u32 %s7155, 4
          %s7169 = int_to_ptr.vmem [resolvable:$true] %s7168
          %7174 = dma.vmem_to_hbm [thread:$0]  %s7169, 512, %s7167, %s7152, 256, 512, 16
        $region82: #{feed_forward.1} parent=73 // pred_fallthru
          _
      $region74: #{feed_forward.1} parent=5 // pred_fallthru
        _
      %p7175 = scmp.le.s32.totalorder 2, %s14
      // Predicated region
      $region83: #{feed_forward.1} parent=5 // pred_check
        %p7176 = pneg %p7175
      $region84: #{feed_forward.1} parent=5 // pred_check_branch
        %7178 = sbr.rel (%p7176) target = $region86
      $region85: #{feed_forward.1} parent=5 // pred_region
        %s7179 = ssub.s32 %s14, 2
        // Predicated region
        $region87: #{feed_forward.1} parent=85 // pred_check
          %p7180 = pneg %p177
        $region88: #{feed_forward.1} parent=85 // pred_check_branch
          %7182 = sbr.rel (%p7180) target = $region90
        $region89: #{feed_forward.1} parent=85 // pred_region
          %s7183 = sand.u32 %s162, 1
          %s7184 = scalar_lea.sflag [#allocation4], %s7183
          %s7185 = sand.u32 %s162, 1
          %s7186 = smul.addr %s7185, 32
          %s7187 = scalar_lea.vmem [#allocation3], %s7186
          %7188 = dma.done %s7184, 512
        $region90: #{feed_forward.1} parent=85 // pred_fallthru
          _
      $region86: #{feed_forward.1} parent=5 // pred_fallthru
        _
    $region6: #{feed_forward.1} parent=1 // loop_footer
      %s18 = sadd.s32 1, %s14
    $region7: #{feed_forward.1} parent=1 // loop_footer_branch
      %13 = sbr.rel target = $region3
    $region8: #{feed_forward.1} parent=1 // loop_exit
      _
    %7189 = vsyncpa [#allocation4], 1
    %s7190 = scalar_lea.sflag [#allocation4], 1
    %7191 = vsyncpa %s7190, 1

</llo_original>
